<compile_context>
chip_gen: v5e
topology: v5e:2x2
jax: 0.10.0
libtpu: 0.0.40
codegen_flags: <defaults>
</compile_context>

<pallas_src>
import jax
import jax.numpy as jnp
from jax.experimental import pallas as pl
from jax.experimental.pallas import tpu as pltpu


# ------------------------------ fused kernel -------------------------------- #

def _tracker_fused_kernel(x_ref, z_ref, w1_ref, b1_ref, wf_ref, bf_ref,
                          wh_ref, bh_ref, o_ref, xpad_ref, feat_ref, corr_ref):
    """Fused backbone + fpn + xcorr + heads for one batch tile of Bt images.

    x_ref   : (Bt, H, W, Cin)           images (NHWC)
    z_ref   : (Bt, Hk, Wk, C)           template kernels (NHWC)
    w1_ref  : (9, Cin, C)               backbone 3x3 weight, tap-major (dy*3+dx)
    b1_ref  : (1, C)                    backbone bias
    wf_ref  : (C, C), bf_ref : (1, C)   fpn 1x1 weight / bias
    wh_ref  : (8, C), bh_ref : (8, 1)   merged, zero-padded [cls(2); box(4); pad(2)] head
    o_ref   : (Bt, 8, H*W)              lane-dense, NCHW-ordered (padded) output
    xpad_ref: VMEM (Bt, H+2, W+2, Cin)  halo-padded image scratch
    feat_ref: VMEM (Bt, H*W, C)         staged fpn output
    corr_ref: VMEM (Bt*H*W, C)          width-padded depthwise xcorr
    """
    Bt, H, W, Cin = x_ref.shape
    _, Hk, Wk, C = z_ref.shape
    Ho = H - Hk + 1
    HW = H * W

    # ---- halo-padded image --------------------------------------------------
    # (Zeroing only the border on the first grid step was considered, but scratch is
    #  per-TensorCore under a megacore "parallel" grid, so a program_id==0 guard is
    #  unsafe; the full zero is only a few dozen stores per step.)
    xpad_ref[...] = jnp.zeros_like(xpad_ref)
    xpad_ref[:, 1:H + 1, 1:W + 1, :] = x_ref[...]

    # ---- backbone (3x3 conv, pad=1) + ReLU, then fpn (1x1 conv) + ReLU -------
    # Nine accumulated K=Cin dots replace the 9-way lane-narrow im2col concatenate.
    HR = 8 if H % 8 == 0 else H          # image rows per chunk -> ~16-vreg accumulator
    for bb in range(Bt):
        for h0 in range(0, H, HR):
            acc = jnp.zeros((HR * W, C), jnp.float32)
            for t in range(9):
                dy, dx = divmod(t, 3)
                patch = xpad_ref[bb, h0 + dy:h0 + dy + HR, dx:dx + W, :]
                acc = acc + jnp.dot(patch.reshape(HR * W, Cin), w1_ref[t],
                                    preferred_element_type=jnp.float32)
            acc = jnp.maximum(acc + b1_ref[...], 0.0)
            acc = jnp.dot(acc, wf_ref[...], preferred_element_type=jnp.float32)
            acc = jnp.maximum(acc + bf_ref[...], 0.0)
            feat_ref[bb, h0 * W:(h0 + HR) * W, :] = acc       # aligned store

    # ---- depthwise cross-correlation (SiamFC, no kernel flip) ---------------
    # corr[i, j, c] = sum_{dy,dx} feat[i+dy, j+dx, c] * z[dy, dx, c]; computed at full
    # width W (columns j >= Wo hold wrapped garbage, discarded by the wrapper slice).
    # dx -> pltpu.roll on the flattened band (XLU), dy -> free aligned slice.
    BR = 4                                # output rows per band (bounds live vregs)
    for bb in range(Bt):
        z3 = z_ref[bb]                                        # (Hk, Wk, C)
        for r0 in range(0, Ho, BR):
            nr = min(BR, Ho - r0)
            L = (nr + Hk - 1) * W
            acc = jnp.zeros((nr * W, C), jnp.float32)
            for dx in range(Wk):
                band = feat_ref[bb, r0 * W:r0 * W + L, :]     # aligned slice load
                if dx:
                    band = pltpu.roll(band, L - dx, axis=0)   # shift left by dx (cyclic)
                for dy in range(Hk):
                    acc = acc + band[dy * W:(dy + nr) * W, :] * z3[dy, dx]
            corr_ref[(bb * H + r0) * W:(bb * H + r0 + nr) * W, :] = acc   # aligned store
        if Ho < H:  # zero the unused tail rows so no stale VMEM reaches the head matmul
            corr_ref[(bb * H + Ho) * W:(bb + 1) * HW, :] = jnp.zeros(
                ((H - Ho) * W, C), jnp.float32)

    # ---- head: merged cls+box 1x1 conv (channels padded to 8), lane-dense ----
    out = jax.lax.dot_general(wh_ref[...], corr_ref[...],
                              dimension_numbers=(((1,), (1,)), ((), ())),
                              preferred_element_type=jnp.float32)   # (8, Bt*H*W)
    out = out + bh_ref[...]
    for bb in range(Bt):
        o_ref[bb] = out[:, bb * HW:(bb + 1) * HW].astype(o_ref.dtype)


# --------------------------------- wrapper ----------------------------------- #

def init_params(key, cin=3, c=32):
    ks = jax.random.split(key, 8)
    s = 0.1
    return {
        "bb_w": s * jax.random.normal(ks[0], (3, 3, cin, c), jnp.float32),  # HWIO
        "bb_b": s * jax.random.normal(ks[1], (c,), jnp.float32),
        "fpn_w": s * jax.random.normal(ks[2], (c, c), jnp.float32),
        "fpn_b": s * jax.random.normal(ks[3], (c,), jnp.float32),
        "cls_w": s * jax.random.normal(ks[4], (c, 2), jnp.float32),
        "cls_b": s * jax.random.normal(ks[5], (2,), jnp.float32),
        "box_w": s * jax.random.normal(ks[6], (c, 4), jnp.float32),
        "box_b": s * jax.random.normal(ks[7], (4,), jnp.float32),
    }


@jax.jit
def tracker_z_forward(img_nchw, kernel_nchw, params):
    B, Cin, H, W = img_nchw.shape
    _, C, Hk, Wk = kernel_nchw.shape
    assert Hk <= H and Wk <= W, "template must be no larger than the feature map"
    Ho, Wo = H - Hk + 1, W - Wk + 1
    NH = 8                               # head channels padded 6 -> 8 (sublane-aligned)

    # Batch tile: largest divisor of B up to 8.  Amortizes per-grid-step overhead and
    # raises matmul M.  TODO(synk): for v7x with B == 1 (single-stream tracking) add a
    # second "parallel" grid axis (e.g. a 2-way split over H) so both TensorCores work.
    bt = max(d for d in range(1, min(8, B) + 1) if B % d == 0)

    # NCHW (PyTorch) -> NHWC so channels sit on the 128-lane axis inside the kernel.
    x = jnp.transpose(img_nchw, (0, 2, 3, 1))        # (B, H, W, Cin)
    z = jnp.transpose(kernel_nchw, (0, 2, 3, 1))     # (B, Hk, Wk, C)

    w1 = params["bb_w"].reshape(9, Cin, C)           # tap-major (dy*3+dx)
    b1 = params["bb_b"].reshape(1, C)
    wf = params["fpn_w"]
    bf = params["fpn_b"].reshape(1, C)
    wh = jnp.zeros((NH, C), jnp.float32).at[:6].set(
        jnp.concatenate([params["cls_w"], params["box_w"]], axis=1).T)
    bh = jnp.zeros((NH, 1), jnp.float32).at[:6, 0].set(
        jnp.concatenate([params["cls_b"], params["box_b"]]))

    out = pl.pallas_call(
        _tracker_fused_kernel,
        out_shape=jax.ShapeDtypeStruct((B, NH, H * W), img_nchw.dtype),
        grid=(B // bt,),
        in_specs=[
            pl.BlockSpec((bt, H, W, Cin), lambda g: (g, 0, 0, 0)),
            pl.BlockSpec((bt, Hk, Wk, C), lambda g: (g, 0, 0, 0)),
            pl.BlockSpec((9, Cin, C), lambda g: (0, 0, 0)),
            pl.BlockSpec((1, C), lambda g: (0, 0)),
            pl.BlockSpec((C, C), lambda g: (0, 0)),
            pl.BlockSpec((1, C), lambda g: (0, 0)),
            pl.BlockSpec((NH, C), lambda g: (0, 0)),
            pl.BlockSpec((NH, 1), lambda g: (0, 0)),
        ],
        out_specs=pl.BlockSpec((bt, NH, H * W), lambda g: (g, 0, 0)),
        scratch_shapes=[
            # TODO(synk): at realistic tracker resolutions (e.g. 255x255) re-tile this
            # scratch so Cin=3 is not the 128-lane axis (v7x only has 64 MiB VMEM).
            pltpu.VMEM((bt, H + 2, W + 2, Cin), jnp.float32),   # halo-padded image
            pltpu.VMEM((bt, H * W, C), jnp.float32),            # staged fpn output
            pltpu.VMEM((bt * H * W, C), jnp.float32),           # width-padded xcorr
        ],
        compiler_params=pltpu.CompilerParams(dimension_semantics=("parallel",)),
    )(x, z, w1, b1, wf, bf, wh, bh)

    out = out.reshape(B, NH, H, W)                   # already NCHW-ordered, lane-dense
    pred_cls = out[:, :2, :Ho, :Wo]                  # (B, 2, Ho, Wo)
    pred_box = out[:, 2:6, :Ho, :Wo]                 # (B, 4, Ho, Wo)
    return pred_cls, pred_box


# ---------------------------- pure-JAX reference ----------------------------- #

def _reference_forward(img_nchw, kernel_nchw, params):
    hp = jax.lax.Precision.HIGHEST
    x = jnp.transpose(img_nchw, (0, 2, 3, 1))
    z = jnp.transpose(kernel_nchw, (0, 2, 3, 1))
    feat = jax.lax.conv_general_dilated(
        x, params["bb_w"], window_strides=(1, 1), padding="SAME",
        dimension_numbers=("NHWC", "HWIO", "NHWC"), precision=hp)
    feat = jnp.maximum(feat + params["bb_b"], 0.0)
    feat = jnp.einsum("bhwc,cd->bhwd", feat, params["fpn_w"], precision=hp)
    feat = jnp.maximum(feat + params["fpn_b"], 0.0)
    B, H, W, C = feat.shape
    Hk, Wk = z.shape[1], z.shape[2]
    Ho, Wo = H - Hk + 1, W - Wk + 1
    corr = jnp.zeros((B, Ho, Wo, C), jnp.float32)
    for dy in range(Hk):
        for dx in range(Wk):
            corr = corr + feat[:, dy:dy + Ho, dx:dx + Wo, :] * z[:, dy:dy + 1, dx:dx + 1, :]
    cls = jnp.einsum("bhwc,co->bohw", corr, params["cls_w"], precision=hp)
    cls = cls + params["cls_b"][None, :, None, None]
    box = jnp.einsum("bhwc,co->bohw", corr, params["box_w"], precision=hp)
    box = box + params["box_b"][None, :, None, None]
    return cls, box


if __name__ == "__main__":
    key = jax.random.PRNGKey(0)
    k_img, k_ker, k_par = jax.random.split(key, 3)

    B, Cin, H, W = 2, 3, 16, 16
    C, Hk, Wk = 32, 4, 4

    img = jax.random.normal(k_img, (B, Cin, H, W), jnp.float32)
    kernel_z = jax.random.normal(k_ker, (B, C, Hk, Wk), jnp.float32)
    params = init_params(k_par, cin=Cin, c=C)

    pred_cls, pred_box = tracker_z_forward(img, kernel_z, params)
    jax.block_until_ready((pred_cls, pred_box))

    assert pred_cls.shape == (B, 2, H - Hk + 1, W - Wk + 1)
    assert pred_box.shape == (B, 4, H - Hk + 1, W - Wk + 1)

    ref_cls, ref_box = _reference_forward(img, kernel_z, params)
    err = max(float(jnp.max(jnp.abs(pred_cls - ref_cls))),
              float(jnp.max(jnp.abs(pred_box - ref_box))))
    assert err < 1e-3, f"mismatch vs reference: max abs err = {err}"

    print("KERNEL_OK")
</pallas_src>

<mosaic_0001>
module attributes {stable_mosaic.version = 11 : i64} {
  func.func @_tracker_fused_kernel(%arg0: i32, %arg1: memref<2x16x16x3xf32, #tpu.memory_space<vmem>>, %arg2: memref<2x4x4x32xf32, #tpu.memory_space<vmem>>, %arg3: memref<9x3x32xf32, #tpu.memory_space<vmem>>, %arg4: memref<1x32xf32, #tpu.memory_space<vmem>>, %arg5: memref<32x32xf32, #tpu.memory_space<vmem>>, %arg6: memref<1x32xf32, #tpu.memory_space<vmem>>, %arg7: memref<8x32xf32, #tpu.memory_space<vmem>>, %arg8: memref<8x1xf32, #tpu.memory_space<vmem>>, %arg9: memref<2x8x256xf32, #tpu.memory_space<vmem>>, %arg10: memref<2x18x18x3xf32, #tpu.memory_space<vmem>>, %arg11: memref<2x256x32xf32, #tpu.memory_space<vmem>>, %arg12: memref<512x32xf32, #tpu.memory_space<vmem>>) attributes {dimension_semantics = [#tpu.dimension_semantics<parallel>], iteration_bounds = array<i64: 1>, scalar_prefetch = 0 : i64, scratch_operands = 3 : i64, tpu.core_type = #tpu.core_type<tc>, window_params = [{transform_indices = @transform_0, window_bounds = array<i64: 2, 16, 16, 3>}, {transform_indices = @transform_1, window_bounds = array<i64: 2, 4, 4, 32>}, {pipeline_mode = #tpu.pipeline_mode<synchronous>, transform_indices = @transform_2, window_bounds = array<i64: 9, 3, 32>}, {pipeline_mode = #tpu.pipeline_mode<synchronous>, transform_indices = @transform_3, window_bounds = array<i64: 1, 32>}, {pipeline_mode = #tpu.pipeline_mode<synchronous>, transform_indices = @transform_4, window_bounds = array<i64: 32, 32>}, {pipeline_mode = #tpu.pipeline_mode<synchronous>, transform_indices = @transform_5, window_bounds = array<i64: 1, 32>}, {pipeline_mode = #tpu.pipeline_mode<synchronous>, transform_indices = @transform_6, window_bounds = array<i64: 8, 32>}, {pipeline_mode = #tpu.pipeline_mode<synchronous>, transform_indices = @transform_7, window_bounds = array<i64: 8, 1>}, {transform_indices = @transform_8, window_bounds = array<i64: 2, 8, 256>}]} {
    %cst = arith.constant 0.000000e+00 : f32
    %0 = vector.broadcast %cst : f32 to vector<2x18x18x3xf32>
    %c0 = arith.constant 0 : index
    %c0_0 = arith.constant 0 : index
    %c0_1 = arith.constant 0 : index
    %c0_2 = arith.constant 0 : index
    %1 = vector.load %arg10[%c0, %c0_0, %c0_1, %c0_2] : memref<2x18x18x3xf32, #tpu.memory_space<vmem>>, vector<2x18x18x3xf32>
    tpu.vector_store %arg10[%c0, %c0_0, %c0_1, %c0_2], %0 {strides = array<i32>} : memref<2x18x18x3xf32, #tpu.memory_space<vmem>>, vector<2x18x18x3xf32>,
    %c0_3 = arith.constant 0 : index
    %c0_4 = arith.constant 0 : index
    %c0_5 = arith.constant 0 : index
    %c0_6 = arith.constant 0 : index
    %2 = vector.load %arg1[%c0_3, %c0_4, %c0_5, %c0_6] : memref<2x16x16x3xf32, #tpu.memory_space<vmem>>, vector<2x16x16x3xf32>
    %c0_7 = arith.constant 0 : index
    %c1 = arith.constant 1 : index
    %c1_8 = arith.constant 1 : index
    %c0_9 = arith.constant 0 : index
    %3 = vector.load %arg10[%c0_7, %c1, %c1_8, %c0_9] : memref<2x18x18x3xf32, #tpu.memory_space<vmem>>, vector<2x16x16x3xf32>
    tpu.vector_store %arg10[%c0_7, %c1, %c1_8, %c0_9], %2 {strides = array<i32>} : memref<2x18x18x3xf32, #tpu.memory_space<vmem>>, vector<2x16x16x3xf32>,
    %cst_10 = arith.constant 0.000000e+00 : f32
    %4 = vector.broadcast %cst_10 : f32 to vector<128x32xf32>
    %c0_11 = arith.constant 0 : index
    %c0_12 = arith.constant 0 : index
    %c0_13 = arith.constant 0 : index
    %c0_14 = arith.constant 0 : index
    %5 = vector.load %arg10[%c0_11, %c0_12, %c0_13, %c0_14] : memref<2x18x18x3xf32, #tpu.memory_space<vmem>>, vector<1x8x16x3xf32>
    %6 = vector.shape_cast %5 : vector<1x8x16x3xf32> to vector<8x16x3xf32>
    %7 = vector.shape_cast %6 : vector<8x16x3xf32> to vector<128x3xf32>
    %c0_15 = arith.constant 0 : index
    %c0_16 = arith.constant 0 : index
    %c0_17 = arith.constant 0 : index
    %8 = vector.load %arg3[%c0_15, %c0_16, %c0_17] : memref<9x3x32xf32, #tpu.memory_space<vmem>>, vector<1x3x32xf32>
    %9 = vector.shape_cast %8 : vector<1x3x32xf32> to vector<3x32xf32>
    %cst_18 = arith.constant dense<0.000000e+00> : vector<128x32xf32>
    %10 = tpu.matmul %7, %9, %cst_18 {dimension_numbers = #tpu.dot_dimension_numbers<[1], [0], [0], [1], [0, 0, 1, 1], [], []>} : vector<128x3xf32>, vector<3x32xf32>, vector<128x32xf32> -> vector<128x32xf32>
    %11 = arith.addf %4, %10 : vector<128x32xf32>
    %c0_19 = arith.constant 0 : index
    %c0_20 = arith.constant 0 : index
    %c1_21 = arith.constant 1 : index
    %c0_22 = arith.constant 0 : index
    %12 = vector.load %arg10[%c0_19, %c0_20, %c1_21, %c0_22] : memref<2x18x18x3xf32, #tpu.memory_space<vmem>>, vector<1x8x16x3xf32>
    %13 = vector.shape_cast %12 : vector<1x8x16x3xf32> to vector<8x16x3xf32>
    %14 = vector.shape_cast %13 : vector<8x16x3xf32> to vector<128x3xf32>
    %c1_23 = arith.constant 1 : index
    %c0_24 = arith.constant 0 : index
    %c0_25 = arith.constant 0 : index
    %15 = vector.load %arg3[%c1_23, %c0_24, %c0_25] : memref<9x3x32xf32, #tpu.memory_space<vmem>>, vector<1x3x32xf32>
    %16 = vector.shape_cast %15 : vector<1x3x32xf32> to vector<3x32xf32>
    %cst_26 = arith.constant dense<0.000000e+00> : vector<128x32xf32>
    %17 = tpu.matmul %14, %16, %cst_26 {dimension_numbers = #tpu.dot_dimension_numbers<[1], [0], [0], [1], [0, 0, 1, 1], [], []>} : vector<128x3xf32>, vector<3x32xf32>, vector<128x32xf32> -> vector<128x32xf32>
    %18 = arith.addf %11, %17 : vector<128x32xf32>
    %c0_27 = arith.constant 0 : index
    %c0_28 = arith.constant 0 : index
    %c2 = arith.constant 2 : index
    %c0_29 = arith.constant 0 : index
    %19 = vector.load %arg10[%c0_27, %c0_28, %c2, %c0_29] : memref<2x18x18x3xf32, #tpu.memory_space<vmem>>, vector<1x8x16x3xf32>
    %20 = vector.shape_cast %19 : vector<1x8x16x3xf32> to vector<8x16x3xf32>
    %21 = vector.shape_cast %20 : vector<8x16x3xf32> to vector<128x3xf32>
    %c2_30 = arith.constant 2 : index
    %c0_31 = arith.constant 0 : index
    %c0_32 = arith.constant 0 : index
    %22 = vector.load %arg3[%c2_30, %c0_31, %c0_32] : memref<9x3x32xf32, #tpu.memory_space<vmem>>, vector<1x3x32xf32>
    %23 = vector.shape_cast %22 : vector<1x3x32xf32> to vector<3x32xf32>
    %cst_33 = arith.constant dense<0.000000e+00> : vector<128x32xf32>
    %24 = tpu.matmul %21, %23, %cst_33 {dimension_numbers = #tpu.dot_dimension_numbers<[1], [0], [0], [1], [0, 0, 1, 1], [], []>} : vector<128x3xf32>, vector<3x32xf32>, vector<128x32xf32> -> vector<128x32xf32>
    %25 = arith.addf %18, %24 : vector<128x32xf32>
    %c0_34 = arith.constant 0 : index
    %c1_35 = arith.constant 1 : index
    %c0_36 = arith.constant 0 : index
    %c0_37 = arith.constant 0 : index
    %26 = vector.load %arg10[%c0_34, %c1_35, %c0_36, %c0_37] : memref<2x18x18x3xf32, #tpu.memory_space<vmem>>, vector<1x8x16x3xf32>
    %27 = vector.shape_cast %26 : vector<1x8x16x3xf32> to vector<8x16x3xf32>
    %28 = vector.shape_cast %27 : vector<8x16x3xf32> to vector<128x3xf32>
    %c3 = arith.constant 3 : index
    %c0_38 = arith.constant 0 : index
    %c0_39 = arith.constant 0 : index
    %29 = vector.load %arg3[%c3, %c0_38, %c0_39] : memref<9x3x32xf32, #tpu.memory_space<vmem>>, vector<1x3x32xf32>
    %30 = vector.shape_cast %29 : vector<1x3x32xf32> to vector<3x32xf32>
    %cst_40 = arith.constant dense<0.000000e+00> : vector<128x32xf32>
    %31 = tpu.matmul %28, %30, %cst_40 {dimension_numbers = #tpu.dot_dimension_numbers<[1], [0], [0], [1], [0, 0, 1, 1], [], []>} : vector<128x3xf32>, vector<3x32xf32>, vector<128x32xf32> -> vector<128x32xf32>
    %32 = arith.addf %25, %31 : vector<128x32xf32>
    %c0_41 = arith.constant 0 : index
    %c1_42 = arith.constant 1 : index
    %c1_43 = arith.constant 1 : index
    %c0_44 = arith.constant 0 : index
    %33 = vector.load %arg10[%c0_41, %c1_42, %c1_43, %c0_44] : memref<2x18x18x3xf32, #tpu.memory_space<vmem>>, vector<1x8x16x3xf32>
    %34 = vector.shape_cast %33 : vector<1x8x16x3xf32> to vector<8x16x3xf32>
    %35 = vector.shape_cast %34 : vector<8x16x3xf32> to vector<128x3xf32>
    %c4 = arith.constant 4 : index
    %c0_45 = arith.constant 0 : index
    %c0_46 = arith.constant 0 : index
    %36 = vector.load %arg3[%c4, %c0_45, %c0_46] : memref<9x3x32xf32, #tpu.memory_space<vmem>>, vector<1x3x32xf32>
    %37 = vector.shape_cast %36 : vector<1x3x32xf32> to vector<3x32xf32>
    %cst_47 = arith.constant dense<0.000000e+00> : vector<128x32xf32>
    %38 = tpu.matmul %35, %37, %cst_47 {dimension_numbers = #tpu.dot_dimension_numbers<[1], [0], [0], [1], [0, 0, 1, 1], [], []>} : vector<128x3xf32>, vector<3x32xf32>, vector<128x32xf32> -> vector<128x32xf32>
    %39 = arith.addf %32, %38 : vector<128x32xf32>
    %c0_48 = arith.constant 0 : index
    %c1_49 = arith.constant 1 : index
    %c2_50 = arith.constant 2 : index
    %c0_51 = arith.constant 0 : index
    %40 = vector.load %arg10[%c0_48, %c1_49, %c2_50, %c0_51] : memref<2x18x18x3xf32, #tpu.memory_space<vmem>>, vector<1x8x16x3xf32>
    %41 = vector.shape_cast %40 : vector<1x8x16x3xf32> to vector<8x16x3xf32>
    %42 = vector.shape_cast %41 : vector<8x16x3xf32> to vector<128x3xf32>
    %c5 = arith.constant 5 : index
    %c0_52 = arith.constant 0 : index
    %c0_53 = arith.constant 0 : index
    %43 = vector.load %arg3[%c5, %c0_52, %c0_53] : memref<9x3x32xf32, #tpu.memory_space<vmem>>, vector<1x3x32xf32>
    %44 = vector.shape_cast %43 : vector<1x3x32xf32> to vector<3x32xf32>
    %cst_54 = arith.constant dense<0.000000e+00> : vector<128x32xf32>
    %45 = tpu.matmul %42, %44, %cst_54 {dimension_numbers = #tpu.dot_dimension_numbers<[1], [0], [0], [1], [0, 0, 1, 1], [], []>} : vector<128x3xf32>, vector<3x32xf32>, vector<128x32xf32> -> vector<128x32xf32>
    %46 = arith.addf %39, %45 : vector<128x32xf32>
    %c0_55 = arith.constant 0 : index
    %c2_56 = arith.constant 2 : index
    %c0_57 = arith.constant 0 : index
    %c0_58 = arith.constant 0 : index
    %47 = vector.load %arg10[%c0_55, %c2_56, %c0_57, %c0_58] : memref<2x18x18x3xf32, #tpu.memory_space<vmem>>, vector<1x8x16x3xf32>
    %48 = vector.shape_cast %47 : vector<1x8x16x3xf32> to vector<8x16x3xf32>
    %49 = vector.shape_cast %48 : vector<8x16x3xf32> to vector<128x3xf32>
    %c6 = arith.constant 6 : index
    %c0_59 = arith.constant 0 : index
    %c0_60 = arith.constant 0 : index
    %50 = vector.load %arg3[%c6, %c0_59, %c0_60] : memref<9x3x32xf32, #tpu.memory_space<vmem>>, vector<1x3x32xf32>
    %51 = vector.shape_cast %50 : vector<1x3x32xf32> to vector<3x32xf32>
    %cst_61 = arith.constant dense<0.000000e+00> : vector<128x32xf32>
    %52 = tpu.matmul %49, %51, %cst_61 {dimension_numbers = #tpu.dot_dimension_numbers<[1], [0], [0], [1], [0, 0, 1, 1], [], []>} : vector<128x3xf32>, vector<3x32xf32>, vector<128x32xf32> -> vector<128x32xf32>
    %53 = arith.addf %46, %52 : vector<128x32xf32>
    %c0_62 = arith.constant 0 : index
    %c2_63 = arith.constant 2 : index
    %c1_64 = arith.constant 1 : index
    %c0_65 = arith.constant 0 : index
    %54 = vector.load %arg10[%c0_62, %c2_63, %c1_64, %c0_65] : memref<2x18x18x3xf32, #tpu.memory_space<vmem>>, vector<1x8x16x3xf32>
    %55 = vector.shape_cast %54 : vector<1x8x16x3xf32> to vector<8x16x3xf32>
    %56 = vector.shape_cast %55 : vector<8x16x3xf32> to vector<128x3xf32>
    %c7 = arith.constant 7 : index
    %c0_66 = arith.constant 0 : index
    %c0_67 = arith.constant 0 : index
    %57 = vector.load %arg3[%c7, %c0_66, %c0_67] : memref<9x3x32xf32, #tpu.memory_space<vmem>>, vector<1x3x32xf32>
    %58 = vector.shape_cast %57 : vector<1x3x32xf32> to vector<3x32xf32>
    %cst_68 = arith.constant dense<0.000000e+00> : vector<128x32xf32>
    %59 = tpu.matmul %56, %58, %cst_68 {dimension_numbers = #tpu.dot_dimension_numbers<[1], [0], [0], [1], [0, 0, 1, 1], [], []>} : vector<128x3xf32>, vector<3x32xf32>, vector<128x32xf32> -> vector<128x32xf32>
    %60 = arith.addf %53, %59 : vector<128x32xf32>
    %c0_69 = arith.constant 0 : index
    %c2_70 = arith.constant 2 : index
    %c2_71 = arith.constant 2 : index
    %c0_72 = arith.constant 0 : index
    %61 = vector.load %arg10[%c0_69, %c2_70, %c2_71, %c0_72] : memref<2x18x18x3xf32, #tpu.memory_space<vmem>>, vector<1x8x16x3xf32>
    %62 = vector.shape_cast %61 : vector<1x8x16x3xf32> to vector<8x16x3xf32>
    %63 = vector.shape_cast %62 : vector<8x16x3xf32> to vector<128x3xf32>
    %c8 = arith.constant 8 : index
    %c0_73 = arith.constant 0 : index
    %c0_74 = arith.constant 0 : index
    %64 = vector.load %arg3[%c8, %c0_73, %c0_74] : memref<9x3x32xf32, #tpu.memory_space<vmem>>, vector<1x3x32xf32>
    %65 = vector.shape_cast %64 : vector<1x3x32xf32> to vector<3x32xf32>
    %cst_75 = arith.constant dense<0.000000e+00> : vector<128x32xf32>
    %66 = tpu.matmul %63, %65, %cst_75 {dimension_numbers = #tpu.dot_dimension_numbers<[1], [0], [0], [1], [0, 0, 1, 1], [], []>} : vector<128x3xf32>, vector<3x32xf32>, vector<128x32xf32> -> vector<128x32xf32>
    %67 = arith.addf %60, %66 : vector<128x32xf32>
    %c0_76 = arith.constant 0 : index
    %c0_77 = arith.constant 0 : index
    %68 = vector.load %arg4[%c0_76, %c0_77] : memref<1x32xf32, #tpu.memory_space<vmem>>, vector<1x32xf32>
    %69 = vector.broadcast %68 : vector<1x32xf32> to vector<128x32xf32>
    %70 = arith.addf %67, %69 : vector<128x32xf32>
    %cst_78 = arith.constant 0.000000e+00 : f32
    %71 = vector.broadcast %cst_78 : f32 to vector<128x32xf32>
    %72 = arith.maximumf %70, %71 : vector<128x32xf32>
    %c0_79 = arith.constant 0 : index
    %c0_80 = arith.constant 0 : index
    %73 = vector.load %arg5[%c0_79, %c0_80] : memref<32x32xf32, #tpu.memory_space<vmem>>, vector<32x32xf32>
    %cst_81 = arith.constant dense<0.000000e+00> : vector<128x32xf32>
    %74 = tpu.matmul %72, %73, %cst_81 {dimension_numbers = #tpu.dot_dimension_numbers<[1], [0], [0], [1], [0, 0, 1, 1], [], []>} : vector<128x32xf32>, vector<32x32xf32>, vector<128x32xf32> -> vector<128x32xf32>
    %c0_82 = arith.constant 0 : index
    %c0_83 = arith.constant 0 : index
    %75 = vector.load %arg6[%c0_82, %c0_83] : memref<1x32xf32, #tpu.memory_space<vmem>>, vector<1x32xf32>
    %76 = vector.broadcast %75 : vector<1x32xf32> to vector<128x32xf32>
    %77 = arith.addf %74, %76 : vector<128x32xf32>
    %cst_84 = arith.constant 0.000000e+00 : f32
    %78 = vector.broadcast %cst_84 : f32 to vector<128x32xf32>
    %79 = arith.maximumf %77, %78 : vector<128x32xf32>
    %c0_85 = arith.constant 0 : index
    %c0_86 = arith.constant 0 : index
    %c0_87 = arith.constant 0 : index
    %80 = vector.load %arg11[%c0_85, %c0_86, %c0_87] : memref<2x256x32xf32, #tpu.memory_space<vmem>>, vector<1x128x32xf32>
    %81 = vector.shape_cast %80 : vector<1x128x32xf32> to vector<128x32xf32>
    %82 = vector.shape_cast %79 : vector<128x32xf32> to vector<1x128x32xf32>
    tpu.vector_store %arg11[%c0_85, %c0_86, %c0_87], %82 {strides = array<i32>} : memref<2x256x32xf32, #tpu.memory_space<vmem>>, vector<1x128x32xf32>,
    %cst_88 = arith.constant 0.000000e+00 : f32
    %83 = vector.broadcast %cst_88 : f32 to vector<128x32xf32>
    %c0_89 = arith.constant 0 : index
    %c8_90 = arith.constant 8 : index
    %c0_91 = arith.constant 0 : index
    %c0_92 = arith.constant 0 : index
    %84 = vector.load %arg10[%c0_89, %c8_90, %c0_91, %c0_92] : memref<2x18x18x3xf32, #tpu.memory_space<vmem>>, vector<1x8x16x3xf32>
    %85 = vector.shape_cast %84 : vector<1x8x16x3xf32> to vector<8x16x3xf32>
    %86 = vector.shape_cast %85 : vector<8x16x3xf32> to vector<128x3xf32>
    %c0_93 = arith.constant 0 : index
    %c0_94 = arith.constant 0 : index
    %c0_95 = arith.constant 0 : index
    %87 = vector.load %arg3[%c0_93, %c0_94, %c0_95] : memref<9x3x32xf32, #tpu.memory_space<vmem>>, vector<1x3x32xf32>
    %88 = vector.shape_cast %87 : vector<1x3x32xf32> to vector<3x32xf32>
    %cst_96 = arith.constant dense<0.000000e+00> : vector<128x32xf32>
    %89 = tpu.matmul %86, %88, %cst_96 {dimension_numbers = #tpu.dot_dimension_numbers<[1], [0], [0], [1], [0, 0, 1, 1], [], []>} : vector<128x3xf32>, vector<3x32xf32>, vector<128x32xf32> -> vector<128x32xf32>
    %90 = arith.addf %83, %89 : vector<128x32xf32>
    %c0_97 = arith.constant 0 : index
    %c8_98 = arith.constant 8 : index
    %c1_99 = arith.constant 1 : index
    %c0_100 = arith.constant 0 : index
    %91 = vector.load %arg10[%c0_97, %c8_98, %c1_99, %c0_100] : memref<2x18x18x3xf32, #tpu.memory_space<vmem>>, vector<1x8x16x3xf32>
    %92 = vector.shape_cast %91 : vector<1x8x16x3xf32> to vector<8x16x3xf32>
    %93 = vector.shape_cast %92 : vector<8x16x3xf32> to vector<128x3xf32>
    %c1_101 = arith.constant 1 : index
    %c0_102 = arith.constant 0 : index
    %c0_103 = arith.constant 0 : index
    %94 = vector.load %arg3[%c1_101, %c0_102, %c0_103] : memref<9x3x32xf32, #tpu.memory_space<vmem>>, vector<1x3x32xf32>
    %95 = vector.shape_cast %94 : vector<1x3x32xf32> to vector<3x32xf32>
    %cst_104 = arith.constant dense<0.000000e+00> : vector<128x32xf32>
    %96 = tpu.matmul %93, %95, %cst_104 {dimension_numbers = #tpu.dot_dimension_numbers<[1], [0], [0], [1], [0, 0, 1, 1], [], []>} : vector<128x3xf32>, vector<3x32xf32>, vector<128x32xf32> -> vector<128x32xf32>
    %97 = arith.addf %90, %96 : vector<128x32xf32>
    %c0_105 = arith.constant 0 : index
    %c8_106 = arith.constant 8 : index
    %c2_107 = arith.constant 2 : index
    %c0_108 = arith.constant 0 : index
    %98 = vector.load %arg10[%c0_105, %c8_106, %c2_107, %c0_108] : memref<2x18x18x3xf32, #tpu.memory_space<vmem>>, vector<1x8x16x3xf32>
    %99 = vector.shape_cast %98 : vector<1x8x16x3xf32> to vector<8x16x3xf32>
    %100 = vector.shape_cast %99 : vector<8x16x3xf32> to vector<128x3xf32>
    %c2_109 = arith.constant 2 : index
    %c0_110 = arith.constant 0 : index
    %c0_111 = arith.constant 0 : index
    %101 = vector.load %arg3[%c2_109, %c0_110, %c0_111] : memref<9x3x32xf32, #tpu.memory_space<vmem>>, vector<1x3x32xf32>
    %102 = vector.shape_cast %101 : vector<1x3x32xf32> to vector<3x32xf32>
    %cst_112 = arith.constant dense<0.000000e+00> : vector<128x32xf32>
    %103 = tpu.matmul %100, %102, %cst_112 {dimension_numbers = #tpu.dot_dimension_numbers<[1], [0], [0], [1], [0, 0, 1, 1], [], []>} : vector<128x3xf32>, vector<3x32xf32>, vector<128x32xf32> -> vector<128x32xf32>
    %104 = arith.addf %97, %103 : vector<128x32xf32>
    %c0_113 = arith.constant 0 : index
    %c9 = arith.constant 9 : index
    %c0_114 = arith.constant 0 : index
    %c0_115 = arith.constant 0 : index
    %105 = vector.load %arg10[%c0_113, %c9, %c0_114, %c0_115] : memref<2x18x18x3xf32, #tpu.memory_space<vmem>>, vector<1x8x16x3xf32>
    %106 = vector.shape_cast %105 : vector<1x8x16x3xf32> to vector<8x16x3xf32>
    %107 = vector.shape_cast %106 : vector<8x16x3xf32> to vector<128x3xf32>
    %c3_116 = arith.constant 3 : index
    %c0_117 = arith.constant 0 : index
    %c0_118 = arith.constant 0 : index
    %108 = vector.load %arg3[%c3_116, %c0_117, %c0_118] : memref<9x3x32xf32, #tpu.memory_space<vmem>>, vector<1x3x32xf32>
    %109 = vector.shape_cast %108 : vector<1x3x32xf32> to vector<3x32xf32>
    %cst_119 = arith.constant dense<0.000000e+00> : vector<128x32xf32>
    %110 = tpu.matmul %107, %109, %cst_119 {dimension_numbers = #tpu.dot_dimension_numbers<[1], [0], [0], [1], [0, 0, 1, 1], [], []>} : vector<128x3xf32>, vector<3x32xf32>, vector<128x32xf32> -> vector<128x32xf32>
    %111 = arith.addf %104, %110 : vector<128x32xf32>
    %c0_120 = arith.constant 0 : index
    %c9_121 = arith.constant 9 : index
    %c1_122 = arith.constant 1 : index
    %c0_123 = arith.constant 0 : index
    %112 = vector.load %arg10[%c0_120, %c9_121, %c1_122, %c0_123] : memref<2x18x18x3xf32, #tpu.memory_space<vmem>>, vector<1x8x16x3xf32>
    %113 = vector.shape_cast %112 : vector<1x8x16x3xf32> to vector<8x16x3xf32>
    %114 = vector.shape_cast %113 : vector<8x16x3xf32> to vector<128x3xf32>
    %c4_124 = arith.constant 4 : index
    %c0_125 = arith.constant 0 : index
    %c0_126 = arith.constant 0 : index
    %115 = vector.load %arg3[%c4_124, %c0_125, %c0_126] : memref<9x3x32xf32, #tpu.memory_space<vmem>>, vector<1x3x32xf32>
    %116 = vector.shape_cast %115 : vector<1x3x32xf32> to vector<3x32xf32>
    %cst_127 = arith.constant dense<0.000000e+00> : vector<128x32xf32>
    %117 = tpu.matmul %114, %116, %cst_127 {dimension_numbers = #tpu.dot_dimension_numbers<[1], [0], [0], [1], [0, 0, 1, 1], [], []>} : vector<128x3xf32>, vector<3x32xf32>, vector<128x32xf32> -> vector<128x32xf32>
    %118 = arith.addf %111, %117 : vector<128x32xf32>
    %c0_128 = arith.constant 0 : index
    %c9_129 = arith.constant 9 : index
    %c2_130 = arith.constant 2 : index
    %c0_131 = arith.constant 0 : index
    %119 = vector.load %arg10[%c0_128, %c9_129, %c2_130, %c0_131] : memref<2x18x18x3xf32, #tpu.memory_space<vmem>>, vector<1x8x16x3xf32>
    %120 = vector.shape_cast %119 : vector<1x8x16x3xf32> to vector<8x16x3xf32>
    %121 = vector.shape_cast %120 : vector<8x16x3xf32> to vector<128x3xf32>
    %c5_132 = arith.constant 5 : index
    %c0_133 = arith.constant 0 : index
    %c0_134 = arith.constant 0 : index
    %122 = vector.load %arg3[%c5_132, %c0_133, %c0_134] : memref<9x3x32xf32, #tpu.memory_space<vmem>>, vector<1x3x32xf32>
    %123 = vector.shape_cast %122 : vector<1x3x32xf32> to vector<3x32xf32>
    %cst_135 = arith.constant dense<0.000000e+00> : vector<128x32xf32>
    %124 = tpu.matmul %121, %123, %cst_135 {dimension_numbers = #tpu.dot_dimension_numbers<[1], [0], [0], [1], [0, 0, 1, 1], [], []>} : vector<128x3xf32>, vector<3x32xf32>, vector<128x32xf32> -> vector<128x32xf32>
    %125 = arith.addf %118, %124 : vector<128x32xf32>
    %c0_136 = arith.constant 0 : index
    %c10 = arith.constant 10 : index
    %c0_137 = arith.constant 0 : index
    %c0_138 = arith.constant 0 : index
    %126 = vector.load %arg10[%c0_136, %c10, %c0_137, %c0_138] : memref<2x18x18x3xf32, #tpu.memory_space<vmem>>, vector<1x8x16x3xf32>
    %127 = vector.shape_cast %126 : vector<1x8x16x3xf32> to vector<8x16x3xf32>
    %128 = vector.shape_cast %127 : vector<8x16x3xf32> to vector<128x3xf32>
    %c6_139 = arith.constant 6 : index
    %c0_140 = arith.constant 0 : index
    %c0_141 = arith.constant 0 : index
    %129 = vector.load %arg3[%c6_139, %c0_140, %c0_141] : memref<9x3x32xf32, #tpu.memory_space<vmem>>, vector<1x3x32xf32>
    %130 = vector.shape_cast %129 : vector<1x3x32xf32> to vector<3x32xf32>
    %cst_142 = arith.constant dense<0.000000e+00> : vector<128x32xf32>
    %131 = tpu.matmul %128, %130, %cst_142 {dimension_numbers = #tpu.dot_dimension_numbers<[1], [0], [0], [1], [0, 0, 1, 1], [], []>} : vector<128x3xf32>, vector<3x32xf32>, vector<128x32xf32> -> vector<128x32xf32>
    %132 = arith.addf %125, %131 : vector<128x32xf32>
    %c0_143 = arith.constant 0 : index
    %c10_144 = arith.constant 10 : index
    %c1_145 = arith.constant 1 : index
    %c0_146 = arith.constant 0 : index
    %133 = vector.load %arg10[%c0_143, %c10_144, %c1_145, %c0_146] : memref<2x18x18x3xf32, #tpu.memory_space<vmem>>, vector<1x8x16x3xf32>
    %134 = vector.shape_cast %133 : vector<1x8x16x3xf32> to vector<8x16x3xf32>
    %135 = vector.shape_cast %134 : vector<8x16x3xf32> to vector<128x3xf32>
    %c7_147 = arith.constant 7 : index
    %c0_148 = arith.constant 0 : index
    %c0_149 = arith.constant 0 : index
    %136 = vector.load %arg3[%c7_147, %c0_148, %c0_149] : memref<9x3x32xf32, #tpu.memory_space<vmem>>, vector<1x3x32xf32>
    %137 = vector.shape_cast %136 : vector<1x3x32xf32> to vector<3x32xf32>
    %cst_150 = arith.constant dense<0.000000e+00> : vector<128x32xf32>
    %138 = tpu.matmul %135, %137, %cst_150 {dimension_numbers = #tpu.dot_dimension_numbers<[1], [0], [0], [1], [0, 0, 1, 1], [], []>} : vector<128x3xf32>, vector<3x32xf32>, vector<128x32xf32> -> vector<128x32xf32>
    %139 = arith.addf %132, %138 : vector<128x32xf32>
    %c0_151 = arith.constant 0 : index
    %c10_152 = arith.constant 10 : index
    %c2_153 = arith.constant 2 : index
    %c0_154 = arith.constant 0 : index
    %140 = vector.load %arg10[%c0_151, %c10_152, %c2_153, %c0_154] : memref<2x18x18x3xf32, #tpu.memory_space<vmem>>, vector<1x8x16x3xf32>
    %141 = vector.shape_cast %140 : vector<1x8x16x3xf32> to vector<8x16x3xf32>
    %142 = vector.shape_cast %141 : vector<8x16x3xf32> to vector<128x3xf32>
    %c8_155 = arith.constant 8 : index
    %c0_156 = arith.constant 0 : index
    %c0_157 = arith.constant 0 : index
    %143 = vector.load %arg3[%c8_155, %c0_156, %c0_157] : memref<9x3x32xf32, #tpu.memory_space<vmem>>, vector<1x3x32xf32>
    %144 = vector.shape_cast %143 : vector<1x3x32xf32> to vector<3x32xf32>
    %cst_158 = arith.constant dense<0.000000e+00> : vector<128x32xf32>
    %145 = tpu.matmul %142, %144, %cst_158 {dimension_numbers = #tpu.dot_dimension_numbers<[1], [0], [0], [1], [0, 0, 1, 1], [], []>} : vector<128x3xf32>, vector<3x32xf32>, vector<128x32xf32> -> vector<128x32xf32>
    %146 = arith.addf %139, %145 : vector<128x32xf32>
    %c0_159 = arith.constant 0 : index
    %c0_160 = arith.constant 0 : index
    %147 = vector.load %arg4[%c0_159, %c0_160] : memref<1x32xf32, #tpu.memory_space<vmem>>, vector<1x32xf32>
    %148 = vector.broadcast %147 : vector<1x32xf32> to vector<128x32xf32>
    %149 = arith.addf %146, %148 : vector<128x32xf32>
    %cst_161 = arith.constant 0.000000e+00 : f32
    %150 = vector.broadcast %cst_161 : f32 to vector<128x32xf32>
    %151 = arith.maximumf %149, %150 : vector<128x32xf32>
    %c0_162 = arith.constant 0 : index
    %c0_163 = arith.constant 0 : index
    %152 = vector.load %arg5[%c0_162, %c0_163] : memref<32x32xf32, #tpu.memory_space<vmem>>, vector<32x32xf32>
    %cst_164 = arith.constant dense<0.000000e+00> : vector<128x32xf32>
    %153 = tpu.matmul %151, %152, %cst_164 {dimension_numbers = #tpu.dot_dimension_numbers<[1], [0], [0], [1], [0, 0, 1, 1], [], []>} : vector<128x32xf32>, vector<32x32xf32>, vector<128x32xf32> -> vector<128x32xf32>
    %c0_165 = arith.constant 0 : index
    %c0_166 = arith.constant 0 : index
    %154 = vector.load %arg6[%c0_165, %c0_166] : memref<1x32xf32, #tpu.memory_space<vmem>>, vector<1x32xf32>
    %155 = vector.broadcast %154 : vector<1x32xf32> to vector<128x32xf32>
    %156 = arith.addf %153, %155 : vector<128x32xf32>
    %cst_167 = arith.constant 0.000000e+00 : f32
    %157 = vector.broadcast %cst_167 : f32 to vector<128x32xf32>
    %158 = arith.maximumf %156, %157 : vector<128x32xf32>
    %c0_168 = arith.constant 0 : index
    %c128 = arith.constant 128 : index
    %c0_169 = arith.constant 0 : index
    %159 = vector.load %arg11[%c0_168, %c128, %c0_169] : memref<2x256x32xf32, #tpu.memory_space<vmem>>, vector<1x128x32xf32>
    %160 = vector.shape_cast %159 : vector<1x128x32xf32> to vector<128x32xf32>
    %161 = vector.shape_cast %158 : vector<128x32xf32> to vector<1x128x32xf32>
    tpu.vector_store %arg11[%c0_168, %c128, %c0_169], %161 {strides = array<i32>} : memref<2x256x32xf32, #tpu.memory_space<vmem>>, vector<1x128x32xf32>,
    %cst_170 = arith.constant 0.000000e+00 : f32
    %162 = vector.broadcast %cst_170 : f32 to vector<128x32xf32>
    %c1_171 = arith.constant 1 : index
    %c0_172 = arith.constant 0 : index
    %c0_173 = arith.constant 0 : index
    %c0_174 = arith.constant 0 : index
    %163 = vector.load %arg10[%c1_171, %c0_172, %c0_173, %c0_174] : memref<2x18x18x3xf32, #tpu.memory_space<vmem>>, vector<1x8x16x3xf32>
    %164 = vector.shape_cast %163 : vector<1x8x16x3xf32> to vector<8x16x3xf32>
    %165 = vector.shape_cast %164 : vector<8x16x3xf32> to vector<128x3xf32>
    %c0_175 = arith.constant 0 : index
    %c0_176 = arith.constant 0 : index
    %c0_177 = arith.constant 0 : index
    %166 = vector.load %arg3[%c0_175, %c0_176, %c0_177] : memref<9x3x32xf32, #tpu.memory_space<vmem>>, vector<1x3x32xf32>
    %167 = vector.shape_cast %166 : vector<1x3x32xf32> to vector<3x32xf32>
    %cst_178 = arith.constant dense<0.000000e+00> : vector<128x32xf32>
    %168 = tpu.matmul %165, %167, %cst_178 {dimension_numbers = #tpu.dot_dimension_numbers<[1], [0], [0], [1], [0, 0, 1, 1], [], []>} : vector<128x3xf32>, vector<3x32xf32>, vector<128x32xf32> -> vector<128x32xf32>
    %169 = arith.addf %162, %168 : vector<128x32xf32>
    %c1_179 = arith.constant 1 : index
    %c0_180 = arith.constant 0 : index
    %c1_181 = arith.constant 1 : index
    %c0_182 = arith.constant 0 : index
    %170 = vector.load %arg10[%c1_179, %c0_180, %c1_181, %c0_182] : memref<2x18x18x3xf32, #tpu.memory_space<vmem>>, vector<1x8x16x3xf32>
    %171 = vector.shape_cast %170 : vector<1x8x16x3xf32> to vector<8x16x3xf32>
    %172 = vector.shape_cast %171 : vector<8x16x3xf32> to vector<128x3xf32>
    %c1_183 = arith.constant 1 : index
    %c0_184 = arith.constant 0 : index
    %c0_185 = arith.constant 0 : index
    %173 = vector.load %arg3[%c1_183, %c0_184, %c0_185] : memref<9x3x32xf32, #tpu.memory_space<vmem>>, vector<1x3x32xf32>
    %174 = vector.shape_cast %173 : vector<1x3x32xf32> to vector<3x32xf32>
    %cst_186 = arith.constant dense<0.000000e+00> : vector<128x32xf32>
    %175 = tpu.matmul %172, %174, %cst_186 {dimension_numbers = #tpu.dot_dimension_numbers<[1], [0], [0], [1], [0, 0, 1, 1], [], []>} : vector<128x3xf32>, vector<3x32xf32>, vector<128x32xf32> -> vector<128x32xf32>
    %176 = arith.addf %169, %175 : vector<128x32xf32>
    %c1_187 = arith.constant 1 : index
    %c0_188 = arith.constant 0 : index
    %c2_189 = arith.constant 2 : index
    %c0_190 = arith.constant 0 : index
    %177 = vector.load %arg10[%c1_187, %c0_188, %c2_189, %c0_190] : memref<2x18x18x3xf32, #tpu.memory_space<vmem>>, vector<1x8x16x3xf32>
    %178 = vector.shape_cast %177 : vector<1x8x16x3xf32> to vector<8x16x3xf32>
    %179 = vector.shape_cast %178 : vector<8x16x3xf32> to vector<128x3xf32>
    %c2_191 = arith.constant 2 : index
    %c0_192 = arith.constant 0 : index
    %c0_193 = arith.constant 0 : index
    %180 = vector.load %arg3[%c2_191, %c0_192, %c0_193] : memref<9x3x32xf32, #tpu.memory_space<vmem>>, vector<1x3x32xf32>
    %181 = vector.shape_cast %180 : vector<1x3x32xf32> to vector<3x32xf32>
    %cst_194 = arith.constant dense<0.000000e+00> : vector<128x32xf32>
    %182 = tpu.matmul %179, %181, %cst_194 {dimension_numbers = #tpu.dot_dimension_numbers<[1], [0], [0], [1], [0, 0, 1, 1], [], []>} : vector<128x3xf32>, vector<3x32xf32>, vector<128x32xf32> -> vector<128x32xf32>
    %183 = arith.addf %176, %182 : vector<128x32xf32>
    %c1_195 = arith.constant 1 : index
    %c1_196 = arith.constant 1 : index
    %c0_197 = arith.constant 0 : index
    %c0_198 = arith.constant 0 : index
    %184 = vector.load %arg10[%c1_195, %c1_196, %c0_197, %c0_198] : memref<2x18x18x3xf32, #tpu.memory_space<vmem>>, vector<1x8x16x3xf32>
    %185 = vector.shape_cast %184 : vector<1x8x16x3xf32> to vector<8x16x3xf32>
    %186 = vector.shape_cast %185 : vector<8x16x3xf32> to vector<128x3xf32>
    %c3_199 = arith.constant 3 : index
    %c0_200 = arith.constant 0 : index
    %c0_201 = arith.constant 0 : index
    %187 = vector.load %arg3[%c3_199, %c0_200, %c0_201] : memref<9x3x32xf32, #tpu.memory_space<vmem>>, vector<1x3x32xf32>
    %188 = vector.shape_cast %187 : vector<1x3x32xf32> to vector<3x32xf32>
    %cst_202 = arith.constant dense<0.000000e+00> : vector<128x32xf32>
    %189 = tpu.matmul %186, %188, %cst_202 {dimension_numbers = #tpu.dot_dimension_numbers<[1], [0], [0], [1], [0, 0, 1, 1], [], []>} : vector<128x3xf32>, vector<3x32xf32>, vector<128x32xf32> -> vector<128x32xf32>
    %190 = arith.addf %183, %189 : vector<128x32xf32>
    %c1_203 = arith.constant 1 : index
    %c1_204 = arith.constant 1 : index
    %c1_205 = arith.constant 1 : index
    %c0_206 = arith.constant 0 : index
    %191 = vector.load %arg10[%c1_203, %c1_204, %c1_205, %c0_206] : memref<2x18x18x3xf32, #tpu.memory_space<vmem>>, vector<1x8x16x3xf32>
    %192 = vector.shape_cast %191 : vector<1x8x16x3xf32> to vector<8x16x3xf32>
    %193 = vector.shape_cast %192 : vector<8x16x3xf32> to vector<128x3xf32>
    %c4_207 = arith.constant 4 : index
    %c0_208 = arith.constant 0 : index
    %c0_209 = arith.constant 0 : index
    %194 = vector.load %arg3[%c4_207, %c0_208, %c0_209] : memref<9x3x32xf32, #tpu.memory_space<vmem>>, vector<1x3x32xf32>
    %195 = vector.shape_cast %194 : vector<1x3x32xf32> to vector<3x32xf32>
    %cst_210 = arith.constant dense<0.000000e+00> : vector<128x32xf32>
    %196 = tpu.matmul %193, %195, %cst_210 {dimension_numbers = #tpu.dot_dimension_numbers<[1], [0], [0], [1], [0, 0, 1, 1], [], []>} : vector<128x3xf32>, vector<3x32xf32>, vector<128x32xf32> -> vector<128x32xf32>
    %197 = arith.addf %190, %196 : vector<128x32xf32>
    %c1_211 = arith.constant 1 : index
    %c1_212 = arith.constant 1 : index
    %c2_213 = arith.constant 2 : index
    %c0_214 = arith.constant 0 : index
    %198 = vector.load %arg10[%c1_211, %c1_212, %c2_213, %c0_214] : memref<2x18x18x3xf32, #tpu.memory_space<vmem>>, vector<1x8x16x3xf32>
    %199 = vector.shape_cast %198 : vector<1x8x16x3xf32> to vector<8x16x3xf32>
    %200 = vector.shape_cast %199 : vector<8x16x3xf32> to vector<128x3xf32>
    %c5_215 = arith.constant 5 : index
    %c0_216 = arith.constant 0 : index
    %c0_217 = arith.constant 0 : index
    %201 = vector.load %arg3[%c5_215, %c0_216, %c0_217] : memref<9x3x32xf32, #tpu.memory_space<vmem>>, vector<1x3x32xf32>
    %202 = vector.shape_cast %201 : vector<1x3x32xf32> to vector<3x32xf32>
    %cst_218 = arith.constant dense<0.000000e+00> : vector<128x32xf32>
    %203 = tpu.matmul %200, %202, %cst_218 {dimension_numbers = #tpu.dot_dimension_numbers<[1], [0], [0], [1], [0, 0, 1, 1], [], []>} : vector<128x3xf32>, vector<3x32xf32>, vector<128x32xf32> -> vector<128x32xf32>
    %204 = arith.addf %197, %203 : vector<128x32xf32>
    %c1_219 = arith.constant 1 : index
    %c2_220 = arith.constant 2 : index
    %c0_221 = arith.constant 0 : index
    %c0_222 = arith.constant 0 : index
    %205 = vector.load %arg10[%c1_219, %c2_220, %c0_221, %c0_222] : memref<2x18x18x3xf32, #tpu.memory_space<vmem>>, vector<1x8x16x3xf32>
    %206 = vector.shape_cast %205 : vector<1x8x16x3xf32> to vector<8x16x3xf32>
    %207 = vector.shape_cast %206 : vector<8x16x3xf32> to vector<128x3xf32>
    %c6_223 = arith.constant 6 : index
    %c0_224 = arith.constant 0 : index
    %c0_225 = arith.constant 0 : index
    %208 = vector.load %arg3[%c6_223, %c0_224, %c0_225] : memref<9x3x32xf32, #tpu.memory_space<vmem>>, vector<1x3x32xf32>
    %209 = vector.shape_cast %208 : vector<1x3x32xf32> to vector<3x32xf32>
    %cst_226 = arith.constant dense<0.000000e+00> : vector<128x32xf32>
    %210 = tpu.matmul %207, %209, %cst_226 {dimension_numbers = #tpu.dot_dimension_numbers<[1], [0], [0], [1], [0, 0, 1, 1], [], []>} : vector<128x3xf32>, vector<3x32xf32>, vector<128x32xf32> -> vector<128x32xf32>
    %211 = arith.addf %204, %210 : vector<128x32xf32>
    %c1_227 = arith.constant 1 : index
    %c2_228 = arith.constant 2 : index
    %c1_229 = arith.constant 1 : index
    %c0_230 = arith.constant 0 : index
    %212 = vector.load %arg10[%c1_227, %c2_228, %c1_229, %c0_230] : memref<2x18x18x3xf32, #tpu.memory_space<vmem>>, vector<1x8x16x3xf32>
    %213 = vector.shape_cast %212 : vector<1x8x16x3xf32> to vector<8x16x3xf32>
    %214 = vector.shape_cast %213 : vector<8x16x3xf32> to vector<128x3xf32>
    %c7_231 = arith.constant 7 : index
    %c0_232 = arith.constant 0 : index
    %c0_233 = arith.constant 0 : index
    %215 = vector.load %arg3[%c7_231, %c0_232, %c0_233] : memref<9x3x32xf32, #tpu.memory_space<vmem>>, vector<1x3x32xf32>
    %216 = vector.shape_cast %215 : vector<1x3x32xf32> to vector<3x32xf32>
    %cst_234 = arith.constant dense<0.000000e+00> : vector<128x32xf32>
    %217 = tpu.matmul %214, %216, %cst_234 {dimension_numbers = #tpu.dot_dimension_numbers<[1], [0], [0], [1], [0, 0, 1, 1], [], []>} : vector<128x3xf32>, vector<3x32xf32>, vector<128x32xf32> -> vector<128x32xf32>
    %218 = arith.addf %211, %217 : vector<128x32xf32>
    %c1_235 = arith.constant 1 : index
    %c2_236 = arith.constant 2 : index
    %c2_237 = arith.constant 2 : index
    %c0_238 = arith.constant 0 : index
    %219 = vector.load %arg10[%c1_235, %c2_236, %c2_237, %c0_238] : memref<2x18x18x3xf32, #tpu.memory_space<vmem>>, vector<1x8x16x3xf32>
    %220 = vector.shape_cast %219 : vector<1x8x16x3xf32> to vector<8x16x3xf32>
    %221 = vector.shape_cast %220 : vector<8x16x3xf32> to vector<128x3xf32>
    %c8_239 = arith.constant 8 : index
    %c0_240 = arith.constant 0 : index
    %c0_241 = arith.constant 0 : index
    %222 = vector.load %arg3[%c8_239, %c0_240, %c0_241] : memref<9x3x32xf32, #tpu.memory_space<vmem>>, vector<1x3x32xf32>
    %223 = vector.shape_cast %222 : vector<1x3x32xf32> to vector<3x32xf32>
    %cst_242 = arith.constant dense<0.000000e+00> : vector<128x32xf32>
    %224 = tpu.matmul %221, %223, %cst_242 {dimension_numbers = #tpu.dot_dimension_numbers<[1], [0], [0], [1], [0, 0, 1, 1], [], []>} : vector<128x3xf32>, vector<3x32xf32>, vector<128x32xf32> -> vector<128x32xf32>
    %225 = arith.addf %218, %224 : vector<128x32xf32>
    %c0_243 = arith.constant 0 : index
    %c0_244 = arith.constant 0 : index
    %226 = vector.load %arg4[%c0_243, %c0_244] : memref<1x32xf32, #tpu.memory_space<vmem>>, vector<1x32xf32>
    %227 = vector.broadcast %226 : vector<1x32xf32> to vector<128x32xf32>
    %228 = arith.addf %225, %227 : vector<128x32xf32>
    %cst_245 = arith.constant 0.000000e+00 : f32
    %229 = vector.broadcast %cst_245 : f32 to vector<128x32xf32>
    %230 = arith.maximumf %228, %229 : vector<128x32xf32>
    %c0_246 = arith.constant 0 : index
    %c0_247 = arith.constant 0 : index
    %231 = vector.load %arg5[%c0_246, %c0_247] : memref<32x32xf32, #tpu.memory_space<vmem>>, vector<32x32xf32>
    %cst_248 = arith.constant dense<0.000000e+00> : vector<128x32xf32>
    %232 = tpu.matmul %230, %231, %cst_248 {dimension_numbers = #tpu.dot_dimension_numbers<[1], [0], [0], [1], [0, 0, 1, 1], [], []>} : vector<128x32xf32>, vector<32x32xf32>, vector<128x32xf32> -> vector<128x32xf32>
    %c0_249 = arith.constant 0 : index
    %c0_250 = arith.constant 0 : index
    %233 = vector.load %arg6[%c0_249, %c0_250] : memref<1x32xf32, #tpu.memory_space<vmem>>, vector<1x32xf32>
    %234 = vector.broadcast %233 : vector<1x32xf32> to vector<128x32xf32>
    %235 = arith.addf %232, %234 : vector<128x32xf32>
    %cst_251 = arith.constant 0.000000e+00 : f32
    %236 = vector.broadcast %cst_251 : f32 to vector<128x32xf32>
    %237 = arith.maximumf %235, %236 : vector<128x32xf32>
    %c1_252 = arith.constant 1 : index
    %c0_253 = arith.constant 0 : index
    %c0_254 = arith.constant 0 : index
    %238 = vector.load %arg11[%c1_252, %c0_253, %c0_254] : memref<2x256x32xf32, #tpu.memory_space<vmem>>, vector<1x128x32xf32>
    %239 = vector.shape_cast %238 : vector<1x128x32xf32> to vector<128x32xf32>
    %240 = vector.shape_cast %237 : vector<128x32xf32> to vector<1x128x32xf32>
    tpu.vector_store %arg11[%c1_252, %c0_253, %c0_254], %240 {strides = array<i32>} : memref<2x256x32xf32, #tpu.memory_space<vmem>>, vector<1x128x32xf32>,
    %cst_255 = arith.constant 0.000000e+00 : f32
    %241 = vector.broadcast %cst_255 : f32 to vector<128x32xf32>
    %c1_256 = arith.constant 1 : index
    %c8_257 = arith.constant 8 : index
    %c0_258 = arith.constant 0 : index
    %c0_259 = arith.constant 0 : index
    %242 = vector.load %arg10[%c1_256, %c8_257, %c0_258, %c0_259] : memref<2x18x18x3xf32, #tpu.memory_space<vmem>>, vector<1x8x16x3xf32>
    %243 = vector.shape_cast %242 : vector<1x8x16x3xf32> to vector<8x16x3xf32>
    %244 = vector.shape_cast %243 : vector<8x16x3xf32> to vector<128x3xf32>
    %c0_260 = arith.constant 0 : index
    %c0_261 = arith.constant 0 : index
    %c0_262 = arith.constant 0 : index
    %245 = vector.load %arg3[%c0_260, %c0_261, %c0_262] : memref<9x3x32xf32, #tpu.memory_space<vmem>>, vector<1x3x32xf32>
    %246 = vector.shape_cast %245 : vector<1x3x32xf32> to vector<3x32xf32>
    %cst_263 = arith.constant dense<0.000000e+00> : vector<128x32xf32>
    %247 = tpu.matmul %244, %246, %cst_263 {dimension_numbers = #tpu.dot_dimension_numbers<[1], [0], [0], [1], [0, 0, 1, 1], [], []>} : vector<128x3xf32>, vector<3x32xf32>, vector<128x32xf32> -> vector<128x32xf32>
    %248 = arith.addf %241, %247 : vector<128x32xf32>
    %c1_264 = arith.constant 1 : index
    %c8_265 = arith.constant 8 : index
    %c1_266 = arith.constant 1 : index
    %c0_267 = arith.constant 0 : index
    %249 = vector.load %arg10[%c1_264, %c8_265, %c1_266, %c0_267] : memref<2x18x18x3xf32, #tpu.memory_space<vmem>>, vector<1x8x16x3xf32>
    %250 = vector.shape_cast %249 : vector<1x8x16x3xf32> to vector<8x16x3xf32>
    %251 = vector.shape_cast %250 : vector<8x16x3xf32> to vector<128x3xf32>
    %c1_268 = arith.constant 1 : index
    %c0_269 = arith.constant 0 : index
    %c0_270 = arith.constant 0 : index
    %252 = vector.load %arg3[%c1_268, %c0_269, %c0_270] : memref<9x3x32xf32, #tpu.memory_space<vmem>>, vector<1x3x32xf32>
    %253 = vector.shape_cast %252 : vector<1x3x32xf32> to vector<3x32xf32>
    %cst_271 = arith.constant dense<0.000000e+00> : vector<128x32xf32>
    %254 = tpu.matmul %251, %253, %cst_271 {dimension_numbers = #tpu.dot_dimension_numbers<[1], [0], [0], [1], [0, 0, 1, 1], [], []>} : vector<128x3xf32>, vector<3x32xf32>, vector<128x32xf32> -> vector<128x32xf32>
    %255 = arith.addf %248, %254 : vector<128x32xf32>
    %c1_272 = arith.constant 1 : index
    %c8_273 = arith.constant 8 : index
    %c2_274 = arith.constant 2 : index
    %c0_275 = arith.constant 0 : index
    %256 = vector.load %arg10[%c1_272, %c8_273, %c2_274, %c0_275] : memref<2x18x18x3xf32, #tpu.memory_space<vmem>>, vector<1x8x16x3xf32>
    %257 = vector.shape_cast %256 : vector<1x8x16x3xf32> to vector<8x16x3xf32>
    %258 = vector.shape_cast %257 : vector<8x16x3xf32> to vector<128x3xf32>
    %c2_276 = arith.constant 2 : index
    %c0_277 = arith.constant 0 : index
    %c0_278 = arith.constant 0 : index
    %259 = vector.load %arg3[%c2_276, %c0_277, %c0_278] : memref<9x3x32xf32, #tpu.memory_space<vmem>>, vector<1x3x32xf32>
    %260 = vector.shape_cast %259 : vector<1x3x32xf32> to vector<3x32xf32>
    %cst_279 = arith.constant dense<0.000000e+00> : vector<128x32xf32>
    %261 = tpu.matmul %258, %260, %cst_279 {dimension_numbers = #tpu.dot_dimension_numbers<[1], [0], [0], [1], [0, 0, 1, 1], [], []>} : vector<128x3xf32>, vector<3x32xf32>, vector<128x32xf32> -> vector<128x32xf32>
    %262 = arith.addf %255, %261 : vector<128x32xf32>
    %c1_280 = arith.constant 1 : index
    %c9_281 = arith.constant 9 : index
    %c0_282 = arith.constant 0 : index
    %c0_283 = arith.constant 0 : index
    %263 = vector.load %arg10[%c1_280, %c9_281, %c0_282, %c0_283] : memref<2x18x18x3xf32, #tpu.memory_space<vmem>>, vector<1x8x16x3xf32>
    %264 = vector.shape_cast %263 : vector<1x8x16x3xf32> to vector<8x16x3xf32>
    %265 = vector.shape_cast %264 : vector<8x16x3xf32> to vector<128x3xf32>
    %c3_284 = arith.constant 3 : index
    %c0_285 = arith.constant 0 : index
    %c0_286 = arith.constant 0 : index
    %266 = vector.load %arg3[%c3_284, %c0_285, %c0_286] : memref<9x3x32xf32, #tpu.memory_space<vmem>>, vector<1x3x32xf32>
    %267 = vector.shape_cast %266 : vector<1x3x32xf32> to vector<3x32xf32>
    %cst_287 = arith.constant dense<0.000000e+00> : vector<128x32xf32>
    %268 = tpu.matmul %265, %267, %cst_287 {dimension_numbers = #tpu.dot_dimension_numbers<[1], [0], [0], [1], [0, 0, 1, 1], [], []>} : vector<128x3xf32>, vector<3x32xf32>, vector<128x32xf32> -> vector<128x32xf32>
    %269 = arith.addf %262, %268 : vector<128x32xf32>
    %c1_288 = arith.constant 1 : index
    %c9_289 = arith.constant 9 : index
    %c1_290 = arith.constant 1 : index
    %c0_291 = arith.constant 0 : index
    %270 = vector.load %arg10[%c1_288, %c9_289, %c1_290, %c0_291] : memref<2x18x18x3xf32, #tpu.memory_space<vmem>>, vector<1x8x16x3xf32>
    %271 = vector.shape_cast %270 : vector<1x8x16x3xf32> to vector<8x16x3xf32>
    %272 = vector.shape_cast %271 : vector<8x16x3xf32> to vector<128x3xf32>
    %c4_292 = arith.constant 4 : index
    %c0_293 = arith.constant 0 : index
    %c0_294 = arith.constant 0 : index
    %273 = vector.load %arg3[%c4_292, %c0_293, %c0_294] : memref<9x3x32xf32, #tpu.memory_space<vmem>>, vector<1x3x32xf32>
    %274 = vector.shape_cast %273 : vector<1x3x32xf32> to vector<3x32xf32>
    %cst_295 = arith.constant dense<0.000000e+00> : vector<128x32xf32>
    %275 = tpu.matmul %272, %274, %cst_295 {dimension_numbers = #tpu.dot_dimension_numbers<[1], [0], [0], [1], [0, 0, 1, 1], [], []>} : vector<128x3xf32>, vector<3x32xf32>, vector<128x32xf32> -> vector<128x32xf32>
    %276 = arith.addf %269, %275 : vector<128x32xf32>
    %c1_296 = arith.constant 1 : index
    %c9_297 = arith.constant 9 : index
    %c2_298 = arith.constant 2 : index
    %c0_299 = arith.constant 0 : index
    %277 = vector.load %arg10[%c1_296, %c9_297, %c2_298, %c0_299] : memref<2x18x18x3xf32, #tpu.memory_space<vmem>>, vector<1x8x16x3xf32>
    %278 = vector.shape_cast %277 : vector<1x8x16x3xf32> to vector<8x16x3xf32>
    %279 = vector.shape_cast %278 : vector<8x16x3xf32> to vector<128x3xf32>
    %c5_300 = arith.constant 5 : index
    %c0_301 = arith.constant 0 : index
    %c0_302 = arith.constant 0 : index
    %280 = vector.load %arg3[%c5_300, %c0_301, %c0_302] : memref<9x3x32xf32, #tpu.memory_space<vmem>>, vector<1x3x32xf32>
    %281 = vector.shape_cast %280 : vector<1x3x32xf32> to vector<3x32xf32>
    %cst_303 = arith.constant dense<0.000000e+00> : vector<128x32xf32>
    %282 = tpu.matmul %279, %281, %cst_303 {dimension_numbers = #tpu.dot_dimension_numbers<[1], [0], [0], [1], [0, 0, 1, 1], [], []>} : vector<128x3xf32>, vector<3x32xf32>, vector<128x32xf32> -> vector<128x32xf32>
    %283 = arith.addf %276, %282 : vector<128x32xf32>
    %c1_304 = arith.constant 1 : index
    %c10_305 = arith.constant 10 : index
    %c0_306 = arith.constant 0 : index
    %c0_307 = arith.constant 0 : index
    %284 = vector.load %arg10[%c1_304, %c10_305, %c0_306, %c0_307] : memref<2x18x18x3xf32, #tpu.memory_space<vmem>>, vector<1x8x16x3xf32>
    %285 = vector.shape_cast %284 : vector<1x8x16x3xf32> to vector<8x16x3xf32>
    %286 = vector.shape_cast %285 : vector<8x16x3xf32> to vector<128x3xf32>
    %c6_308 = arith.constant 6 : index
    %c0_309 = arith.constant 0 : index
    %c0_310 = arith.constant 0 : index
    %287 = vector.load %arg3[%c6_308, %c0_309, %c0_310] : memref<9x3x32xf32, #tpu.memory_space<vmem>>, vector<1x3x32xf32>
    %288 = vector.shape_cast %287 : vector<1x3x32xf32> to vector<3x32xf32>
    %cst_311 = arith.constant dense<0.000000e+00> : vector<128x32xf32>
    %289 = tpu.matmul %286, %288, %cst_311 {dimension_numbers = #tpu.dot_dimension_numbers<[1], [0], [0], [1], [0, 0, 1, 1], [], []>} : vector<128x3xf32>, vector<3x32xf32>, vector<128x32xf32> -> vector<128x32xf32>
    %290 = arith.addf %283, %289 : vector<128x32xf32>
    %c1_312 = arith.constant 1 : index
    %c10_313 = arith.constant 10 : index
    %c1_314 = arith.constant 1 : index
    %c0_315 = arith.constant 0 : index
    %291 = vector.load %arg10[%c1_312, %c10_313, %c1_314, %c0_315] : memref<2x18x18x3xf32, #tpu.memory_space<vmem>>, vector<1x8x16x3xf32>
    %292 = vector.shape_cast %291 : vector<1x8x16x3xf32> to vector<8x16x3xf32>
    %293 = vector.shape_cast %292 : vector<8x16x3xf32> to vector<128x3xf32>
    %c7_316 = arith.constant 7 : index
    %c0_317 = arith.constant 0 : index
    %c0_318 = arith.constant 0 : index
    %294 = vector.load %arg3[%c7_316, %c0_317, %c0_318] : memref<9x3x32xf32, #tpu.memory_space<vmem>>, vector<1x3x32xf32>
    %295 = vector.shape_cast %294 : vector<1x3x32xf32> to vector<3x32xf32>
    %cst_319 = arith.constant dense<0.000000e+00> : vector<128x32xf32>
    %296 = tpu.matmul %293, %295, %cst_319 {dimension_numbers = #tpu.dot_dimension_numbers<[1], [0], [0], [1], [0, 0, 1, 1], [], []>} : vector<128x3xf32>, vector<3x32xf32>, vector<128x32xf32> -> vector<128x32xf32>
    %297 = arith.addf %290, %296 : vector<128x32xf32>
    %c1_320 = arith.constant 1 : index
    %c10_321 = arith.constant 10 : index
    %c2_322 = arith.constant 2 : index
    %c0_323 = arith.constant 0 : index
    %298 = vector.load %arg10[%c1_320, %c10_321, %c2_322, %c0_323] : memref<2x18x18x3xf32, #tpu.memory_space<vmem>>, vector<1x8x16x3xf32>
    %299 = vector.shape_cast %298 : vector<1x8x16x3xf32> to vector<8x16x3xf32>
    %300 = vector.shape_cast %299 : vector<8x16x3xf32> to vector<128x3xf32>
    %c8_324 = arith.constant 8 : index
    %c0_325 = arith.constant 0 : index
    %c0_326 = arith.constant 0 : index
    %301 = vector.load %arg3[%c8_324, %c0_325, %c0_326] : memref<9x3x32xf32, #tpu.memory_space<vmem>>, vector<1x3x32xf32>
    %302 = vector.shape_cast %301 : vector<1x3x32xf32> to vector<3x32xf32>
    %cst_327 = arith.constant dense<0.000000e+00> : vector<128x32xf32>
    %303 = tpu.matmul %300, %302, %cst_327 {dimension_numbers = #tpu.dot_dimension_numbers<[1], [0], [0], [1], [0, 0, 1, 1], [], []>} : vector<128x3xf32>, vector<3x32xf32>, vector<128x32xf32> -> vector<128x32xf32>
    %304 = arith.addf %297, %303 : vector<128x32xf32>
    %c0_328 = arith.constant 0 : index
    %c0_329 = arith.constant 0 : index
    %305 = vector.load %arg4[%c0_328, %c0_329] : memref<1x32xf32, #tpu.memory_space<vmem>>, vector<1x32xf32>
    %306 = vector.broadcast %305 : vector<1x32xf32> to vector<128x32xf32>
    %307 = arith.addf %304, %306 : vector<128x32xf32>
    %cst_330 = arith.constant 0.000000e+00 : f32
    %308 = vector.broadcast %cst_330 : f32 to vector<128x32xf32>
    %309 = arith.maximumf %307, %308 : vector<128x32xf32>
    %c0_331 = arith.constant 0 : index
    %c0_332 = arith.constant 0 : index
    %310 = vector.load %arg5[%c0_331, %c0_332] : memref<32x32xf32, #tpu.memory_space<vmem>>, vector<32x32xf32>
    %cst_333 = arith.constant dense<0.000000e+00> : vector<128x32xf32>
    %311 = tpu.matmul %309, %310, %cst_333 {dimension_numbers = #tpu.dot_dimension_numbers<[1], [0], [0], [1], [0, 0, 1, 1], [], []>} : vector<128x32xf32>, vector<32x32xf32>, vector<128x32xf32> -> vector<128x32xf32>
    %c0_334 = arith.constant 0 : index
    %c0_335 = arith.constant 0 : index
    %312 = vector.load %arg6[%c0_334, %c0_335] : memref<1x32xf32, #tpu.memory_space<vmem>>, vector<1x32xf32>
    %313 = vector.broadcast %312 : vector<1x32xf32> to vector<128x32xf32>
    %314 = arith.addf %311, %313 : vector<128x32xf32>
    %cst_336 = arith.constant 0.000000e+00 : f32
    %315 = vector.broadcast %cst_336 : f32 to vector<128x32xf32>
    %316 = arith.maximumf %314, %315 : vector<128x32xf32>
    %c1_337 = arith.constant 1 : index
    %c128_338 = arith.constant 128 : index
    %c0_339 = arith.constant 0 : index
    %317 = vector.load %arg11[%c1_337, %c128_338, %c0_339] : memref<2x256x32xf32, #tpu.memory_space<vmem>>, vector<1x128x32xf32>
    %318 = vector.shape_cast %317 : vector<1x128x32xf32> to vector<128x32xf32>
    %319 = vector.shape_cast %316 : vector<128x32xf32> to vector<1x128x32xf32>
    tpu.vector_store %arg11[%c1_337, %c128_338, %c0_339], %319 {strides = array<i32>} : memref<2x256x32xf32, #tpu.memory_space<vmem>>, vector<1x128x32xf32>,
    %c0_340 = arith.constant 0 : index
    %c0_341 = arith.constant 0 : index
    %c0_342 = arith.constant 0 : index
    %c0_343 = arith.constant 0 : index
    %320 = vector.load %arg2[%c0_340, %c0_341, %c0_342, %c0_343] : memref<2x4x4x32xf32, #tpu.memory_space<vmem>>, vector<1x4x4x32xf32>
    %321 = vector.shape_cast %320 : vector<1x4x4x32xf32> to vector<4x4x32xf32>
    %cst_344 = arith.constant 0.000000e+00 : f32
    %322 = vector.broadcast %cst_344 : f32 to vector<64x32xf32>
    %c0_345 = arith.constant 0 : index
    %c0_346 = arith.constant 0 : index
    %c0_347 = arith.constant 0 : index
    %323 = vector.load %arg11[%c0_345, %c0_346, %c0_347] : memref<2x256x32xf32, #tpu.memory_space<vmem>>, vector<1x112x32xf32>
    %324 = vector.shape_cast %323 : vector<1x112x32xf32> to vector<112x32xf32>
    %325 = vector.extract_strided_slice %324 {offsets = [0, 0], sizes = [64, 32], strides = [1, 1]} : vector<112x32xf32> to vector<64x32xf32>
    %326 = vector.extract_strided_slice %321 {offsets = [0, 0, 0], sizes = [1, 1, 32], strides = [1, 1, 1]} : vector<4x4x32xf32> to vector<1x1x32xf32>
    %327 = vector.shape_cast %326 : vector<1x1x32xf32> to vector<32xf32>
    %328 = vector.shape_cast %327 : vector<32xf32> to vector<1x32xf32>
    %329 = vector.broadcast %328 : vector<1x32xf32> to vector<64x32xf32>
    %330 = arith.mulf %325, %329 : vector<64x32xf32>
    %331 = arith.addf %322, %330 : vector<64x32xf32>
    %332 = vector.extract_strided_slice %324 {offsets = [16, 0], sizes = [64, 32], strides = [1, 1]} : vector<112x32xf32> to vector<64x32xf32>
    %333 = vector.extract_strided_slice %321 {offsets = [1, 0, 0], sizes = [1, 1, 32], strides = [1, 1, 1]} : vector<4x4x32xf32> to vector<1x1x32xf32>
    %334 = vector.shape_cast %333 : vector<1x1x32xf32> to vector<32xf32>
    %335 = vector.shape_cast %334 : vector<32xf32> to vector<1x32xf32>
    %336 = vector.broadcast %335 : vector<1x32xf32> to vector<64x32xf32>
    %337 = arith.mulf %332, %336 : vector<64x32xf32>
    %338 = arith.addf %331, %337 : vector<64x32xf32>
    %339 = vector.extract_strided_slice %324 {offsets = [32, 0], sizes = [64, 32], strides = [1, 1]} : vector<112x32xf32> to vector<64x32xf32>
    %340 = vector.extract_strided_slice %321 {offsets = [2, 0, 0], sizes = [1, 1, 32], strides = [1, 1, 1]} : vector<4x4x32xf32> to vector<1x1x32xf32>
    %341 = vector.shape_cast %340 : vector<1x1x32xf32> to vector<32xf32>
    %342 = vector.shape_cast %341 : vector<32xf32> to vector<1x32xf32>
    %343 = vector.broadcast %342 : vector<1x32xf32> to vector<64x32xf32>
    %344 = arith.mulf %339, %343 : vector<64x32xf32>
    %345 = arith.addf %338, %344 : vector<64x32xf32>
    %346 = vector.extract_strided_slice %324 {offsets = [48, 0], sizes = [64, 32], strides = [1, 1]} : vector<112x32xf32> to vector<64x32xf32>
    %347 = vector.extract_strided_slice %321 {offsets = [3, 0, 0], sizes = [1, 1, 32], strides = [1, 1, 1]} : vector<4x4x32xf32> to vector<1x1x32xf32>
    %348 = vector.shape_cast %347 : vector<1x1x32xf32> to vector<32xf32>
    %349 = vector.shape_cast %348 : vector<32xf32> to vector<1x32xf32>
    %350 = vector.broadcast %349 : vector<1x32xf32> to vector<64x32xf32>
    %351 = arith.mulf %346, %350 : vector<64x32xf32>
    %352 = arith.addf %345, %351 : vector<64x32xf32>
    %c0_348 = arith.constant 0 : index
    %c0_349 = arith.constant 0 : index
    %c0_350 = arith.constant 0 : index
    %353 = vector.load %arg11[%c0_348, %c0_349, %c0_350] : memref<2x256x32xf32, #tpu.memory_space<vmem>>, vector<1x112x32xf32>
    %354 = vector.shape_cast %353 : vector<1x112x32xf32> to vector<112x32xf32>
    %c111_i32 = arith.constant 111 : i32
    %355 = tpu.dynamic_rotate %354 by %c111_i32 dim 0 : vector<112x32xf32>, i32 -> vector<112x32xf32>
    %356 = vector.extract_strided_slice %355 {offsets = [0, 0], sizes = [64, 32], strides = [1, 1]} : vector<112x32xf32> to vector<64x32xf32>
    %357 = vector.extract_strided_slice %321 {offsets = [0, 1, 0], sizes = [1, 1, 32], strides = [1, 1, 1]} : vector<4x4x32xf32> to vector<1x1x32xf32>
    %358 = vector.shape_cast %357 : vector<1x1x32xf32> to vector<32xf32>
    %359 = vector.shape_cast %358 : vector<32xf32> to vector<1x32xf32>
    %360 = vector.broadcast %359 : vector<1x32xf32> to vector<64x32xf32>
    %361 = arith.mulf %356, %360 : vector<64x32xf32>
    %362 = arith.addf %352, %361 : vector<64x32xf32>
    %363 = vector.extract_strided_slice %355 {offsets = [16, 0], sizes = [64, 32], strides = [1, 1]} : vector<112x32xf32> to vector<64x32xf32>
    %364 = vector.extract_strided_slice %321 {offsets = [1, 1, 0], sizes = [1, 1, 32], strides = [1, 1, 1]} : vector<4x4x32xf32> to vector<1x1x32xf32>
    %365 = vector.shape_cast %364 : vector<1x1x32xf32> to vector<32xf32>
    %366 = vector.shape_cast %365 : vector<32xf32> to vector<1x32xf32>
    %367 = vector.broadcast %366 : vector<1x32xf32> to vector<64x32xf32>
    %368 = arith.mulf %363, %367 : vector<64x32xf32>
    %369 = arith.addf %362, %368 : vector<64x32xf32>
    %370 = vector.extract_strided_slice %355 {offsets = [32, 0], sizes = [64, 32], strides = [1, 1]} : vector<112x32xf32> to vector<64x32xf32>
    %371 = vector.extract_strided_slice %321 {offsets = [2, 1, 0], sizes = [1, 1, 32], strides = [1, 1, 1]} : vector<4x4x32xf32> to vector<1x1x32xf32>
    %372 = vector.shape_cast %371 : vector<1x1x32xf32> to vector<32xf32>
    %373 = vector.shape_cast %372 : vector<32xf32> to vector<1x32xf32>
    %374 = vector.broadcast %373 : vector<1x32xf32> to vector<64x32xf32>
    %375 = arith.mulf %370, %374 : vector<64x32xf32>
    %376 = arith.addf %369, %375 : vector<64x32xf32>
    %377 = vector.extract_strided_slice %355 {offsets = [48, 0], sizes = [64, 32], strides = [1, 1]} : vector<112x32xf32> to vector<64x32xf32>
    %378 = vector.extract_strided_slice %321 {offsets = [3, 1, 0], sizes = [1, 1, 32], strides = [1, 1, 1]} : vector<4x4x32xf32> to vector<1x1x32xf32>
    %379 = vector.shape_cast %378 : vector<1x1x32xf32> to vector<32xf32>
    %380 = vector.shape_cast %379 : vector<32xf32> to vector<1x32xf32>
    %381 = vector.broadcast %380 : vector<1x32xf32> to vector<64x32xf32>
    %382 = arith.mulf %377, %381 : vector<64x32xf32>
    %383 = arith.addf %376, %382 : vector<64x32xf32>
    %c0_351 = arith.constant 0 : index
    %c0_352 = arith.constant 0 : index
    %c0_353 = arith.constant 0 : index
    %384 = vector.load %arg11[%c0_351, %c0_352, %c0_353] : memref<2x256x32xf32, #tpu.memory_space<vmem>>, vector<1x112x32xf32>
    %385 = vector.shape_cast %384 : vector<1x112x32xf32> to vector<112x32xf32>
    %c110_i32 = arith.constant 110 : i32
    %386 = tpu.dynamic_rotate %385 by %c110_i32 dim 0 : vector<112x32xf32>, i32 -> vector<112x32xf32>
    %387 = vector.extract_strided_slice %386 {offsets = [0, 0], sizes = [64, 32], strides = [1, 1]} : vector<112x32xf32> to vector<64x32xf32>
    %388 = vector.extract_strided_slice %321 {offsets = [0, 2, 0], sizes = [1, 1, 32], strides = [1, 1, 1]} : vector<4x4x32xf32> to vector<1x1x32xf32>
    %389 = vector.shape_cast %388 : vector<1x1x32xf32> to vector<32xf32>
    %390 = vector.shape_cast %389 : vector<32xf32> to vector<1x32xf32>
    %391 = vector.broadcast %390 : vector<1x32xf32> to vector<64x32xf32>
    %392 = arith.mulf %387, %391 : vector<64x32xf32>
    %393 = arith.addf %383, %392 : vector<64x32xf32>
    %394 = vector.extract_strided_slice %386 {offsets = [16, 0], sizes = [64, 32], strides = [1, 1]} : vector<112x32xf32> to vector<64x32xf32>
    %395 = vector.extract_strided_slice %321 {offsets = [1, 2, 0], sizes = [1, 1, 32], strides = [1, 1, 1]} : vector<4x4x32xf32> to vector<1x1x32xf32>
    %396 = vector.shape_cast %395 : vector<1x1x32xf32> to vector<32xf32>
    %397 = vector.shape_cast %396 : vector<32xf32> to vector<1x32xf32>
    %398 = vector.broadcast %397 : vector<1x32xf32> to vector<64x32xf32>
    %399 = arith.mulf %394, %398 : vector<64x32xf32>
    %400 = arith.addf %393, %399 : vector<64x32xf32>
    %401 = vector.extract_strided_slice %386 {offsets = [32, 0], sizes = [64, 32], strides = [1, 1]} : vector<112x32xf32> to vector<64x32xf32>
    %402 = vector.extract_strided_slice %321 {offsets = [2, 2, 0], sizes = [1, 1, 32], strides = [1, 1, 1]} : vector<4x4x32xf32> to vector<1x1x32xf32>
    %403 = vector.shape_cast %402 : vector<1x1x32xf32> to vector<32xf32>
    %404 = vector.shape_cast %403 : vector<32xf32> to vector<1x32xf32>
    %405 = vector.broadcast %404 : vector<1x32xf32> to vector<64x32xf32>
    %406 = arith.mulf %401, %405 : vector<64x32xf32>
    %407 = arith.addf %400, %406 : vector<64x32xf32>
    %408 = vector.extract_strided_slice %386 {offsets = [48, 0], sizes = [64, 32], strides = [1, 1]} : vector<112x32xf32> to vector<64x32xf32>
    %409 = vector.extract_strided_slice %321 {offsets = [3, 2, 0], sizes = [1, 1, 32], strides = [1, 1, 1]} : vector<4x4x32xf32> to vector<1x1x32xf32>
    %410 = vector.shape_cast %409 : vector<1x1x32xf32> to vector<32xf32>
    %411 = vector.shape_cast %410 : vector<32xf32> to vector<1x32xf32>
    %412 = vector.broadcast %411 : vector<1x32xf32> to vector<64x32xf32>
    %413 = arith.mulf %408, %412 : vector<64x32xf32>
    %414 = arith.addf %407, %413 : vector<64x32xf32>
    %c0_354 = arith.constant 0 : index
    %c0_355 = arith.constant 0 : index
    %c0_356 = arith.constant 0 : index
    %415 = vector.load %arg11[%c0_354, %c0_355, %c0_356] : memref<2x256x32xf32, #tpu.memory_space<vmem>>, vector<1x112x32xf32>
    %416 = vector.shape_cast %415 : vector<1x112x32xf32> to vector<112x32xf32>
    %c109_i32 = arith.constant 109 : i32
    %417 = tpu.dynamic_rotate %416 by %c109_i32 dim 0 : vector<112x32xf32>, i32 -> vector<112x32xf32>
    %418 = vector.extract_strided_slice %417 {offsets = [0, 0], sizes = [64, 32], strides = [1, 1]} : vector<112x32xf32> to vector<64x32xf32>
    %419 = vector.extract_strided_slice %321 {offsets = [0, 3, 0], sizes = [1, 1, 32], strides = [1, 1, 1]} : vector<4x4x32xf32> to vector<1x1x32xf32>
    %420 = vector.shape_cast %419 : vector<1x1x32xf32> to vector<32xf32>
    %421 = vector.shape_cast %420 : vector<32xf32> to vector<1x32xf32>
    %422 = vector.broadcast %421 : vector<1x32xf32> to vector<64x32xf32>
    %423 = arith.mulf %418, %422 : vector<64x32xf32>
    %424 = arith.addf %414, %423 : vector<64x32xf32>
    %425 = vector.extract_strided_slice %417 {offsets = [16, 0], sizes = [64, 32], strides = [1, 1]} : vector<112x32xf32> to vector<64x32xf32>
    %426 = vector.extract_strided_slice %321 {offsets = [1, 3, 0], sizes = [1, 1, 32], strides = [1, 1, 1]} : vector<4x4x32xf32> to vector<1x1x32xf32>
    %427 = vector.shape_cast %426 : vector<1x1x32xf32> to vector<32xf32>
    %428 = vector.shape_cast %427 : vector<32xf32> to vector<1x32xf32>
    %429 = vector.broadcast %428 : vector<1x32xf32> to vector<64x32xf32>
    %430 = arith.mulf %425, %429 : vector<64x32xf32>
    %431 = arith.addf %424, %430 : vector<64x32xf32>
    %432 = vector.extract_strided_slice %417 {offsets = [32, 0], sizes = [64, 32], strides = [1, 1]} : vector<112x32xf32> to vector<64x32xf32>
    %433 = vector.extract_strided_slice %321 {offsets = [2, 3, 0], sizes = [1, 1, 32], strides = [1, 1, 1]} : vector<4x4x32xf32> to vector<1x1x32xf32>
    %434 = vector.shape_cast %433 : vector<1x1x32xf32> to vector<32xf32>
    %435 = vector.shape_cast %434 : vector<32xf32> to vector<1x32xf32>
    %436 = vector.broadcast %435 : vector<1x32xf32> to vector<64x32xf32>
    %437 = arith.mulf %432, %436 : vector<64x32xf32>
    %438 = arith.addf %431, %437 : vector<64x32xf32>
    %439 = vector.extract_strided_slice %417 {offsets = [48, 0], sizes = [64, 32], strides = [1, 1]} : vector<112x32xf32> to vector<64x32xf32>
    %440 = vector.extract_strided_slice %321 {offsets = [3, 3, 0], sizes = [1, 1, 32], strides = [1, 1, 1]} : vector<4x4x32xf32> to vector<1x1x32xf32>
    %441 = vector.shape_cast %440 : vector<1x1x32xf32> to vector<32xf32>
    %442 = vector.shape_cast %441 : vector<32xf32> to vector<1x32xf32>
    %443 = vector.broadcast %442 : vector<1x32xf32> to vector<64x32xf32>
    %444 = arith.mulf %439, %443 : vector<64x32xf32>
    %445 = arith.addf %438, %444 : vector<64x32xf32>
    %c0_357 = arith.constant 0 : index
    %c0_358 = arith.constant 0 : index
    %446 = vector.load %arg12[%c0_357, %c0_358] : memref<512x32xf32, #tpu.memory_space<vmem>>, vector<64x32xf32>
    tpu.vector_store %arg12[%c0_357, %c0_358], %445 {strides = array<i32>} : memref<512x32xf32, #tpu.memory_space<vmem>>, vector<64x32xf32>,
    %cst_359 = arith.constant 0.000000e+00 : f32
    %447 = vector.broadcast %cst_359 : f32 to vector<64x32xf32>
    %c0_360 = arith.constant 0 : index
    %c64 = arith.constant 64 : index
    %c0_361 = arith.constant 0 : index
    %448 = vector.load %arg11[%c0_360, %c64, %c0_361] : memref<2x256x32xf32, #tpu.memory_space<vmem>>, vector<1x112x32xf32>
    %449 = vector.shape_cast %448 : vector<1x112x32xf32> to vector<112x32xf32>
    %450 = vector.extract_strided_slice %449 {offsets = [0, 0], sizes = [64, 32], strides = [1, 1]} : vector<112x32xf32> to vector<64x32xf32>
    %451 = vector.extract_strided_slice %321 {offsets = [0, 0, 0], sizes = [1, 1, 32], strides = [1, 1, 1]} : vector<4x4x32xf32> to vector<1x1x32xf32>
    %452 = vector.shape_cast %451 : vector<1x1x32xf32> to vector<32xf32>
    %453 = vector.shape_cast %452 : vector<32xf32> to vector<1x32xf32>
    %454 = vector.broadcast %453 : vector<1x32xf32> to vector<64x32xf32>
    %455 = arith.mulf %450, %454 : vector<64x32xf32>
    %456 = arith.addf %447, %455 : vector<64x32xf32>
    %457 = vector.extract_strided_slice %449 {offsets = [16, 0], sizes = [64, 32], strides = [1, 1]} : vector<112x32xf32> to vector<64x32xf32>
    %458 = vector.extract_strided_slice %321 {offsets = [1, 0, 0], sizes = [1, 1, 32], strides = [1, 1, 1]} : vector<4x4x32xf32> to vector<1x1x32xf32>
    %459 = vector.shape_cast %458 : vector<1x1x32xf32> to vector<32xf32>
    %460 = vector.shape_cast %459 : vector<32xf32> to vector<1x32xf32>
    %461 = vector.broadcast %460 : vector<1x32xf32> to vector<64x32xf32>
    %462 = arith.mulf %457, %461 : vector<64x32xf32>
    %463 = arith.addf %456, %462 : vector<64x32xf32>
    %464 = vector.extract_strided_slice %449 {offsets = [32, 0], sizes = [64, 32], strides = [1, 1]} : vector<112x32xf32> to vector<64x32xf32>
    %465 = vector.extract_strided_slice %321 {offsets = [2, 0, 0], sizes = [1, 1, 32], strides = [1, 1, 1]} : vector<4x4x32xf32> to vector<1x1x32xf32>
    %466 = vector.shape_cast %465 : vector<1x1x32xf32> to vector<32xf32>
    %467 = vector.shape_cast %466 : vector<32xf32> to vector<1x32xf32>
    %468 = vector.broadcast %467 : vector<1x32xf32> to vector<64x32xf32>
    %469 = arith.mulf %464, %468 : vector<64x32xf32>
    %470 = arith.addf %463, %469 : vector<64x32xf32>
    %471 = vector.extract_strided_slice %449 {offsets = [48, 0], sizes = [64, 32], strides = [1, 1]} : vector<112x32xf32> to vector<64x32xf32>
    %472 = vector.extract_strided_slice %321 {offsets = [3, 0, 0], sizes = [1, 1, 32], strides = [1, 1, 1]} : vector<4x4x32xf32> to vector<1x1x32xf32>
    %473 = vector.shape_cast %472 : vector<1x1x32xf32> to vector<32xf32>
    %474 = vector.shape_cast %473 : vector<32xf32> to vector<1x32xf32>
    %475 = vector.broadcast %474 : vector<1x32xf32> to vector<64x32xf32>
    %476 = arith.mulf %471, %475 : vector<64x32xf32>
    %477 = arith.addf %470, %476 : vector<64x32xf32>
    %c0_362 = arith.constant 0 : index
    %c64_363 = arith.constant 64 : index
    %c0_364 = arith.constant 0 : index
    %478 = vector.load %arg11[%c0_362, %c64_363, %c0_364] : memref<2x256x32xf32, #tpu.memory_space<vmem>>, vector<1x112x32xf32>
    %479 = vector.shape_cast %478 : vector<1x112x32xf32> to vector<112x32xf32>
    %c111_i32_365 = arith.constant 111 : i32
    %480 = tpu.dynamic_rotate %479 by %c111_i32_365 dim 0 : vector<112x32xf32>, i32 -> vector<112x32xf32>
    %481 = vector.extract_strided_slice %480 {offsets = [0, 0], sizes = [64, 32], strides = [1, 1]} : vector<112x32xf32> to vector<64x32xf32>
    %482 = vector.extract_strided_slice %321 {offsets = [0, 1, 0], sizes = [1, 1, 32], strides = [1, 1, 1]} : vector<4x4x32xf32> to vector<1x1x32xf32>
    %483 = vector.shape_cast %482 : vector<1x1x32xf32> to vector<32xf32>
    %484 = vector.shape_cast %483 : vector<32xf32> to vector<1x32xf32>
    %485 = vector.broadcast %484 : vector<1x32xf32> to vector<64x32xf32>
    %486 = arith.mulf %481, %485 : vector<64x32xf32>
    %487 = arith.addf %477, %486 : vector<64x32xf32>
    %488 = vector.extract_strided_slice %480 {offsets = [16, 0], sizes = [64, 32], strides = [1, 1]} : vector<112x32xf32> to vector<64x32xf32>
    %489 = vector.extract_strided_slice %321 {offsets = [1, 1, 0], sizes = [1, 1, 32], strides = [1, 1, 1]} : vector<4x4x32xf32> to vector<1x1x32xf32>
    %490 = vector.shape_cast %489 : vector<1x1x32xf32> to vector<32xf32>
    %491 = vector.shape_cast %490 : vector<32xf32> to vector<1x32xf32>
    %492 = vector.broadcast %491 : vector<1x32xf32> to vector<64x32xf32>
    %493 = arith.mulf %488, %492 : vector<64x32xf32>
    %494 = arith.addf %487, %493 : vector<64x32xf32>
    %495 = vector.extract_strided_slice %480 {offsets = [32, 0], sizes = [64, 32], strides = [1, 1]} : vector<112x32xf32> to vector<64x32xf32>
    %496 = vector.extract_strided_slice %321 {offsets = [2, 1, 0], sizes = [1, 1, 32], strides = [1, 1, 1]} : vector<4x4x32xf32> to vector<1x1x32xf32>
    %497 = vector.shape_cast %496 : vector<1x1x32xf32> to vector<32xf32>
    %498 = vector.shape_cast %497 : vector<32xf32> to vector<1x32xf32>
    %499 = vector.broadcast %498 : vector<1x32xf32> to vector<64x32xf32>
    %500 = arith.mulf %495, %499 : vector<64x32xf32>
    %501 = arith.addf %494, %500 : vector<64x32xf32>
    %502 = vector.extract_strided_slice %480 {offsets = [48, 0], sizes = [64, 32], strides = [1, 1]} : vector<112x32xf32> to vector<64x32xf32>
    %503 = vector.extract_strided_slice %321 {offsets = [3, 1, 0], sizes = [1, 1, 32], strides = [1, 1, 1]} : vector<4x4x32xf32> to vector<1x1x32xf32>
    %504 = vector.shape_cast %503 : vector<1x1x32xf32> to vector<32xf32>
    %505 = vector.shape_cast %504 : vector<32xf32> to vector<1x32xf32>
    %506 = vector.broadcast %505 : vector<1x32xf32> to vector<64x32xf32>
    %507 = arith.mulf %502, %506 : vector<64x32xf32>
    %508 = arith.addf %501, %507 : vector<64x32xf32>
    %c0_366 = arith.constant 0 : index
    %c64_367 = arith.constant 64 : index
    %c0_368 = arith.constant 0 : index
    %509 = vector.load %arg11[%c0_366, %c64_367, %c0_368] : memref<2x256x32xf32, #tpu.memory_space<vmem>>, vector<1x112x32xf32>
    %510 = vector.shape_cast %509 : vector<1x112x32xf32> to vector<112x32xf32>
    %c110_i32_369 = arith.constant 110 : i32
    %511 = tpu.dynamic_rotate %510 by %c110_i32_369 dim 0 : vector<112x32xf32>, i32 -> vector<112x32xf32>
    %512 = vector.extract_strided_slice %511 {offsets = [0, 0], sizes = [64, 32], strides = [1, 1]} : vector<112x32xf32> to vector<64x32xf32>
    %513 = vector.extract_strided_slice %321 {offsets = [0, 2, 0], sizes = [1, 1, 32], strides = [1, 1, 1]} : vector<4x4x32xf32> to vector<1x1x32xf32>
    %514 = vector.shape_cast %513 : vector<1x1x32xf32> to vector<32xf32>
    %515 = vector.shape_cast %514 : vector<32xf32> to vector<1x32xf32>
    %516 = vector.broadcast %515 : vector<1x32xf32> to vector<64x32xf32>
    %517 = arith.mulf %512, %516 : vector<64x32xf32>
    %518 = arith.addf %508, %517 : vector<64x32xf32>
    %519 = vector.extract_strided_slice %511 {offsets = [16, 0], sizes = [64, 32], strides = [1, 1]} : vector<112x32xf32> to vector<64x32xf32>
    %520 = vector.extract_strided_slice %321 {offsets = [1, 2, 0], sizes = [1, 1, 32], strides = [1, 1, 1]} : vector<4x4x32xf32> to vector<1x1x32xf32>
    %521 = vector.shape_cast %520 : vector<1x1x32xf32> to vector<32xf32>
    %522 = vector.shape_cast %521 : vector<32xf32> to vector<1x32xf32>
    %523 = vector.broadcast %522 : vector<1x32xf32> to vector<64x32xf32>
    %524 = arith.mulf %519, %523 : vector<64x32xf32>
    %525 = arith.addf %518, %524 : vector<64x32xf32>
    %526 = vector.extract_strided_slice %511 {offsets = [32, 0], sizes = [64, 32], strides = [1, 1]} : vector<112x32xf32> to vector<64x32xf32>
    %527 = vector.extract_strided_slice %321 {offsets = [2, 2, 0], sizes = [1, 1, 32], strides = [1, 1, 1]} : vector<4x4x32xf32> to vector<1x1x32xf32>
    %528 = vector.shape_cast %527 : vector<1x1x32xf32> to vector<32xf32>
    %529 = vector.shape_cast %528 : vector<32xf32> to vector<1x32xf32>
    %530 = vector.broadcast %529 : vector<1x32xf32> to vector<64x32xf32>
    %531 = arith.mulf %526, %530 : vector<64x32xf32>
    %532 = arith.addf %525, %531 : vector<64x32xf32>
    %533 = vector.extract_strided_slice %511 {offsets = [48, 0], sizes = [64, 32], strides = [1, 1]} : vector<112x32xf32> to vector<64x32xf32>
    %534 = vector.extract_strided_slice %321 {offsets = [3, 2, 0], sizes = [1, 1, 32], strides = [1, 1, 1]} : vector<4x4x32xf32> to vector<1x1x32xf32>
    %535 = vector.shape_cast %534 : vector<1x1x32xf32> to vector<32xf32>
    %536 = vector.shape_cast %535 : vector<32xf32> to vector<1x32xf32>
    %537 = vector.broadcast %536 : vector<1x32xf32> to vector<64x32xf32>
    %538 = arith.mulf %533, %537 : vector<64x32xf32>
    %539 = arith.addf %532, %538 : vector<64x32xf32>
    %c0_370 = arith.constant 0 : index
    %c64_371 = arith.constant 64 : index
    %c0_372 = arith.constant 0 : index
    %540 = vector.load %arg11[%c0_370, %c64_371, %c0_372] : memref<2x256x32xf32, #tpu.memory_space<vmem>>, vector<1x112x32xf32>
    %541 = vector.shape_cast %540 : vector<1x112x32xf32> to vector<112x32xf32>
    %c109_i32_373 = arith.constant 109 : i32
    %542 = tpu.dynamic_rotate %541 by %c109_i32_373 dim 0 : vector<112x32xf32>, i32 -> vector<112x32xf32>
    %543 = vector.extract_strided_slice %542 {offsets = [0, 0], sizes = [64, 32], strides = [1, 1]} : vector<112x32xf32> to vector<64x32xf32>
    %544 = vector.extract_strided_slice %321 {offsets = [0, 3, 0], sizes = [1, 1, 32], strides = [1, 1, 1]} : vector<4x4x32xf32> to vector<1x1x32xf32>
    %545 = vector.shape_cast %544 : vector<1x1x32xf32> to vector<32xf32>
    %546 = vector.shape_cast %545 : vector<32xf32> to vector<1x32xf32>
    %547 = vector.broadcast %546 : vector<1x32xf32> to vector<64x32xf32>
    %548 = arith.mulf %543, %547 : vector<64x32xf32>
    %549 = arith.addf %539, %548 : vector<64x32xf32>
    %550 = vector.extract_strided_slice %542 {offsets = [16, 0], sizes = [64, 32], strides = [1, 1]} : vector<112x32xf32> to vector<64x32xf32>
    %551 = vector.extract_strided_slice %321 {offsets = [1, 3, 0], sizes = [1, 1, 32], strides = [1, 1, 1]} : vector<4x4x32xf32> to vector<1x1x32xf32>
    %552 = vector.shape_cast %551 : vector<1x1x32xf32> to vector<32xf32>
    %553 = vector.shape_cast %552 : vector<32xf32> to vector<1x32xf32>
    %554 = vector.broadcast %553 : vector<1x32xf32> to vector<64x32xf32>
    %555 = arith.mulf %550, %554 : vector<64x32xf32>
    %556 = arith.addf %549, %555 : vector<64x32xf32>
    %557 = vector.extract_strided_slice %542 {offsets = [32, 0], sizes = [64, 32], strides = [1, 1]} : vector<112x32xf32> to vector<64x32xf32>
    %558 = vector.extract_strided_slice %321 {offsets = [2, 3, 0], sizes = [1, 1, 32], strides = [1, 1, 1]} : vector<4x4x32xf32> to vector<1x1x32xf32>
    %559 = vector.shape_cast %558 : vector<1x1x32xf32> to vector<32xf32>
    %560 = vector.shape_cast %559 : vector<32xf32> to vector<1x32xf32>
    %561 = vector.broadcast %560 : vector<1x32xf32> to vector<64x32xf32>
    %562 = arith.mulf %557, %561 : vector<64x32xf32>
    %563 = arith.addf %556, %562 : vector<64x32xf32>
    %564 = vector.extract_strided_slice %542 {offsets = [48, 0], sizes = [64, 32], strides = [1, 1]} : vector<112x32xf32> to vector<64x32xf32>
    %565 = vector.extract_strided_slice %321 {offsets = [3, 3, 0], sizes = [1, 1, 32], strides = [1, 1, 1]} : vector<4x4x32xf32> to vector<1x1x32xf32>
    %566 = vector.shape_cast %565 : vector<1x1x32xf32> to vector<32xf32>
    %567 = vector.shape_cast %566 : vector<32xf32> to vector<1x32xf32>
    %568 = vector.broadcast %567 : vector<1x32xf32> to vector<64x32xf32>
    %569 = arith.mulf %564, %568 : vector<64x32xf32>
    %570 = arith.addf %563, %569 : vector<64x32xf32>
    %c64_374 = arith.constant 64 : index
    %c0_375 = arith.constant 0 : index
    %571 = vector.load %arg12[%c64_374, %c0_375] : memref<512x32xf32, #tpu.memory_space<vmem>>, vector<64x32xf32>
    tpu.vector_store %arg12[%c64_374, %c0_375], %570 {strides = array<i32>} : memref<512x32xf32, #tpu.memory_space<vmem>>, vector<64x32xf32>,
    %cst_376 = arith.constant 0.000000e+00 : f32
    %572 = vector.broadcast %cst_376 : f32 to vector<64x32xf32>
    %c0_377 = arith.constant 0 : index
    %c128_378 = arith.constant 128 : index
    %c0_379 = arith.constant 0 : index
    %573 = vector.load %arg11[%c0_377, %c128_378, %c0_379] : memref<2x256x32xf32, #tpu.memory_space<vmem>>, vector<1x112x32xf32>
    %574 = vector.shape_cast %573 : vector<1x112x32xf32> to vector<112x32xf32>
    %575 = vector.extract_strided_slice %574 {offsets = [0, 0], sizes = [64, 32], strides = [1, 1]} : vector<112x32xf32> to vector<64x32xf32>
    %576 = vector.extract_strided_slice %321 {offsets = [0, 0, 0], sizes = [1, 1, 32], strides = [1, 1, 1]} : vector<4x4x32xf32> to vector<1x1x32xf32>
    %577 = vector.shape_cast %576 : vector<1x1x32xf32> to vector<32xf32>
    %578 = vector.shape_cast %577 : vector<32xf32> to vector<1x32xf32>
    %579 = vector.broadcast %578 : vector<1x32xf32> to vector<64x32xf32>
    %580 = arith.mulf %575, %579 : vector<64x32xf32>
    %581 = arith.addf %572, %580 : vector<64x32xf32>
    %582 = vector.extract_strided_slice %574 {offsets = [16, 0], sizes = [64, 32], strides = [1, 1]} : vector<112x32xf32> to vector<64x32xf32>
    %583 = vector.extract_strided_slice %321 {offsets = [1, 0, 0], sizes = [1, 1, 32], strides = [1, 1, 1]} : vector<4x4x32xf32> to vector<1x1x32xf32>
    %584 = vector.shape_cast %583 : vector<1x1x32xf32> to vector<32xf32>
    %585 = vector.shape_cast %584 : vector<32xf32> to vector<1x32xf32>
    %586 = vector.broadcast %585 : vector<1x32xf32> to vector<64x32xf32>
    %587 = arith.mulf %582, %586 : vector<64x32xf32>
    %588 = arith.addf %581, %587 : vector<64x32xf32>
    %589 = vector.extract_strided_slice %574 {offsets = [32, 0], sizes = [64, 32], strides = [1, 1]} : vector<112x32xf32> to vector<64x32xf32>
    %590 = vector.extract_strided_slice %321 {offsets = [2, 0, 0], sizes = [1, 1, 32], strides = [1, 1, 1]} : vector<4x4x32xf32> to vector<1x1x32xf32>
    %591 = vector.shape_cast %590 : vector<1x1x32xf32> to vector<32xf32>
    %592 = vector.shape_cast %591 : vector<32xf32> to vector<1x32xf32>
    %593 = vector.broadcast %592 : vector<1x32xf32> to vector<64x32xf32>
    %594 = arith.mulf %589, %593 : vector<64x32xf32>
    %595 = arith.addf %588, %594 : vector<64x32xf32>
    %596 = vector.extract_strided_slice %574 {offsets = [48, 0], sizes = [64, 32], strides = [1, 1]} : vector<112x32xf32> to vector<64x32xf32>
    %597 = vector.extract_strided_slice %321 {offsets = [3, 0, 0], sizes = [1, 1, 32], strides = [1, 1, 1]} : vector<4x4x32xf32> to vector<1x1x32xf32>
    %598 = vector.shape_cast %597 : vector<1x1x32xf32> to vector<32xf32>
    %599 = vector.shape_cast %598 : vector<32xf32> to vector<1x32xf32>
    %600 = vector.broadcast %599 : vector<1x32xf32> to vector<64x32xf32>
    %601 = arith.mulf %596, %600 : vector<64x32xf32>
    %602 = arith.addf %595, %601 : vector<64x32xf32>
    %c0_380 = arith.constant 0 : index
    %c128_381 = arith.constant 128 : index
    %c0_382 = arith.constant 0 : index
    %603 = vector.load %arg11[%c0_380, %c128_381, %c0_382] : memref<2x256x32xf32, #tpu.memory_space<vmem>>, vector<1x112x32xf32>
    %604 = vector.shape_cast %603 : vector<1x112x32xf32> to vector<112x32xf32>
    %c111_i32_383 = arith.constant 111 : i32
    %605 = tpu.dynamic_rotate %604 by %c111_i32_383 dim 0 : vector<112x32xf32>, i32 -> vector<112x32xf32>
    %606 = vector.extract_strided_slice %605 {offsets = [0, 0], sizes = [64, 32], strides = [1, 1]} : vector<112x32xf32> to vector<64x32xf32>
    %607 = vector.extract_strided_slice %321 {offsets = [0, 1, 0], sizes = [1, 1, 32], strides = [1, 1, 1]} : vector<4x4x32xf32> to vector<1x1x32xf32>
    %608 = vector.shape_cast %607 : vector<1x1x32xf32> to vector<32xf32>
    %609 = vector.shape_cast %608 : vector<32xf32> to vector<1x32xf32>
    %610 = vector.broadcast %609 : vector<1x32xf32> to vector<64x32xf32>
    %611 = arith.mulf %606, %610 : vector<64x32xf32>
    %612 = arith.addf %602, %611 : vector<64x32xf32>
    %613 = vector.extract_strided_slice %605 {offsets = [16, 0], sizes = [64, 32], strides = [1, 1]} : vector<112x32xf32> to vector<64x32xf32>
    %614 = vector.extract_strided_slice %321 {offsets = [1, 1, 0], sizes = [1, 1, 32], strides = [1, 1, 1]} : vector<4x4x32xf32> to vector<1x1x32xf32>
    %615 = vector.shape_cast %614 : vector<1x1x32xf32> to vector<32xf32>
    %616 = vector.shape_cast %615 : vector<32xf32> to vector<1x32xf32>
    %617 = vector.broadcast %616 : vector<1x32xf32> to vector<64x32xf32>
    %618 = arith.mulf %613, %617 : vector<64x32xf32>
    %619 = arith.addf %612, %618 : vector<64x32xf32>
    %620 = vector.extract_strided_slice %605 {offsets = [32, 0], sizes = [64, 32], strides = [1, 1]} : vector<112x32xf32> to vector<64x32xf32>
    %621 = vector.extract_strided_slice %321 {offsets = [2, 1, 0], sizes = [1, 1, 32], strides = [1, 1, 1]} : vector<4x4x32xf32> to vector<1x1x32xf32>
    %622 = vector.shape_cast %621 : vector<1x1x32xf32> to vector<32xf32>
    %623 = vector.shape_cast %622 : vector<32xf32> to vector<1x32xf32>
    %624 = vector.broadcast %623 : vector<1x32xf32> to vector<64x32xf32>
    %625 = arith.mulf %620, %624 : vector<64x32xf32>
    %626 = arith.addf %619, %625 : vector<64x32xf32>
    %627 = vector.extract_strided_slice %605 {offsets = [48, 0], sizes = [64, 32], strides = [1, 1]} : vector<112x32xf32> to vector<64x32xf32>
    %628 = vector.extract_strided_slice %321 {offsets = [3, 1, 0], sizes = [1, 1, 32], strides = [1, 1, 1]} : vector<4x4x32xf32> to vector<1x1x32xf32>
    %629 = vector.shape_cast %628 : vector<1x1x32xf32> to vector<32xf32>
    %630 = vector.shape_cast %629 : vector<32xf32> to vector<1x32xf32>
    %631 = vector.broadcast %630 : vector<1x32xf32> to vector<64x32xf32>
    %632 = arith.mulf %627, %631 : vector<64x32xf32>
    %633 = arith.addf %626, %632 : vector<64x32xf32>
    %c0_384 = arith.constant 0 : index
    %c128_385 = arith.constant 128 : index
    %c0_386 = arith.constant 0 : index
    %634 = vector.load %arg11[%c0_384, %c128_385, %c0_386] : memref<2x256x32xf32, #tpu.memory_space<vmem>>, vector<1x112x32xf32>
    %635 = vector.shape_cast %634 : vector<1x112x32xf32> to vector<112x32xf32>
    %c110_i32_387 = arith.constant 110 : i32
    %636 = tpu.dynamic_rotate %635 by %c110_i32_387 dim 0 : vector<112x32xf32>, i32 -> vector<112x32xf32>
    %637 = vector.extract_strided_slice %636 {offsets = [0, 0], sizes = [64, 32], strides = [1, 1]} : vector<112x32xf32> to vector<64x32xf32>
    %638 = vector.extract_strided_slice %321 {offsets = [0, 2, 0], sizes = [1, 1, 32], strides = [1, 1, 1]} : vector<4x4x32xf32> to vector<1x1x32xf32>
    %639 = vector.shape_cast %638 : vector<1x1x32xf32> to vector<32xf32>
    %640 = vector.shape_cast %639 : vector<32xf32> to vector<1x32xf32>
    %641 = vector.broadcast %640 : vector<1x32xf32> to vector<64x32xf32>
    %642 = arith.mulf %637, %641 : vector<64x32xf32>
    %643 = arith.addf %633, %642 : vector<64x32xf32>
    %644 = vector.extract_strided_slice %636 {offsets = [16, 0], sizes = [64, 32], strides = [1, 1]} : vector<112x32xf32> to vector<64x32xf32>
    %645 = vector.extract_strided_slice %321 {offsets = [1, 2, 0], sizes = [1, 1, 32], strides = [1, 1, 1]} : vector<4x4x32xf32> to vector<1x1x32xf32>
    %646 = vector.shape_cast %645 : vector<1x1x32xf32> to vector<32xf32>
    %647 = vector.shape_cast %646 : vector<32xf32> to vector<1x32xf32>
    %648 = vector.broadcast %647 : vector<1x32xf32> to vector<64x32xf32>
    %649 = arith.mulf %644, %648 : vector<64x32xf32>
    %650 = arith.addf %643, %649 : vector<64x32xf32>
    %651 = vector.extract_strided_slice %636 {offsets = [32, 0], sizes = [64, 32], strides = [1, 1]} : vector<112x32xf32> to vector<64x32xf32>
    %652 = vector.extract_strided_slice %321 {offsets = [2, 2, 0], sizes = [1, 1, 32], strides = [1, 1, 1]} : vector<4x4x32xf32> to vector<1x1x32xf32>
    %653 = vector.shape_cast %652 : vector<1x1x32xf32> to vector<32xf32>
    %654 = vector.shape_cast %653 : vector<32xf32> to vector<1x32xf32>
    %655 = vector.broadcast %654 : vector<1x32xf32> to vector<64x32xf32>
    %656 = arith.mulf %651, %655 : vector<64x32xf32>
    %657 = arith.addf %650, %656 : vector<64x32xf32>
    %658 = vector.extract_strided_slice %636 {offsets = [48, 0], sizes = [64, 32], strides = [1, 1]} : vector<112x32xf32> to vector<64x32xf32>
    %659 = vector.extract_strided_slice %321 {offsets = [3, 2, 0], sizes = [1, 1, 32], strides = [1, 1, 1]} : vector<4x4x32xf32> to vector<1x1x32xf32>
    %660 = vector.shape_cast %659 : vector<1x1x32xf32> to vector<32xf32>
    %661 = vector.shape_cast %660 : vector<32xf32> to vector<1x32xf32>
    %662 = vector.broadcast %661 : vector<1x32xf32> to vector<64x32xf32>
    %663 = arith.mulf %658, %662 : vector<64x32xf32>
    %664 = arith.addf %657, %663 : vector<64x32xf32>
    %c0_388 = arith.constant 0 : index
    %c128_389 = arith.constant 128 : index
    %c0_390 = arith.constant 0 : index
    %665 = vector.load %arg11[%c0_388, %c128_389, %c0_390] : memref<2x256x32xf32, #tpu.memory_space<vmem>>, vector<1x112x32xf32>
    %666 = vector.shape_cast %665 : vector<1x112x32xf32> to vector<112x32xf32>
    %c109_i32_391 = arith.constant 109 : i32
    %667 = tpu.dynamic_rotate %666 by %c109_i32_391 dim 0 : vector<112x32xf32>, i32 -> vector<112x32xf32>
    %668 = vector.extract_strided_slice %667 {offsets = [0, 0], sizes = [64, 32], strides = [1, 1]} : vector<112x32xf32> to vector<64x32xf32>
    %669 = vector.extract_strided_slice %321 {offsets = [0, 3, 0], sizes = [1, 1, 32], strides = [1, 1, 1]} : vector<4x4x32xf32> to vector<1x1x32xf32>
    %670 = vector.shape_cast %669 : vector<1x1x32xf32> to vector<32xf32>
    %671 = vector.shape_cast %670 : vector<32xf32> to vector<1x32xf32>
    %672 = vector.broadcast %671 : vector<1x32xf32> to vector<64x32xf32>
    %673 = arith.mulf %668, %672 : vector<64x32xf32>
    %674 = arith.addf %664, %673 : vector<64x32xf32>
    %675 = vector.extract_strided_slice %667 {offsets = [16, 0], sizes = [64, 32], strides = [1, 1]} : vector<112x32xf32> to vector<64x32xf32>
    %676 = vector.extract_strided_slice %321 {offsets = [1, 3, 0], sizes = [1, 1, 32], strides = [1, 1, 1]} : vector<4x4x32xf32> to vector<1x1x32xf32>
    %677 = vector.shape_cast %676 : vector<1x1x32xf32> to vector<32xf32>
    %678 = vector.shape_cast %677 : vector<32xf32> to vector<1x32xf32>
    %679 = vector.broadcast %678 : vector<1x32xf32> to vector<64x32xf32>
    %680 = arith.mulf %675, %679 : vector<64x32xf32>
    %681 = arith.addf %674, %680 : vector<64x32xf32>
    %682 = vector.extract_strided_slice %667 {offsets = [32, 0], sizes = [64, 32], strides = [1, 1]} : vector<112x32xf32> to vector<64x32xf32>
    %683 = vector.extract_strided_slice %321 {offsets = [2, 3, 0], sizes = [1, 1, 32], strides = [1, 1, 1]} : vector<4x4x32xf32> to vector<1x1x32xf32>
    %684 = vector.shape_cast %683 : vector<1x1x32xf32> to vector<32xf32>
    %685 = vector.shape_cast %684 : vector<32xf32> to vector<1x32xf32>
    %686 = vector.broadcast %685 : vector<1x32xf32> to vector<64x32xf32>
    %687 = arith.mulf %682, %686 : vector<64x32xf32>
    %688 = arith.addf %681, %687 : vector<64x32xf32>
    %689 = vector.extract_strided_slice %667 {offsets = [48, 0], sizes = [64, 32], strides = [1, 1]} : vector<112x32xf32> to vector<64x32xf32>
    %690 = vector.extract_strided_slice %321 {offsets = [3, 3, 0], sizes = [1, 1, 32], strides = [1, 1, 1]} : vector<4x4x32xf32> to vector<1x1x32xf32>
    %691 = vector.shape_cast %690 : vector<1x1x32xf32> to vector<32xf32>
    %692 = vector.shape_cast %691 : vector<32xf32> to vector<1x32xf32>
    %693 = vector.broadcast %692 : vector<1x32xf32> to vector<64x32xf32>
    %694 = arith.mulf %689, %693 : vector<64x32xf32>
    %695 = arith.addf %688, %694 : vector<64x32xf32>
    %c128_392 = arith.constant 128 : index
    %c0_393 = arith.constant 0 : index
    %696 = vector.load %arg12[%c128_392, %c0_393] : memref<512x32xf32, #tpu.memory_space<vmem>>, vector<64x32xf32>
    tpu.vector_store %arg12[%c128_392, %c0_393], %695 {strides = array<i32>} : memref<512x32xf32, #tpu.memory_space<vmem>>, vector<64x32xf32>,
    %cst_394 = arith.constant 0.000000e+00 : f32
    %697 = vector.broadcast %cst_394 : f32 to vector<16x32xf32>
    %c0_395 = arith.constant 0 : index
    %c192 = arith.constant 192 : index
    %c0_396 = arith.constant 0 : index
    %698 = vector.load %arg11[%c0_395, %c192, %c0_396] : memref<2x256x32xf32, #tpu.memory_space<vmem>>, vector<1x64x32xf32>
    %699 = vector.shape_cast %698 : vector<1x64x32xf32> to vector<64x32xf32>
    %700 = vector.extract_strided_slice %699 {offsets = [0, 0], sizes = [16, 32], strides = [1, 1]} : vector<64x32xf32> to vector<16x32xf32>
    %701 = vector.extract_strided_slice %321 {offsets = [0, 0, 0], sizes = [1, 1, 32], strides = [1, 1, 1]} : vector<4x4x32xf32> to vector<1x1x32xf32>
    %702 = vector.shape_cast %701 : vector<1x1x32xf32> to vector<32xf32>
    %703 = vector.shape_cast %702 : vector<32xf32> to vector<1x32xf32>
    %704 = vector.broadcast %703 : vector<1x32xf32> to vector<16x32xf32>
    %705 = arith.mulf %700, %704 : vector<16x32xf32>
    %706 = arith.addf %697, %705 : vector<16x32xf32>
    %707 = vector.extract_strided_slice %699 {offsets = [16, 0], sizes = [16, 32], strides = [1, 1]} : vector<64x32xf32> to vector<16x32xf32>
    %708 = vector.extract_strided_slice %321 {offsets = [1, 0, 0], sizes = [1, 1, 32], strides = [1, 1, 1]} : vector<4x4x32xf32> to vector<1x1x32xf32>
    %709 = vector.shape_cast %708 : vector<1x1x32xf32> to vector<32xf32>
    %710 = vector.shape_cast %709 : vector<32xf32> to vector<1x32xf32>
    %711 = vector.broadcast %710 : vector<1x32xf32> to vector<16x32xf32>
    %712 = arith.mulf %707, %711 : vector<16x32xf32>
    %713 = arith.addf %706, %712 : vector<16x32xf32>
    %714 = vector.extract_strided_slice %699 {offsets = [32, 0], sizes = [16, 32], strides = [1, 1]} : vector<64x32xf32> to vector<16x32xf32>
    %715 = vector.extract_strided_slice %321 {offsets = [2, 0, 0], sizes = [1, 1, 32], strides = [1, 1, 1]} : vector<4x4x32xf32> to vector<1x1x32xf32>
    %716 = vector.shape_cast %715 : vector<1x1x32xf32> to vector<32xf32>
    %717 = vector.shape_cast %716 : vector<32xf32> to vector<1x32xf32>
    %718 = vector.broadcast %717 : vector<1x32xf32> to vector<16x32xf32>
    %719 = arith.mulf %714, %718 : vector<16x32xf32>
    %720 = arith.addf %713, %719 : vector<16x32xf32>
    %721 = vector.extract_strided_slice %699 {offsets = [48, 0], sizes = [16, 32], strides = [1, 1]} : vector<64x32xf32> to vector<16x32xf32>
    %722 = vector.extract_strided_slice %321 {offsets = [3, 0, 0], sizes = [1, 1, 32], strides = [1, 1, 1]} : vector<4x4x32xf32> to vector<1x1x32xf32>
    %723 = vector.shape_cast %722 : vector<1x1x32xf32> to vector<32xf32>
    %724 = vector.shape_cast %723 : vector<32xf32> to vector<1x32xf32>
    %725 = vector.broadcast %724 : vector<1x32xf32> to vector<16x32xf32>
    %726 = arith.mulf %721, %725 : vector<16x32xf32>
    %727 = arith.addf %720, %726 : vector<16x32xf32>
    %c0_397 = arith.constant 0 : index
    %c192_398 = arith.constant 192 : index
    %c0_399 = arith.constant 0 : index
    %728 = vector.load %arg11[%c0_397, %c192_398, %c0_399] : memref<2x256x32xf32, #tpu.memory_space<vmem>>, vector<1x64x32xf32>
    %729 = vector.shape_cast %728 : vector<1x64x32xf32> to vector<64x32xf32>
    %c63_i32 = arith.constant 63 : i32
    %730 = tpu.dynamic_rotate %729 by %c63_i32 dim 0 : vector<64x32xf32>, i32 -> vector<64x32xf32>
    %731 = vector.extract_strided_slice %730 {offsets = [0, 0], sizes = [16, 32], strides = [1, 1]} : vector<64x32xf32> to vector<16x32xf32>
    %732 = vector.extract_strided_slice %321 {offsets = [0, 1, 0], sizes = [1, 1, 32], strides = [1, 1, 1]} : vector<4x4x32xf32> to vector<1x1x32xf32>
    %733 = vector.shape_cast %732 : vector<1x1x32xf32> to vector<32xf32>
    %734 = vector.shape_cast %733 : vector<32xf32> to vector<1x32xf32>
    %735 = vector.broadcast %734 : vector<1x32xf32> to vector<16x32xf32>
    %736 = arith.mulf %731, %735 : vector<16x32xf32>
    %737 = arith.addf %727, %736 : vector<16x32xf32>
    %738 = vector.extract_strided_slice %730 {offsets = [16, 0], sizes = [16, 32], strides = [1, 1]} : vector<64x32xf32> to vector<16x32xf32>
    %739 = vector.extract_strided_slice %321 {offsets = [1, 1, 0], sizes = [1, 1, 32], strides = [1, 1, 1]} : vector<4x4x32xf32> to vector<1x1x32xf32>
    %740 = vector.shape_cast %739 : vector<1x1x32xf32> to vector<32xf32>
    %741 = vector.shape_cast %740 : vector<32xf32> to vector<1x32xf32>
    %742 = vector.broadcast %741 : vector<1x32xf32> to vector<16x32xf32>
    %743 = arith.mulf %738, %742 : vector<16x32xf32>
    %744 = arith.addf %737, %743 : vector<16x32xf32>
    %745 = vector.extract_strided_slice %730 {offsets = [32, 0], sizes = [16, 32], strides = [1, 1]} : vector<64x32xf32> to vector<16x32xf32>
    %746 = vector.extract_strided_slice %321 {offsets = [2, 1, 0], sizes = [1, 1, 32], strides = [1, 1, 1]} : vector<4x4x32xf32> to vector<1x1x32xf32>
    %747 = vector.shape_cast %746 : vector<1x1x32xf32> to vector<32xf32>
    %748 = vector.shape_cast %747 : vector<32xf32> to vector<1x32xf32>
    %749 = vector.broadcast %748 : vector<1x32xf32> to vector<16x32xf32>
    %750 = arith.mulf %745, %749 : vector<16x32xf32>
    %751 = arith.addf %744, %750 : vector<16x32xf32>
    %752 = vector.extract_strided_slice %730 {offsets = [48, 0], sizes = [16, 32], strides = [1, 1]} : vector<64x32xf32> to vector<16x32xf32>
    %753 = vector.extract_strided_slice %321 {offsets = [3, 1, 0], sizes = [1, 1, 32], strides = [1, 1, 1]} : vector<4x4x32xf32> to vector<1x1x32xf32>
    %754 = vector.shape_cast %753 : vector<1x1x32xf32> to vector<32xf32>
    %755 = vector.shape_cast %754 : vector<32xf32> to vector<1x32xf32>
    %756 = vector.broadcast %755 : vector<1x32xf32> to vector<16x32xf32>
    %757 = arith.mulf %752, %756 : vector<16x32xf32>
    %758 = arith.addf %751, %757 : vector<16x32xf32>
    %c0_400 = arith.constant 0 : index
    %c192_401 = arith.constant 192 : index
    %c0_402 = arith.constant 0 : index
    %759 = vector.load %arg11[%c0_400, %c192_401, %c0_402] : memref<2x256x32xf32, #tpu.memory_space<vmem>>, vector<1x64x32xf32>
    %760 = vector.shape_cast %759 : vector<1x64x32xf32> to vector<64x32xf32>
    %c62_i32 = arith.constant 62 : i32
    %761 = tpu.dynamic_rotate %760 by %c62_i32 dim 0 : vector<64x32xf32>, i32 -> vector<64x32xf32>
    %762 = vector.extract_strided_slice %761 {offsets = [0, 0], sizes = [16, 32], strides = [1, 1]} : vector<64x32xf32> to vector<16x32xf32>
    %763 = vector.extract_strided_slice %321 {offsets = [0, 2, 0], sizes = [1, 1, 32], strides = [1, 1, 1]} : vector<4x4x32xf32> to vector<1x1x32xf32>
    %764 = vector.shape_cast %763 : vector<1x1x32xf32> to vector<32xf32>
    %765 = vector.shape_cast %764 : vector<32xf32> to vector<1x32xf32>
    %766 = vector.broadcast %765 : vector<1x32xf32> to vector<16x32xf32>
    %767 = arith.mulf %762, %766 : vector<16x32xf32>
    %768 = arith.addf %758, %767 : vector<16x32xf32>
    %769 = vector.extract_strided_slice %761 {offsets = [16, 0], sizes = [16, 32], strides = [1, 1]} : vector<64x32xf32> to vector<16x32xf32>
    %770 = vector.extract_strided_slice %321 {offsets = [1, 2, 0], sizes = [1, 1, 32], strides = [1, 1, 1]} : vector<4x4x32xf32> to vector<1x1x32xf32>
    %771 = vector.shape_cast %770 : vector<1x1x32xf32> to vector<32xf32>
    %772 = vector.shape_cast %771 : vector<32xf32> to vector<1x32xf32>
    %773 = vector.broadcast %772 : vector<1x32xf32> to vector<16x32xf32>
    %774 = arith.mulf %769, %773 : vector<16x32xf32>
    %775 = arith.addf %768, %774 : vector<16x32xf32>
    %776 = vector.extract_strided_slice %761 {offsets = [32, 0], sizes = [16, 32], strides = [1, 1]} : vector<64x32xf32> to vector<16x32xf32>
    %777 = vector.extract_strided_slice %321 {offsets = [2, 2, 0], sizes = [1, 1, 32], strides = [1, 1, 1]} : vector<4x4x32xf32> to vector<1x1x32xf32>
    %778 = vector.shape_cast %777 : vector<1x1x32xf32> to vector<32xf32>
    %779 = vector.shape_cast %778 : vector<32xf32> to vector<1x32xf32>
    %780 = vector.broadcast %779 : vector<1x32xf32> to vector<16x32xf32>
    %781 = arith.mulf %776, %780 : vector<16x32xf32>
    %782 = arith.addf %775, %781 : vector<16x32xf32>
    %783 = vector.extract_strided_slice %761 {offsets = [48, 0], sizes = [16, 32], strides = [1, 1]} : vector<64x32xf32> to vector<16x32xf32>
    %784 = vector.extract_strided_slice %321 {offsets = [3, 2, 0], sizes = [1, 1, 32], strides = [1, 1, 1]} : vector<4x4x32xf32> to vector<1x1x32xf32>
    %785 = vector.shape_cast %784 : vector<1x1x32xf32> to vector<32xf32>
    %786 = vector.shape_cast %785 : vector<32xf32> to vector<1x32xf32>
    %787 = vector.broadcast %786 : vector<1x32xf32> to vector<16x32xf32>
    %788 = arith.mulf %783, %787 : vector<16x32xf32>
    %789 = arith.addf %782, %788 : vector<16x32xf32>
    %c0_403 = arith.constant 0 : index
    %c192_404 = arith.constant 192 : index
    %c0_405 = arith.constant 0 : index
    %790 = vector.load %arg11[%c0_403, %c192_404, %c0_405] : memref<2x256x32xf32, #tpu.memory_space<vmem>>, vector<1x64x32xf32>
    %791 = vector.shape_cast %790 : vector<1x64x32xf32> to vector<64x32xf32>
    %c61_i32 = arith.constant 61 : i32
    %792 = tpu.dynamic_rotate %791 by %c61_i32 dim 0 : vector<64x32xf32>, i32 -> vector<64x32xf32>
    %793 = vector.extract_strided_slice %792 {offsets = [0, 0], sizes = [16, 32], strides = [1, 1]} : vector<64x32xf32> to vector<16x32xf32>
    %794 = vector.extract_strided_slice %321 {offsets = [0, 3, 0], sizes = [1, 1, 32], strides = [1, 1, 1]} : vector<4x4x32xf32> to vector<1x1x32xf32>
    %795 = vector.shape_cast %794 : vector<1x1x32xf32> to vector<32xf32>
    %796 = vector.shape_cast %795 : vector<32xf32> to vector<1x32xf32>
    %797 = vector.broadcast %796 : vector<1x32xf32> to vector<16x32xf32>
    %798 = arith.mulf %793, %797 : vector<16x32xf32>
    %799 = arith.addf %789, %798 : vector<16x32xf32>
    %800 = vector.extract_strided_slice %792 {offsets = [16, 0], sizes = [16, 32], strides = [1, 1]} : vector<64x32xf32> to vector<16x32xf32>
    %801 = vector.extract_strided_slice %321 {offsets = [1, 3, 0], sizes = [1, 1, 32], strides = [1, 1, 1]} : vector<4x4x32xf32> to vector<1x1x32xf32>
    %802 = vector.shape_cast %801 : vector<1x1x32xf32> to vector<32xf32>
    %803 = vector.shape_cast %802 : vector<32xf32> to vector<1x32xf32>
    %804 = vector.broadcast %803 : vector<1x32xf32> to vector<16x32xf32>
    %805 = arith.mulf %800, %804 : vector<16x32xf32>
    %806 = arith.addf %799, %805 : vector<16x32xf32>
    %807 = vector.extract_strided_slice %792 {offsets = [32, 0], sizes = [16, 32], strides = [1, 1]} : vector<64x32xf32> to vector<16x32xf32>
    %808 = vector.extract_strided_slice %321 {offsets = [2, 3, 0], sizes = [1, 1, 32], strides = [1, 1, 1]} : vector<4x4x32xf32> to vector<1x1x32xf32>
    %809 = vector.shape_cast %808 : vector<1x1x32xf32> to vector<32xf32>
    %810 = vector.shape_cast %809 : vector<32xf32> to vector<1x32xf32>
    %811 = vector.broadcast %810 : vector<1x32xf32> to vector<16x32xf32>
    %812 = arith.mulf %807, %811 : vector<16x32xf32>
    %813 = arith.addf %806, %812 : vector<16x32xf32>
    %814 = vector.extract_strided_slice %792 {offsets = [48, 0], sizes = [16, 32], strides = [1, 1]} : vector<64x32xf32> to vector<16x32xf32>
    %815 = vector.extract_strided_slice %321 {offsets = [3, 3, 0], sizes = [1, 1, 32], strides = [1, 1, 1]} : vector<4x4x32xf32> to vector<1x1x32xf32>
    %816 = vector.shape_cast %815 : vector<1x1x32xf32> to vector<32xf32>
    %817 = vector.shape_cast %816 : vector<32xf32> to vector<1x32xf32>
    %818 = vector.broadcast %817 : vector<1x32xf32> to vector<16x32xf32>
    %819 = arith.mulf %814, %818 : vector<16x32xf32>
    %820 = arith.addf %813, %819 : vector<16x32xf32>
    %c192_406 = arith.constant 192 : index
    %c0_407 = arith.constant 0 : index
    %821 = vector.load %arg12[%c192_406, %c0_407] : memref<512x32xf32, #tpu.memory_space<vmem>>, vector<16x32xf32>
    tpu.vector_store %arg12[%c192_406, %c0_407], %820 {strides = array<i32>} : memref<512x32xf32, #tpu.memory_space<vmem>>, vector<16x32xf32>,
    %cst_408 = arith.constant 0.000000e+00 : f32
    %822 = vector.broadcast %cst_408 : f32 to vector<48x32xf32>
    %c208 = arith.constant 208 : index
    %c0_409 = arith.constant 0 : index
    %823 = vector.load %arg12[%c208, %c0_409] : memref<512x32xf32, #tpu.memory_space<vmem>>, vector<48x32xf32>
    tpu.vector_store %arg12[%c208, %c0_409], %822 {strides = array<i32>} : memref<512x32xf32, #tpu.memory_space<vmem>>, vector<48x32xf32>,
    %c1_410 = arith.constant 1 : index
    %c0_411 = arith.constant 0 : index
    %c0_412 = arith.constant 0 : index
    %c0_413 = arith.constant 0 : index
    %824 = vector.load %arg2[%c1_410, %c0_411, %c0_412, %c0_413] : memref<2x4x4x32xf32, #tpu.memory_space<vmem>>, vector<1x4x4x32xf32>
    %825 = vector.shape_cast %824 : vector<1x4x4x32xf32> to vector<4x4x32xf32>
    %cst_414 = arith.constant 0.000000e+00 : f32
    %826 = vector.broadcast %cst_414 : f32 to vector<64x32xf32>
    %c1_415 = arith.constant 1 : index
    %c0_416 = arith.constant 0 : index
    %c0_417 = arith.constant 0 : index
    %827 = vector.load %arg11[%c1_415, %c0_416, %c0_417] : memref<2x256x32xf32, #tpu.memory_space<vmem>>, vector<1x112x32xf32>
    %828 = vector.shape_cast %827 : vector<1x112x32xf32> to vector<112x32xf32>
    %829 = vector.extract_strided_slice %828 {offsets = [0, 0], sizes = [64, 32], strides = [1, 1]} : vector<112x32xf32> to vector<64x32xf32>
    %830 = vector.extract_strided_slice %825 {offsets = [0, 0, 0], sizes = [1, 1, 32], strides = [1, 1, 1]} : vector<4x4x32xf32> to vector<1x1x32xf32>
    %831 = vector.shape_cast %830 : vector<1x1x32xf32> to vector<32xf32>
    %832 = vector.shape_cast %831 : vector<32xf32> to vector<1x32xf32>
    %833 = vector.broadcast %832 : vector<1x32xf32> to vector<64x32xf32>
    %834 = arith.mulf %829, %833 : vector<64x32xf32>
    %835 = arith.addf %826, %834 : vector<64x32xf32>
    %836 = vector.extract_strided_slice %828 {offsets = [16, 0], sizes = [64, 32], strides = [1, 1]} : vector<112x32xf32> to vector<64x32xf32>
    %837 = vector.extract_strided_slice %825 {offsets = [1, 0, 0], sizes = [1, 1, 32], strides = [1, 1, 1]} : vector<4x4x32xf32> to vector<1x1x32xf32>
    %838 = vector.shape_cast %837 : vector<1x1x32xf32> to vector<32xf32>
    %839 = vector.shape_cast %838 : vector<32xf32> to vector<1x32xf32>
    %840 = vector.broadcast %839 : vector<1x32xf32> to vector<64x32xf32>
    %841 = arith.mulf %836, %840 : vector<64x32xf32>
    %842 = arith.addf %835, %841 : vector<64x32xf32>
    %843 = vector.extract_strided_slice %828 {offsets = [32, 0], sizes = [64, 32], strides = [1, 1]} : vector<112x32xf32> to vector<64x32xf32>
    %844 = vector.extract_strided_slice %825 {offsets = [2, 0, 0], sizes = [1, 1, 32], strides = [1, 1, 1]} : vector<4x4x32xf32> to vector<1x1x32xf32>
    %845 = vector.shape_cast %844 : vector<1x1x32xf32> to vector<32xf32>
    %846 = vector.shape_cast %845 : vector<32xf32> to vector<1x32xf32>
    %847 = vector.broadcast %846 : vector<1x32xf32> to vector<64x32xf32>
    %848 = arith.mulf %843, %847 : vector<64x32xf32>
    %849 = arith.addf %842, %848 : vector<64x32xf32>
    %850 = vector.extract_strided_slice %828 {offsets = [48, 0], sizes = [64, 32], strides = [1, 1]} : vector<112x32xf32> to vector<64x32xf32>
    %851 = vector.extract_strided_slice %825 {offsets = [3, 0, 0], sizes = [1, 1, 32], strides = [1, 1, 1]} : vector<4x4x32xf32> to vector<1x1x32xf32>
    %852 = vector.shape_cast %851 : vector<1x1x32xf32> to vector<32xf32>
    %853 = vector.shape_cast %852 : vector<32xf32> to vector<1x32xf32>
    %854 = vector.broadcast %853 : vector<1x32xf32> to vector<64x32xf32>
    %855 = arith.mulf %850, %854 : vector<64x32xf32>
    %856 = arith.addf %849, %855 : vector<64x32xf32>
    %c1_418 = arith.constant 1 : index
    %c0_419 = arith.constant 0 : index
    %c0_420 = arith.constant 0 : index
    %857 = vector.load %arg11[%c1_418, %c0_419, %c0_420] : memref<2x256x32xf32, #tpu.memory_space<vmem>>, vector<1x112x32xf32>
    %858 = vector.shape_cast %857 : vector<1x112x32xf32> to vector<112x32xf32>
    %c111_i32_421 = arith.constant 111 : i32
    %859 = tpu.dynamic_rotate %858 by %c111_i32_421 dim 0 : vector<112x32xf32>, i32 -> vector<112x32xf32>
    %860 = vector.extract_strided_slice %859 {offsets = [0, 0], sizes = [64, 32], strides = [1, 1]} : vector<112x32xf32> to vector<64x32xf32>
    %861 = vector.extract_strided_slice %825 {offsets = [0, 1, 0], sizes = [1, 1, 32], strides = [1, 1, 1]} : vector<4x4x32xf32> to vector<1x1x32xf32>
    %862 = vector.shape_cast %861 : vector<1x1x32xf32> to vector<32xf32>
    %863 = vector.shape_cast %862 : vector<32xf32> to vector<1x32xf32>
    %864 = vector.broadcast %863 : vector<1x32xf32> to vector<64x32xf32>
    %865 = arith.mulf %860, %864 : vector<64x32xf32>
    %866 = arith.addf %856, %865 : vector<64x32xf32>
    %867 = vector.extract_strided_slice %859 {offsets = [16, 0], sizes = [64, 32], strides = [1, 1]} : vector<112x32xf32> to vector<64x32xf32>
    %868 = vector.extract_strided_slice %825 {offsets = [1, 1, 0], sizes = [1, 1, 32], strides = [1, 1, 1]} : vector<4x4x32xf32> to vector<1x1x32xf32>
    %869 = vector.shape_cast %868 : vector<1x1x32xf32> to vector<32xf32>
    %870 = vector.shape_cast %869 : vector<32xf32> to vector<1x32xf32>
    %871 = vector.broadcast %870 : vector<1x32xf32> to vector<64x32xf32>
    %872 = arith.mulf %867, %871 : vector<64x32xf32>
    %873 = arith.addf %866, %872 : vector<64x32xf32>
    %874 = vector.extract_strided_slice %859 {offsets = [32, 0], sizes = [64, 32], strides = [1, 1]} : vector<112x32xf32> to vector<64x32xf32>
    %875 = vector.extract_strided_slice %825 {offsets = [2, 1, 0], sizes = [1, 1, 32], strides = [1, 1, 1]} : vector<4x4x32xf32> to vector<1x1x32xf32>
    %876 = vector.shape_cast %875 : vector<1x1x32xf32> to vector<32xf32>
    %877 = vector.shape_cast %876 : vector<32xf32> to vector<1x32xf32>
    %878 = vector.broadcast %877 : vector<1x32xf32> to vector<64x32xf32>
    %879 = arith.mulf %874, %878 : vector<64x32xf32>
    %880 = arith.addf %873, %879 : vector<64x32xf32>
    %881 = vector.extract_strided_slice %859 {offsets = [48, 0], sizes = [64, 32], strides = [1, 1]} : vector<112x32xf32> to vector<64x32xf32>
    %882 = vector.extract_strided_slice %825 {offsets = [3, 1, 0], sizes = [1, 1, 32], strides = [1, 1, 1]} : vector<4x4x32xf32> to vector<1x1x32xf32>
    %883 = vector.shape_cast %882 : vector<1x1x32xf32> to vector<32xf32>
    %884 = vector.shape_cast %883 : vector<32xf32> to vector<1x32xf32>
    %885 = vector.broadcast %884 : vector<1x32xf32> to vector<64x32xf32>
    %886 = arith.mulf %881, %885 : vector<64x32xf32>
    %887 = arith.addf %880, %886 : vector<64x32xf32>
    %c1_422 = arith.constant 1 : index
    %c0_423 = arith.constant 0 : index
    %c0_424 = arith.constant 0 : index
    %888 = vector.load %arg11[%c1_422, %c0_423, %c0_424] : memref<2x256x32xf32, #tpu.memory_space<vmem>>, vector<1x112x32xf32>
    %889 = vector.shape_cast %888 : vector<1x112x32xf32> to vector<112x32xf32>
    %c110_i32_425 = arith.constant 110 : i32
    %890 = tpu.dynamic_rotate %889 by %c110_i32_425 dim 0 : vector<112x32xf32>, i32 -> vector<112x32xf32>
    %891 = vector.extract_strided_slice %890 {offsets = [0, 0], sizes = [64, 32], strides = [1, 1]} : vector<112x32xf32> to vector<64x32xf32>
    %892 = vector.extract_strided_slice %825 {offsets = [0, 2, 0], sizes = [1, 1, 32], strides = [1, 1, 1]} : vector<4x4x32xf32> to vector<1x1x32xf32>
    %893 = vector.shape_cast %892 : vector<1x1x32xf32> to vector<32xf32>
    %894 = vector.shape_cast %893 : vector<32xf32> to vector<1x32xf32>
    %895 = vector.broadcast %894 : vector<1x32xf32> to vector<64x32xf32>
    %896 = arith.mulf %891, %895 : vector<64x32xf32>
    %897 = arith.addf %887, %896 : vector<64x32xf32>
    %898 = vector.extract_strided_slice %890 {offsets = [16, 0], sizes = [64, 32], strides = [1, 1]} : vector<112x32xf32> to vector<64x32xf32>
    %899 = vector.extract_strided_slice %825 {offsets = [1, 2, 0], sizes = [1, 1, 32], strides = [1, 1, 1]} : vector<4x4x32xf32> to vector<1x1x32xf32>
    %900 = vector.shape_cast %899 : vector<1x1x32xf32> to vector<32xf32>
    %901 = vector.shape_cast %900 : vector<32xf32> to vector<1x32xf32>
    %902 = vector.broadcast %901 : vector<1x32xf32> to vector<64x32xf32>
    %903 = arith.mulf %898, %902 : vector<64x32xf32>
    %904 = arith.addf %897, %903 : vector<64x32xf32>
    %905 = vector.extract_strided_slice %890 {offsets = [32, 0], sizes = [64, 32], strides = [1, 1]} : vector<112x32xf32> to vector<64x32xf32>
    %906 = vector.extract_strided_slice %825 {offsets = [2, 2, 0], sizes = [1, 1, 32], strides = [1, 1, 1]} : vector<4x4x32xf32> to vector<1x1x32xf32>
    %907 = vector.shape_cast %906 : vector<1x1x32xf32> to vector<32xf32>
    %908 = vector.shape_cast %907 : vector<32xf32> to vector<1x32xf32>
    %909 = vector.broadcast %908 : vector<1x32xf32> to vector<64x32xf32>
    %910 = arith.mulf %905, %909 : vector<64x32xf32>
    %911 = arith.addf %904, %910 : vector<64x32xf32>
    %912 = vector.extract_strided_slice %890 {offsets = [48, 0], sizes = [64, 32], strides = [1, 1]} : vector<112x32xf32> to vector<64x32xf32>
    %913 = vector.extract_strided_slice %825 {offsets = [3, 2, 0], sizes = [1, 1, 32], strides = [1, 1, 1]} : vector<4x4x32xf32> to vector<1x1x32xf32>
    %914 = vector.shape_cast %913 : vector<1x1x32xf32> to vector<32xf32>
    %915 = vector.shape_cast %914 : vector<32xf32> to vector<1x32xf32>
    %916 = vector.broadcast %915 : vector<1x32xf32> to vector<64x32xf32>
    %917 = arith.mulf %912, %916 : vector<64x32xf32>
    %918 = arith.addf %911, %917 : vector<64x32xf32>
    %c1_426 = arith.constant 1 : index
    %c0_427 = arith.constant 0 : index
    %c0_428 = arith.constant 0 : index
    %919 = vector.load %arg11[%c1_426, %c0_427, %c0_428] : memref<2x256x32xf32, #tpu.memory_space<vmem>>, vector<1x112x32xf32>
    %920 = vector.shape_cast %919 : vector<1x112x32xf32> to vector<112x32xf32>
    %c109_i32_429 = arith.constant 109 : i32
    %921 = tpu.dynamic_rotate %920 by %c109_i32_429 dim 0 : vector<112x32xf32>, i32 -> vector<112x32xf32>
    %922 = vector.extract_strided_slice %921 {offsets = [0, 0], sizes = [64, 32], strides = [1, 1]} : vector<112x32xf32> to vector<64x32xf32>
    %923 = vector.extract_strided_slice %825 {offsets = [0, 3, 0], sizes = [1, 1, 32], strides = [1, 1, 1]} : vector<4x4x32xf32> to vector<1x1x32xf32>
    %924 = vector.shape_cast %923 : vector<1x1x32xf32> to vector<32xf32>
    %925 = vector.shape_cast %924 : vector<32xf32> to vector<1x32xf32>
    %926 = vector.broadcast %925 : vector<1x32xf32> to vector<64x32xf32>
    %927 = arith.mulf %922, %926 : vector<64x32xf32>
    %928 = arith.addf %918, %927 : vector<64x32xf32>
    %929 = vector.extract_strided_slice %921 {offsets = [16, 0], sizes = [64, 32], strides = [1, 1]} : vector<112x32xf32> to vector<64x32xf32>
    %930 = vector.extract_strided_slice %825 {offsets = [1, 3, 0], sizes = [1, 1, 32], strides = [1, 1, 1]} : vector<4x4x32xf32> to vector<1x1x32xf32>
    %931 = vector.shape_cast %930 : vector<1x1x32xf32> to vector<32xf32>
    %932 = vector.shape_cast %931 : vector<32xf32> to vector<1x32xf32>
    %933 = vector.broadcast %932 : vector<1x32xf32> to vector<64x32xf32>
    %934 = arith.mulf %929, %933 : vector<64x32xf32>
    %935 = arith.addf %928, %934 : vector<64x32xf32>
    %936 = vector.extract_strided_slice %921 {offsets = [32, 0], sizes = [64, 32], strides = [1, 1]} : vector<112x32xf32> to vector<64x32xf32>
    %937 = vector.extract_strided_slice %825 {offsets = [2, 3, 0], sizes = [1, 1, 32], strides = [1, 1, 1]} : vector<4x4x32xf32> to vector<1x1x32xf32>
    %938 = vector.shape_cast %937 : vector<1x1x32xf32> to vector<32xf32>
    %939 = vector.shape_cast %938 : vector<32xf32> to vector<1x32xf32>
    %940 = vector.broadcast %939 : vector<1x32xf32> to vector<64x32xf32>
    %941 = arith.mulf %936, %940 : vector<64x32xf32>
    %942 = arith.addf %935, %941 : vector<64x32xf32>
    %943 = vector.extract_strided_slice %921 {offsets = [48, 0], sizes = [64, 32], strides = [1, 1]} : vector<112x32xf32> to vector<64x32xf32>
    %944 = vector.extract_strided_slice %825 {offsets = [3, 3, 0], sizes = [1, 1, 32], strides = [1, 1, 1]} : vector<4x4x32xf32> to vector<1x1x32xf32>
    %945 = vector.shape_cast %944 : vector<1x1x32xf32> to vector<32xf32>
    %946 = vector.shape_cast %945 : vector<32xf32> to vector<1x32xf32>
    %947 = vector.broadcast %946 : vector<1x32xf32> to vector<64x32xf32>
    %948 = arith.mulf %943, %947 : vector<64x32xf32>
    %949 = arith.addf %942, %948 : vector<64x32xf32>
    %c256 = arith.constant 256 : index
    %c0_430 = arith.constant 0 : index
    %950 = vector.load %arg12[%c256, %c0_430] : memref<512x32xf32, #tpu.memory_space<vmem>>, vector<64x32xf32>
    tpu.vector_store %arg12[%c256, %c0_430], %949 {strides = array<i32>} : memref<512x32xf32, #tpu.memory_space<vmem>>, vector<64x32xf32>,
    %cst_431 = arith.constant 0.000000e+00 : f32
    %951 = vector.broadcast %cst_431 : f32 to vector<64x32xf32>
    %c1_432 = arith.constant 1 : index
    %c64_433 = arith.constant 64 : index
    %c0_434 = arith.constant 0 : index
    %952 = vector.load %arg11[%c1_432, %c64_433, %c0_434] : memref<2x256x32xf32, #tpu.memory_space<vmem>>, vector<1x112x32xf32>
    %953 = vector.shape_cast %952 : vector<1x112x32xf32> to vector<112x32xf32>
    %954 = vector.extract_strided_slice %953 {offsets = [0, 0], sizes = [64, 32], strides = [1, 1]} : vector<112x32xf32> to vector<64x32xf32>
    %955 = vector.extract_strided_slice %825 {offsets = [0, 0, 0], sizes = [1, 1, 32], strides = [1, 1, 1]} : vector<4x4x32xf32> to vector<1x1x32xf32>
    %956 = vector.shape_cast %955 : vector<1x1x32xf32> to vector<32xf32>
    %957 = vector.shape_cast %956 : vector<32xf32> to vector<1x32xf32>
    %958 = vector.broadcast %957 : vector<1x32xf32> to vector<64x32xf32>
    %959 = arith.mulf %954, %958 : vector<64x32xf32>
    %960 = arith.addf %951, %959 : vector<64x32xf32>
    %961 = vector.extract_strided_slice %953 {offsets = [16, 0], sizes = [64, 32], strides = [1, 1]} : vector<112x32xf32> to vector<64x32xf32>
    %962 = vector.extract_strided_slice %825 {offsets = [1, 0, 0], sizes = [1, 1, 32], strides = [1, 1, 1]} : vector<4x4x32xf32> to vector<1x1x32xf32>
    %963 = vector.shape_cast %962 : vector<1x1x32xf32> to vector<32xf32>
    %964 = vector.shape_cast %963 : vector<32xf32> to vector<1x32xf32>
    %965 = vector.broadcast %964 : vector<1x32xf32> to vector<64x32xf32>
    %966 = arith.mulf %961, %965 : vector<64x32xf32>
    %967 = arith.addf %960, %966 : vector<64x32xf32>
    %968 = vector.extract_strided_slice %953 {offsets = [32, 0], sizes = [64, 32], strides = [1, 1]} : vector<112x32xf32> to vector<64x32xf32>
    %969 = vector.extract_strided_slice %825 {offsets = [2, 0, 0], sizes = [1, 1, 32], strides = [1, 1, 1]} : vector<4x4x32xf32> to vector<1x1x32xf32>
    %970 = vector.shape_cast %969 : vector<1x1x32xf32> to vector<32xf32>
    %971 = vector.shape_cast %970 : vector<32xf32> to vector<1x32xf32>
    %972 = vector.broadcast %971 : vector<1x32xf32> to vector<64x32xf32>
    %973 = arith.mulf %968, %972 : vector<64x32xf32>
    %974 = arith.addf %967, %973 : vector<64x32xf32>
    %975 = vector.extract_strided_slice %953 {offsets = [48, 0], sizes = [64, 32], strides = [1, 1]} : vector<112x32xf32> to vector<64x32xf32>
    %976 = vector.extract_strided_slice %825 {offsets = [3, 0, 0], sizes = [1, 1, 32], strides = [1, 1, 1]} : vector<4x4x32xf32> to vector<1x1x32xf32>
    %977 = vector.shape_cast %976 : vector<1x1x32xf32> to vector<32xf32>
    %978 = vector.shape_cast %977 : vector<32xf32> to vector<1x32xf32>
    %979 = vector.broadcast %978 : vector<1x32xf32> to vector<64x32xf32>
    %980 = arith.mulf %975, %979 : vector<64x32xf32>
    %981 = arith.addf %974, %980 : vector<64x32xf32>
    %c1_435 = arith.constant 1 : index
    %c64_436 = arith.constant 64 : index
    %c0_437 = arith.constant 0 : index
    %982 = vector.load %arg11[%c1_435, %c64_436, %c0_437] : memref<2x256x32xf32, #tpu.memory_space<vmem>>, vector<1x112x32xf32>
    %983 = vector.shape_cast %982 : vector<1x112x32xf32> to vector<112x32xf32>
    %c111_i32_438 = arith.constant 111 : i32
    %984 = tpu.dynamic_rotate %983 by %c111_i32_438 dim 0 : vector<112x32xf32>, i32 -> vector<112x32xf32>
    %985 = vector.extract_strided_slice %984 {offsets = [0, 0], sizes = [64, 32], strides = [1, 1]} : vector<112x32xf32> to vector<64x32xf32>
    %986 = vector.extract_strided_slice %825 {offsets = [0, 1, 0], sizes = [1, 1, 32], strides = [1, 1, 1]} : vector<4x4x32xf32> to vector<1x1x32xf32>
    %987 = vector.shape_cast %986 : vector<1x1x32xf32> to vector<32xf32>
    %988 = vector.shape_cast %987 : vector<32xf32> to vector<1x32xf32>
    %989 = vector.broadcast %988 : vector<1x32xf32> to vector<64x32xf32>
    %990 = arith.mulf %985, %989 : vector<64x32xf32>
    %991 = arith.addf %981, %990 : vector<64x32xf32>
    %992 = vector.extract_strided_slice %984 {offsets = [16, 0], sizes = [64, 32], strides = [1, 1]} : vector<112x32xf32> to vector<64x32xf32>
    %993 = vector.extract_strided_slice %825 {offsets = [1, 1, 0], sizes = [1, 1, 32], strides = [1, 1, 1]} : vector<4x4x32xf32> to vector<1x1x32xf32>
    %994 = vector.shape_cast %993 : vector<1x1x32xf32> to vector<32xf32>
    %995 = vector.shape_cast %994 : vector<32xf32> to vector<1x32xf32>
    %996 = vector.broadcast %995 : vector<1x32xf32> to vector<64x32xf32>
    %997 = arith.mulf %992, %996 : vector<64x32xf32>
    %998 = arith.addf %991, %997 : vector<64x32xf32>
    %999 = vector.extract_strided_slice %984 {offsets = [32, 0], sizes = [64, 32], strides = [1, 1]} : vector<112x32xf32> to vector<64x32xf32>
    %1000 = vector.extract_strided_slice %825 {offsets = [2, 1, 0], sizes = [1, 1, 32], strides = [1, 1, 1]} : vector<4x4x32xf32> to vector<1x1x32xf32>
    %1001 = vector.shape_cast %1000 : vector<1x1x32xf32> to vector<32xf32>
    %1002 = vector.shape_cast %1001 : vector<32xf32> to vector<1x32xf32>
    %1003 = vector.broadcast %1002 : vector<1x32xf32> to vector<64x32xf32>
    %1004 = arith.mulf %999, %1003 : vector<64x32xf32>
    %1005 = arith.addf %998, %1004 : vector<64x32xf32>
    %1006 = vector.extract_strided_slice %984 {offsets = [48, 0], sizes = [64, 32], strides = [1, 1]} : vector<112x32xf32> to vector<64x32xf32>
    %1007 = vector.extract_strided_slice %825 {offsets = [3, 1, 0], sizes = [1, 1, 32], strides = [1, 1, 1]} : vector<4x4x32xf32> to vector<1x1x32xf32>
    %1008 = vector.shape_cast %1007 : vector<1x1x32xf32> to vector<32xf32>
    %1009 = vector.shape_cast %1008 : vector<32xf32> to vector<1x32xf32>
    %1010 = vector.broadcast %1009 : vector<1x32xf32> to vector<64x32xf32>
    %1011 = arith.mulf %1006, %1010 : vector<64x32xf32>
    %1012 = arith.addf %1005, %1011 : vector<64x32xf32>
    %c1_439 = arith.constant 1 : index
    %c64_440 = arith.constant 64 : index
    %c0_441 = arith.constant 0 : index
    %1013 = vector.load %arg11[%c1_439, %c64_440, %c0_441] : memref<2x256x32xf32, #tpu.memory_space<vmem>>, vector<1x112x32xf32>
    %1014 = vector.shape_cast %1013 : vector<1x112x32xf32> to vector<112x32xf32>
    %c110_i32_442 = arith.constant 110 : i32
    %1015 = tpu.dynamic_rotate %1014 by %c110_i32_442 dim 0 : vector<112x32xf32>, i32 -> vector<112x32xf32>
    %1016 = vector.extract_strided_slice %1015 {offsets = [0, 0], sizes = [64, 32], strides = [1, 1]} : vector<112x32xf32> to vector<64x32xf32>
    %1017 = vector.extract_strided_slice %825 {offsets = [0, 2, 0], sizes = [1, 1, 32], strides = [1, 1, 1]} : vector<4x4x32xf32> to vector<1x1x32xf32>
    %1018 = vector.shape_cast %1017 : vector<1x1x32xf32> to vector<32xf32>
    %1019 = vector.shape_cast %1018 : vector<32xf32> to vector<1x32xf32>
    %1020 = vector.broadcast %1019 : vector<1x32xf32> to vector<64x32xf32>
    %1021 = arith.mulf %1016, %1020 : vector<64x32xf32>
    %1022 = arith.addf %1012, %1021 : vector<64x32xf32>
    %1023 = vector.extract_strided_slice %1015 {offsets = [16, 0], sizes = [64, 32], strides = [1, 1]} : vector<112x32xf32> to vector<64x32xf32>
    %1024 = vector.extract_strided_slice %825 {offsets = [1, 2, 0], sizes = [1, 1, 32], strides = [1, 1, 1]} : vector<4x4x32xf32> to vector<1x1x32xf32>
    %1025 = vector.shape_cast %1024 : vector<1x1x32xf32> to vector<32xf32>
    %1026 = vector.shape_cast %1025 : vector<32xf32> to vector<1x32xf32>
    %1027 = vector.broadcast %1026 : vector<1x32xf32> to vector<64x32xf32>
    %1028 = arith.mulf %1023, %1027 : vector<64x32xf32>
    %1029 = arith.addf %1022, %1028 : vector<64x32xf32>
    %1030 = vector.extract_strided_slice %1015 {offsets = [32, 0], sizes = [64, 32], strides = [1, 1]} : vector<112x32xf32> to vector<64x32xf32>
    %1031 = vector.extract_strided_slice %825 {offsets = [2, 2, 0], sizes = [1, 1, 32], strides = [1, 1, 1]} : vector<4x4x32xf32> to vector<1x1x32xf32>
    %1032 = vector.shape_cast %1031 : vector<1x1x32xf32> to vector<32xf32>
    %1033 = vector.shape_cast %1032 : vector<32xf32> to vector<1x32xf32>
    %1034 = vector.broadcast %1033 : vector<1x32xf32> to vector<64x32xf32>
    %1035 = arith.mulf %1030, %1034 : vector<64x32xf32>
    %1036 = arith.addf %1029, %1035 : vector<64x32xf32>
    %1037 = vector.extract_strided_slice %1015 {offsets = [48, 0], sizes = [64, 32], strides = [1, 1]} : vector<112x32xf32> to vector<64x32xf32>
    %1038 = vector.extract_strided_slice %825 {offsets = [3, 2, 0], sizes = [1, 1, 32], strides = [1, 1, 1]} : vector<4x4x32xf32> to vector<1x1x32xf32>
    %1039 = vector.shape_cast %1038 : vector<1x1x32xf32> to vector<32xf32>
    %1040 = vector.shape_cast %1039 : vector<32xf32> to vector<1x32xf32>
    %1041 = vector.broadcast %1040 : vector<1x32xf32> to vector<64x32xf32>
    %1042 = arith.mulf %1037, %1041 : vector<64x32xf32>
    %1043 = arith.addf %1036, %1042 : vector<64x32xf32>
    %c1_443 = arith.constant 1 : index
    %c64_444 = arith.constant 64 : index
    %c0_445 = arith.constant 0 : index
    %1044 = vector.load %arg11[%c1_443, %c64_444, %c0_445] : memref<2x256x32xf32, #tpu.memory_space<vmem>>, vector<1x112x32xf32>
    %1045 = vector.shape_cast %1044 : vector<1x112x32xf32> to vector<112x32xf32>
    %c109_i32_446 = arith.constant 109 : i32
    %1046 = tpu.dynamic_rotate %1045 by %c109_i32_446 dim 0 : vector<112x32xf32>, i32 -> vector<112x32xf32>
    %1047 = vector.extract_strided_slice %1046 {offsets = [0, 0], sizes = [64, 32], strides = [1, 1]} : vector<112x32xf32> to vector<64x32xf32>
    %1048 = vector.extract_strided_slice %825 {offsets = [0, 3, 0], sizes = [1, 1, 32], strides = [1, 1, 1]} : vector<4x4x32xf32> to vector<1x1x32xf32>
    %1049 = vector.shape_cast %1048 : vector<1x1x32xf32> to vector<32xf32>
    %1050 = vector.shape_cast %1049 : vector<32xf32> to vector<1x32xf32>
    %1051 = vector.broadcast %1050 : vector<1x32xf32> to vector<64x32xf32>
    %1052 = arith.mulf %1047, %1051 : vector<64x32xf32>
    %1053 = arith.addf %1043, %1052 : vector<64x32xf32>
    %1054 = vector.extract_strided_slice %1046 {offsets = [16, 0], sizes = [64, 32], strides = [1, 1]} : vector<112x32xf32> to vector<64x32xf32>
    %1055 = vector.extract_strided_slice %825 {offsets = [1, 3, 0], sizes = [1, 1, 32], strides = [1, 1, 1]} : vector<4x4x32xf32> to vector<1x1x32xf32>
    %1056 = vector.shape_cast %1055 : vector<1x1x32xf32> to vector<32xf32>
    %1057 = vector.shape_cast %1056 : vector<32xf32> to vector<1x32xf32>
    %1058 = vector.broadcast %1057 : vector<1x32xf32> to vector<64x32xf32>
    %1059 = arith.mulf %1054, %1058 : vector<64x32xf32>
    %1060 = arith.addf %1053, %1059 : vector<64x32xf32>
    %1061 = vector.extract_strided_slice %1046 {offsets = [32, 0], sizes = [64, 32], strides = [1, 1]} : vector<112x32xf32> to vector<64x32xf32>
    %1062 = vector.extract_strided_slice %825 {offsets = [2, 3, 0], sizes = [1, 1, 32], strides = [1, 1, 1]} : vector<4x4x32xf32> to vector<1x1x32xf32>
    %1063 = vector.shape_cast %1062 : vector<1x1x32xf32> to vector<32xf32>
    %1064 = vector.shape_cast %1063 : vector<32xf32> to vector<1x32xf32>
    %1065 = vector.broadcast %1064 : vector<1x32xf32> to vector<64x32xf32>
    %1066 = arith.mulf %1061, %1065 : vector<64x32xf32>
    %1067 = arith.addf %1060, %1066 : vector<64x32xf32>
    %1068 = vector.extract_strided_slice %1046 {offsets = [48, 0], sizes = [64, 32], strides = [1, 1]} : vector<112x32xf32> to vector<64x32xf32>
    %1069 = vector.extract_strided_slice %825 {offsets = [3, 3, 0], sizes = [1, 1, 32], strides = [1, 1, 1]} : vector<4x4x32xf32> to vector<1x1x32xf32>
    %1070 = vector.shape_cast %1069 : vector<1x1x32xf32> to vector<32xf32>
    %1071 = vector.shape_cast %1070 : vector<32xf32> to vector<1x32xf32>
    %1072 = vector.broadcast %1071 : vector<1x32xf32> to vector<64x32xf32>
    %1073 = arith.mulf %1068, %1072 : vector<64x32xf32>
    %1074 = arith.addf %1067, %1073 : vector<64x32xf32>
    %c320 = arith.constant 320 : index
    %c0_447 = arith.constant 0 : index
    %1075 = vector.load %arg12[%c320, %c0_447] : memref<512x32xf32, #tpu.memory_space<vmem>>, vector<64x32xf32>
    tpu.vector_store %arg12[%c320, %c0_447], %1074 {strides = array<i32>} : memref<512x32xf32, #tpu.memory_space<vmem>>, vector<64x32xf32>,
    %cst_448 = arith.constant 0.000000e+00 : f32
    %1076 = vector.broadcast %cst_448 : f32 to vector<64x32xf32>
    %c1_449 = arith.constant 1 : index
    %c128_450 = arith.constant 128 : index
    %c0_451 = arith.constant 0 : index
    %1077 = vector.load %arg11[%c1_449, %c128_450, %c0_451] : memref<2x256x32xf32, #tpu.memory_space<vmem>>, vector<1x112x32xf32>
    %1078 = vector.shape_cast %1077 : vector<1x112x32xf32> to vector<112x32xf32>
    %1079 = vector.extract_strided_slice %1078 {offsets = [0, 0], sizes = [64, 32], strides = [1, 1]} : vector<112x32xf32> to vector<64x32xf32>
    %1080 = vector.extract_strided_slice %825 {offsets = [0, 0, 0], sizes = [1, 1, 32], strides = [1, 1, 1]} : vector<4x4x32xf32> to vector<1x1x32xf32>
    %1081 = vector.shape_cast %1080 : vector<1x1x32xf32> to vector<32xf32>
    %1082 = vector.shape_cast %1081 : vector<32xf32> to vector<1x32xf32>
    %1083 = vector.broadcast %1082 : vector<1x32xf32> to vector<64x32xf32>
    %1084 = arith.mulf %1079, %1083 : vector<64x32xf32>
    %1085 = arith.addf %1076, %1084 : vector<64x32xf32>
    %1086 = vector.extract_strided_slice %1078 {offsets = [16, 0], sizes = [64, 32], strides = [1, 1]} : vector<112x32xf32> to vector<64x32xf32>
    %1087 = vector.extract_strided_slice %825 {offsets = [1, 0, 0], sizes = [1, 1, 32], strides = [1, 1, 1]} : vector<4x4x32xf32> to vector<1x1x32xf32>
    %1088 = vector.shape_cast %1087 : vector<1x1x32xf32> to vector<32xf32>
    %1089 = vector.shape_cast %1088 : vector<32xf32> to vector<1x32xf32>
    %1090 = vector.broadcast %1089 : vector<1x32xf32> to vector<64x32xf32>
    %1091 = arith.mulf %1086, %1090 : vector<64x32xf32>
    %1092 = arith.addf %1085, %1091 : vector<64x32xf32>
    %1093 = vector.extract_strided_slice %1078 {offsets = [32, 0], sizes = [64, 32], strides = [1, 1]} : vector<112x32xf32> to vector<64x32xf32>
    %1094 = vector.extract_strided_slice %825 {offsets = [2, 0, 0], sizes = [1, 1, 32], strides = [1, 1, 1]} : vector<4x4x32xf32> to vector<1x1x32xf32>
    %1095 = vector.shape_cast %1094 : vector<1x1x32xf32> to vector<32xf32>
    %1096 = vector.shape_cast %1095 : vector<32xf32> to vector<1x32xf32>
    %1097 = vector.broadcast %1096 : vector<1x32xf32> to vector<64x32xf32>
    %1098 = arith.mulf %1093, %1097 : vector<64x32xf32>
    %1099 = arith.addf %1092, %1098 : vector<64x32xf32>
    %1100 = vector.extract_strided_slice %1078 {offsets = [48, 0], sizes = [64, 32], strides = [1, 1]} : vector<112x32xf32> to vector<64x32xf32>
    %1101 = vector.extract_strided_slice %825 {offsets = [3, 0, 0], sizes = [1, 1, 32], strides = [1, 1, 1]} : vector<4x4x32xf32> to vector<1x1x32xf32>
    %1102 = vector.shape_cast %1101 : vector<1x1x32xf32> to vector<32xf32>
    %1103 = vector.shape_cast %1102 : vector<32xf32> to vector<1x32xf32>
    %1104 = vector.broadcast %1103 : vector<1x32xf32> to vector<64x32xf32>
    %1105 = arith.mulf %1100, %1104 : vector<64x32xf32>
    %1106 = arith.addf %1099, %1105 : vector<64x32xf32>
    %c1_452 = arith.constant 1 : index
    %c128_453 = arith.constant 128 : index
    %c0_454 = arith.constant 0 : index
    %1107 = vector.load %arg11[%c1_452, %c128_453, %c0_454] : memref<2x256x32xf32, #tpu.memory_space<vmem>>, vector<1x112x32xf32>
    %1108 = vector.shape_cast %1107 : vector<1x112x32xf32> to vector<112x32xf32>
    %c111_i32_455 = arith.constant 111 : i32
    %1109 = tpu.dynamic_rotate %1108 by %c111_i32_455 dim 0 : vector<112x32xf32>, i32 -> vector<112x32xf32>
    %1110 = vector.extract_strided_slice %1109 {offsets = [0, 0], sizes = [64, 32], strides = [1, 1]} : vector<112x32xf32> to vector<64x32xf32>
    %1111 = vector.extract_strided_slice %825 {offsets = [0, 1, 0], sizes = [1, 1, 32], strides = [1, 1, 1]} : vector<4x4x32xf32> to vector<1x1x32xf32>
    %1112 = vector.shape_cast %1111 : vector<1x1x32xf32> to vector<32xf32>
    %1113 = vector.shape_cast %1112 : vector<32xf32> to vector<1x32xf32>
    %1114 = vector.broadcast %1113 : vector<1x32xf32> to vector<64x32xf32>
    %1115 = arith.mulf %1110, %1114 : vector<64x32xf32>
    %1116 = arith.addf %1106, %1115 : vector<64x32xf32>
    %1117 = vector.extract_strided_slice %1109 {offsets = [16, 0], sizes = [64, 32], strides = [1, 1]} : vector<112x32xf32> to vector<64x32xf32>
    %1118 = vector.extract_strided_slice %825 {offsets = [1, 1, 0], sizes = [1, 1, 32], strides = [1, 1, 1]} : vector<4x4x32xf32> to vector<1x1x32xf32>
    %1119 = vector.shape_cast %1118 : vector<1x1x32xf32> to vector<32xf32>
    %1120 = vector.shape_cast %1119 : vector<32xf32> to vector<1x32xf32>
    %1121 = vector.broadcast %1120 : vector<1x32xf32> to vector<64x32xf32>
    %1122 = arith.mulf %1117, %1121 : vector<64x32xf32>
    %1123 = arith.addf %1116, %1122 : vector<64x32xf32>
    %1124 = vector.extract_strided_slice %1109 {offsets = [32, 0], sizes = [64, 32], strides = [1, 1]} : vector<112x32xf32> to vector<64x32xf32>
    %1125 = vector.extract_strided_slice %825 {offsets = [2, 1, 0], sizes = [1, 1, 32], strides = [1, 1, 1]} : vector<4x4x32xf32> to vector<1x1x32xf32>
    %1126 = vector.shape_cast %1125 : vector<1x1x32xf32> to vector<32xf32>
    %1127 = vector.shape_cast %1126 : vector<32xf32> to vector<1x32xf32>
    %1128 = vector.broadcast %1127 : vector<1x32xf32> to vector<64x32xf32>
    %1129 = arith.mulf %1124, %1128 : vector<64x32xf32>
    %1130 = arith.addf %1123, %1129 : vector<64x32xf32>
    %1131 = vector.extract_strided_slice %1109 {offsets = [48, 0], sizes = [64, 32], strides = [1, 1]} : vector<112x32xf32> to vector<64x32xf32>
    %1132 = vector.extract_strided_slice %825 {offsets = [3, 1, 0], sizes = [1, 1, 32], strides = [1, 1, 1]} : vector<4x4x32xf32> to vector<1x1x32xf32>
    %1133 = vector.shape_cast %1132 : vector<1x1x32xf32> to vector<32xf32>
    %1134 = vector.shape_cast %1133 : vector<32xf32> to vector<1x32xf32>
    %1135 = vector.broadcast %1134 : vector<1x32xf32> to vector<64x32xf32>
    %1136 = arith.mulf %1131, %1135 : vector<64x32xf32>
    %1137 = arith.addf %1130, %1136 : vector<64x32xf32>
    %c1_456 = arith.constant 1 : index
    %c128_457 = arith.constant 128 : index
    %c0_458 = arith.constant 0 : index
    %1138 = vector.load %arg11[%c1_456, %c128_457, %c0_458] : memref<2x256x32xf32, #tpu.memory_space<vmem>>, vector<1x112x32xf32>
    %1139 = vector.shape_cast %1138 : vector<1x112x32xf32> to vector<112x32xf32>
    %c110_i32_459 = arith.constant 110 : i32
    %1140 = tpu.dynamic_rotate %1139 by %c110_i32_459 dim 0 : vector<112x32xf32>, i32 -> vector<112x32xf32>
    %1141 = vector.extract_strided_slice %1140 {offsets = [0, 0], sizes = [64, 32], strides = [1, 1]} : vector<112x32xf32> to vector<64x32xf32>
    %1142 = vector.extract_strided_slice %825 {offsets = [0, 2, 0], sizes = [1, 1, 32], strides = [1, 1, 1]} : vector<4x4x32xf32> to vector<1x1x32xf32>
    %1143 = vector.shape_cast %1142 : vector<1x1x32xf32> to vector<32xf32>
    %1144 = vector.shape_cast %1143 : vector<32xf32> to vector<1x32xf32>
    %1145 = vector.broadcast %1144 : vector<1x32xf32> to vector<64x32xf32>
    %1146 = arith.mulf %1141, %1145 : vector<64x32xf32>
    %1147 = arith.addf %1137, %1146 : vector<64x32xf32>
    %1148 = vector.extract_strided_slice %1140 {offsets = [16, 0], sizes = [64, 32], strides = [1, 1]} : vector<112x32xf32> to vector<64x32xf32>
    %1149 = vector.extract_strided_slice %825 {offsets = [1, 2, 0], sizes = [1, 1, 32], strides = [1, 1, 1]} : vector<4x4x32xf32> to vector<1x1x32xf32>
    %1150 = vector.shape_cast %1149 : vector<1x1x32xf32> to vector<32xf32>
    %1151 = vector.shape_cast %1150 : vector<32xf32> to vector<1x32xf32>
    %1152 = vector.broadcast %1151 : vector<1x32xf32> to vector<64x32xf32>
    %1153 = arith.mulf %1148, %1152 : vector<64x32xf32>
    %1154 = arith.addf %1147, %1153 : vector<64x32xf32>
    %1155 = vector.extract_strided_slice %1140 {offsets = [32, 0], sizes = [64, 32], strides = [1, 1]} : vector<112x32xf32> to vector<64x32xf32>
    %1156 = vector.extract_strided_slice %825 {offsets = [2, 2, 0], sizes = [1, 1, 32], strides = [1, 1, 1]} : vector<4x4x32xf32> to vector<1x1x32xf32>
    %1157 = vector.shape_cast %1156 : vector<1x1x32xf32> to vector<32xf32>
    %1158 = vector.shape_cast %1157 : vector<32xf32> to vector<1x32xf32>
    %1159 = vector.broadcast %1158 : vector<1x32xf32> to vector<64x32xf32>
    %1160 = arith.mulf %1155, %1159 : vector<64x32xf32>
    %1161 = arith.addf %1154, %1160 : vector<64x32xf32>
    %1162 = vector.extract_strided_slice %1140 {offsets = [48, 0], sizes = [64, 32], strides = [1, 1]} : vector<112x32xf32> to vector<64x32xf32>
    %1163 = vector.extract_strided_slice %825 {offsets = [3, 2, 0], sizes = [1, 1, 32], strides = [1, 1, 1]} : vector<4x4x32xf32> to vector<1x1x32xf32>
    %1164 = vector.shape_cast %1163 : vector<1x1x32xf32> to vector<32xf32>
    %1165 = vector.shape_cast %1164 : vector<32xf32> to vector<1x32xf32>
    %1166 = vector.broadcast %1165 : vector<1x32xf32> to vector<64x32xf32>
    %1167 = arith.mulf %1162, %1166 : vector<64x32xf32>
    %1168 = arith.addf %1161, %1167 : vector<64x32xf32>
    %c1_460 = arith.constant 1 : index
    %c128_461 = arith.constant 128 : index
    %c0_462 = arith.constant 0 : index
    %1169 = vector.load %arg11[%c1_460, %c128_461, %c0_462] : memref<2x256x32xf32, #tpu.memory_space<vmem>>, vector<1x112x32xf32>
    %1170 = vector.shape_cast %1169 : vector<1x112x32xf32> to vector<112x32xf32>
    %c109_i32_463 = arith.constant 109 : i32
    %1171 = tpu.dynamic_rotate %1170 by %c109_i32_463 dim 0 : vector<112x32xf32>, i32 -> vector<112x32xf32>
    %1172 = vector.extract_strided_slice %1171 {offsets = [0, 0], sizes = [64, 32], strides = [1, 1]} : vector<112x32xf32> to vector<64x32xf32>
    %1173 = vector.extract_strided_slice %825 {offsets = [0, 3, 0], sizes = [1, 1, 32], strides = [1, 1, 1]} : vector<4x4x32xf32> to vector<1x1x32xf32>
    %1174 = vector.shape_cast %1173 : vector<1x1x32xf32> to vector<32xf32>
    %1175 = vector.shape_cast %1174 : vector<32xf32> to vector<1x32xf32>
    %1176 = vector.broadcast %1175 : vector<1x32xf32> to vector<64x32xf32>
    %1177 = arith.mulf %1172, %1176 : vector<64x32xf32>
    %1178 = arith.addf %1168, %1177 : vector<64x32xf32>
    %1179 = vector.extract_strided_slice %1171 {offsets = [16, 0], sizes = [64, 32], strides = [1, 1]} : vector<112x32xf32> to vector<64x32xf32>
    %1180 = vector.extract_strided_slice %825 {offsets = [1, 3, 0], sizes = [1, 1, 32], strides = [1, 1, 1]} : vector<4x4x32xf32> to vector<1x1x32xf32>
    %1181 = vector.shape_cast %1180 : vector<1x1x32xf32> to vector<32xf32>
    %1182 = vector.shape_cast %1181 : vector<32xf32> to vector<1x32xf32>
    %1183 = vector.broadcast %1182 : vector<1x32xf32> to vector<64x32xf32>
    %1184 = arith.mulf %1179, %1183 : vector<64x32xf32>
    %1185 = arith.addf %1178, %1184 : vector<64x32xf32>
    %1186 = vector.extract_strided_slice %1171 {offsets = [32, 0], sizes = [64, 32], strides = [1, 1]} : vector<112x32xf32> to vector<64x32xf32>
    %1187 = vector.extract_strided_slice %825 {offsets = [2, 3, 0], sizes = [1, 1, 32], strides = [1, 1, 1]} : vector<4x4x32xf32> to vector<1x1x32xf32>
    %1188 = vector.shape_cast %1187 : vector<1x1x32xf32> to vector<32xf32>
    %1189 = vector.shape_cast %1188 : vector<32xf32> to vector<1x32xf32>
    %1190 = vector.broadcast %1189 : vector<1x32xf32> to vector<64x32xf32>
    %1191 = arith.mulf %1186, %1190 : vector<64x32xf32>
    %1192 = arith.addf %1185, %1191 : vector<64x32xf32>
    %1193 = vector.extract_strided_slice %1171 {offsets = [48, 0], sizes = [64, 32], strides = [1, 1]} : vector<112x32xf32> to vector<64x32xf32>
    %1194 = vector.extract_strided_slice %825 {offsets = [3, 3, 0], sizes = [1, 1, 32], strides = [1, 1, 1]} : vector<4x4x32xf32> to vector<1x1x32xf32>
    %1195 = vector.shape_cast %1194 : vector<1x1x32xf32> to vector<32xf32>
    %1196 = vector.shape_cast %1195 : vector<32xf32> to vector<1x32xf32>
    %1197 = vector.broadcast %1196 : vector<1x32xf32> to vector<64x32xf32>
    %1198 = arith.mulf %1193, %1197 : vector<64x32xf32>
    %1199 = arith.addf %1192, %1198 : vector<64x32xf32>
    %c384 = arith.constant 384 : index
    %c0_464 = arith.constant 0 : index
    %1200 = vector.load %arg12[%c384, %c0_464] : memref<512x32xf32, #tpu.memory_space<vmem>>, vector<64x32xf32>
    tpu.vector_store %arg12[%c384, %c0_464], %1199 {strides = array<i32>} : memref<512x32xf32, #tpu.memory_space<vmem>>, vector<64x32xf32>,
    %cst_465 = arith.constant 0.000000e+00 : f32
    %1201 = vector.broadcast %cst_465 : f32 to vector<16x32xf32>
    %c1_466 = arith.constant 1 : index
    %c192_467 = arith.constant 192 : index
    %c0_468 = arith.constant 0 : index
    %1202 = vector.load %arg11[%c1_466, %c192_467, %c0_468] : memref<2x256x32xf32, #tpu.memory_space<vmem>>, vector<1x64x32xf32>
    %1203 = vector.shape_cast %1202 : vector<1x64x32xf32> to vector<64x32xf32>
    %1204 = vector.extract_strided_slice %1203 {offsets = [0, 0], sizes = [16, 32], strides = [1, 1]} : vector<64x32xf32> to vector<16x32xf32>
    %1205 = vector.extract_strided_slice %825 {offsets = [0, 0, 0], sizes = [1, 1, 32], strides = [1, 1, 1]} : vector<4x4x32xf32> to vector<1x1x32xf32>
    %1206 = vector.shape_cast %1205 : vector<1x1x32xf32> to vector<32xf32>
    %1207 = vector.shape_cast %1206 : vector<32xf32> to vector<1x32xf32>
    %1208 = vector.broadcast %1207 : vector<1x32xf32> to vector<16x32xf32>
    %1209 = arith.mulf %1204, %1208 : vector<16x32xf32>
    %1210 = arith.addf %1201, %1209 : vector<16x32xf32>
    %1211 = vector.extract_strided_slice %1203 {offsets = [16, 0], sizes = [16, 32], strides = [1, 1]} : vector<64x32xf32> to vector<16x32xf32>
    %1212 = vector.extract_strided_slice %825 {offsets = [1, 0, 0], sizes = [1, 1, 32], strides = [1, 1, 1]} : vector<4x4x32xf32> to vector<1x1x32xf32>
    %1213 = vector.shape_cast %1212 : vector<1x1x32xf32> to vector<32xf32>
    %1214 = vector.shape_cast %1213 : vector<32xf32> to vector<1x32xf32>
    %1215 = vector.broadcast %1214 : vector<1x32xf32> to vector<16x32xf32>
    %1216 = arith.mulf %1211, %1215 : vector<16x32xf32>
    %1217 = arith.addf %1210, %1216 : vector<16x32xf32>
    %1218 = vector.extract_strided_slice %1203 {offsets = [32, 0], sizes = [16, 32], strides = [1, 1]} : vector<64x32xf32> to vector<16x32xf32>
    %1219 = vector.extract_strided_slice %825 {offsets = [2, 0, 0], sizes = [1, 1, 32], strides = [1, 1, 1]} : vector<4x4x32xf32> to vector<1x1x32xf32>
    %1220 = vector.shape_cast %1219 : vector<1x1x32xf32> to vector<32xf32>
    %1221 = vector.shape_cast %1220 : vector<32xf32> to vector<1x32xf32>
    %1222 = vector.broadcast %1221 : vector<1x32xf32> to vector<16x32xf32>
    %1223 = arith.mulf %1218, %1222 : vector<16x32xf32>
    %1224 = arith.addf %1217, %1223 : vector<16x32xf32>
    %1225 = vector.extract_strided_slice %1203 {offsets = [48, 0], sizes = [16, 32], strides = [1, 1]} : vector<64x32xf32> to vector<16x32xf32>
    %1226 = vector.extract_strided_slice %825 {offsets = [3, 0, 0], sizes = [1, 1, 32], strides = [1, 1, 1]} : vector<4x4x32xf32> to vector<1x1x32xf32>
    %1227 = vector.shape_cast %1226 : vector<1x1x32xf32> to vector<32xf32>
    %1228 = vector.shape_cast %1227 : vector<32xf32> to vector<1x32xf32>
    %1229 = vector.broadcast %1228 : vector<1x32xf32> to vector<16x32xf32>
    %1230 = arith.mulf %1225, %1229 : vector<16x32xf32>
    %1231 = arith.addf %1224, %1230 : vector<16x32xf32>
    %c1_469 = arith.constant 1 : index
    %c192_470 = arith.constant 192 : index
    %c0_471 = arith.constant 0 : index
    %1232 = vector.load %arg11[%c1_469, %c192_470, %c0_471] : memref<2x256x32xf32, #tpu.memory_space<vmem>>, vector<1x64x32xf32>
    %1233 = vector.shape_cast %1232 : vector<1x64x32xf32> to vector<64x32xf32>
    %c63_i32_472 = arith.constant 63 : i32
    %1234 = tpu.dynamic_rotate %1233 by %c63_i32_472 dim 0 : vector<64x32xf32>, i32 -> vector<64x32xf32>
    %1235 = vector.extract_strided_slice %1234 {offsets = [0, 0], sizes = [16, 32], strides = [1, 1]} : vector<64x32xf32> to vector<16x32xf32>
    %1236 = vector.extract_strided_slice %825 {offsets = [0, 1, 0], sizes = [1, 1, 32], strides = [1, 1, 1]} : vector<4x4x32xf32> to vector<1x1x32xf32>
    %1237 = vector.shape_cast %1236 : vector<1x1x32xf32> to vector<32xf32>
    %1238 = vector.shape_cast %1237 : vector<32xf32> to vector<1x32xf32>
    %1239 = vector.broadcast %1238 : vector<1x32xf32> to vector<16x32xf32>
    %1240 = arith.mulf %1235, %1239 : vector<16x32xf32>
    %1241 = arith.addf %1231, %1240 : vector<16x32xf32>
    %1242 = vector.extract_strided_slice %1234 {offsets = [16, 0], sizes = [16, 32], strides = [1, 1]} : vector<64x32xf32> to vector<16x32xf32>
    %1243 = vector.extract_strided_slice %825 {offsets = [1, 1, 0], sizes = [1, 1, 32], strides = [1, 1, 1]} : vector<4x4x32xf32> to vector<1x1x32xf32>
    %1244 = vector.shape_cast %1243 : vector<1x1x32xf32> to vector<32xf32>
    %1245 = vector.shape_cast %1244 : vector<32xf32> to vector<1x32xf32>
    %1246 = vector.broadcast %1245 : vector<1x32xf32> to vector<16x32xf32>
    %1247 = arith.mulf %1242, %1246 : vector<16x32xf32>
    %1248 = arith.addf %1241, %1247 : vector<16x32xf32>
    %1249 = vector.extract_strided_slice %1234 {offsets = [32, 0], sizes = [16, 32], strides = [1, 1]} : vector<64x32xf32> to vector<16x32xf32>
    %1250 = vector.extract_strided_slice %825 {offsets = [2, 1, 0], sizes = [1, 1, 32], strides = [1, 1, 1]} : vector<4x4x32xf32> to vector<1x1x32xf32>
    %1251 = vector.shape_cast %1250 : vector<1x1x32xf32> to vector<32xf32>
    %1252 = vector.shape_cast %1251 : vector<32xf32> to vector<1x32xf32>
    %1253 = vector.broadcast %1252 : vector<1x32xf32> to vector<16x32xf32>
    %1254 = arith.mulf %1249, %1253 : vector<16x32xf32>
    %1255 = arith.addf %1248, %1254 : vector<16x32xf32>
    %1256 = vector.extract_strided_slice %1234 {offsets = [48, 0], sizes = [16, 32], strides = [1, 1]} : vector<64x32xf32> to vector<16x32xf32>
    %1257 = vector.extract_strided_slice %825 {offsets = [3, 1, 0], sizes = [1, 1, 32], strides = [1, 1, 1]} : vector<4x4x32xf32> to vector<1x1x32xf32>
    %1258 = vector.shape_cast %1257 : vector<1x1x32xf32> to vector<32xf32>
    %1259 = vector.shape_cast %1258 : vector<32xf32> to vector<1x32xf32>
    %1260 = vector.broadcast %1259 : vector<1x32xf32> to vector<16x32xf32>
    %1261 = arith.mulf %1256, %1260 : vector<16x32xf32>
    %1262 = arith.addf %1255, %1261 : vector<16x32xf32>
    %c1_473 = arith.constant 1 : index
    %c192_474 = arith.constant 192 : index
    %c0_475 = arith.constant 0 : index
    %1263 = vector.load %arg11[%c1_473, %c192_474, %c0_475] : memref<2x256x32xf32, #tpu.memory_space<vmem>>, vector<1x64x32xf32>
    %1264 = vector.shape_cast %1263 : vector<1x64x32xf32> to vector<64x32xf32>
    %c62_i32_476 = arith.constant 62 : i32
    %1265 = tpu.dynamic_rotate %1264 by %c62_i32_476 dim 0 : vector<64x32xf32>, i32 -> vector<64x32xf32>
    %1266 = vector.extract_strided_slice %1265 {offsets = [0, 0], sizes = [16, 32], strides = [1, 1]} : vector<64x32xf32> to vector<16x32xf32>
    %1267 = vector.extract_strided_slice %825 {offsets = [0, 2, 0], sizes = [1, 1, 32], strides = [1, 1, 1]} : vector<4x4x32xf32> to vector<1x1x32xf32>
    %1268 = vector.shape_cast %1267 : vector<1x1x32xf32> to vector<32xf32>
    %1269 = vector.shape_cast %1268 : vector<32xf32> to vector<1x32xf32>
    %1270 = vector.broadcast %1269 : vector<1x32xf32> to vector<16x32xf32>
    %1271 = arith.mulf %1266, %1270 : vector<16x32xf32>
    %1272 = arith.addf %1262, %1271 : vector<16x32xf32>
    %1273 = vector.extract_strided_slice %1265 {offsets = [16, 0], sizes = [16, 32], strides = [1, 1]} : vector<64x32xf32> to vector<16x32xf32>
    %1274 = vector.extract_strided_slice %825 {offsets = [1, 2, 0], sizes = [1, 1, 32], strides = [1, 1, 1]} : vector<4x4x32xf32> to vector<1x1x32xf32>
    %1275 = vector.shape_cast %1274 : vector<1x1x32xf32> to vector<32xf32>
    %1276 = vector.shape_cast %1275 : vector<32xf32> to vector<1x32xf32>
    %1277 = vector.broadcast %1276 : vector<1x32xf32> to vector<16x32xf32>
    %1278 = arith.mulf %1273, %1277 : vector<16x32xf32>
    %1279 = arith.addf %1272, %1278 : vector<16x32xf32>
    %1280 = vector.extract_strided_slice %1265 {offsets = [32, 0], sizes = [16, 32], strides = [1, 1]} : vector<64x32xf32> to vector<16x32xf32>
    %1281 = vector.extract_strided_slice %825 {offsets = [2, 2, 0], sizes = [1, 1, 32], strides = [1, 1, 1]} : vector<4x4x32xf32> to vector<1x1x32xf32>
    %1282 = vector.shape_cast %1281 : vector<1x1x32xf32> to vector<32xf32>
    %1283 = vector.shape_cast %1282 : vector<32xf32> to vector<1x32xf32>
    %1284 = vector.broadcast %1283 : vector<1x32xf32> to vector<16x32xf32>
    %1285 = arith.mulf %1280, %1284 : vector<16x32xf32>
    %1286 = arith.addf %1279, %1285 : vector<16x32xf32>
    %1287 = vector.extract_strided_slice %1265 {offsets = [48, 0], sizes = [16, 32], strides = [1, 1]} : vector<64x32xf32> to vector<16x32xf32>
    %1288 = vector.extract_strided_slice %825 {offsets = [3, 2, 0], sizes = [1, 1, 32], strides = [1, 1, 1]} : vector<4x4x32xf32> to vector<1x1x32xf32>
    %1289 = vector.shape_cast %1288 : vector<1x1x32xf32> to vector<32xf32>
    %1290 = vector.shape_cast %1289 : vector<32xf32> to vector<1x32xf32>
    %1291 = vector.broadcast %1290 : vector<1x32xf32> to vector<16x32xf32>
    %1292 = arith.mulf %1287, %1291 : vector<16x32xf32>
    %1293 = arith.addf %1286, %1292 : vector<16x32xf32>
    %c1_477 = arith.constant 1 : index
    %c192_478 = arith.constant 192 : index
    %c0_479 = arith.constant 0 : index
    %1294 = vector.load %arg11[%c1_477, %c192_478, %c0_479] : memref<2x256x32xf32, #tpu.memory_space<vmem>>, vector<1x64x32xf32>
    %1295 = vector.shape_cast %1294 : vector<1x64x32xf32> to vector<64x32xf32>
    %c61_i32_480 = arith.constant 61 : i32
    %1296 = tpu.dynamic_rotate %1295 by %c61_i32_480 dim 0 : vector<64x32xf32>, i32 -> vector<64x32xf32>
    %1297 = vector.extract_strided_slice %1296 {offsets = [0, 0], sizes = [16, 32], strides = [1, 1]} : vector<64x32xf32> to vector<16x32xf32>
    %1298 = vector.extract_strided_slice %825 {offsets = [0, 3, 0], sizes = [1, 1, 32], strides = [1, 1, 1]} : vector<4x4x32xf32> to vector<1x1x32xf32>
    %1299 = vector.shape_cast %1298 : vector<1x1x32xf32> to vector<32xf32>
    %1300 = vector.shape_cast %1299 : vector<32xf32> to vector<1x32xf32>
    %1301 = vector.broadcast %1300 : vector<1x32xf32> to vector<16x32xf32>
    %1302 = arith.mulf %1297, %1301 : vector<16x32xf32>
    %1303 = arith.addf %1293, %1302 : vector<16x32xf32>
    %1304 = vector.extract_strided_slice %1296 {offsets = [16, 0], sizes = [16, 32], strides = [1, 1]} : vector<64x32xf32> to vector<16x32xf32>
    %1305 = vector.extract_strided_slice %825 {offsets = [1, 3, 0], sizes = [1, 1, 32], strides = [1, 1, 1]} : vector<4x4x32xf32> to vector<1x1x32xf32>
    %1306 = vector.shape_cast %1305 : vector<1x1x32xf32> to vector<32xf32>
    %1307 = vector.shape_cast %1306 : vector<32xf32> to vector<1x32xf32>
    %1308 = vector.broadcast %1307 : vector<1x32xf32> to vector<16x32xf32>
    %1309 = arith.mulf %1304, %1308 : vector<16x32xf32>
    %1310 = arith.addf %1303, %1309 : vector<16x32xf32>
    %1311 = vector.extract_strided_slice %1296 {offsets = [32, 0], sizes = [16, 32], strides = [1, 1]} : vector<64x32xf32> to vector<16x32xf32>
    %1312 = vector.extract_strided_slice %825 {offsets = [2, 3, 0], sizes = [1, 1, 32], strides = [1, 1, 1]} : vector<4x4x32xf32> to vector<1x1x32xf32>
    %1313 = vector.shape_cast %1312 : vector<1x1x32xf32> to vector<32xf32>
    %1314 = vector.shape_cast %1313 : vector<32xf32> to vector<1x32xf32>
    %1315 = vector.broadcast %1314 : vector<1x32xf32> to vector<16x32xf32>
    %1316 = arith.mulf %1311, %1315 : vector<16x32xf32>
    %1317 = arith.addf %1310, %1316 : vector<16x32xf32>
    %1318 = vector.extract_strided_slice %1296 {offsets = [48, 0], sizes = [16, 32], strides = [1, 1]} : vector<64x32xf32> to vector<16x32xf32>
    %1319 = vector.extract_strided_slice %825 {offsets = [3, 3, 0], sizes = [1, 1, 32], strides = [1, 1, 1]} : vector<4x4x32xf32> to vector<1x1x32xf32>
    %1320 = vector.shape_cast %1319 : vector<1x1x32xf32> to vector<32xf32>
    %1321 = vector.shape_cast %1320 : vector<32xf32> to vector<1x32xf32>
    %1322 = vector.broadcast %1321 : vector<1x32xf32> to vector<16x32xf32>
    %1323 = arith.mulf %1318, %1322 : vector<16x32xf32>
    %1324 = arith.addf %1317, %1323 : vector<16x32xf32>
    %c448 = arith.constant 448 : index
    %c0_481 = arith.constant 0 : index
    %1325 = vector.load %arg12[%c448, %c0_481] : memref<512x32xf32, #tpu.memory_space<vmem>>, vector<16x32xf32>
    tpu.vector_store %arg12[%c448, %c0_481], %1324 {strides = array<i32>} : memref<512x32xf32, #tpu.memory_space<vmem>>, vector<16x32xf32>,
    %cst_482 = arith.constant 0.000000e+00 : f32
    %1326 = vector.broadcast %cst_482 : f32 to vector<48x32xf32>
    %c464 = arith.constant 464 : index
    %c0_483 = arith.constant 0 : index
    %1327 = vector.load %arg12[%c464, %c0_483] : memref<512x32xf32, #tpu.memory_space<vmem>>, vector<48x32xf32>
    tpu.vector_store %arg12[%c464, %c0_483], %1326 {strides = array<i32>} : memref<512x32xf32, #tpu.memory_space<vmem>>, vector<48x32xf32>,
    %c0_484 = arith.constant 0 : index
    %c0_485 = arith.constant 0 : index
    %1328 = vector.load %arg7[%c0_484, %c0_485] : memref<8x32xf32, #tpu.memory_space<vmem>>, vector<8x32xf32>
    %c0_486 = arith.constant 0 : index
    %c0_487 = arith.constant 0 : index
    %1329 = vector.load %arg12[%c0_486, %c0_487] : memref<512x32xf32, #tpu.memory_space<vmem>>, vector<512x32xf32>
    %cst_488 = arith.constant dense<0.000000e+00> : vector<8x512xf32>
    %1330 = tpu.matmul %1328, %1329, %cst_488 {dimension_numbers = #tpu.dot_dimension_numbers<[1], [1], [0], [0], [0, 0, 1, 0], [], []>} : vector<8x32xf32>, vector<512x32xf32>, vector<8x512xf32> -> vector<8x512xf32>
    %c0_489 = arith.constant 0 : index
    %c0_490 = arith.constant 0 : index
    %1331 = vector.load %arg8[%c0_489, %c0_490] : memref<8x1xf32, #tpu.memory_space<vmem>>, vector<8x1xf32>
    %1332 = vector.broadcast %1331 : vector<8x1xf32> to vector<8x512xf32>
    %1333 = arith.addf %1330, %1332 : vector<8x512xf32>
    %1334 = vector.extract_strided_slice %1333 {offsets = [0, 0], sizes = [8, 256], strides = [1, 1]} : vector<8x512xf32> to vector<8x256xf32>
    %c0_491 = arith.constant 0 : index
    %c0_492 = arith.constant 0 : index
    %c0_493 = arith.constant 0 : index
    %1335 = vector.load %arg9[%c0_491, %c0_492, %c0_493] : memref<2x8x256xf32, #tpu.memory_space<vmem>>, vector<1x8x256xf32>
    %1336 = vector.shape_cast %1335 : vector<1x8x256xf32> to vector<8x256xf32>
    %1337 = vector.shape_cast %1334 : vector<8x256xf32> to vector<1x8x256xf32>
    tpu.vector_store %arg9[%c0_491, %c0_492, %c0_493], %1337 {strides = array<i32>} : memref<2x8x256xf32, #tpu.memory_space<vmem>>, vector<1x8x256xf32>,
    %1338 = vector.extract_strided_slice %1333 {offsets = [0, 256], sizes = [8, 256], strides = [1, 1]} : vector<8x512xf32> to vector<8x256xf32>
    %c1_494 = arith.constant 1 : index
    %c0_495 = arith.constant 0 : index
    %c0_496 = arith.constant 0 : index
    %1339 = vector.load %arg9[%c1_494, %c0_495, %c0_496] : memref<2x8x256xf32, #tpu.memory_space<vmem>>, vector<1x8x256xf32>
    %1340 = vector.shape_cast %1339 : vector<1x8x256xf32> to vector<8x256xf32>
    %1341 = vector.shape_cast %1338 : vector<8x256xf32> to vector<1x8x256xf32>
    tpu.vector_store %arg9[%c1_494, %c0_495, %c0_496], %1341 {strides = array<i32>} : memref<2x8x256xf32, #tpu.memory_space<vmem>>, vector<1x8x256xf32>,
    return
  }
  func.func @transform_0(%arg0: i32) -> (i32, i32, i32, i32) {
    %c0_i32 = arith.constant 0 : i32
    %c0_i32_0 = arith.constant 0 : i32
    %c0_i32_1 = arith.constant 0 : i32
    %c0_i32_2 = arith.constant 0 : i32
    return %arg0, %c0_i32, %c0_i32_0, %c0_i32_1 : i32, i32, i32, i32
  }
  func.func @transform_1(%arg0: i32) -> (i32, i32, i32, i32) {
    %c0_i32 = arith.constant 0 : i32
    %c0_i32_0 = arith.constant 0 : i32
    %c0_i32_1 = arith.constant 0 : i32
    %c0_i32_2 = arith.constant 0 : i32
    return %arg0, %c0_i32, %c0_i32_0, %c0_i32_1 : i32, i32, i32, i32
  }
  func.func @transform_2(%arg0: i32) -> (i32, i32, i32) {
    %c0_i32 = arith.constant 0 : i32
    %c0_i32_0 = arith.constant 0 : i32
    %c0_i32_1 = arith.constant 0 : i32
    %c0_i32_2 = arith.constant 0 : i32
    return %c0_i32, %c0_i32_0, %c0_i32_1 : i32, i32, i32
  }
  func.func @transform_3(%arg0: i32) -> (i32, i32) {
    %c0_i32 = arith.constant 0 : i32
    %c0_i32_0 = arith.constant 0 : i32
    %c0_i32_1 = arith.constant 0 : i32
    return %c0_i32, %c0_i32_0 : i32, i32
  }
  func.func @transform_4(%arg0: i32) -> (i32, i32) {
    %c0_i32 = arith.constant 0 : i32
    %c0_i32_0 = arith.constant 0 : i32
    %c0_i32_1 = arith.constant 0 : i32
    return %c0_i32, %c0_i32_0 : i32, i32
  }
  func.func @transform_5(%arg0: i32) -> (i32, i32) {
    %c0_i32 = arith.constant 0 : i32
    %c0_i32_0 = arith.constant 0 : i32
    %c0_i32_1 = arith.constant 0 : i32
    return %c0_i32, %c0_i32_0 : i32, i32
  }
  func.func @transform_6(%arg0: i32) -> (i32, i32) {
    %c0_i32 = arith.constant 0 : i32
    %c0_i32_0 = arith.constant 0 : i32
    %c0_i32_1 = arith.constant 0 : i32
    return %c0_i32, %c0_i32_0 : i32, i32
  }
  func.func @transform_7(%arg0: i32) -> (i32, i32) {
    %c0_i32 = arith.constant 0 : i32
    %c0_i32_0 = arith.constant 0 : i32
    %c0_i32_1 = arith.constant 0 : i32
    return %c0_i32, %c0_i32_0 : i32, i32
  }
  func.func @transform_8(%arg0: i32) -> (i32, i32, i32) {
    %c0_i32 = arith.constant 0 : i32
    %c0_i32_0 = arith.constant 0 : i32
    %c0_i32_1 = arith.constant 0 : i32
    return %arg0, %c0_i32, %c0_i32_0 : i32, i32, i32
  }
}

</mosaic_0001>

<llo_original>
// kernel: tracker_z_forward.1
$region0: #{tracker_z_forward.1}
  #allocation0 [shape = 'u32[]', space=smem, size = 0x4, offset = 0x4, fixed_abs, tag = 'smem constant byte address 0x4 - core index']
  #allocation1 [shape = 'u32[72,128]{1,0:T(1,128)}', space=vmem, size = 0x9000, scoped, tag = 'internal scratch']
  #allocation2 [shape = 'f32[2,18,18,3]{3,2,1,0:T(8,128)}', space=vmem, size = 0x6c000, scoped, tag = 'scratch operand']
  #allocation3 [shape = 'f32[2,256,32]{2,1,0:T(8,128)}', space=vmem, size = 0x40000, scoped, tag = 'scratch operand']
  #allocation4 [shape = 'f32[512,32]{1,0:T(8,128)}', space=vmem, size = 0x40000, scoped, tag = 'scratch operand']
  %s0 = inlined_call_operand.vmem [shape: f32[2,16,16,3], index: 0, kind: input, shape index: {}]
  %s1 = inlined_call_operand.vmem [shape: f32[2,4,4,32], index: 1, kind: input, shape index: {}]
  %s2 = inlined_call_operand.vmem [shape: f32[9,3,32], index: 2, kind: input, shape index: {}]
  %s3 = inlined_call_operand.vmem [shape: f32[1,32], index: 3, kind: input, shape index: {}]
  %s4 = inlined_call_operand.vmem [shape: f32[32,32], index: 4, kind: input, shape index: {}]
  %s5 = inlined_call_operand.vmem [shape: f32[1,32], index: 5, kind: input, shape index: {}]
  %s6 = inlined_call_operand.vmem [shape: f32[8,32], index: 6, kind: input, shape index: {}]
  %s7 = inlined_call_operand.vmem [shape: f32[8,1], index: 7, kind: input, shape index: {}]
  %s8 = inlined_call_operand.vmem [shape: f32[2,8,256], index: 8, kind: output, shape index: {}]
  %s9 = sld [smem:[#allocation0]]
  $region42: #{tracker_z_forward.1} parent=0
    _
  %s11 = ssub.s32 1, %s9
  %s12 = scalar_select 0, %s11, %s9
  // Predicated region
  $region2: #{tracker_z_forward.1} parent=0 // pred_check
    _
  $region3: #{tracker_z_forward.1} parent=0 // pred_check_branch
    %14 = sbr.rel (0) target = $region5
  $region4: #{tracker_z_forward.1} parent=0 // pred_region
    _
  $region5: #{tracker_z_forward.1} parent=0 // pred_fallthru
    _
  // Predicated region
  $region6: #{tracker_z_forward.1} parent=0 // pred_check
    _
  $region7: #{tracker_z_forward.1} parent=0 // pred_check_branch
    %16 = sbr.rel (0) target = $region9
  $region8: #{tracker_z_forward.1} parent=0 // pred_region
    _
  $region9: #{tracker_z_forward.1} parent=0 // pred_fallthru
    _
  // Predicated region
  $region10: #{tracker_z_forward.1} parent=0 // pred_check
    _
  $region11: #{tracker_z_forward.1} parent=0 // pred_check_branch
    %18 = sbr.rel (0) target = $region13
  $region12: #{tracker_z_forward.1} parent=0 // pred_region
    _
  $region13: #{tracker_z_forward.1} parent=0 // pred_fallthru
    _
  // Predicated region
  $region14: #{tracker_z_forward.1} parent=0 // pred_check
    _
  $region15: #{tracker_z_forward.1} parent=0 // pred_check_branch
    %20 = sbr.rel (0) target = $region17
  $region16: #{tracker_z_forward.1} parent=0 // pred_region
    _
  $region17: #{tracker_z_forward.1} parent=0 // pred_fallthru
    _
  // Predicated region
  $region18: #{tracker_z_forward.1} parent=0 // pred_check
    _
  $region19: #{tracker_z_forward.1} parent=0 // pred_check_branch
    %22 = sbr.rel (0) target = $region21
  $region20: #{tracker_z_forward.1} parent=0 // pred_region
    _
  $region21: #{tracker_z_forward.1} parent=0 // pred_fallthru
    _
  // Predicated region
  $region22: #{tracker_z_forward.1} parent=0 // pred_check
    _
  $region23: #{tracker_z_forward.1} parent=0 // pred_check_branch
    %24 = sbr.rel (0) target = $region25
  $region24: #{tracker_z_forward.1} parent=0 // pred_region
    _
  $region25: #{tracker_z_forward.1} parent=0 // pred_fallthru
    _
  // Predicated region
  $region26: #{tracker_z_forward.1} parent=0 // pred_check
    _
  $region27: #{tracker_z_forward.1} parent=0 // pred_check_branch
    %26 = sbr.rel (0) target = $region29
  $region28: #{tracker_z_forward.1} parent=0 // pred_region
    _
  $region29: #{tracker_z_forward.1} parent=0 // pred_fallthru
    _
  // Predicated region
  $region30: #{tracker_z_forward.1} parent=0 // pred_check
    _
  $region31: #{tracker_z_forward.1} parent=0 // pred_check_branch
    %28 = sbr.rel (0) target = $region33
  $region32: #{tracker_z_forward.1} parent=0 // pred_region
    _
  $region33: #{tracker_z_forward.1} parent=0 // pred_fallthru
    _
  %vm29 = vcmask 23552
  %30 = vst.msk [vmem:[#allocation2] sm:$0xff] %vm29, 0.0
  %31 = vst.msk [vmem:[#allocation2 + $0x8] sm:$0xff] %vm29, 0.0
  %vm32 = vcmask 17408
  %33 = vst.msk [vmem:[#allocation2 + $0x10] sm:$0x3] %vm32, 0.0
  %34 = vst.msk [vmem:[#allocation2 + $0x18] sm:$0xff] %vm29, 0.0
  %35 = vst.msk [vmem:[#allocation2 + $0x20] sm:$0xff] %vm29, 0.0
  %36 = vst.msk [vmem:[#allocation2 + $0x28] sm:$0x3] %vm32, 0.0
  %37 = vst.msk [vmem:[#allocation2 + $0x30] sm:$0xff] %vm29, 0.0
  %38 = vst.msk [vmem:[#allocation2 + $0x38] sm:$0xff] %vm29, 0.0
  %39 = vst.msk [vmem:[#allocation2 + $0x40] sm:$0x3] %vm32, 0.0
  %40 = vst.msk [vmem:[#allocation2 + $0x48] sm:$0xff] %vm29, 0.0
  %41 = vst.msk [vmem:[#allocation2 + $0x50] sm:$0xff] %vm29, 0.0
  %42 = vst.msk [vmem:[#allocation2 + $0x58] sm:$0x3] %vm32, 0.0
  %43 = vst.msk [vmem:[#allocation2 + $0x60] sm:$0xff] %vm29, 0.0
  %44 = vst.msk [vmem:[#allocation2 + $0x68] sm:$0xff] %vm29, 0.0
  %45 = vst.msk [vmem:[#allocation2 + $0x70] sm:$0x3] %vm32, 0.0
  %46 = vst.msk [vmem:[#allocation2 + $0x78] sm:$0xff] %vm29, 0.0
  %47 = vst.msk [vmem:[#allocation2 + $0x80] sm:$0xff] %vm29, 0.0
  %48 = vst.msk [vmem:[#allocation2 + $0x88] sm:$0x3] %vm32, 0.0
  %49 = vst.msk [vmem:[#allocation2 + $0x90] sm:$0xff] %vm29, 0.0
  %50 = vst.msk [vmem:[#allocation2 + $0x98] sm:$0xff] %vm29, 0.0
  %51 = vst.msk [vmem:[#allocation2 + $0xa0] sm:$0x3] %vm32, 0.0
  %52 = vst.msk [vmem:[#allocation2 + $0xa8] sm:$0xff] %vm29, 0.0
  %53 = vst.msk [vmem:[#allocation2 + $0xb0] sm:$0xff] %vm29, 0.0
  %54 = vst.msk [vmem:[#allocation2 + $0xb8] sm:$0x3] %vm32, 0.0
  %55 = vst.msk [vmem:[#allocation2 + $0xc0] sm:$0xff] %vm29, 0.0
  %56 = vst.msk [vmem:[#allocation2 + $0xc8] sm:$0xff] %vm29, 0.0
  %57 = vst.msk [vmem:[#allocation2 + $0xd0] sm:$0x3] %vm32, 0.0
  %58 = vst.msk [vmem:[#allocation2 + $0xd8] sm:$0xff] %vm29, 0.0
  %59 = vst.msk [vmem:[#allocation2 + $0xe0] sm:$0xff] %vm29, 0.0
  %60 = vst.msk [vmem:[#allocation2 + $0xe8] sm:$0x3] %vm32, 0.0
  %61 = vst.msk [vmem:[#allocation2 + $0xf0] sm:$0xff] %vm29, 0.0
  %62 = vst.msk [vmem:[#allocation2 + $0xf8] sm:$0xff] %vm29, 0.0
  %63 = vst.msk [vmem:[#allocation2 + $0x100] sm:$0x3] %vm32, 0.0
  %64 = vst.msk [vmem:[#allocation2 + $0x108] sm:$0xff] %vm29, 0.0
  %65 = vst.msk [vmem:[#allocation2 + $0x110] sm:$0xff] %vm29, 0.0
  %66 = vst.msk [vmem:[#allocation2 + $0x118] sm:$0x3] %vm32, 0.0
  %67 = vst.msk [vmem:[#allocation2 + $0x120] sm:$0xff] %vm29, 0.0
  %68 = vst.msk [vmem:[#allocation2 + $0x128] sm:$0xff] %vm29, 0.0
  %69 = vst.msk [vmem:[#allocation2 + $0x130] sm:$0x3] %vm32, 0.0
  %70 = vst.msk [vmem:[#allocation2 + $0x138] sm:$0xff] %vm29, 0.0
  %71 = vst.msk [vmem:[#allocation2 + $0x140] sm:$0xff] %vm29, 0.0
  %72 = vst.msk [vmem:[#allocation2 + $0x148] sm:$0x3] %vm32, 0.0
  %73 = vst.msk [vmem:[#allocation2 + $0x150] sm:$0xff] %vm29, 0.0
  %74 = vst.msk [vmem:[#allocation2 + $0x158] sm:$0xff] %vm29, 0.0
  %75 = vst.msk [vmem:[#allocation2 + $0x160] sm:$0x3] %vm32, 0.0
  %76 = vst.msk [vmem:[#allocation2 + $0x168] sm:$0xff] %vm29, 0.0
  %77 = vst.msk [vmem:[#allocation2 + $0x170] sm:$0xff] %vm29, 0.0
  %78 = vst.msk [vmem:[#allocation2 + $0x178] sm:$0x3] %vm32, 0.0
  %79 = vst.msk [vmem:[#allocation2 + $0x180] sm:$0xff] %vm29, 0.0
  %80 = vst.msk [vmem:[#allocation2 + $0x188] sm:$0xff] %vm29, 0.0
  %81 = vst.msk [vmem:[#allocation2 + $0x190] sm:$0x3] %vm32, 0.0
  %82 = vst.msk [vmem:[#allocation2 + $0x198] sm:$0xff] %vm29, 0.0
  %83 = vst.msk [vmem:[#allocation2 + $0x1a0] sm:$0xff] %vm29, 0.0
  %84 = vst.msk [vmem:[#allocation2 + $0x1a8] sm:$0x3] %vm32, 0.0
  %85 = vst.msk [vmem:[#allocation2 + $0x1b0] sm:$0xff] %vm29, 0.0
  %86 = vst.msk [vmem:[#allocation2 + $0x1b8] sm:$0xff] %vm29, 0.0
  %87 = vst.msk [vmem:[#allocation2 + $0x1c0] sm:$0x3] %vm32, 0.0
  %88 = vst.msk [vmem:[#allocation2 + $0x1c8] sm:$0xff] %vm29, 0.0
  %89 = vst.msk [vmem:[#allocation2 + $0x1d0] sm:$0xff] %vm29, 0.0
  %90 = vst.msk [vmem:[#allocation2 + $0x1d8] sm:$0x3] %vm32, 0.0
  %91 = vst.msk [vmem:[#allocation2 + $0x1e0] sm:$0xff] %vm29, 0.0
  %92 = vst.msk [vmem:[#allocation2 + $0x1e8] sm:$0xff] %vm29, 0.0
  %93 = vst.msk [vmem:[#allocation2 + $0x1f0] sm:$0x3] %vm32, 0.0
  %94 = vst.msk [vmem:[#allocation2 + $0x1f8] sm:$0xff] %vm29, 0.0
  %95 = vst.msk [vmem:[#allocation2 + $0x200] sm:$0xff] %vm29, 0.0
  %96 = vst.msk [vmem:[#allocation2 + $0x208] sm:$0x3] %vm32, 0.0
  %97 = vst.msk [vmem:[#allocation2 + $0x210] sm:$0xff] %vm29, 0.0
  %98 = vst.msk [vmem:[#allocation2 + $0x218] sm:$0xff] %vm29, 0.0
  %99 = vst.msk [vmem:[#allocation2 + $0x220] sm:$0x3] %vm32, 0.0
  %100 = vst.msk [vmem:[#allocation2 + $0x228] sm:$0xff] %vm29, 0.0
  %101 = vst.msk [vmem:[#allocation2 + $0x230] sm:$0xff] %vm29, 0.0
  %102 = vst.msk [vmem:[#allocation2 + $0x238] sm:$0x3] %vm32, 0.0
  %103 = vst.msk [vmem:[#allocation2 + $0x240] sm:$0xff] %vm29, 0.0
  %104 = vst.msk [vmem:[#allocation2 + $0x248] sm:$0xff] %vm29, 0.0
  %105 = vst.msk [vmem:[#allocation2 + $0x250] sm:$0x3] %vm32, 0.0
  %106 = vst.msk [vmem:[#allocation2 + $0x258] sm:$0xff] %vm29, 0.0
  %107 = vst.msk [vmem:[#allocation2 + $0x260] sm:$0xff] %vm29, 0.0
  %108 = vst.msk [vmem:[#allocation2 + $0x268] sm:$0x3] %vm32, 0.0
  %109 = vst.msk [vmem:[#allocation2 + $0x270] sm:$0xff] %vm29, 0.0
  %110 = vst.msk [vmem:[#allocation2 + $0x278] sm:$0xff] %vm29, 0.0
  %111 = vst.msk [vmem:[#allocation2 + $0x280] sm:$0x3] %vm32, 0.0
  %112 = vst.msk [vmem:[#allocation2 + $0x288] sm:$0xff] %vm29, 0.0
  %113 = vst.msk [vmem:[#allocation2 + $0x290] sm:$0xff] %vm29, 0.0
  %114 = vst.msk [vmem:[#allocation2 + $0x298] sm:$0x3] %vm32, 0.0
  %115 = vst.msk [vmem:[#allocation2 + $0x2a0] sm:$0xff] %vm29, 0.0
  %116 = vst.msk [vmem:[#allocation2 + $0x2a8] sm:$0xff] %vm29, 0.0
  %117 = vst.msk [vmem:[#allocation2 + $0x2b0] sm:$0x3] %vm32, 0.0
  %118 = vst.msk [vmem:[#allocation2 + $0x2b8] sm:$0xff] %vm29, 0.0
  %119 = vst.msk [vmem:[#allocation2 + $0x2c0] sm:$0xff] %vm29, 0.0
  %120 = vst.msk [vmem:[#allocation2 + $0x2c8] sm:$0x3] %vm32, 0.0
  %121 = vst.msk [vmem:[#allocation2 + $0x2d0] sm:$0xff] %vm29, 0.0
  %122 = vst.msk [vmem:[#allocation2 + $0x2d8] sm:$0xff] %vm29, 0.0
  %123 = vst.msk [vmem:[#allocation2 + $0x2e0] sm:$0x3] %vm32, 0.0
  %124 = vst.msk [vmem:[#allocation2 + $0x2e8] sm:$0xff] %vm29, 0.0
  %125 = vst.msk [vmem:[#allocation2 + $0x2f0] sm:$0xff] %vm29, 0.0
  %126 = vst.msk [vmem:[#allocation2 + $0x2f8] sm:$0x3] %vm32, 0.0
  %127 = vst.msk [vmem:[#allocation2 + $0x300] sm:$0xff] %vm29, 0.0
  %128 = vst.msk [vmem:[#allocation2 + $0x308] sm:$0xff] %vm29, 0.0
  %129 = vst.msk [vmem:[#allocation2 + $0x310] sm:$0x3] %vm32, 0.0
  %130 = vst.msk [vmem:[#allocation2 + $0x318] sm:$0xff] %vm29, 0.0
  %131 = vst.msk [vmem:[#allocation2 + $0x320] sm:$0xff] %vm29, 0.0
  %132 = vst.msk [vmem:[#allocation2 + $0x328] sm:$0x3] %vm32, 0.0
  %133 = vst.msk [vmem:[#allocation2 + $0x330] sm:$0xff] %vm29, 0.0
  %134 = vst.msk [vmem:[#allocation2 + $0x338] sm:$0xff] %vm29, 0.0
  %135 = vst.msk [vmem:[#allocation2 + $0x340] sm:$0x3] %vm32, 0.0
  %136 = vst.msk [vmem:[#allocation2 + $0x348] sm:$0xff] %vm29, 0.0
  %137 = vst.msk [vmem:[#allocation2 + $0x350] sm:$0xff] %vm29, 0.0
  %138 = vst.msk [vmem:[#allocation2 + $0x358] sm:$0x3] %vm32, 0.0
  %v139 = vld [vmem:[%s0] sm:$0xff]
  %v140 = vld [vmem:[%s0 + $0x8] sm:$0xff]
  %v141 = vld [vmem:[%s0 + $0x10] sm:$0xff]
  %v142 = vld [vmem:[%s0 + $0x18] sm:$0xff]
  %v143 = vld [vmem:[%s0 + $0x20] sm:$0xff]
  %v144 = vld [vmem:[%s0 + $0x28] sm:$0xff]
  %v145 = vld [vmem:[%s0 + $0x30] sm:$0xff]
  %v146 = vld [vmem:[%s0 + $0x38] sm:$0xff]
  %v147 = vld [vmem:[%s0 + $0x40] sm:$0xff]
  %v148 = vld [vmem:[%s0 + $0x48] sm:$0xff]
  %v149 = vld [vmem:[%s0 + $0x50] sm:$0xff]
  %v150 = vld [vmem:[%s0 + $0x58] sm:$0xff]
  %v151 = vld [vmem:[%s0 + $0x60] sm:$0xff]
  %v152 = vld [vmem:[%s0 + $0x68] sm:$0xff]
  %v153 = vld [vmem:[%s0 + $0x70] sm:$0xff]
  %v154 = vld [vmem:[%s0 + $0x78] sm:$0xff]
  %v155 = vld [vmem:[%s0 + $0x80] sm:$0xff]
  %v156 = vld [vmem:[%s0 + $0x88] sm:$0xff]
  %v157 = vld [vmem:[%s0 + $0x90] sm:$0xff]
  %v158 = vld [vmem:[%s0 + $0x98] sm:$0xff]
  %v159 = vld [vmem:[%s0 + $0xa0] sm:$0xff]
  %v160 = vld [vmem:[%s0 + $0xa8] sm:$0xff]
  %v161 = vld [vmem:[%s0 + $0xb0] sm:$0xff]
  %v162 = vld [vmem:[%s0 + $0xb8] sm:$0xff]
  %v163 = vld [vmem:[%s0 + $0xc0] sm:$0xff]
  %v164 = vld [vmem:[%s0 + $0xc8] sm:$0xff]
  %v165 = vld [vmem:[%s0 + $0xd0] sm:$0xff]
  %v166 = vld [vmem:[%s0 + $0xd8] sm:$0xff]
  %v167 = vld [vmem:[%s0 + $0xe0] sm:$0xff]
  %v168 = vld [vmem:[%s0 + $0xe8] sm:$0xff]
  %v169 = vld [vmem:[%s0 + $0xf0] sm:$0xff]
  %v170 = vld [vmem:[%s0 + $0xf8] sm:$0xff]
  %v171 = vld [vmem:[%s0 + $0x100] sm:$0xff]
  %v172 = vld [vmem:[%s0 + $0x108] sm:$0xff]
  %v173 = vld [vmem:[%s0 + $0x110] sm:$0xff]
  %v174 = vld [vmem:[%s0 + $0x118] sm:$0xff]
  %v175 = vld [vmem:[%s0 + $0x120] sm:$0xff]
  %v176 = vld [vmem:[%s0 + $0x128] sm:$0xff]
  %v177 = vld [vmem:[%s0 + $0x130] sm:$0xff]
  %v178 = vld [vmem:[%s0 + $0x138] sm:$0xff]
  %v179 = vld [vmem:[%s0 + $0x140] sm:$0xff]
  %v180 = vld [vmem:[%s0 + $0x148] sm:$0xff]
  %v181 = vld [vmem:[%s0 + $0x150] sm:$0xff]
  %v182 = vld [vmem:[%s0 + $0x158] sm:$0xff]
  %v183 = vld [vmem:[%s0 + $0x160] sm:$0xff]
  %v184 = vld [vmem:[%s0 + $0x168] sm:$0xff]
  %v185 = vld [vmem:[%s0 + $0x170] sm:$0xff]
  %v186 = vld [vmem:[%s0 + $0x178] sm:$0xff]
  %v187 = vld [vmem:[%s0 + $0x180] sm:$0xff]
  %v188 = vld [vmem:[%s0 + $0x188] sm:$0xff]
  %v189 = vld [vmem:[%s0 + $0x190] sm:$0xff]
  %v190 = vld [vmem:[%s0 + $0x198] sm:$0xff]
  %v191 = vld [vmem:[%s0 + $0x1a0] sm:$0xff]
  %v192 = vld [vmem:[%s0 + $0x1a8] sm:$0xff]
  %v193 = vld [vmem:[%s0 + $0x1b0] sm:$0xff]
  %v194 = vld [vmem:[%s0 + $0x1b8] sm:$0xff]
  %v195 = vld [vmem:[%s0 + $0x1c0] sm:$0xff]
  %v196 = vld [vmem:[%s0 + $0x1c8] sm:$0xff]
  %v197 = vld [vmem:[%s0 + $0x1d0] sm:$0xff]
  %v198 = vld [vmem:[%s0 + $0x1d8] sm:$0xff]
  %v199 = vld [vmem:[%s0 + $0x1e0] sm:$0xff]
  %v200 = vld [vmem:[%s0 + $0x1e8] sm:$0xff]
  %v201 = vld [vmem:[%s0 + $0x1f0] sm:$0xff]
  %v202 = vld [vmem:[%s0 + $0x1f8] sm:$0xff]
  %s203 = scalar_lea.vmem [#allocation2], 24
  %204 = vst.msk [vmem:[%s203 + $0x1] sm:$0xff] %vm29, %v139
  %205 = vst.msk [vmem:[%s203 + $0x9] sm:$0xff] %vm29, %v140
  %206 = vst.msk [vmem:[%s203 + $0x19] sm:$0xff] %vm29, %v141
  %207 = vst.msk [vmem:[%s203 + $0x21] sm:$0xff] %vm29, %v142
  %208 = vst.msk [vmem:[%s203 + $0x31] sm:$0xff] %vm29, %v143
  %209 = vst.msk [vmem:[%s203 + $0x39] sm:$0xff] %vm29, %v144
  %210 = vst.msk [vmem:[%s203 + $0x49] sm:$0xff] %vm29, %v145
  %211 = vst.msk [vmem:[%s203 + $0x51] sm:$0xff] %vm29, %v146
  %212 = vst.msk [vmem:[%s203 + $0x61] sm:$0xff] %vm29, %v147
  %213 = vst.msk [vmem:[%s203 + $0x69] sm:$0xff] %vm29, %v148
  %214 = vst.msk [vmem:[%s203 + $0x79] sm:$0xff] %vm29, %v149
  %215 = vst.msk [vmem:[%s203 + $0x81] sm:$0xff] %vm29, %v150
  %216 = vst.msk [vmem:[%s203 + $0x91] sm:$0xff] %vm29, %v151
  %217 = vst.msk [vmem:[%s203 + $0x99] sm:$0xff] %vm29, %v152
  %218 = vst.msk [vmem:[%s203 + $0xa9] sm:$0xff] %vm29, %v153
  %219 = vst.msk [vmem:[%s203 + $0xb1] sm:$0xff] %vm29, %v154
  %220 = vst.msk [vmem:[%s203 + $0xc1] sm:$0xff] %vm29, %v155
  %221 = vst.msk [vmem:[%s203 + $0xc9] sm:$0xff] %vm29, %v156
  %222 = vst.msk [vmem:[%s203 + $0xd9] sm:$0xff] %vm29, %v157
  %223 = vst.msk [vmem:[%s203 + $0xe1] sm:$0xff] %vm29, %v158
  %224 = vst.msk [vmem:[%s203 + $0xf1] sm:$0xff] %vm29, %v159
  %225 = vst.msk [vmem:[%s203 + $0xf9] sm:$0xff] %vm29, %v160
  %226 = vst.msk [vmem:[%s203 + $0x109] sm:$0xff] %vm29, %v161
  %227 = vst.msk [vmem:[%s203 + $0x111] sm:$0xff] %vm29, %v162
  %228 = vst.msk [vmem:[%s203 + $0x121] sm:$0xff] %vm29, %v163
  %229 = vst.msk [vmem:[%s203 + $0x129] sm:$0xff] %vm29, %v164
  %230 = vst.msk [vmem:[%s203 + $0x139] sm:$0xff] %vm29, %v165
  %231 = vst.msk [vmem:[%s203 + $0x141] sm:$0xff] %vm29, %v166
  %232 = vst.msk [vmem:[%s203 + $0x151] sm:$0xff] %vm29, %v167
  %233 = vst.msk [vmem:[%s203 + $0x159] sm:$0xff] %vm29, %v168
  %234 = vst.msk [vmem:[%s203 + $0x169] sm:$0xff] %vm29, %v169
  %235 = vst.msk [vmem:[%s203 + $0x171] sm:$0xff] %vm29, %v170
  %236 = vst.msk [vmem:[%s203 + $0x1b1] sm:$0xff] %vm29, %v171
  %237 = vst.msk [vmem:[%s203 + $0x1b9] sm:$0xff] %vm29, %v172
  %238 = vst.msk [vmem:[%s203 + $0x1c9] sm:$0xff] %vm29, %v173
  %239 = vst.msk [vmem:[%s203 + $0x1d1] sm:$0xff] %vm29, %v174
  %240 = vst.msk [vmem:[%s203 + $0x1e1] sm:$0xff] %vm29, %v175
  %241 = vst.msk [vmem:[%s203 + $0x1e9] sm:$0xff] %vm29, %v176
  %242 = vst.msk [vmem:[%s203 + $0x1f9] sm:$0xff] %vm29, %v177
  %243 = vst.msk [vmem:[%s203 + $0x201] sm:$0xff] %vm29, %v178
  %244 = vst.msk [vmem:[%s203 + $0x211] sm:$0xff] %vm29, %v179
  %245 = vst.msk [vmem:[%s203 + $0x219] sm:$0xff] %vm29, %v180
  %246 = vst.msk [vmem:[%s203 + $0x229] sm:$0xff] %vm29, %v181
  %247 = vst.msk [vmem:[%s203 + $0x231] sm:$0xff] %vm29, %v182
  %248 = vst.msk [vmem:[%s203 + $0x241] sm:$0xff] %vm29, %v183
  %249 = vst.msk [vmem:[%s203 + $0x249] sm:$0xff] %vm29, %v184
  %250 = vst.msk [vmem:[%s203 + $0x259] sm:$0xff] %vm29, %v185
  %251 = vst.msk [vmem:[%s203 + $0x261] sm:$0xff] %vm29, %v186
  %252 = vst.msk [vmem:[%s203 + $0x271] sm:$0xff] %vm29, %v187
  %253 = vst.msk [vmem:[%s203 + $0x279] sm:$0xff] %vm29, %v188
  %254 = vst.msk [vmem:[%s203 + $0x289] sm:$0xff] %vm29, %v189
  %255 = vst.msk [vmem:[%s203 + $0x291] sm:$0xff] %vm29, %v190
  %256 = vst.msk [vmem:[%s203 + $0x2a1] sm:$0xff] %vm29, %v191
  %257 = vst.msk [vmem:[%s203 + $0x2a9] sm:$0xff] %vm29, %v192
  %258 = vst.msk [vmem:[%s203 + $0x2b9] sm:$0xff] %vm29, %v193
  %259 = vst.msk [vmem:[%s203 + $0x2c1] sm:$0xff] %vm29, %v194
  %260 = vst.msk [vmem:[%s203 + $0x2d1] sm:$0xff] %vm29, %v195
  %261 = vst.msk [vmem:[%s203 + $0x2d9] sm:$0xff] %vm29, %v196
  %262 = vst.msk [vmem:[%s203 + $0x2e9] sm:$0xff] %vm29, %v197
  %263 = vst.msk [vmem:[%s203 + $0x2f1] sm:$0xff] %vm29, %v198
  %264 = vst.msk [vmem:[%s203 + $0x301] sm:$0xff] %vm29, %v199
  %265 = vst.msk [vmem:[%s203 + $0x309] sm:$0xff] %vm29, %v200
  %266 = vst.msk [vmem:[%s203 + $0x319] sm:$0xff] %vm29, %v201
  %267 = vst.msk [vmem:[%s203 + $0x321] sm:$0xff] %vm29, %v202
  %v268 = vld [vmem:[#allocation2] sm:$0xff]
  %v269 = vld [vmem:[#allocation2 + $0x8] sm:$0xff]
  %v270 = vld [vmem:[#allocation2 + $0x18] sm:$0xff]
  %v271 = vld [vmem:[#allocation2 + $0x20] sm:$0xff]
  %v272 = vld [vmem:[#allocation2 + $0x30] sm:$0xff]
  %v273 = vld [vmem:[#allocation2 + $0x38] sm:$0xff]
  %v274 = vld [vmem:[#allocation2 + $0x48] sm:$0xff]
  %v275 = vld [vmem:[#allocation2 + $0x50] sm:$0xff]
  %v276 = vld [vmem:[#allocation2 + $0x60] sm:$0xff]
  %v277 = vld [vmem:[#allocation2 + $0x68] sm:$0xff]
  %v278 = vld [vmem:[#allocation2 + $0x78] sm:$0xff]
  %v279 = vld [vmem:[#allocation2 + $0x80] sm:$0xff]
  %v280 = vld [vmem:[#allocation2 + $0x90] sm:$0xff]
  %v281 = vld [vmem:[#allocation2 + $0x98] sm:$0xff]
  %v282 = vld [vmem:[#allocation2 + $0xa8] sm:$0xff]
  %v283 = vld [vmem:[#allocation2 + $0xb0] sm:$0xff]
  %v284 = vld [vmem:[%s2] sm:$0x7]
  %v285 = vld [vmem:[#allocation2 + $0x1] sm:$0xff]
  %v286 = vld [vmem:[#allocation2 + $0x9] sm:$0xff]
  %v287 = vld [vmem:[#allocation2 + $0x19] sm:$0xff]
  %v288 = vld [vmem:[#allocation2 + $0x21] sm:$0xff]
  %v289 = vld [vmem:[#allocation2 + $0x31] sm:$0xff]
  %v290 = vld [vmem:[#allocation2 + $0x39] sm:$0xff]
  %v291 = vld [vmem:[#allocation2 + $0x49] sm:$0xff]
  %v292 = vld [vmem:[#allocation2 + $0x51] sm:$0xff]
  %v293 = vld [vmem:[#allocation2 + $0x61] sm:$0xff]
  %v294 = vld [vmem:[#allocation2 + $0x69] sm:$0xff]
  %v295 = vld [vmem:[#allocation2 + $0x79] sm:$0xff]
  %v296 = vld [vmem:[#allocation2 + $0x81] sm:$0xff]
  %v297 = vld [vmem:[#allocation2 + $0x91] sm:$0xff]
  %v298 = vld [vmem:[#allocation2 + $0x99] sm:$0xff]
  %v299 = vld [vmem:[#allocation2 + $0xa9] sm:$0xff]
  %v300 = vld [vmem:[#allocation2 + $0xb1] sm:$0xff]
  %s301 = scalar_lea.vmem %s2, 4
  %v302 = vld [vmem:[%s301] sm:$0x7]
  %v304 = vsel %vm29, %v285, 0
  %v307 = vsel %vm29, %v286, 0
  %v310 = vsel %vm29, %v287, 0
  %v313 = vsel %vm29, %v288, 0
  %v316 = vsel %vm29, %v289, 0
  %v319 = vsel %vm29, %v290, 0
  %v322 = vsel %vm29, %v291, 0
  %v325 = vsel %vm29, %v292, 0
  %v328 = vsel %vm29, %v293, 0
  %v331 = vsel %vm29, %v294, 0
  %v334 = vsel %vm29, %v295, 0
  %v337 = vsel %vm29, %v296, 0
  %v340 = vsel %vm29, %v297, 0
  %v343 = vsel %vm29, %v298, 0
  %v346 = vsel %vm29, %v299, 0
  %v349 = vsel %vm29, %v300, 0
  %vm351 = vcmask 1042432
  %v353 = vsel %vm351, %v302, 0
  %355 = vmatpush.msra.mxu0 0.0
  %356 = vmatpush.msra.mxu0 0.0
  %357 = vmatpush.msra.mxu0 0.0
  %358 = vmatpush.msra.mxu0 0.0
  %359 = vmatpush.msra.mxu0 0.0
  %360 = vmatpush.msra.mxu0 0.0
  %361 = vmatpush.msra.mxu0 0.0
  %362 = vmatpush.msra.mxu0 0.0
  %363 = vmatpush.msra.mxu0 0.0
  %364 = vmatpush.msra.mxu0 0.0
  %365 = vmatpush.msra.mxu0 0.0
  %366 = vmatpush.msra.mxu0 0.0
  %367 = vmatpush.msra.mxu0 0.0
  %368 = vmatpush.msra.mxu0 0.0
  %369 = vmatpush.msra.mxu0 0.0
  %370 = vmatpush.msra.mxu0 %v353
  %371 = vmatmul.f32.gmra.mxu0 %v304
  %v372 = vpop.f32.mrf.mxu0
  %v373 = vadd.f32 0.0, %v372
  %374 = vmatmul.f32.gmra.mxu0 %v307
  %v375 = vpop.f32.mrf.mxu0
  %v376 = vadd.f32 0.0, %v375
  %377 = vmatmul.f32.gmra.mxu0 %v310
  %v378 = vpop.f32.mrf.mxu0
  %v379 = vadd.f32 0.0, %v378
  %380 = vmatmul.f32.gmra.mxu0 %v313
  %v381 = vpop.f32.mrf.mxu0
  %v382 = vadd.f32 0.0, %v381
  %383 = vmatmul.f32.gmra.mxu0 %v316
  %v384 = vpop.f32.mrf.mxu0
  %v385 = vadd.f32 0.0, %v384
  %386 = vmatmul.f32.gmra.mxu0 %v319
  %v387 = vpop.f32.mrf.mxu0
  %v388 = vadd.f32 0.0, %v387
  %389 = vmatmul.f32.gmra.mxu0 %v322
  %v390 = vpop.f32.mrf.mxu0
  %v391 = vadd.f32 0.0, %v390
  %392 = vmatmul.f32.gmra.mxu0 %v325
  %v393 = vpop.f32.mrf.mxu0
  %v394 = vadd.f32 0.0, %v393
  %395 = vmatmul.f32.gmra.mxu0 %v328
  %v396 = vpop.f32.mrf.mxu0
  %v397 = vadd.f32 0.0, %v396
  %398 = vmatmul.f32.gmra.mxu0 %v331
  %v399 = vpop.f32.mrf.mxu0
  %v400 = vadd.f32 0.0, %v399
  %401 = vmatmul.f32.gmra.mxu0 %v334
  %v402 = vpop.f32.mrf.mxu0
  %v403 = vadd.f32 0.0, %v402
  %404 = vmatmul.f32.gmra.mxu0 %v337
  %v405 = vpop.f32.mrf.mxu0
  %v406 = vadd.f32 0.0, %v405
  %407 = vmatmul.f32.gmra.mxu0 %v340
  %v408 = vpop.f32.mrf.mxu0
  %v409 = vadd.f32 0.0, %v408
  %410 = vmatmul.f32.gmra.mxu0 %v343
  %v411 = vpop.f32.mrf.mxu0
  %v412 = vadd.f32 0.0, %v411
  %413 = vmatmul.f32.gmra.mxu0 %v346
  %v414 = vpop.f32.mrf.mxu0
  %v415 = vadd.f32 0.0, %v414
  %416 = vmatmul.f32.gmra.mxu0 %v349
  %v417 = vpop.f32.mrf.mxu0
  %v418 = vadd.f32 0.0, %v417
  %419 = vdwg.mxu0
  %v421 = vsel %vm29, %v268, 0
  %v424 = vsel %vm29, %v269, 0
  %v427 = vsel %vm29, %v270, 0
  %v430 = vsel %vm29, %v271, 0
  %v433 = vsel %vm29, %v272, 0
  %v436 = vsel %vm29, %v273, 0
  %v439 = vsel %vm29, %v274, 0
  %v442 = vsel %vm29, %v275, 0
  %v445 = vsel %vm29, %v276, 0
  %v448 = vsel %vm29, %v277, 0
  %v451 = vsel %vm29, %v278, 0
  %v454 = vsel %vm29, %v279, 0
  %v457 = vsel %vm29, %v280, 0
  %v460 = vsel %vm29, %v281, 0
  %v463 = vsel %vm29, %v282, 0
  %v466 = vsel %vm29, %v283, 0
  %v469 = vsel %vm351, %v284, 0
  %471 = vmatpush.msra.mxu0 0.0
  %472 = vmatpush.msra.mxu0 0.0
  %473 = vmatpush.msra.mxu0 0.0
  %474 = vmatpush.msra.mxu0 0.0
  %475 = vmatpush.msra.mxu0 0.0
  %476 = vmatpush.msra.mxu0 0.0
  %477 = vmatpush.msra.mxu0 0.0
  %478 = vmatpush.msra.mxu0 0.0
  %479 = vmatpush.msra.mxu0 0.0
  %480 = vmatpush.msra.mxu0 0.0
  %481 = vmatpush.msra.mxu0 0.0
  %482 = vmatpush.msra.mxu0 0.0
  %483 = vmatpush.msra.mxu0 0.0
  %484 = vmatpush.msra.mxu0 0.0
  %485 = vmatpush.msra.mxu0 0.0
  %486 = vmatpush.msra.mxu0 %v469
  %487 = vmatmul.f32.gmra.mxu0 %v421
  %v488 = vpop.f32.mrf.mxu0
  %v489 = vadd.f32 %v373, %v488
  %490 = vmatmul.f32.gmra.mxu0 %v424
  %v491 = vpop.f32.mrf.mxu0
  %v492 = vadd.f32 %v376, %v491
  %493 = vmatmul.f32.gmra.mxu0 %v427
  %v494 = vpop.f32.mrf.mxu0
  %v495 = vadd.f32 %v379, %v494
  %496 = vmatmul.f32.gmra.mxu0 %v430
  %v497 = vpop.f32.mrf.mxu0
  %v498 = vadd.f32 %v382, %v497
  %499 = vmatmul.f32.gmra.mxu0 %v433
  %v500 = vpop.f32.mrf.mxu0
  %v501 = vadd.f32 %v385, %v500
  %502 = vmatmul.f32.gmra.mxu0 %v436
  %v503 = vpop.f32.mrf.mxu0
  %v504 = vadd.f32 %v388, %v503
  %505 = vmatmul.f32.gmra.mxu0 %v439
  %v506 = vpop.f32.mrf.mxu0
  %v507 = vadd.f32 %v391, %v506
  %508 = vmatmul.f32.gmra.mxu0 %v442
  %v509 = vpop.f32.mrf.mxu0
  %v510 = vadd.f32 %v394, %v509
  %511 = vmatmul.f32.gmra.mxu0 %v445
  %v512 = vpop.f32.mrf.mxu0
  %v513 = vadd.f32 %v397, %v512
  %514 = vmatmul.f32.gmra.mxu0 %v448
  %v515 = vpop.f32.mrf.mxu0
  %v516 = vadd.f32 %v400, %v515
  %517 = vmatmul.f32.gmra.mxu0 %v451
  %v518 = vpop.f32.mrf.mxu0
  %v519 = vadd.f32 %v403, %v518
  %520 = vmatmul.f32.gmra.mxu0 %v454
  %v521 = vpop.f32.mrf.mxu0
  %v522 = vadd.f32 %v406, %v521
  %523 = vmatmul.f32.gmra.mxu0 %v457
  %v524 = vpop.f32.mrf.mxu0
  %v525 = vadd.f32 %v409, %v524
  %526 = vmatmul.f32.gmra.mxu0 %v460
  %v527 = vpop.f32.mrf.mxu0
  %v528 = vadd.f32 %v412, %v527
  %529 = vmatmul.f32.gmra.mxu0 %v463
  %v530 = vpop.f32.mrf.mxu0
  %v531 = vadd.f32 %v415, %v530
  %532 = vmatmul.f32.gmra.mxu0 %v466
  %v533 = vpop.f32.mrf.mxu0
  %v534 = vadd.f32 %v418, %v533
  %535 = vdwg.mxu0
  %v536 = vld [vmem:[#allocation2 + $0x2] sm:$0xff]
  %v537 = vld [vmem:[#allocation2 + $0xa] sm:$0xff]
  %v538 = vld [vmem:[#allocation2 + $0x1a] sm:$0xff]
  %v539 = vld [vmem:[#allocation2 + $0x22] sm:$0xff]
  %v540 = vld [vmem:[#allocation2 + $0x32] sm:$0xff]
  %v541 = vld [vmem:[#allocation2 + $0x3a] sm:$0xff]
  %v542 = vld [vmem:[#allocation2 + $0x4a] sm:$0xff]
  %v543 = vld [vmem:[#allocation2 + $0x52] sm:$0xff]
  %v544 = vld [vmem:[#allocation2 + $0x62] sm:$0xff]
  %v545 = vld [vmem:[#allocation2 + $0x6a] sm:$0xff]
  %v546 = vld [vmem:[#allocation2 + $0x7a] sm:$0xff]
  %v547 = vld [vmem:[#allocation2 + $0x82] sm:$0xff]
  %v548 = vld [vmem:[#allocation2 + $0x92] sm:$0xff]
  %v549 = vld [vmem:[#allocation2 + $0x9a] sm:$0xff]
  %v550 = vld [vmem:[#allocation2 + $0xaa] sm:$0xff]
  %v551 = vld [vmem:[#allocation2 + $0xb2] sm:$0xff]
  %s552 = scalar_lea.vmem %s2, 8
  %v553 = vld [vmem:[%s552] sm:$0x7]
  %v555 = vsel %vm29, %v536, 0
  %v558 = vsel %vm29, %v537, 0
  %v561 = vsel %vm29, %v538, 0
  %v564 = vsel %vm29, %v539, 0
  %v567 = vsel %vm29, %v540, 0
  %v570 = vsel %vm29, %v541, 0
  %v573 = vsel %vm29, %v542, 0
  %v576 = vsel %vm29, %v543, 0
  %v579 = vsel %vm29, %v544, 0
  %v582 = vsel %vm29, %v545, 0
  %v585 = vsel %vm29, %v546, 0
  %v588 = vsel %vm29, %v547, 0
  %v591 = vsel %vm29, %v548, 0
  %v594 = vsel %vm29, %v549, 0
  %v597 = vsel %vm29, %v550, 0
  %v600 = vsel %vm29, %v551, 0
  %v603 = vsel %vm351, %v553, 0
  %605 = vmatpush.msra.mxu0 0.0
  %606 = vmatpush.msra.mxu0 0.0
  %607 = vmatpush.msra.mxu0 0.0
  %608 = vmatpush.msra.mxu0 0.0
  %609 = vmatpush.msra.mxu0 0.0
  %610 = vmatpush.msra.mxu0 0.0
  %611 = vmatpush.msra.mxu0 0.0
  %612 = vmatpush.msra.mxu0 0.0
  %613 = vmatpush.msra.mxu0 0.0
  %614 = vmatpush.msra.mxu0 0.0
  %615 = vmatpush.msra.mxu0 0.0
  %616 = vmatpush.msra.mxu0 0.0
  %617 = vmatpush.msra.mxu0 0.0
  %618 = vmatpush.msra.mxu0 0.0
  %619 = vmatpush.msra.mxu0 0.0
  %620 = vmatpush.msra.mxu0 %v603
  %621 = vmatmul.f32.gmra.mxu0 %v555
  %v622 = vpop.f32.mrf.mxu0
  %v623 = vadd.f32 0.0, %v622
  %624 = vmatmul.f32.gmra.mxu0 %v558
  %v625 = vpop.f32.mrf.mxu0
  %v626 = vadd.f32 0.0, %v625
  %627 = vmatmul.f32.gmra.mxu0 %v561
  %v628 = vpop.f32.mrf.mxu0
  %v629 = vadd.f32 0.0, %v628
  %630 = vmatmul.f32.gmra.mxu0 %v564
  %v631 = vpop.f32.mrf.mxu0
  %v632 = vadd.f32 0.0, %v631
  %633 = vmatmul.f32.gmra.mxu0 %v567
  %v634 = vpop.f32.mrf.mxu0
  %v635 = vadd.f32 0.0, %v634
  %636 = vmatmul.f32.gmra.mxu0 %v570
  %v637 = vpop.f32.mrf.mxu0
  %v638 = vadd.f32 0.0, %v637
  %639 = vmatmul.f32.gmra.mxu0 %v573
  %v640 = vpop.f32.mrf.mxu0
  %v641 = vadd.f32 0.0, %v640
  %642 = vmatmul.f32.gmra.mxu0 %v576
  %v643 = vpop.f32.mrf.mxu0
  %v644 = vadd.f32 0.0, %v643
  %645 = vmatmul.f32.gmra.mxu0 %v579
  %v646 = vpop.f32.mrf.mxu0
  %v647 = vadd.f32 0.0, %v646
  %648 = vmatmul.f32.gmra.mxu0 %v582
  %v649 = vpop.f32.mrf.mxu0
  %v650 = vadd.f32 0.0, %v649
  %651 = vmatmul.f32.gmra.mxu0 %v585
  %v652 = vpop.f32.mrf.mxu0
  %v653 = vadd.f32 0.0, %v652
  %654 = vmatmul.f32.gmra.mxu0 %v588
  %v655 = vpop.f32.mrf.mxu0
  %v656 = vadd.f32 0.0, %v655
  %657 = vmatmul.f32.gmra.mxu0 %v591
  %v658 = vpop.f32.mrf.mxu0
  %v659 = vadd.f32 0.0, %v658
  %660 = vmatmul.f32.gmra.mxu0 %v594
  %v661 = vpop.f32.mrf.mxu0
  %v662 = vadd.f32 0.0, %v661
  %663 = vmatmul.f32.gmra.mxu0 %v597
  %v664 = vpop.f32.mrf.mxu0
  %v665 = vadd.f32 0.0, %v664
  %666 = vmatmul.f32.gmra.mxu0 %v600
  %v667 = vpop.f32.mrf.mxu0
  %v668 = vadd.f32 0.0, %v667
  %669 = vdwg.mxu0
  %v670 = vadd.f32 %v489, %v623
  %v671 = vadd.f32 %v492, %v626
  %v672 = vadd.f32 %v495, %v629
  %v673 = vadd.f32 %v498, %v632
  %v674 = vadd.f32 %v501, %v635
  %v675 = vadd.f32 %v504, %v638
  %v676 = vadd.f32 %v507, %v641
  %v677 = vadd.f32 %v510, %v644
  %v678 = vadd.f32 %v513, %v647
  %v679 = vadd.f32 %v516, %v650
  %v680 = vadd.f32 %v519, %v653
  %v681 = vadd.f32 %v522, %v656
  %v682 = vadd.f32 %v525, %v659
  %v683 = vadd.f32 %v528, %v662
  %v684 = vadd.f32 %v531, %v665
  %v685 = vadd.f32 %v534, %v668
  %v686 = vld [vmem:[%s203] sm:$0xff]
  %v687 = vld [vmem:[%s203 + $0x8] sm:$0xff]
  %v688 = vld [vmem:[%s203 + $0x18] sm:$0xff]
  %v689 = vld [vmem:[%s203 + $0x20] sm:$0xff]
  %v690 = vld [vmem:[%s203 + $0x30] sm:$0xff]
  %v691 = vld [vmem:[%s203 + $0x38] sm:$0xff]
  %v692 = vld [vmem:[%s203 + $0x48] sm:$0xff]
  %v693 = vld [vmem:[%s203 + $0x50] sm:$0xff]
  %v694 = vld [vmem:[%s203 + $0x60] sm:$0xff]
  %v695 = vld [vmem:[%s203 + $0x68] sm:$0xff]
  %v696 = vld [vmem:[%s203 + $0x78] sm:$0xff]
  %v697 = vld [vmem:[%s203 + $0x80] sm:$0xff]
  %v698 = vld [vmem:[%s203 + $0x90] sm:$0xff]
  %v699 = vld [vmem:[%s203 + $0x98] sm:$0xff]
  %v700 = vld [vmem:[%s203 + $0xa8] sm:$0xff]
  %v701 = vld [vmem:[%s203 + $0xb0] sm:$0xff]
  %s702 = scalar_lea.vmem %s2, 12
  %v703 = vld [vmem:[%s702] sm:$0x7]
  %v705 = vsel %vm29, %v686, 0
  %v708 = vsel %vm29, %v687, 0
  %v711 = vsel %vm29, %v688, 0
  %v714 = vsel %vm29, %v689, 0
  %v717 = vsel %vm29, %v690, 0
  %v720 = vsel %vm29, %v691, 0
  %v723 = vsel %vm29, %v692, 0
  %v726 = vsel %vm29, %v693, 0
  %v729 = vsel %vm29, %v694, 0
  %v732 = vsel %vm29, %v695, 0
  %v735 = vsel %vm29, %v696, 0
  %v738 = vsel %vm29, %v697, 0
  %v741 = vsel %vm29, %v698, 0
  %v744 = vsel %vm29, %v699, 0
  %v747 = vsel %vm29, %v700, 0
  %v750 = vsel %vm29, %v701, 0
  %v753 = vsel %vm351, %v703, 0
  %755 = vmatpush.msra.mxu0 0.0
  %756 = vmatpush.msra.mxu0 0.0
  %757 = vmatpush.msra.mxu0 0.0
  %758 = vmatpush.msra.mxu0 0.0
  %759 = vmatpush.msra.mxu0 0.0
  %760 = vmatpush.msra.mxu0 0.0
  %761 = vmatpush.msra.mxu0 0.0
  %762 = vmatpush.msra.mxu0 0.0
  %763 = vmatpush.msra.mxu0 0.0
  %764 = vmatpush.msra.mxu0 0.0
  %765 = vmatpush.msra.mxu0 0.0
  %766 = vmatpush.msra.mxu0 0.0
  %767 = vmatpush.msra.mxu0 0.0
  %768 = vmatpush.msra.mxu0 0.0
  %769 = vmatpush.msra.mxu0 0.0
  %770 = vmatpush.msra.mxu0 %v753
  %771 = vmatmul.f32.gmra.mxu0 %v705
  %v772 = vpop.f32.mrf.mxu0
  %v773 = vadd.f32 0.0, %v772
  %774 = vmatmul.f32.gmra.mxu0 %v708
  %v775 = vpop.f32.mrf.mxu0
  %v776 = vadd.f32 0.0, %v775
  %777 = vmatmul.f32.gmra.mxu0 %v711
  %v778 = vpop.f32.mrf.mxu0
  %v779 = vadd.f32 0.0, %v778
  %780 = vmatmul.f32.gmra.mxu0 %v714
  %v781 = vpop.f32.mrf.mxu0
  %v782 = vadd.f32 0.0, %v781
  %783 = vmatmul.f32.gmra.mxu0 %v717
  %v784 = vpop.f32.mrf.mxu0
  %v785 = vadd.f32 0.0, %v784
  %786 = vmatmul.f32.gmra.mxu0 %v720
  %v787 = vpop.f32.mrf.mxu0
  %v788 = vadd.f32 0.0, %v787
  %789 = vmatmul.f32.gmra.mxu0 %v723
  %v790 = vpop.f32.mrf.mxu0
  %v791 = vadd.f32 0.0, %v790
  %792 = vmatmul.f32.gmra.mxu0 %v726
  %v793 = vpop.f32.mrf.mxu0
  %v794 = vadd.f32 0.0, %v793
  %795 = vmatmul.f32.gmra.mxu0 %v729
  %v796 = vpop.f32.mrf.mxu0
  %v797 = vadd.f32 0.0, %v796
  %798 = vmatmul.f32.gmra.mxu0 %v732
  %v799 = vpop.f32.mrf.mxu0
  %v800 = vadd.f32 0.0, %v799
  %801 = vmatmul.f32.gmra.mxu0 %v735
  %v802 = vpop.f32.mrf.mxu0
  %v803 = vadd.f32 0.0, %v802
  %804 = vmatmul.f32.gmra.mxu0 %v738
  %v805 = vpop.f32.mrf.mxu0
  %v806 = vadd.f32 0.0, %v805
  %807 = vmatmul.f32.gmra.mxu0 %v741
  %v808 = vpop.f32.mrf.mxu0
  %v809 = vadd.f32 0.0, %v808
  %810 = vmatmul.f32.gmra.mxu0 %v744
  %v811 = vpop.f32.mrf.mxu0
  %v812 = vadd.f32 0.0, %v811
  %813 = vmatmul.f32.gmra.mxu0 %v747
  %v814 = vpop.f32.mrf.mxu0
  %v815 = vadd.f32 0.0, %v814
  %816 = vmatmul.f32.gmra.mxu0 %v750
  %v817 = vpop.f32.mrf.mxu0
  %v818 = vadd.f32 0.0, %v817
  %819 = vdwg.mxu0
  %v820 = vadd.f32 %v670, %v773
  %v821 = vadd.f32 %v671, %v776
  %v822 = vadd.f32 %v672, %v779
  %v823 = vadd.f32 %v673, %v782
  %v824 = vadd.f32 %v674, %v785
  %v825 = vadd.f32 %v675, %v788
  %v826 = vadd.f32 %v676, %v791
  %v827 = vadd.f32 %v677, %v794
  %v828 = vadd.f32 %v678, %v797
  %v829 = vadd.f32 %v679, %v800
  %v830 = vadd.f32 %v680, %v803
  %v831 = vadd.f32 %v681, %v806
  %v832 = vadd.f32 %v682, %v809
  %v833 = vadd.f32 %v683, %v812
  %v834 = vadd.f32 %v684, %v815
  %v835 = vadd.f32 %v685, %v818
  %v836 = vld [vmem:[%s203 + $0x1] sm:$0xff]
  %v837 = vld [vmem:[%s203 + $0x9] sm:$0xff]
  %v838 = vld [vmem:[%s203 + $0x19] sm:$0xff]
  %v839 = vld [vmem:[%s203 + $0x21] sm:$0xff]
  %v840 = vld [vmem:[%s203 + $0x31] sm:$0xff]
  %v841 = vld [vmem:[%s203 + $0x39] sm:$0xff]
  %v842 = vld [vmem:[%s203 + $0x49] sm:$0xff]
  %v843 = vld [vmem:[%s203 + $0x51] sm:$0xff]
  %v844 = vld [vmem:[%s203 + $0x61] sm:$0xff]
  %v845 = vld [vmem:[%s203 + $0x69] sm:$0xff]
  %v846 = vld [vmem:[%s203 + $0x79] sm:$0xff]
  %v847 = vld [vmem:[%s203 + $0x81] sm:$0xff]
  %v848 = vld [vmem:[%s203 + $0x91] sm:$0xff]
  %v849 = vld [vmem:[%s203 + $0x99] sm:$0xff]
  %v850 = vld [vmem:[%s203 + $0xa9] sm:$0xff]
  %v851 = vld [vmem:[%s203 + $0xb1] sm:$0xff]
  %s852 = scalar_lea.vmem %s2, 16
  %v853 = vld [vmem:[%s852] sm:$0x7]
  %v855 = vsel %vm29, %v836, 0
  %v858 = vsel %vm29, %v837, 0
  %v861 = vsel %vm29, %v838, 0
  %v864 = vsel %vm29, %v839, 0
  %v867 = vsel %vm29, %v840, 0
  %v870 = vsel %vm29, %v841, 0
  %v873 = vsel %vm29, %v842, 0
  %v876 = vsel %vm29, %v843, 0
  %v879 = vsel %vm29, %v844, 0
  %v882 = vsel %vm29, %v845, 0
  %v885 = vsel %vm29, %v846, 0
  %v888 = vsel %vm29, %v847, 0
  %v891 = vsel %vm29, %v848, 0
  %v894 = vsel %vm29, %v849, 0
  %v897 = vsel %vm29, %v850, 0
  %v900 = vsel %vm29, %v851, 0
  %v903 = vsel %vm351, %v853, 0
  %905 = vmatpush.msra.mxu0 0.0
  %906 = vmatpush.msra.mxu0 0.0
  %907 = vmatpush.msra.mxu0 0.0
  %908 = vmatpush.msra.mxu0 0.0
  %909 = vmatpush.msra.mxu0 0.0
  %910 = vmatpush.msra.mxu0 0.0
  %911 = vmatpush.msra.mxu0 0.0
  %912 = vmatpush.msra.mxu0 0.0
  %913 = vmatpush.msra.mxu0 0.0
  %914 = vmatpush.msra.mxu0 0.0
  %915 = vmatpush.msra.mxu0 0.0
  %916 = vmatpush.msra.mxu0 0.0
  %917 = vmatpush.msra.mxu0 0.0
  %918 = vmatpush.msra.mxu0 0.0
  %919 = vmatpush.msra.mxu0 0.0
  %920 = vmatpush.msra.mxu0 %v903
  %921 = vmatmul.f32.gmra.mxu0 %v855
  %v922 = vpop.f32.mrf.mxu0
  %v923 = vadd.f32 0.0, %v922
  %924 = vmatmul.f32.gmra.mxu0 %v858
  %v925 = vpop.f32.mrf.mxu0
  %v926 = vadd.f32 0.0, %v925
  %927 = vmatmul.f32.gmra.mxu0 %v861
  %v928 = vpop.f32.mrf.mxu0
  %v929 = vadd.f32 0.0, %v928
  %930 = vmatmul.f32.gmra.mxu0 %v864
  %v931 = vpop.f32.mrf.mxu0
  %v932 = vadd.f32 0.0, %v931
  %933 = vmatmul.f32.gmra.mxu0 %v867
  %v934 = vpop.f32.mrf.mxu0
  %v935 = vadd.f32 0.0, %v934
  %936 = vmatmul.f32.gmra.mxu0 %v870
  %v937 = vpop.f32.mrf.mxu0
  %v938 = vadd.f32 0.0, %v937
  %939 = vmatmul.f32.gmra.mxu0 %v873
  %v940 = vpop.f32.mrf.mxu0
  %v941 = vadd.f32 0.0, %v940
  %942 = vmatmul.f32.gmra.mxu0 %v876
  %v943 = vpop.f32.mrf.mxu0
  %v944 = vadd.f32 0.0, %v943
  %945 = vmatmul.f32.gmra.mxu0 %v879
  %v946 = vpop.f32.mrf.mxu0
  %v947 = vadd.f32 0.0, %v946
  %948 = vmatmul.f32.gmra.mxu0 %v882
  %v949 = vpop.f32.mrf.mxu0
  %v950 = vadd.f32 0.0, %v949
  %951 = vmatmul.f32.gmra.mxu0 %v885
  %v952 = vpop.f32.mrf.mxu0
  %v953 = vadd.f32 0.0, %v952
  %954 = vmatmul.f32.gmra.mxu0 %v888
  %v955 = vpop.f32.mrf.mxu0
  %v956 = vadd.f32 0.0, %v955
  %957 = vmatmul.f32.gmra.mxu0 %v891
  %v958 = vpop.f32.mrf.mxu0
  %v959 = vadd.f32 0.0, %v958
  %960 = vmatmul.f32.gmra.mxu0 %v894
  %v961 = vpop.f32.mrf.mxu0
  %v962 = vadd.f32 0.0, %v961
  %963 = vmatmul.f32.gmra.mxu0 %v897
  %v964 = vpop.f32.mrf.mxu0
  %v965 = vadd.f32 0.0, %v964
  %966 = vmatmul.f32.gmra.mxu0 %v900
  %v967 = vpop.f32.mrf.mxu0
  %v968 = vadd.f32 0.0, %v967
  %969 = vdwg.mxu0
  %v970 = vadd.f32 %v820, %v923
  %v971 = vadd.f32 %v821, %v926
  %v972 = vadd.f32 %v822, %v929
  %v973 = vadd.f32 %v823, %v932
  %v974 = vadd.f32 %v824, %v935
  %v975 = vadd.f32 %v825, %v938
  %v976 = vadd.f32 %v826, %v941
  %v977 = vadd.f32 %v827, %v944
  %v978 = vadd.f32 %v828, %v947
  %v979 = vadd.f32 %v829, %v950
  %v980 = vadd.f32 %v830, %v953
  %v981 = vadd.f32 %v831, %v956
  %v982 = vadd.f32 %v832, %v959
  %v983 = vadd.f32 %v833, %v962
  %v984 = vadd.f32 %v834, %v965
  %v985 = vadd.f32 %v835, %v968
  %v986 = vld [vmem:[%s203 + $0x2] sm:$0xff]
  %v987 = vld [vmem:[%s203 + $0xa] sm:$0xff]
  %v988 = vld [vmem:[%s203 + $0x1a] sm:$0xff]
  %v989 = vld [vmem:[%s203 + $0x22] sm:$0xff]
  %v990 = vld [vmem:[%s203 + $0x32] sm:$0xff]
  %v991 = vld [vmem:[%s203 + $0x3a] sm:$0xff]
  %v992 = vld [vmem:[%s203 + $0x4a] sm:$0xff]
  %v993 = vld [vmem:[%s203 + $0x52] sm:$0xff]
  %v994 = vld [vmem:[%s203 + $0x62] sm:$0xff]
  %v995 = vld [vmem:[%s203 + $0x6a] sm:$0xff]
  %v996 = vld [vmem:[%s203 + $0x7a] sm:$0xff]
  %v997 = vld [vmem:[%s203 + $0x82] sm:$0xff]
  %v998 = vld [vmem:[%s203 + $0x92] sm:$0xff]
  %v999 = vld [vmem:[%s203 + $0x9a] sm:$0xff]
  %v1000 = vld [vmem:[%s203 + $0xaa] sm:$0xff]
  %v1001 = vld [vmem:[%s203 + $0xb2] sm:$0xff]
  %s1002 = scalar_lea.vmem %s2, 20
  %v1003 = vld [vmem:[%s1002] sm:$0x7]
  %v1005 = vsel %vm29, %v986, 0
  %v1008 = vsel %vm29, %v987, 0
  %v1011 = vsel %vm29, %v988, 0
  %v1014 = vsel %vm29, %v989, 0
  %v1017 = vsel %vm29, %v990, 0
  %v1020 = vsel %vm29, %v991, 0
  %v1023 = vsel %vm29, %v992, 0
  %v1026 = vsel %vm29, %v993, 0
  %v1029 = vsel %vm29, %v994, 0
  %v1032 = vsel %vm29, %v995, 0
  %v1035 = vsel %vm29, %v996, 0
  %v1038 = vsel %vm29, %v997, 0
  %v1041 = vsel %vm29, %v998, 0
  %v1044 = vsel %vm29, %v999, 0
  %v1047 = vsel %vm29, %v1000, 0
  %v1050 = vsel %vm29, %v1001, 0
  %v1053 = vsel %vm351, %v1003, 0
  %1055 = vmatpush.msra.mxu0 0.0
  %1056 = vmatpush.msra.mxu0 0.0
  %1057 = vmatpush.msra.mxu0 0.0
  %1058 = vmatpush.msra.mxu0 0.0
  %1059 = vmatpush.msra.mxu0 0.0
  %1060 = vmatpush.msra.mxu0 0.0
  %1061 = vmatpush.msra.mxu0 0.0
  %1062 = vmatpush.msra.mxu0 0.0
  %1063 = vmatpush.msra.mxu0 0.0
  %1064 = vmatpush.msra.mxu0 0.0
  %1065 = vmatpush.msra.mxu0 0.0
  %1066 = vmatpush.msra.mxu0 0.0
  %1067 = vmatpush.msra.mxu0 0.0
  %1068 = vmatpush.msra.mxu0 0.0
  %1069 = vmatpush.msra.mxu0 0.0
  %1070 = vmatpush.msra.mxu0 %v1053
  %1071 = vmatmul.f32.gmra.mxu0 %v1005
  %v1072 = vpop.f32.mrf.mxu0
  %v1073 = vadd.f32 0.0, %v1072
  %1074 = vmatmul.f32.gmra.mxu0 %v1008
  %v1075 = vpop.f32.mrf.mxu0
  %v1076 = vadd.f32 0.0, %v1075
  %1077 = vmatmul.f32.gmra.mxu0 %v1011
  %v1078 = vpop.f32.mrf.mxu0
  %v1079 = vadd.f32 0.0, %v1078
  %1080 = vmatmul.f32.gmra.mxu0 %v1014
  %v1081 = vpop.f32.mrf.mxu0
  %v1082 = vadd.f32 0.0, %v1081
  %1083 = vmatmul.f32.gmra.mxu0 %v1017
  %v1084 = vpop.f32.mrf.mxu0
  %v1085 = vadd.f32 0.0, %v1084
  %1086 = vmatmul.f32.gmra.mxu0 %v1020
  %v1087 = vpop.f32.mrf.mxu0
  %v1088 = vadd.f32 0.0, %v1087
  %1089 = vmatmul.f32.gmra.mxu0 %v1023
  %v1090 = vpop.f32.mrf.mxu0
  %v1091 = vadd.f32 0.0, %v1090
  %1092 = vmatmul.f32.gmra.mxu0 %v1026
  %v1093 = vpop.f32.mrf.mxu0
  %v1094 = vadd.f32 0.0, %v1093
  %1095 = vmatmul.f32.gmra.mxu0 %v1029
  %v1096 = vpop.f32.mrf.mxu0
  %v1097 = vadd.f32 0.0, %v1096
  %1098 = vmatmul.f32.gmra.mxu0 %v1032
  %v1099 = vpop.f32.mrf.mxu0
  %v1100 = vadd.f32 0.0, %v1099
  %1101 = vmatmul.f32.gmra.mxu0 %v1035
  %v1102 = vpop.f32.mrf.mxu0
  %v1103 = vadd.f32 0.0, %v1102
  %1104 = vmatmul.f32.gmra.mxu0 %v1038
  %v1105 = vpop.f32.mrf.mxu0
  %v1106 = vadd.f32 0.0, %v1105
  %1107 = vmatmul.f32.gmra.mxu0 %v1041
  %v1108 = vpop.f32.mrf.mxu0
  %v1109 = vadd.f32 0.0, %v1108
  %1110 = vmatmul.f32.gmra.mxu0 %v1044
  %v1111 = vpop.f32.mrf.mxu0
  %v1112 = vadd.f32 0.0, %v1111
  %1113 = vmatmul.f32.gmra.mxu0 %v1047
  %v1114 = vpop.f32.mrf.mxu0
  %v1115 = vadd.f32 0.0, %v1114
  %1116 = vmatmul.f32.gmra.mxu0 %v1050
  %v1117 = vpop.f32.mrf.mxu0
  %v1118 = vadd.f32 0.0, %v1117
  %1119 = vdwg.mxu0
  %v1120 = vadd.f32 %v970, %v1073
  %v1121 = vadd.f32 %v971, %v1076
  %v1122 = vadd.f32 %v972, %v1079
  %v1123 = vadd.f32 %v973, %v1082
  %v1124 = vadd.f32 %v974, %v1085
  %v1125 = vadd.f32 %v975, %v1088
  %v1126 = vadd.f32 %v976, %v1091
  %v1127 = vadd.f32 %v977, %v1094
  %v1128 = vadd.f32 %v978, %v1097
  %v1129 = vadd.f32 %v979, %v1100
  %v1130 = vadd.f32 %v980, %v1103
  %v1131 = vadd.f32 %v981, %v1106
  %v1132 = vadd.f32 %v982, %v1109
  %v1133 = vadd.f32 %v983, %v1112
  %v1134 = vadd.f32 %v984, %v1115
  %v1135 = vadd.f32 %v985, %v1118
  %s1136 = scalar_lea.vmem [#allocation2], 48
  %v1137 = vld [vmem:[%s1136] sm:$0xff]
  %v1138 = vld [vmem:[%s1136 + $0x8] sm:$0xff]
  %v1139 = vld [vmem:[%s1136 + $0x18] sm:$0xff]
  %v1140 = vld [vmem:[%s1136 + $0x20] sm:$0xff]
  %v1141 = vld [vmem:[%s1136 + $0x30] sm:$0xff]
  %v1142 = vld [vmem:[%s1136 + $0x38] sm:$0xff]
  %v1143 = vld [vmem:[%s1136 + $0x48] sm:$0xff]
  %v1144 = vld [vmem:[%s1136 + $0x50] sm:$0xff]
  %v1145 = vld [vmem:[%s1136 + $0x60] sm:$0xff]
  %v1146 = vld [vmem:[%s1136 + $0x68] sm:$0xff]
  %v1147 = vld [vmem:[%s1136 + $0x78] sm:$0xff]
  %v1148 = vld [vmem:[%s1136 + $0x80] sm:$0xff]
  %v1149 = vld [vmem:[%s1136 + $0x90] sm:$0xff]
  %v1150 = vld [vmem:[%s1136 + $0x98] sm:$0xff]
  %v1151 = vld [vmem:[%s1136 + $0xa8] sm:$0xff]
  %v1152 = vld [vmem:[%s1136 + $0xb0] sm:$0xff]
  %s1153 = scalar_lea.vmem %s2, 24
  %v1154 = vld [vmem:[%s1153] sm:$0x7]
  %v1156 = vsel %vm29, %v1137, 0
  %v1159 = vsel %vm29, %v1138, 0
  %v1162 = vsel %vm29, %v1139, 0
  %v1165 = vsel %vm29, %v1140, 0
  %v1168 = vsel %vm29, %v1141, 0
  %v1171 = vsel %vm29, %v1142, 0
  %v1174 = vsel %vm29, %v1143, 0
  %v1177 = vsel %vm29, %v1144, 0
  %v1180 = vsel %vm29, %v1145, 0
  %v1183 = vsel %vm29, %v1146, 0
  %v1186 = vsel %vm29, %v1147, 0
  %v1189 = vsel %vm29, %v1148, 0
  %v1192 = vsel %vm29, %v1149, 0
  %v1195 = vsel %vm29, %v1150, 0
  %v1198 = vsel %vm29, %v1151, 0
  %v1201 = vsel %vm29, %v1152, 0
  %v1204 = vsel %vm351, %v1154, 0
  %1206 = vmatpush.msra.mxu0 0.0
  %1207 = vmatpush.msra.mxu0 0.0
  %1208 = vmatpush.msra.mxu0 0.0
  %1209 = vmatpush.msra.mxu0 0.0
  %1210 = vmatpush.msra.mxu0 0.0
  %1211 = vmatpush.msra.mxu0 0.0
  %1212 = vmatpush.msra.mxu0 0.0
  %1213 = vmatpush.msra.mxu0 0.0
  %1214 = vmatpush.msra.mxu0 0.0
  %1215 = vmatpush.msra.mxu0 0.0
  %1216 = vmatpush.msra.mxu0 0.0
  %1217 = vmatpush.msra.mxu0 0.0
  %1218 = vmatpush.msra.mxu0 0.0
  %1219 = vmatpush.msra.mxu0 0.0
  %1220 = vmatpush.msra.mxu0 0.0
  %1221 = vmatpush.msra.mxu0 %v1204
  %1222 = vmatmul.f32.gmra.mxu0 %v1156
  %v1223 = vpop.f32.mrf.mxu0
  %v1224 = vadd.f32 0.0, %v1223
  %1225 = vmatmul.f32.gmra.mxu0 %v1159
  %v1226 = vpop.f32.mrf.mxu0
  %v1227 = vadd.f32 0.0, %v1226
  %1228 = vmatmul.f32.gmra.mxu0 %v1162
  %v1229 = vpop.f32.mrf.mxu0
  %v1230 = vadd.f32 0.0, %v1229
  %1231 = vmatmul.f32.gmra.mxu0 %v1165
  %v1232 = vpop.f32.mrf.mxu0
  %v1233 = vadd.f32 0.0, %v1232
  %1234 = vmatmul.f32.gmra.mxu0 %v1168
  %v1235 = vpop.f32.mrf.mxu0
  %v1236 = vadd.f32 0.0, %v1235
  %1237 = vmatmul.f32.gmra.mxu0 %v1171
  %v1238 = vpop.f32.mrf.mxu0
  %v1239 = vadd.f32 0.0, %v1238
  %1240 = vmatmul.f32.gmra.mxu0 %v1174
  %v1241 = vpop.f32.mrf.mxu0
  %v1242 = vadd.f32 0.0, %v1241
  %1243 = vmatmul.f32.gmra.mxu0 %v1177
  %v1244 = vpop.f32.mrf.mxu0
  %v1245 = vadd.f32 0.0, %v1244
  %1246 = vmatmul.f32.gmra.mxu0 %v1180
  %v1247 = vpop.f32.mrf.mxu0
  %v1248 = vadd.f32 0.0, %v1247
  %1249 = vmatmul.f32.gmra.mxu0 %v1183
  %v1250 = vpop.f32.mrf.mxu0
  %v1251 = vadd.f32 0.0, %v1250
  %1252 = vmatmul.f32.gmra.mxu0 %v1186
  %v1253 = vpop.f32.mrf.mxu0
  %v1254 = vadd.f32 0.0, %v1253
  %1255 = vmatmul.f32.gmra.mxu0 %v1189
  %v1256 = vpop.f32.mrf.mxu0
  %v1257 = vadd.f32 0.0, %v1256
  %1258 = vmatmul.f32.gmra.mxu0 %v1192
  %v1259 = vpop.f32.mrf.mxu0
  %v1260 = vadd.f32 0.0, %v1259
  %1261 = vmatmul.f32.gmra.mxu0 %v1195
  %v1262 = vpop.f32.mrf.mxu0
  %v1263 = vadd.f32 0.0, %v1262
  %1264 = vmatmul.f32.gmra.mxu0 %v1198
  %v1265 = vpop.f32.mrf.mxu0
  %v1266 = vadd.f32 0.0, %v1265
  %1267 = vmatmul.f32.gmra.mxu0 %v1201
  %v1268 = vpop.f32.mrf.mxu0
  %v1269 = vadd.f32 0.0, %v1268
  %1270 = vdwg.mxu0
  %v1271 = vadd.f32 %v1120, %v1224
  %v1272 = vadd.f32 %v1121, %v1227
  %v1273 = vadd.f32 %v1122, %v1230
  %v1274 = vadd.f32 %v1123, %v1233
  %v1275 = vadd.f32 %v1124, %v1236
  %v1276 = vadd.f32 %v1125, %v1239
  %v1277 = vadd.f32 %v1126, %v1242
  %v1278 = vadd.f32 %v1127, %v1245
  %v1279 = vadd.f32 %v1128, %v1248
  %v1280 = vadd.f32 %v1129, %v1251
  %v1281 = vadd.f32 %v1130, %v1254
  %v1282 = vadd.f32 %v1131, %v1257
  %v1283 = vadd.f32 %v1132, %v1260
  %v1284 = vadd.f32 %v1133, %v1263
  %v1285 = vadd.f32 %v1134, %v1266
  %v1286 = vadd.f32 %v1135, %v1269
  %v1287 = vld [vmem:[%s1136 + $0x1] sm:$0xff]
  %v1288 = vld [vmem:[%s1136 + $0x9] sm:$0xff]
  %v1289 = vld [vmem:[%s1136 + $0x19] sm:$0xff]
  %v1290 = vld [vmem:[%s1136 + $0x21] sm:$0xff]
  %v1291 = vld [vmem:[%s1136 + $0x31] sm:$0xff]
  %v1292 = vld [vmem:[%s1136 + $0x39] sm:$0xff]
  %v1293 = vld [vmem:[%s1136 + $0x49] sm:$0xff]
  %v1294 = vld [vmem:[%s1136 + $0x51] sm:$0xff]
  %v1295 = vld [vmem:[%s1136 + $0x61] sm:$0xff]
  %v1296 = vld [vmem:[%s1136 + $0x69] sm:$0xff]
  %v1297 = vld [vmem:[%s1136 + $0x79] sm:$0xff]
  %v1298 = vld [vmem:[%s1136 + $0x81] sm:$0xff]
  %v1299 = vld [vmem:[%s1136 + $0x91] sm:$0xff]
  %v1300 = vld [vmem:[%s1136 + $0x99] sm:$0xff]
  %v1301 = vld [vmem:[%s1136 + $0xa9] sm:$0xff]
  %v1302 = vld [vmem:[%s1136 + $0xb1] sm:$0xff]
  %s1303 = scalar_lea.vmem %s2, 28
  %v1304 = vld [vmem:[%s1303] sm:$0x7]
  %v1306 = vsel %vm29, %v1287, 0
  %v1309 = vsel %vm29, %v1288, 0
  %v1312 = vsel %vm29, %v1289, 0
  %v1315 = vsel %vm29, %v1290, 0
  %v1318 = vsel %vm29, %v1291, 0
  %v1321 = vsel %vm29, %v1292, 0
  %v1324 = vsel %vm29, %v1293, 0
  %v1327 = vsel %vm29, %v1294, 0
  %v1330 = vsel %vm29, %v1295, 0
  %v1333 = vsel %vm29, %v1296, 0
  %v1336 = vsel %vm29, %v1297, 0
  %v1339 = vsel %vm29, %v1298, 0
  %v1342 = vsel %vm29, %v1299, 0
  %v1345 = vsel %vm29, %v1300, 0
  %v1348 = vsel %vm29, %v1301, 0
  %v1351 = vsel %vm29, %v1302, 0
  %v1354 = vsel %vm351, %v1304, 0
  %1356 = vmatpush.msra.mxu0 0.0
  %1357 = vmatpush.msra.mxu0 0.0
  %1358 = vmatpush.msra.mxu0 0.0
  %1359 = vmatpush.msra.mxu0 0.0
  %1360 = vmatpush.msra.mxu0 0.0
  %1361 = vmatpush.msra.mxu0 0.0
  %1362 = vmatpush.msra.mxu0 0.0
  %1363 = vmatpush.msra.mxu0 0.0
  %1364 = vmatpush.msra.mxu0 0.0
  %1365 = vmatpush.msra.mxu0 0.0
  %1366 = vmatpush.msra.mxu0 0.0
  %1367 = vmatpush.msra.mxu0 0.0
  %1368 = vmatpush.msra.mxu0 0.0
  %1369 = vmatpush.msra.mxu0 0.0
  %1370 = vmatpush.msra.mxu0 0.0
  %1371 = vmatpush.msra.mxu0 %v1354
  %1372 = vmatmul.f32.gmra.mxu0 %v1306
  %v1373 = vpop.f32.mrf.mxu0
  %v1374 = vadd.f32 0.0, %v1373
  %1375 = vmatmul.f32.gmra.mxu0 %v1309
  %v1376 = vpop.f32.mrf.mxu0
  %v1377 = vadd.f32 0.0, %v1376
  %1378 = vmatmul.f32.gmra.mxu0 %v1312
  %v1379 = vpop.f32.mrf.mxu0
  %v1380 = vadd.f32 0.0, %v1379
  %1381 = vmatmul.f32.gmra.mxu0 %v1315
  %v1382 = vpop.f32.mrf.mxu0
  %v1383 = vadd.f32 0.0, %v1382
  %1384 = vmatmul.f32.gmra.mxu0 %v1318
  %v1385 = vpop.f32.mrf.mxu0
  %v1386 = vadd.f32 0.0, %v1385
  %1387 = vmatmul.f32.gmra.mxu0 %v1321
  %v1388 = vpop.f32.mrf.mxu0
  %v1389 = vadd.f32 0.0, %v1388
  %1390 = vmatmul.f32.gmra.mxu0 %v1324
  %v1391 = vpop.f32.mrf.mxu0
  %v1392 = vadd.f32 0.0, %v1391
  %1393 = vmatmul.f32.gmra.mxu0 %v1327
  %v1394 = vpop.f32.mrf.mxu0
  %v1395 = vadd.f32 0.0, %v1394
  %1396 = vmatmul.f32.gmra.mxu0 %v1330
  %v1397 = vpop.f32.mrf.mxu0
  %v1398 = vadd.f32 0.0, %v1397
  %1399 = vmatmul.f32.gmra.mxu0 %v1333
  %v1400 = vpop.f32.mrf.mxu0
  %v1401 = vadd.f32 0.0, %v1400
  %1402 = vmatmul.f32.gmra.mxu0 %v1336
  %v1403 = vpop.f32.mrf.mxu0
  %v1404 = vadd.f32 0.0, %v1403
  %1405 = vmatmul.f32.gmra.mxu0 %v1339
  %v1406 = vpop.f32.mrf.mxu0
  %v1407 = vadd.f32 0.0, %v1406
  %1408 = vmatmul.f32.gmra.mxu0 %v1342
  %v1409 = vpop.f32.mrf.mxu0
  %v1410 = vadd.f32 0.0, %v1409
  %1411 = vmatmul.f32.gmra.mxu0 %v1345
  %v1412 = vpop.f32.mrf.mxu0
  %v1413 = vadd.f32 0.0, %v1412
  %1414 = vmatmul.f32.gmra.mxu0 %v1348
  %v1415 = vpop.f32.mrf.mxu0
  %v1416 = vadd.f32 0.0, %v1415
  %1417 = vmatmul.f32.gmra.mxu0 %v1351
  %v1418 = vpop.f32.mrf.mxu0
  %v1419 = vadd.f32 0.0, %v1418
  %1420 = vdwg.mxu0
  %v1421 = vadd.f32 %v1271, %v1374
  %v1422 = vadd.f32 %v1272, %v1377
  %v1423 = vadd.f32 %v1273, %v1380
  %v1424 = vadd.f32 %v1274, %v1383
  %v1425 = vadd.f32 %v1275, %v1386
  %v1426 = vadd.f32 %v1276, %v1389
  %v1427 = vadd.f32 %v1277, %v1392
  %v1428 = vadd.f32 %v1278, %v1395
  %v1429 = vadd.f32 %v1279, %v1398
  %v1430 = vadd.f32 %v1280, %v1401
  %v1431 = vadd.f32 %v1281, %v1404
  %v1432 = vadd.f32 %v1282, %v1407
  %v1433 = vadd.f32 %v1283, %v1410
  %v1434 = vadd.f32 %v1284, %v1413
  %v1435 = vadd.f32 %v1285, %v1416
  %v1436 = vadd.f32 %v1286, %v1419
  %v1437 = vld [vmem:[%s1136 + $0x2] sm:$0xff]
  %v1438 = vld [vmem:[%s1136 + $0xa] sm:$0xff]
  %v1439 = vld [vmem:[%s1136 + $0x1a] sm:$0xff]
  %v1440 = vld [vmem:[%s1136 + $0x22] sm:$0xff]
  %v1441 = vld [vmem:[%s1136 + $0x32] sm:$0xff]
  %v1442 = vld [vmem:[%s1136 + $0x3a] sm:$0xff]
  %v1443 = vld [vmem:[%s1136 + $0x4a] sm:$0xff]
  %v1444 = vld [vmem:[%s1136 + $0x52] sm:$0xff]
  %v1445 = vld [vmem:[%s1136 + $0x62] sm:$0xff]
  %v1446 = vld [vmem:[%s1136 + $0x6a] sm:$0xff]
  %v1447 = vld [vmem:[%s1136 + $0x7a] sm:$0xff]
  %v1448 = vld [vmem:[%s1136 + $0x82] sm:$0xff]
  %v1449 = vld [vmem:[%s1136 + $0x92] sm:$0xff]
  %v1450 = vld [vmem:[%s1136 + $0x9a] sm:$0xff]
  %v1451 = vld [vmem:[%s1136 + $0xaa] sm:$0xff]
  %v1452 = vld [vmem:[%s1136 + $0xb2] sm:$0xff]
  %s1453 = scalar_lea.vmem %s2, 32
  %v1454 = vld [vmem:[%s1453] sm:$0x7]
  %v1456 = vsel %vm29, %v1437, 0
  %v1459 = vsel %vm29, %v1438, 0
  %v1462 = vsel %vm29, %v1439, 0
  %v1465 = vsel %vm29, %v1440, 0
  %v1468 = vsel %vm29, %v1441, 0
  %v1471 = vsel %vm29, %v1442, 0
  %v1474 = vsel %vm29, %v1443, 0
  %v1477 = vsel %vm29, %v1444, 0
  %v1480 = vsel %vm29, %v1445, 0
  %v1483 = vsel %vm29, %v1446, 0
  %v1486 = vsel %vm29, %v1447, 0
  %v1489 = vsel %vm29, %v1448, 0
  %v1492 = vsel %vm29, %v1449, 0
  %v1495 = vsel %vm29, %v1450, 0
  %v1498 = vsel %vm29, %v1451, 0
  %v1501 = vsel %vm29, %v1452, 0
  %v1504 = vsel %vm351, %v1454, 0
  %1506 = vmatpush.msra.mxu0 0.0
  %1507 = vmatpush.msra.mxu0 0.0
  %1508 = vmatpush.msra.mxu0 0.0
  %1509 = vmatpush.msra.mxu0 0.0
  %1510 = vmatpush.msra.mxu0 0.0
  %1511 = vmatpush.msra.mxu0 0.0
  %1512 = vmatpush.msra.mxu0 0.0
  %1513 = vmatpush.msra.mxu0 0.0
  %1514 = vmatpush.msra.mxu0 0.0
  %1515 = vmatpush.msra.mxu0 0.0
  %1516 = vmatpush.msra.mxu0 0.0
  %1517 = vmatpush.msra.mxu0 0.0
  %1518 = vmatpush.msra.mxu0 0.0
  %1519 = vmatpush.msra.mxu0 0.0
  %1520 = vmatpush.msra.mxu0 0.0
  %1521 = vmatpush.msra.mxu0 %v1504
  %1522 = vmatmul.f32.gmra.mxu0 %v1456
  %v1523 = vpop.f32.mrf.mxu0
  %v1524 = vadd.f32 0.0, %v1523
  %1525 = vmatmul.f32.gmra.mxu0 %v1459
  %v1526 = vpop.f32.mrf.mxu0
  %v1527 = vadd.f32 0.0, %v1526
  %1528 = vmatmul.f32.gmra.mxu0 %v1462
  %v1529 = vpop.f32.mrf.mxu0
  %v1530 = vadd.f32 0.0, %v1529
  %1531 = vmatmul.f32.gmra.mxu0 %v1465
  %v1532 = vpop.f32.mrf.mxu0
  %v1533 = vadd.f32 0.0, %v1532
  %1534 = vmatmul.f32.gmra.mxu0 %v1468
  %v1535 = vpop.f32.mrf.mxu0
  %v1536 = vadd.f32 0.0, %v1535
  %1537 = vmatmul.f32.gmra.mxu0 %v1471
  %v1538 = vpop.f32.mrf.mxu0
  %v1539 = vadd.f32 0.0, %v1538
  %1540 = vmatmul.f32.gmra.mxu0 %v1474
  %v1541 = vpop.f32.mrf.mxu0
  %v1542 = vadd.f32 0.0, %v1541
  %1543 = vmatmul.f32.gmra.mxu0 %v1477
  %v1544 = vpop.f32.mrf.mxu0
  %v1545 = vadd.f32 0.0, %v1544
  %1546 = vmatmul.f32.gmra.mxu0 %v1480
  %v1547 = vpop.f32.mrf.mxu0
  %v1548 = vadd.f32 0.0, %v1547
  %1549 = vmatmul.f32.gmra.mxu0 %v1483
  %v1550 = vpop.f32.mrf.mxu0
  %v1551 = vadd.f32 0.0, %v1550
  %1552 = vmatmul.f32.gmra.mxu0 %v1486
  %v1553 = vpop.f32.mrf.mxu0
  %v1554 = vadd.f32 0.0, %v1553
  %1555 = vmatmul.f32.gmra.mxu0 %v1489
  %v1556 = vpop.f32.mrf.mxu0
  %v1557 = vadd.f32 0.0, %v1556
  %1558 = vmatmul.f32.gmra.mxu0 %v1492
  %v1559 = vpop.f32.mrf.mxu0
  %v1560 = vadd.f32 0.0, %v1559
  %1561 = vmatmul.f32.gmra.mxu0 %v1495
  %v1562 = vpop.f32.mrf.mxu0
  %v1563 = vadd.f32 0.0, %v1562
  %1564 = vmatmul.f32.gmra.mxu0 %v1498
  %v1565 = vpop.f32.mrf.mxu0
  %v1566 = vadd.f32 0.0, %v1565
  %1567 = vmatmul.f32.gmra.mxu0 %v1501
  %v1568 = vpop.f32.mrf.mxu0
  %v1569 = vadd.f32 0.0, %v1568
  %1570 = vdwg.mxu0
  %v1571 = vadd.f32 %v1421, %v1524
  %v1572 = vadd.f32 %v1422, %v1527
  %v1573 = vadd.f32 %v1423, %v1530
  %v1574 = vadd.f32 %v1424, %v1533
  %v1575 = vadd.f32 %v1425, %v1536
  %v1576 = vadd.f32 %v1426, %v1539
  %v1577 = vadd.f32 %v1427, %v1542
  %v1578 = vadd.f32 %v1428, %v1545
  %v1579 = vadd.f32 %v1429, %v1548
  %v1580 = vadd.f32 %v1430, %v1551
  %v1581 = vadd.f32 %v1431, %v1554
  %v1582 = vadd.f32 %v1432, %v1557
  %v1583 = vadd.f32 %v1433, %v1560
  %v1584 = vadd.f32 %v1434, %v1563
  %v1585 = vadd.f32 %v1435, %v1566
  %v1586 = vadd.f32 %v1436, %v1569
  %v1587 = vld [vmem:[%s3] sm:$0x1]
  %v1589 = vperm.slane %v1587, 0
  %v1591 = vadd.f32 %v1571, %v1589
  %v1592 = vadd.f32 %v1572, %v1589
  %v1593 = vadd.f32 %v1573, %v1589
  %v1594 = vadd.f32 %v1574, %v1589
  %v1595 = vadd.f32 %v1575, %v1589
  %v1596 = vadd.f32 %v1576, %v1589
  %v1597 = vadd.f32 %v1577, %v1589
  %v1598 = vadd.f32 %v1578, %v1589
  %v1599 = vadd.f32 %v1579, %v1589
  %v1600 = vadd.f32 %v1580, %v1589
  %v1601 = vadd.f32 %v1581, %v1589
  %v1602 = vadd.f32 %v1582, %v1589
  %v1603 = vadd.f32 %v1583, %v1589
  %v1604 = vadd.f32 %v1584, %v1589
  %v1605 = vadd.f32 %v1585, %v1589
  %v1606 = vadd.f32 %v1586, %v1589
  %v1607 = vmax.f32 %v1591, 0.0
  %v1608 = vmax.f32 %v1592, 0.0
  %v1609 = vmax.f32 %v1593, 0.0
  %v1610 = vmax.f32 %v1594, 0.0
  %v1611 = vmax.f32 %v1595, 0.0
  %v1612 = vmax.f32 %v1596, 0.0
  %v1613 = vmax.f32 %v1597, 0.0
  %v1614 = vmax.f32 %v1598, 0.0
  %v1615 = vmax.f32 %v1599, 0.0
  %v1616 = vmax.f32 %v1600, 0.0
  %v1617 = vmax.f32 %v1601, 0.0
  %v1618 = vmax.f32 %v1602, 0.0
  %v1619 = vmax.f32 %v1603, 0.0
  %v1620 = vmax.f32 %v1604, 0.0
  %v1621 = vmax.f32 %v1605, 0.0
  %v1622 = vmax.f32 %v1606, 0.0
  %v1623 = vld [vmem:[%s4] sm:$0xff]
  %v1624 = vld [vmem:[%s4 + $0x8] sm:$0xff]
  %v1625 = vld [vmem:[%s4 + $0x10] sm:$0xff]
  %v1626 = vld [vmem:[%s4 + $0x18] sm:$0xff]
  %v1627 = vld [vmem:[%s5] sm:$0x1]
  %v1629 = vperm.slane %v1627, 0
  %vm1631 = vcmask 261120
  %v1633 = vsel %vm1631, %v1607, 0
  %v1636 = vsel %vm1631, %v1608, 0
  %v1639 = vsel %vm1631, %v1609, 0
  %v1642 = vsel %vm1631, %v1610, 0
  %v1645 = vsel %vm1631, %v1611, 0
  %v1648 = vsel %vm1631, %v1612, 0
  %v1651 = vsel %vm1631, %v1613, 0
  %v1654 = vsel %vm1631, %v1614, 0
  %v1657 = vsel %vm1631, %v1615, 0
  %v1660 = vsel %vm1631, %v1616, 0
  %v1663 = vsel %vm1631, %v1617, 0
  %v1666 = vsel %vm1631, %v1618, 0
  %v1669 = vsel %vm1631, %v1619, 0
  %v1672 = vsel %vm1631, %v1620, 0
  %v1675 = vsel %vm1631, %v1621, 0
  %v1678 = vsel %vm1631, %v1622, 0
  %1680 = vmatpush.msra.mxu0 0.0
  %1681 = vmatpush.msra.mxu0 0.0
  %1682 = vmatpush.msra.mxu0 0.0
  %1683 = vmatpush.msra.mxu0 0.0
  %1684 = vmatpush.msra.mxu0 0.0
  %1685 = vmatpush.msra.mxu0 0.0
  %1686 = vmatpush.msra.mxu0 0.0
  %1687 = vmatpush.msra.mxu0 0.0
  %1688 = vmatpush.msra.mxu0 0.0
  %1689 = vmatpush.msra.mxu0 0.0
  %1690 = vmatpush.msra.mxu0 0.0
  %1691 = vmatpush.msra.mxu0 0.0
  %1692 = vmatpush.msra.mxu0 %v1626
  %1693 = vmatpush.msra.mxu0 %v1625
  %1694 = vmatpush.msra.mxu0 %v1624
  %1695 = vmatpush.msra.mxu0 %v1623
  %1696 = vmatmul.f32.gmra.mxu0 %v1633
  %v1697 = vpop.f32.mrf.mxu0
  %v1698 = vadd.f32 %v1629, %v1697
  %1699 = vmatmul.f32.gmra.mxu0 %v1636
  %v1700 = vpop.f32.mrf.mxu0
  %v1701 = vadd.f32 %v1629, %v1700
  %1702 = vmatmul.f32.gmra.mxu0 %v1639
  %v1703 = vpop.f32.mrf.mxu0
  %v1704 = vadd.f32 %v1629, %v1703
  %1705 = vmatmul.f32.gmra.mxu0 %v1642
  %v1706 = vpop.f32.mrf.mxu0
  %v1707 = vadd.f32 %v1629, %v1706
  %1708 = vmatmul.f32.gmra.mxu0 %v1645
  %v1709 = vpop.f32.mrf.mxu0
  %v1710 = vadd.f32 %v1629, %v1709
  %1711 = vmatmul.f32.gmra.mxu0 %v1648
  %v1712 = vpop.f32.mrf.mxu0
  %v1713 = vadd.f32 %v1629, %v1712
  %1714 = vmatmul.f32.gmra.mxu0 %v1651
  %v1715 = vpop.f32.mrf.mxu0
  %v1716 = vadd.f32 %v1629, %v1715
  %1717 = vmatmul.f32.gmra.mxu0 %v1654
  %v1718 = vpop.f32.mrf.mxu0
  %v1719 = vadd.f32 %v1629, %v1718
  %1720 = vmatmul.f32.gmra.mxu0 %v1657
  %v1721 = vpop.f32.mrf.mxu0
  %v1722 = vadd.f32 %v1629, %v1721
  %1723 = vmatmul.f32.gmra.mxu0 %v1660
  %v1724 = vpop.f32.mrf.mxu0
  %v1725 = vadd.f32 %v1629, %v1724
  %1726 = vmatmul.f32.gmra.mxu0 %v1663
  %v1727 = vpop.f32.mrf.mxu0
  %v1728 = vadd.f32 %v1629, %v1727
  %1729 = vmatmul.f32.gmra.mxu0 %v1666
  %v1730 = vpop.f32.mrf.mxu0
  %v1731 = vadd.f32 %v1629, %v1730
  %1732 = vmatmul.f32.gmra.mxu0 %v1669
  %v1733 = vpop.f32.mrf.mxu0
  %v1734 = vadd.f32 %v1629, %v1733
  %1735 = vmatmul.f32.gmra.mxu0 %v1672
  %v1736 = vpop.f32.mrf.mxu0
  %v1737 = vadd.f32 %v1629, %v1736
  %1738 = vmatmul.f32.gmra.mxu0 %v1675
  %v1739 = vpop.f32.mrf.mxu0
  %v1740 = vadd.f32 %v1629, %v1739
  %1741 = vmatmul.f32.gmra.mxu0 %v1678
  %v1742 = vpop.f32.mrf.mxu0
  %v1743 = vadd.f32 %v1629, %v1742
  %1744 = vdwg.mxu0
  %v1745 = vmax.f32 %v1698, 0.0
  %v1746 = vmax.f32 %v1701, 0.0
  %v1747 = vmax.f32 %v1704, 0.0
  %v1748 = vmax.f32 %v1707, 0.0
  %v1749 = vmax.f32 %v1710, 0.0
  %v1750 = vmax.f32 %v1713, 0.0
  %v1751 = vmax.f32 %v1716, 0.0
  %v1752 = vmax.f32 %v1719, 0.0
  %v1753 = vmax.f32 %v1722, 0.0
  %v1754 = vmax.f32 %v1725, 0.0
  %v1755 = vmax.f32 %v1728, 0.0
  %v1756 = vmax.f32 %v1731, 0.0
  %v1757 = vmax.f32 %v1734, 0.0
  %v1758 = vmax.f32 %v1737, 0.0
  %v1759 = vmax.f32 %v1740, 0.0
  %v1760 = vmax.f32 %v1743, 0.0
  %1761 = vst.msk [vmem:[#allocation3] sm:$0xff] %vm1631, %v1745
  %1762 = vst.msk [vmem:[#allocation3 + $0x8] sm:$0xff] %vm1631, %v1746
  %1763 = vst.msk [vmem:[#allocation3 + $0x10] sm:$0xff] %vm1631, %v1747
  %1764 = vst.msk [vmem:[#allocation3 + $0x18] sm:$0xff] %vm1631, %v1748
  %1765 = vst.msk [vmem:[#allocation3 + $0x20] sm:$0xff] %vm1631, %v1749
  %1766 = vst.msk [vmem:[#allocation3 + $0x28] sm:$0xff] %vm1631, %v1750
  %1767 = vst.msk [vmem:[#allocation3 + $0x30] sm:$0xff] %vm1631, %v1751
  %1768 = vst.msk [vmem:[#allocation3 + $0x38] sm:$0xff] %vm1631, %v1752
  %1769 = vst.msk [vmem:[#allocation3 + $0x40] sm:$0xff] %vm1631, %v1753
  %1770 = vst.msk [vmem:[#allocation3 + $0x48] sm:$0xff] %vm1631, %v1754
  %1771 = vst.msk [vmem:[#allocation3 + $0x50] sm:$0xff] %vm1631, %v1755
  %1772 = vst.msk [vmem:[#allocation3 + $0x58] sm:$0xff] %vm1631, %v1756
  %1773 = vst.msk [vmem:[#allocation3 + $0x60] sm:$0xff] %vm1631, %v1757
  %1774 = vst.msk [vmem:[#allocation3 + $0x68] sm:$0xff] %vm1631, %v1758
  %1775 = vst.msk [vmem:[#allocation3 + $0x70] sm:$0xff] %vm1631, %v1759
  %1776 = vst.msk [vmem:[#allocation3 + $0x78] sm:$0xff] %vm1631, %v1760
  %s1777 = scalar_lea.vmem [#allocation2], 192
  %v1778 = vld [vmem:[%s1777] sm:$0xff]
  %v1779 = vld [vmem:[%s1777 + $0x8] sm:$0xff]
  %v1780 = vld [vmem:[%s1777 + $0x18] sm:$0xff]
  %v1781 = vld [vmem:[%s1777 + $0x20] sm:$0xff]
  %v1782 = vld [vmem:[%s1777 + $0x30] sm:$0xff]
  %v1783 = vld [vmem:[%s1777 + $0x38] sm:$0xff]
  %v1784 = vld [vmem:[%s1777 + $0x48] sm:$0xff]
  %v1785 = vld [vmem:[%s1777 + $0x50] sm:$0xff]
  %v1786 = vld [vmem:[%s1777 + $0x60] sm:$0xff]
  %v1787 = vld [vmem:[%s1777 + $0x68] sm:$0xff]
  %v1788 = vld [vmem:[%s1777 + $0x78] sm:$0xff]
  %v1789 = vld [vmem:[%s1777 + $0x80] sm:$0xff]
  %v1790 = vld [vmem:[%s1777 + $0x90] sm:$0xff]
  %v1791 = vld [vmem:[%s1777 + $0x98] sm:$0xff]
  %v1792 = vld [vmem:[%s1777 + $0xa8] sm:$0xff]
  %v1793 = vld [vmem:[%s1777 + $0xb0] sm:$0xff]
  %v1794 = vld [vmem:[%s2] sm:$0x7]
  %v1795 = vld [vmem:[%s1777 + $0x1] sm:$0xff]
  %v1796 = vld [vmem:[%s1777 + $0x9] sm:$0xff]
  %v1797 = vld [vmem:[%s1777 + $0x19] sm:$0xff]
  %v1798 = vld [vmem:[%s1777 + $0x21] sm:$0xff]
  %v1799 = vld [vmem:[%s1777 + $0x31] sm:$0xff]
  %v1800 = vld [vmem:[%s1777 + $0x39] sm:$0xff]
  %v1801 = vld [vmem:[%s1777 + $0x49] sm:$0xff]
  %v1802 = vld [vmem:[%s1777 + $0x51] sm:$0xff]
  %v1803 = vld [vmem:[%s1777 + $0x61] sm:$0xff]
  %v1804 = vld [vmem:[%s1777 + $0x69] sm:$0xff]
  %v1805 = vld [vmem:[%s1777 + $0x79] sm:$0xff]
  %v1806 = vld [vmem:[%s1777 + $0x81] sm:$0xff]
  %v1807 = vld [vmem:[%s1777 + $0x91] sm:$0xff]
  %v1808 = vld [vmem:[%s1777 + $0x99] sm:$0xff]
  %v1809 = vld [vmem:[%s1777 + $0xa9] sm:$0xff]
  %v1810 = vld [vmem:[%s1777 + $0xb1] sm:$0xff]
  %v1811 = vld [vmem:[%s301] sm:$0x7]
  %v1813 = vsel %vm29, %v1795, 0
  %v1816 = vsel %vm29, %v1796, 0
  %v1819 = vsel %vm29, %v1797, 0
  %v1822 = vsel %vm29, %v1798, 0
  %v1825 = vsel %vm29, %v1799, 0
  %v1828 = vsel %vm29, %v1800, 0
  %v1831 = vsel %vm29, %v1801, 0
  %v1834 = vsel %vm29, %v1802, 0
  %v1837 = vsel %vm29, %v1803, 0
  %v1840 = vsel %vm29, %v1804, 0
  %v1843 = vsel %vm29, %v1805, 0
  %v1846 = vsel %vm29, %v1806, 0
  %v1849 = vsel %vm29, %v1807, 0
  %v1852 = vsel %vm29, %v1808, 0
  %v1855 = vsel %vm29, %v1809, 0
  %v1858 = vsel %vm29, %v1810, 0
  %v1861 = vsel %vm351, %v1811, 0
  %1863 = vmatpush.msra.mxu0 0.0
  %1864 = vmatpush.msra.mxu0 0.0
  %1865 = vmatpush.msra.mxu0 0.0
  %1866 = vmatpush.msra.mxu0 0.0
  %1867 = vmatpush.msra.mxu0 0.0
  %1868 = vmatpush.msra.mxu0 0.0
  %1869 = vmatpush.msra.mxu0 0.0
  %1870 = vmatpush.msra.mxu0 0.0
  %1871 = vmatpush.msra.mxu0 0.0
  %1872 = vmatpush.msra.mxu0 0.0
  %1873 = vmatpush.msra.mxu0 0.0
  %1874 = vmatpush.msra.mxu0 0.0
  %1875 = vmatpush.msra.mxu0 0.0
  %1876 = vmatpush.msra.mxu0 0.0
  %1877 = vmatpush.msra.mxu0 0.0
  %1878 = vmatpush.msra.mxu0 %v1861
  %1879 = vmatmul.f32.gmra.mxu0 %v1813
  %v1880 = vpop.f32.mrf.mxu0
  %v1881 = vadd.f32 0.0, %v1880
  %1882 = vmatmul.f32.gmra.mxu0 %v1816
  %v1883 = vpop.f32.mrf.mxu0
  %v1884 = vadd.f32 0.0, %v1883
  %1885 = vmatmul.f32.gmra.mxu0 %v1819
  %v1886 = vpop.f32.mrf.mxu0
  %v1887 = vadd.f32 0.0, %v1886
  %1888 = vmatmul.f32.gmra.mxu0 %v1822
  %v1889 = vpop.f32.mrf.mxu0
  %v1890 = vadd.f32 0.0, %v1889
  %1891 = vmatmul.f32.gmra.mxu0 %v1825
  %v1892 = vpop.f32.mrf.mxu0
  %v1893 = vadd.f32 0.0, %v1892
  %1894 = vmatmul.f32.gmra.mxu0 %v1828
  %v1895 = vpop.f32.mrf.mxu0
  %v1896 = vadd.f32 0.0, %v1895
  %1897 = vmatmul.f32.gmra.mxu0 %v1831
  %v1898 = vpop.f32.mrf.mxu0
  %v1899 = vadd.f32 0.0, %v1898
  %1900 = vmatmul.f32.gmra.mxu0 %v1834
  %v1901 = vpop.f32.mrf.mxu0
  %v1902 = vadd.f32 0.0, %v1901
  %1903 = vmatmul.f32.gmra.mxu0 %v1837
  %v1904 = vpop.f32.mrf.mxu0
  %v1905 = vadd.f32 0.0, %v1904
  %1906 = vmatmul.f32.gmra.mxu0 %v1840
  %v1907 = vpop.f32.mrf.mxu0
  %v1908 = vadd.f32 0.0, %v1907
  %1909 = vmatmul.f32.gmra.mxu0 %v1843
  %v1910 = vpop.f32.mrf.mxu0
  %v1911 = vadd.f32 0.0, %v1910
  %1912 = vmatmul.f32.gmra.mxu0 %v1846
  %v1913 = vpop.f32.mrf.mxu0
  %v1914 = vadd.f32 0.0, %v1913
  %1915 = vmatmul.f32.gmra.mxu0 %v1849
  %v1916 = vpop.f32.mrf.mxu0
  %v1917 = vadd.f32 0.0, %v1916
  %1918 = vmatmul.f32.gmra.mxu0 %v1852
  %v1919 = vpop.f32.mrf.mxu0
  %v1920 = vadd.f32 0.0, %v1919
  %1921 = vmatmul.f32.gmra.mxu0 %v1855
  %v1922 = vpop.f32.mrf.mxu0
  %v1923 = vadd.f32 0.0, %v1922
  %1924 = vmatmul.f32.gmra.mxu0 %v1858
  %v1925 = vpop.f32.mrf.mxu0
  %v1926 = vadd.f32 0.0, %v1925
  %1927 = vdwg.mxu0
  %v1929 = vsel %vm29, %v1778, 0
  %v1932 = vsel %vm29, %v1779, 0
  %v1935 = vsel %vm29, %v1780, 0
  %v1938 = vsel %vm29, %v1781, 0
  %v1941 = vsel %vm29, %v1782, 0
  %v1944 = vsel %vm29, %v1783, 0
  %v1947 = vsel %vm29, %v1784, 0
  %v1950 = vsel %vm29, %v1785, 0
  %v1953 = vsel %vm29, %v1786, 0
  %v1956 = vsel %vm29, %v1787, 0
  %v1959 = vsel %vm29, %v1788, 0
  %v1962 = vsel %vm29, %v1789, 0
  %v1965 = vsel %vm29, %v1790, 0
  %v1968 = vsel %vm29, %v1791, 0
  %v1971 = vsel %vm29, %v1792, 0
  %v1974 = vsel %vm29, %v1793, 0
  %v1977 = vsel %vm351, %v1794, 0
  %1979 = vmatpush.msra.mxu0 0.0
  %1980 = vmatpush.msra.mxu0 0.0
  %1981 = vmatpush.msra.mxu0 0.0
  %1982 = vmatpush.msra.mxu0 0.0
  %1983 = vmatpush.msra.mxu0 0.0
  %1984 = vmatpush.msra.mxu0 0.0
  %1985 = vmatpush.msra.mxu0 0.0
  %1986 = vmatpush.msra.mxu0 0.0
  %1987 = vmatpush.msra.mxu0 0.0
  %1988 = vmatpush.msra.mxu0 0.0
  %1989 = vmatpush.msra.mxu0 0.0
  %1990 = vmatpush.msra.mxu0 0.0
  %1991 = vmatpush.msra.mxu0 0.0
  %1992 = vmatpush.msra.mxu0 0.0
  %1993 = vmatpush.msra.mxu0 0.0
  %1994 = vmatpush.msra.mxu0 %v1977
  %1995 = vmatmul.f32.gmra.mxu0 %v1929
  %v1996 = vpop.f32.mrf.mxu0
  %v1997 = vadd.f32 %v1881, %v1996
  %1998 = vmatmul.f32.gmra.mxu0 %v1932
  %v1999 = vpop.f32.mrf.mxu0
  %v2000 = vadd.f32 %v1884, %v1999
  %2001 = vmatmul.f32.gmra.mxu0 %v1935
  %v2002 = vpop.f32.mrf.mxu0
  %v2003 = vadd.f32 %v1887, %v2002
  %2004 = vmatmul.f32.gmra.mxu0 %v1938
  %v2005 = vpop.f32.mrf.mxu0
  %v2006 = vadd.f32 %v1890, %v2005
  %2007 = vmatmul.f32.gmra.mxu0 %v1941
  %v2008 = vpop.f32.mrf.mxu0
  %v2009 = vadd.f32 %v1893, %v2008
  %2010 = vmatmul.f32.gmra.mxu0 %v1944
  %v2011 = vpop.f32.mrf.mxu0
  %v2012 = vadd.f32 %v1896, %v2011
  %2013 = vmatmul.f32.gmra.mxu0 %v1947
  %v2014 = vpop.f32.mrf.mxu0
  %v2015 = vadd.f32 %v1899, %v2014
  %2016 = vmatmul.f32.gmra.mxu0 %v1950
  %v2017 = vpop.f32.mrf.mxu0
  %v2018 = vadd.f32 %v1902, %v2017
  %2019 = vmatmul.f32.gmra.mxu0 %v1953
  %v2020 = vpop.f32.mrf.mxu0
  %v2021 = vadd.f32 %v1905, %v2020
  %2022 = vmatmul.f32.gmra.mxu0 %v1956
  %v2023 = vpop.f32.mrf.mxu0
  %v2024 = vadd.f32 %v1908, %v2023
  %2025 = vmatmul.f32.gmra.mxu0 %v1959
  %v2026 = vpop.f32.mrf.mxu0
  %v2027 = vadd.f32 %v1911, %v2026
  %2028 = vmatmul.f32.gmra.mxu0 %v1962
  %v2029 = vpop.f32.mrf.mxu0
  %v2030 = vadd.f32 %v1914, %v2029
  %2031 = vmatmul.f32.gmra.mxu0 %v1965
  %v2032 = vpop.f32.mrf.mxu0
  %v2033 = vadd.f32 %v1917, %v2032
  %2034 = vmatmul.f32.gmra.mxu0 %v1968
  %v2035 = vpop.f32.mrf.mxu0
  %v2036 = vadd.f32 %v1920, %v2035
  %2037 = vmatmul.f32.gmra.mxu0 %v1971
  %v2038 = vpop.f32.mrf.mxu0
  %v2039 = vadd.f32 %v1923, %v2038
  %2040 = vmatmul.f32.gmra.mxu0 %v1974
  %v2041 = vpop.f32.mrf.mxu0
  %v2042 = vadd.f32 %v1926, %v2041
  %2043 = vdwg.mxu0
  %v2044 = vld [vmem:[%s1777 + $0x2] sm:$0xff]
  %v2045 = vld [vmem:[%s1777 + $0xa] sm:$0xff]
  %v2046 = vld [vmem:[%s1777 + $0x1a] sm:$0xff]
  %v2047 = vld [vmem:[%s1777 + $0x22] sm:$0xff]
  %v2048 = vld [vmem:[%s1777 + $0x32] sm:$0xff]
  %v2049 = vld [vmem:[%s1777 + $0x3a] sm:$0xff]
  %v2050 = vld [vmem:[%s1777 + $0x4a] sm:$0xff]
  %v2051 = vld [vmem:[%s1777 + $0x52] sm:$0xff]
  %v2052 = vld [vmem:[%s1777 + $0x62] sm:$0xff]
  %v2053 = vld [vmem:[%s1777 + $0x6a] sm:$0xff]
  %v2054 = vld [vmem:[%s1777 + $0x7a] sm:$0xff]
  %v2055 = vld [vmem:[%s1777 + $0x82] sm:$0xff]
  %v2056 = vld [vmem:[%s1777 + $0x92] sm:$0xff]
  %v2057 = vld [vmem:[%s1777 + $0x9a] sm:$0xff]
  %v2058 = vld [vmem:[%s1777 + $0xaa] sm:$0xff]
  %v2059 = vld [vmem:[%s1777 + $0xb2] sm:$0xff]
  %v2060 = vld [vmem:[%s552] sm:$0x7]
  %v2062 = vsel %vm29, %v2044, 0
  %v2065 = vsel %vm29, %v2045, 0
  %v2068 = vsel %vm29, %v2046, 0
  %v2071 = vsel %vm29, %v2047, 0
  %v2074 = vsel %vm29, %v2048, 0
  %v2077 = vsel %vm29, %v2049, 0
  %v2080 = vsel %vm29, %v2050, 0
  %v2083 = vsel %vm29, %v2051, 0
  %v2086 = vsel %vm29, %v2052, 0
  %v2089 = vsel %vm29, %v2053, 0
  %v2092 = vsel %vm29, %v2054, 0
  %v2095 = vsel %vm29, %v2055, 0
  %v2098 = vsel %vm29, %v2056, 0
  %v2101 = vsel %vm29, %v2057, 0
  %v2104 = vsel %vm29, %v2058, 0
  %v2107 = vsel %vm29, %v2059, 0
  %v2110 = vsel %vm351, %v2060, 0
  %2112 = vmatpush.msra.mxu0 0.0
  %2113 = vmatpush.msra.mxu0 0.0
  %2114 = vmatpush.msra.mxu0 0.0
  %2115 = vmatpush.msra.mxu0 0.0
  %2116 = vmatpush.msra.mxu0 0.0
  %2117 = vmatpush.msra.mxu0 0.0
  %2118 = vmatpush.msra.mxu0 0.0
  %2119 = vmatpush.msra.mxu0 0.0
  %2120 = vmatpush.msra.mxu0 0.0
  %2121 = vmatpush.msra.mxu0 0.0
  %2122 = vmatpush.msra.mxu0 0.0
  %2123 = vmatpush.msra.mxu0 0.0
  %2124 = vmatpush.msra.mxu0 0.0
  %2125 = vmatpush.msra.mxu0 0.0
  %2126 = vmatpush.msra.mxu0 0.0
  %2127 = vmatpush.msra.mxu0 %v2110
  %2128 = vmatmul.f32.gmra.mxu0 %v2062
  %v2129 = vpop.f32.mrf.mxu0
  %v2130 = vadd.f32 0.0, %v2129
  %2131 = vmatmul.f32.gmra.mxu0 %v2065
  %v2132 = vpop.f32.mrf.mxu0
  %v2133 = vadd.f32 0.0, %v2132
  %2134 = vmatmul.f32.gmra.mxu0 %v2068
  %v2135 = vpop.f32.mrf.mxu0
  %v2136 = vadd.f32 0.0, %v2135
  %2137 = vmatmul.f32.gmra.mxu0 %v2071
  %v2138 = vpop.f32.mrf.mxu0
  %v2139 = vadd.f32 0.0, %v2138
  %2140 = vmatmul.f32.gmra.mxu0 %v2074
  %v2141 = vpop.f32.mrf.mxu0
  %v2142 = vadd.f32 0.0, %v2141
  %2143 = vmatmul.f32.gmra.mxu0 %v2077
  %v2144 = vpop.f32.mrf.mxu0
  %v2145 = vadd.f32 0.0, %v2144
  %2146 = vmatmul.f32.gmra.mxu0 %v2080
  %v2147 = vpop.f32.mrf.mxu0
  %v2148 = vadd.f32 0.0, %v2147
  %2149 = vmatmul.f32.gmra.mxu0 %v2083
  %v2150 = vpop.f32.mrf.mxu0
  %v2151 = vadd.f32 0.0, %v2150
  %2152 = vmatmul.f32.gmra.mxu0 %v2086
  %v2153 = vpop.f32.mrf.mxu0
  %v2154 = vadd.f32 0.0, %v2153
  %2155 = vmatmul.f32.gmra.mxu0 %v2089
  %v2156 = vpop.f32.mrf.mxu0
  %v2157 = vadd.f32 0.0, %v2156
  %2158 = vmatmul.f32.gmra.mxu0 %v2092
  %v2159 = vpop.f32.mrf.mxu0
  %v2160 = vadd.f32 0.0, %v2159
  %2161 = vmatmul.f32.gmra.mxu0 %v2095
  %v2162 = vpop.f32.mrf.mxu0
  %v2163 = vadd.f32 0.0, %v2162
  %2164 = vmatmul.f32.gmra.mxu0 %v2098
  %v2165 = vpop.f32.mrf.mxu0
  %v2166 = vadd.f32 0.0, %v2165
  %2167 = vmatmul.f32.gmra.mxu0 %v2101
  %v2168 = vpop.f32.mrf.mxu0
  %v2169 = vadd.f32 0.0, %v2168
  %2170 = vmatmul.f32.gmra.mxu0 %v2104
  %v2171 = vpop.f32.mrf.mxu0
  %v2172 = vadd.f32 0.0, %v2171
  %2173 = vmatmul.f32.gmra.mxu0 %v2107
  %v2174 = vpop.f32.mrf.mxu0
  %v2175 = vadd.f32 0.0, %v2174
  %2176 = vdwg.mxu0
  %v2177 = vadd.f32 %v1997, %v2130
  %v2178 = vadd.f32 %v2000, %v2133
  %v2179 = vadd.f32 %v2003, %v2136
  %v2180 = vadd.f32 %v2006, %v2139
  %v2181 = vadd.f32 %v2009, %v2142
  %v2182 = vadd.f32 %v2012, %v2145
  %v2183 = vadd.f32 %v2015, %v2148
  %v2184 = vadd.f32 %v2018, %v2151
  %v2185 = vadd.f32 %v2021, %v2154
  %v2186 = vadd.f32 %v2024, %v2157
  %v2187 = vadd.f32 %v2027, %v2160
  %v2188 = vadd.f32 %v2030, %v2163
  %v2189 = vadd.f32 %v2033, %v2166
  %v2190 = vadd.f32 %v2036, %v2169
  %v2191 = vadd.f32 %v2039, %v2172
  %v2192 = vadd.f32 %v2042, %v2175
  %s2193 = scalar_lea.vmem [#allocation2], 216
  %v2194 = vld [vmem:[%s2193] sm:$0xff]
  %v2195 = vld [vmem:[%s2193 + $0x8] sm:$0xff]
  %v2196 = vld [vmem:[%s2193 + $0x18] sm:$0xff]
  %v2197 = vld [vmem:[%s2193 + $0x20] sm:$0xff]
  %v2198 = vld [vmem:[%s2193 + $0x30] sm:$0xff]
  %v2199 = vld [vmem:[%s2193 + $0x38] sm:$0xff]
  %v2200 = vld [vmem:[%s2193 + $0x48] sm:$0xff]
  %v2201 = vld [vmem:[%s2193 + $0x50] sm:$0xff]
  %v2202 = vld [vmem:[%s2193 + $0x60] sm:$0xff]
  %v2203 = vld [vmem:[%s2193 + $0x68] sm:$0xff]
  %v2204 = vld [vmem:[%s2193 + $0x78] sm:$0xff]
  %v2205 = vld [vmem:[%s2193 + $0x80] sm:$0xff]
  %v2206 = vld [vmem:[%s2193 + $0x90] sm:$0xff]
  %v2207 = vld [vmem:[%s2193 + $0x98] sm:$0xff]
  %v2208 = vld [vmem:[%s2193 + $0xa8] sm:$0xff]
  %v2209 = vld [vmem:[%s2193 + $0xb0] sm:$0xff]
  %v2210 = vld [vmem:[%s702] sm:$0x7]
  %v2212 = vsel %vm29, %v2194, 0
  %v2215 = vsel %vm29, %v2195, 0
  %v2218 = vsel %vm29, %v2196, 0
  %v2221 = vsel %vm29, %v2197, 0
  %v2224 = vsel %vm29, %v2198, 0
  %v2227 = vsel %vm29, %v2199, 0
  %v2230 = vsel %vm29, %v2200, 0
  %v2233 = vsel %vm29, %v2201, 0
  %v2236 = vsel %vm29, %v2202, 0
  %v2239 = vsel %vm29, %v2203, 0
  %v2242 = vsel %vm29, %v2204, 0
  %v2245 = vsel %vm29, %v2205, 0
  %v2248 = vsel %vm29, %v2206, 0
  %v2251 = vsel %vm29, %v2207, 0
  %v2254 = vsel %vm29, %v2208, 0
  %v2257 = vsel %vm29, %v2209, 0
  %v2260 = vsel %vm351, %v2210, 0
  %2262 = vmatpush.msra.mxu0 0.0
  %2263 = vmatpush.msra.mxu0 0.0
  %2264 = vmatpush.msra.mxu0 0.0
  %2265 = vmatpush.msra.mxu0 0.0
  %2266 = vmatpush.msra.mxu0 0.0
  %2267 = vmatpush.msra.mxu0 0.0
  %2268 = vmatpush.msra.mxu0 0.0
  %2269 = vmatpush.msra.mxu0 0.0
  %2270 = vmatpush.msra.mxu0 0.0
  %2271 = vmatpush.msra.mxu0 0.0
  %2272 = vmatpush.msra.mxu0 0.0
  %2273 = vmatpush.msra.mxu0 0.0
  %2274 = vmatpush.msra.mxu0 0.0
  %2275 = vmatpush.msra.mxu0 0.0
  %2276 = vmatpush.msra.mxu0 0.0
  %2277 = vmatpush.msra.mxu0 %v2260
  %2278 = vmatmul.f32.gmra.mxu0 %v2212
  %v2279 = vpop.f32.mrf.mxu0
  %v2280 = vadd.f32 0.0, %v2279
  %2281 = vmatmul.f32.gmra.mxu0 %v2215
  %v2282 = vpop.f32.mrf.mxu0
  %v2283 = vadd.f32 0.0, %v2282
  %2284 = vmatmul.f32.gmra.mxu0 %v2218
  %v2285 = vpop.f32.mrf.mxu0
  %v2286 = vadd.f32 0.0, %v2285
  %2287 = vmatmul.f32.gmra.mxu0 %v2221
  %v2288 = vpop.f32.mrf.mxu0
  %v2289 = vadd.f32 0.0, %v2288
  %2290 = vmatmul.f32.gmra.mxu0 %v2224
  %v2291 = vpop.f32.mrf.mxu0
  %v2292 = vadd.f32 0.0, %v2291
  %2293 = vmatmul.f32.gmra.mxu0 %v2227
  %v2294 = vpop.f32.mrf.mxu0
  %v2295 = vadd.f32 0.0, %v2294
  %2296 = vmatmul.f32.gmra.mxu0 %v2230
  %v2297 = vpop.f32.mrf.mxu0
  %v2298 = vadd.f32 0.0, %v2297
  %2299 = vmatmul.f32.gmra.mxu0 %v2233
  %v2300 = vpop.f32.mrf.mxu0
  %v2301 = vadd.f32 0.0, %v2300
  %2302 = vmatmul.f32.gmra.mxu0 %v2236
  %v2303 = vpop.f32.mrf.mxu0
  %v2304 = vadd.f32 0.0, %v2303
  %2305 = vmatmul.f32.gmra.mxu0 %v2239
  %v2306 = vpop.f32.mrf.mxu0
  %v2307 = vadd.f32 0.0, %v2306
  %2308 = vmatmul.f32.gmra.mxu0 %v2242
  %v2309 = vpop.f32.mrf.mxu0
  %v2310 = vadd.f32 0.0, %v2309
  %2311 = vmatmul.f32.gmra.mxu0 %v2245
  %v2312 = vpop.f32.mrf.mxu0
  %v2313 = vadd.f32 0.0, %v2312
  %2314 = vmatmul.f32.gmra.mxu0 %v2248
  %v2315 = vpop.f32.mrf.mxu0
  %v2316 = vadd.f32 0.0, %v2315
  %2317 = vmatmul.f32.gmra.mxu0 %v2251
  %v2318 = vpop.f32.mrf.mxu0
  %v2319 = vadd.f32 0.0, %v2318
  %2320 = vmatmul.f32.gmra.mxu0 %v2254
  %v2321 = vpop.f32.mrf.mxu0
  %v2322 = vadd.f32 0.0, %v2321
  %2323 = vmatmul.f32.gmra.mxu0 %v2257
  %v2324 = vpop.f32.mrf.mxu0
  %v2325 = vadd.f32 0.0, %v2324
  %2326 = vdwg.mxu0
  %v2327 = vadd.f32 %v2177, %v2280
  %v2328 = vadd.f32 %v2178, %v2283
  %v2329 = vadd.f32 %v2179, %v2286
  %v2330 = vadd.f32 %v2180, %v2289
  %v2331 = vadd.f32 %v2181, %v2292
  %v2332 = vadd.f32 %v2182, %v2295
  %v2333 = vadd.f32 %v2183, %v2298
  %v2334 = vadd.f32 %v2184, %v2301
  %v2335 = vadd.f32 %v2185, %v2304
  %v2336 = vadd.f32 %v2186, %v2307
  %v2337 = vadd.f32 %v2187, %v2310
  %v2338 = vadd.f32 %v2188, %v2313
  %v2339 = vadd.f32 %v2189, %v2316
  %v2340 = vadd.f32 %v2190, %v2319
  %v2341 = vadd.f32 %v2191, %v2322
  %v2342 = vadd.f32 %v2192, %v2325
  %v2343 = vld [vmem:[%s2193 + $0x1] sm:$0xff]
  %v2344 = vld [vmem:[%s2193 + $0x9] sm:$0xff]
  %v2345 = vld [vmem:[%s2193 + $0x19] sm:$0xff]
  %v2346 = vld [vmem:[%s2193 + $0x21] sm:$0xff]
  %v2347 = vld [vmem:[%s2193 + $0x31] sm:$0xff]
  %v2348 = vld [vmem:[%s2193 + $0x39] sm:$0xff]
  %v2349 = vld [vmem:[%s2193 + $0x49] sm:$0xff]
  %v2350 = vld [vmem:[%s2193 + $0x51] sm:$0xff]
  %v2351 = vld [vmem:[%s2193 + $0x61] sm:$0xff]
  %v2352 = vld [vmem:[%s2193 + $0x69] sm:$0xff]
  %v2353 = vld [vmem:[%s2193 + $0x79] sm:$0xff]
  %v2354 = vld [vmem:[%s2193 + $0x81] sm:$0xff]
  %v2355 = vld [vmem:[%s2193 + $0x91] sm:$0xff]
  %v2356 = vld [vmem:[%s2193 + $0x99] sm:$0xff]
  %v2357 = vld [vmem:[%s2193 + $0xa9] sm:$0xff]
  %v2358 = vld [vmem:[%s2193 + $0xb1] sm:$0xff]
  %v2359 = vld [vmem:[%s852] sm:$0x7]
  %v2361 = vsel %vm29, %v2343, 0
  %v2364 = vsel %vm29, %v2344, 0
  %v2367 = vsel %vm29, %v2345, 0
  %v2370 = vsel %vm29, %v2346, 0
  %v2373 = vsel %vm29, %v2347, 0
  %v2376 = vsel %vm29, %v2348, 0
  %v2379 = vsel %vm29, %v2349, 0
  %v2382 = vsel %vm29, %v2350, 0
  %v2385 = vsel %vm29, %v2351, 0
  %v2388 = vsel %vm29, %v2352, 0
  %v2391 = vsel %vm29, %v2353, 0
  %v2394 = vsel %vm29, %v2354, 0
  %v2397 = vsel %vm29, %v2355, 0
  %v2400 = vsel %vm29, %v2356, 0
  %v2403 = vsel %vm29, %v2357, 0
  %v2406 = vsel %vm29, %v2358, 0
  %v2409 = vsel %vm351, %v2359, 0
  %2411 = vmatpush.msra.mxu0 0.0
  %2412 = vmatpush.msra.mxu0 0.0
  %2413 = vmatpush.msra.mxu0 0.0
  %2414 = vmatpush.msra.mxu0 0.0
  %2415 = vmatpush.msra.mxu0 0.0
  %2416 = vmatpush.msra.mxu0 0.0
  %2417 = vmatpush.msra.mxu0 0.0
  %2418 = vmatpush.msra.mxu0 0.0
  %2419 = vmatpush.msra.mxu0 0.0
  %2420 = vmatpush.msra.mxu0 0.0
  %2421 = vmatpush.msra.mxu0 0.0
  %2422 = vmatpush.msra.mxu0 0.0
  %2423 = vmatpush.msra.mxu0 0.0
  %2424 = vmatpush.msra.mxu0 0.0
  %2425 = vmatpush.msra.mxu0 0.0
  %2426 = vmatpush.msra.mxu0 %v2409
  %2427 = vmatmul.f32.gmra.mxu0 %v2361
  %v2428 = vpop.f32.mrf.mxu0
  %v2429 = vadd.f32 0.0, %v2428
  %2430 = vmatmul.f32.gmra.mxu0 %v2364
  %v2431 = vpop.f32.mrf.mxu0
  %v2432 = vadd.f32 0.0, %v2431
  %2433 = vmatmul.f32.gmra.mxu0 %v2367
  %v2434 = vpop.f32.mrf.mxu0
  %v2435 = vadd.f32 0.0, %v2434
  %2436 = vmatmul.f32.gmra.mxu0 %v2370
  %v2437 = vpop.f32.mrf.mxu0
  %v2438 = vadd.f32 0.0, %v2437
  %2439 = vmatmul.f32.gmra.mxu0 %v2373
  %v2440 = vpop.f32.mrf.mxu0
  %v2441 = vadd.f32 0.0, %v2440
  %2442 = vmatmul.f32.gmra.mxu0 %v2376
  %v2443 = vpop.f32.mrf.mxu0
  %v2444 = vadd.f32 0.0, %v2443
  %2445 = vmatmul.f32.gmra.mxu0 %v2379
  %v2446 = vpop.f32.mrf.mxu0
  %v2447 = vadd.f32 0.0, %v2446
  %2448 = vmatmul.f32.gmra.mxu0 %v2382
  %v2449 = vpop.f32.mrf.mxu0
  %v2450 = vadd.f32 0.0, %v2449
  %2451 = vmatmul.f32.gmra.mxu0 %v2385
  %v2452 = vpop.f32.mrf.mxu0
  %v2453 = vadd.f32 0.0, %v2452
  %2454 = vmatmul.f32.gmra.mxu0 %v2388
  %v2455 = vpop.f32.mrf.mxu0
  %v2456 = vadd.f32 0.0, %v2455
  %2457 = vmatmul.f32.gmra.mxu0 %v2391
  %v2458 = vpop.f32.mrf.mxu0
  %v2459 = vadd.f32 0.0, %v2458
  %2460 = vmatmul.f32.gmra.mxu0 %v2394
  %v2461 = vpop.f32.mrf.mxu0
  %v2462 = vadd.f32 0.0, %v2461
  %2463 = vmatmul.f32.gmra.mxu0 %v2397
  %v2464 = vpop.f32.mrf.mxu0
  %v2465 = vadd.f32 0.0, %v2464
  %2466 = vmatmul.f32.gmra.mxu0 %v2400
  %v2467 = vpop.f32.mrf.mxu0
  %v2468 = vadd.f32 0.0, %v2467
  %2469 = vmatmul.f32.gmra.mxu0 %v2403
  %v2470 = vpop.f32.mrf.mxu0
  %v2471 = vadd.f32 0.0, %v2470
  %2472 = vmatmul.f32.gmra.mxu0 %v2406
  %v2473 = vpop.f32.mrf.mxu0
  %v2474 = vadd.f32 0.0, %v2473
  %2475 = vdwg.mxu0
  %v2476 = vadd.f32 %v2327, %v2429
  %v2477 = vadd.f32 %v2328, %v2432
  %v2478 = vadd.f32 %v2329, %v2435
  %v2479 = vadd.f32 %v2330, %v2438
  %v2480 = vadd.f32 %v2331, %v2441
  %v2481 = vadd.f32 %v2332, %v2444
  %v2482 = vadd.f32 %v2333, %v2447
  %v2483 = vadd.f32 %v2334, %v2450
  %v2484 = vadd.f32 %v2335, %v2453
  %v2485 = vadd.f32 %v2336, %v2456
  %v2486 = vadd.f32 %v2337, %v2459
  %v2487 = vadd.f32 %v2338, %v2462
  %v2488 = vadd.f32 %v2339, %v2465
  %v2489 = vadd.f32 %v2340, %v2468
  %v2490 = vadd.f32 %v2341, %v2471
  %v2491 = vadd.f32 %v2342, %v2474
  %v2492 = vld [vmem:[%s2193 + $0x2] sm:$0xff]
  %v2493 = vld [vmem:[%s2193 + $0xa] sm:$0xff]
  %v2494 = vld [vmem:[%s2193 + $0x1a] sm:$0xff]
  %v2495 = vld [vmem:[%s2193 + $0x22] sm:$0xff]
  %v2496 = vld [vmem:[%s2193 + $0x32] sm:$0xff]
  %v2497 = vld [vmem:[%s2193 + $0x3a] sm:$0xff]
  %v2498 = vld [vmem:[%s2193 + $0x4a] sm:$0xff]
  %v2499 = vld [vmem:[%s2193 + $0x52] sm:$0xff]
  %v2500 = vld [vmem:[%s2193 + $0x62] sm:$0xff]
  %v2501 = vld [vmem:[%s2193 + $0x6a] sm:$0xff]
  %v2502 = vld [vmem:[%s2193 + $0x7a] sm:$0xff]
  %v2503 = vld [vmem:[%s2193 + $0x82] sm:$0xff]
  %v2504 = vld [vmem:[%s2193 + $0x92] sm:$0xff]
  %v2505 = vld [vmem:[%s2193 + $0x9a] sm:$0xff]
  %v2506 = vld [vmem:[%s2193 + $0xaa] sm:$0xff]
  %v2507 = vld [vmem:[%s2193 + $0xb2] sm:$0xff]
  %v2508 = vld [vmem:[%s1002] sm:$0x7]
  %v2510 = vsel %vm29, %v2492, 0
  %v2513 = vsel %vm29, %v2493, 0
  %v2516 = vsel %vm29, %v2494, 0
  %v2519 = vsel %vm29, %v2495, 0
  %v2522 = vsel %vm29, %v2496, 0
  %v2525 = vsel %vm29, %v2497, 0
  %v2528 = vsel %vm29, %v2498, 0
  %v2531 = vsel %vm29, %v2499, 0
  %v2534 = vsel %vm29, %v2500, 0
  %v2537 = vsel %vm29, %v2501, 0
  %v2540 = vsel %vm29, %v2502, 0
  %v2543 = vsel %vm29, %v2503, 0
  %v2546 = vsel %vm29, %v2504, 0
  %v2549 = vsel %vm29, %v2505, 0
  %v2552 = vsel %vm29, %v2506, 0
  %v2555 = vsel %vm29, %v2507, 0
  %v2558 = vsel %vm351, %v2508, 0
  %2560 = vmatpush.msra.mxu0 0.0
  %2561 = vmatpush.msra.mxu0 0.0
  %2562 = vmatpush.msra.mxu0 0.0
  %2563 = vmatpush.msra.mxu0 0.0
  %2564 = vmatpush.msra.mxu0 0.0
  %2565 = vmatpush.msra.mxu0 0.0
  %2566 = vmatpush.msra.mxu0 0.0
  %2567 = vmatpush.msra.mxu0 0.0
  %2568 = vmatpush.msra.mxu0 0.0
  %2569 = vmatpush.msra.mxu0 0.0
  %2570 = vmatpush.msra.mxu0 0.0
  %2571 = vmatpush.msra.mxu0 0.0
  %2572 = vmatpush.msra.mxu0 0.0
  %2573 = vmatpush.msra.mxu0 0.0
  %2574 = vmatpush.msra.mxu0 0.0
  %2575 = vmatpush.msra.mxu0 %v2558
  %2576 = vmatmul.f32.gmra.mxu0 %v2510
  %v2577 = vpop.f32.mrf.mxu0
  %v2578 = vadd.f32 0.0, %v2577
  %2579 = vmatmul.f32.gmra.mxu0 %v2513
  %v2580 = vpop.f32.mrf.mxu0
  %v2581 = vadd.f32 0.0, %v2580
  %2582 = vmatmul.f32.gmra.mxu0 %v2516
  %v2583 = vpop.f32.mrf.mxu0
  %v2584 = vadd.f32 0.0, %v2583
  %2585 = vmatmul.f32.gmra.mxu0 %v2519
  %v2586 = vpop.f32.mrf.mxu0
  %v2587 = vadd.f32 0.0, %v2586
  %2588 = vmatmul.f32.gmra.mxu0 %v2522
  %v2589 = vpop.f32.mrf.mxu0
  %v2590 = vadd.f32 0.0, %v2589
  %2591 = vmatmul.f32.gmra.mxu0 %v2525
  %v2592 = vpop.f32.mrf.mxu0
  %v2593 = vadd.f32 0.0, %v2592
  %2594 = vmatmul.f32.gmra.mxu0 %v2528
  %v2595 = vpop.f32.mrf.mxu0
  %v2596 = vadd.f32 0.0, %v2595
  %2597 = vmatmul.f32.gmra.mxu0 %v2531
  %v2598 = vpop.f32.mrf.mxu0
  %v2599 = vadd.f32 0.0, %v2598
  %2600 = vmatmul.f32.gmra.mxu0 %v2534
  %v2601 = vpop.f32.mrf.mxu0
  %v2602 = vadd.f32 0.0, %v2601
  %2603 = vmatmul.f32.gmra.mxu0 %v2537
  %v2604 = vpop.f32.mrf.mxu0
  %v2605 = vadd.f32 0.0, %v2604
  %2606 = vmatmul.f32.gmra.mxu0 %v2540
  %v2607 = vpop.f32.mrf.mxu0
  %v2608 = vadd.f32 0.0, %v2607
  %2609 = vmatmul.f32.gmra.mxu0 %v2543
  %v2610 = vpop.f32.mrf.mxu0
  %v2611 = vadd.f32 0.0, %v2610
  %2612 = vmatmul.f32.gmra.mxu0 %v2546
  %v2613 = vpop.f32.mrf.mxu0
  %v2614 = vadd.f32 0.0, %v2613
  %2615 = vmatmul.f32.gmra.mxu0 %v2549
  %v2616 = vpop.f32.mrf.mxu0
  %v2617 = vadd.f32 0.0, %v2616
  %2618 = vmatmul.f32.gmra.mxu0 %v2552
  %v2619 = vpop.f32.mrf.mxu0
  %v2620 = vadd.f32 0.0, %v2619
  %2621 = vmatmul.f32.gmra.mxu0 %v2555
  %v2622 = vpop.f32.mrf.mxu0
  %v2623 = vadd.f32 0.0, %v2622
  %2624 = vdwg.mxu0
  %v2625 = vadd.f32 %v2476, %v2578
  %v2626 = vadd.f32 %v2477, %v2581
  %v2627 = vadd.f32 %v2478, %v2584
  %v2628 = vadd.f32 %v2479, %v2587
  %v2629 = vadd.f32 %v2480, %v2590
  %v2630 = vadd.f32 %v2481, %v2593
  %v2631 = vadd.f32 %v2482, %v2596
  %v2632 = vadd.f32 %v2483, %v2599
  %v2633 = vadd.f32 %v2484, %v2602
  %v2634 = vadd.f32 %v2485, %v2605
  %v2635 = vadd.f32 %v2486, %v2608
  %v2636 = vadd.f32 %v2487, %v2611
  %v2637 = vadd.f32 %v2488, %v2614
  %v2638 = vadd.f32 %v2489, %v2617
  %v2639 = vadd.f32 %v2490, %v2620
  %v2640 = vadd.f32 %v2491, %v2623
  %s2641 = scalar_lea.vmem [#allocation2], 240
  %v2642 = vld [vmem:[%s2641] sm:$0xff]
  %v2643 = vld [vmem:[%s2641 + $0x8] sm:$0xff]
  %v2644 = vld [vmem:[%s2641 + $0x18] sm:$0xff]
  %v2645 = vld [vmem:[%s2641 + $0x20] sm:$0xff]
  %v2646 = vld [vmem:[%s2641 + $0x30] sm:$0xff]
  %v2647 = vld [vmem:[%s2641 + $0x38] sm:$0xff]
  %v2648 = vld [vmem:[%s2641 + $0x48] sm:$0xff]
  %v2649 = vld [vmem:[%s2641 + $0x50] sm:$0xff]
  %v2650 = vld [vmem:[%s2641 + $0x60] sm:$0xff]
  %v2651 = vld [vmem:[%s2641 + $0x68] sm:$0xff]
  %v2652 = vld [vmem:[%s2641 + $0x78] sm:$0xff]
  %v2653 = vld [vmem:[%s2641 + $0x80] sm:$0xff]
  %v2654 = vld [vmem:[%s2641 + $0x90] sm:$0xff]
  %v2655 = vld [vmem:[%s2641 + $0x98] sm:$0xff]
  %v2656 = vld [vmem:[%s2641 + $0xa8] sm:$0xff]
  %v2657 = vld [vmem:[%s2641 + $0xb0] sm:$0xff]
  %v2658 = vld [vmem:[%s1153] sm:$0x7]
  %v2660 = vsel %vm29, %v2642, 0
  %v2663 = vsel %vm29, %v2643, 0
  %v2666 = vsel %vm29, %v2644, 0
  %v2669 = vsel %vm29, %v2645, 0
  %v2672 = vsel %vm29, %v2646, 0
  %v2675 = vsel %vm29, %v2647, 0
  %v2678 = vsel %vm29, %v2648, 0
  %v2681 = vsel %vm29, %v2649, 0
  %v2684 = vsel %vm29, %v2650, 0
  %v2687 = vsel %vm29, %v2651, 0
  %v2690 = vsel %vm29, %v2652, 0
  %v2693 = vsel %vm29, %v2653, 0
  %v2696 = vsel %vm29, %v2654, 0
  %v2699 = vsel %vm29, %v2655, 0
  %v2702 = vsel %vm29, %v2656, 0
  %v2705 = vsel %vm29, %v2657, 0
  %v2708 = vsel %vm351, %v2658, 0
  %2710 = vmatpush.msra.mxu0 0.0
  %2711 = vmatpush.msra.mxu0 0.0
  %2712 = vmatpush.msra.mxu0 0.0
  %2713 = vmatpush.msra.mxu0 0.0
  %2714 = vmatpush.msra.mxu0 0.0
  %2715 = vmatpush.msra.mxu0 0.0
  %2716 = vmatpush.msra.mxu0 0.0
  %2717 = vmatpush.msra.mxu0 0.0
  %2718 = vmatpush.msra.mxu0 0.0
  %2719 = vmatpush.msra.mxu0 0.0
  %2720 = vmatpush.msra.mxu0 0.0
  %2721 = vmatpush.msra.mxu0 0.0
  %2722 = vmatpush.msra.mxu0 0.0
  %2723 = vmatpush.msra.mxu0 0.0
  %2724 = vmatpush.msra.mxu0 0.0
  %2725 = vmatpush.msra.mxu0 %v2708
  %2726 = vmatmul.f32.gmra.mxu0 %v2660
  %v2727 = vpop.f32.mrf.mxu0
  %v2728 = vadd.f32 0.0, %v2727
  %2729 = vmatmul.f32.gmra.mxu0 %v2663
  %v2730 = vpop.f32.mrf.mxu0
  %v2731 = vadd.f32 0.0, %v2730
  %2732 = vmatmul.f32.gmra.mxu0 %v2666
  %v2733 = vpop.f32.mrf.mxu0
  %v2734 = vadd.f32 0.0, %v2733
  %2735 = vmatmul.f32.gmra.mxu0 %v2669
  %v2736 = vpop.f32.mrf.mxu0
  %v2737 = vadd.f32 0.0, %v2736
  %2738 = vmatmul.f32.gmra.mxu0 %v2672
  %v2739 = vpop.f32.mrf.mxu0
  %v2740 = vadd.f32 0.0, %v2739
  %2741 = vmatmul.f32.gmra.mxu0 %v2675
  %v2742 = vpop.f32.mrf.mxu0
  %v2743 = vadd.f32 0.0, %v2742
  %2744 = vmatmul.f32.gmra.mxu0 %v2678
  %v2745 = vpop.f32.mrf.mxu0
  %v2746 = vadd.f32 0.0, %v2745
  %2747 = vmatmul.f32.gmra.mxu0 %v2681
  %v2748 = vpop.f32.mrf.mxu0
  %v2749 = vadd.f32 0.0, %v2748
  %2750 = vmatmul.f32.gmra.mxu0 %v2684
  %v2751 = vpop.f32.mrf.mxu0
  %v2752 = vadd.f32 0.0, %v2751
  %2753 = vmatmul.f32.gmra.mxu0 %v2687
  %v2754 = vpop.f32.mrf.mxu0
  %v2755 = vadd.f32 0.0, %v2754
  %2756 = vmatmul.f32.gmra.mxu0 %v2690
  %v2757 = vpop.f32.mrf.mxu0
  %v2758 = vadd.f32 0.0, %v2757
  %2759 = vmatmul.f32.gmra.mxu0 %v2693
  %v2760 = vpop.f32.mrf.mxu0
  %v2761 = vadd.f32 0.0, %v2760
  %2762 = vmatmul.f32.gmra.mxu0 %v2696
  %v2763 = vpop.f32.mrf.mxu0
  %v2764 = vadd.f32 0.0, %v2763
  %2765 = vmatmul.f32.gmra.mxu0 %v2699
  %v2766 = vpop.f32.mrf.mxu0
  %v2767 = vadd.f32 0.0, %v2766
  %2768 = vmatmul.f32.gmra.mxu0 %v2702
  %v2769 = vpop.f32.mrf.mxu0
  %v2770 = vadd.f32 0.0, %v2769
  %2771 = vmatmul.f32.gmra.mxu0 %v2705
  %v2772 = vpop.f32.mrf.mxu0
  %v2773 = vadd.f32 0.0, %v2772
  %2774 = vdwg.mxu0
  %v2775 = vadd.f32 %v2625, %v2728
  %v2776 = vadd.f32 %v2626, %v2731
  %v2777 = vadd.f32 %v2627, %v2734
  %v2778 = vadd.f32 %v2628, %v2737
  %v2779 = vadd.f32 %v2629, %v2740
  %v2780 = vadd.f32 %v2630, %v2743
  %v2781 = vadd.f32 %v2631, %v2746
  %v2782 = vadd.f32 %v2632, %v2749
  %v2783 = vadd.f32 %v2633, %v2752
  %v2784 = vadd.f32 %v2634, %v2755
  %v2785 = vadd.f32 %v2635, %v2758
  %v2786 = vadd.f32 %v2636, %v2761
  %v2787 = vadd.f32 %v2637, %v2764
  %v2788 = vadd.f32 %v2638, %v2767
  %v2789 = vadd.f32 %v2639, %v2770
  %v2790 = vadd.f32 %v2640, %v2773
  %v2791 = vld [vmem:[%s2641 + $0x1] sm:$0xff]
  %v2792 = vld [vmem:[%s2641 + $0x9] sm:$0xff]
  %v2793 = vld [vmem:[%s2641 + $0x19] sm:$0xff]
  %v2794 = vld [vmem:[%s2641 + $0x21] sm:$0xff]
  %v2795 = vld [vmem:[%s2641 + $0x31] sm:$0xff]
  %v2796 = vld [vmem:[%s2641 + $0x39] sm:$0xff]
  %v2797 = vld [vmem:[%s2641 + $0x49] sm:$0xff]
  %v2798 = vld [vmem:[%s2641 + $0x51] sm:$0xff]
  %v2799 = vld [vmem:[%s2641 + $0x61] sm:$0xff]
  %v2800 = vld [vmem:[%s2641 + $0x69] sm:$0xff]
  %v2801 = vld [vmem:[%s2641 + $0x79] sm:$0xff]
  %v2802 = vld [vmem:[%s2641 + $0x81] sm:$0xff]
  %v2803 = vld [vmem:[%s2641 + $0x91] sm:$0xff]
  %v2804 = vld [vmem:[%s2641 + $0x99] sm:$0xff]
  %v2805 = vld [vmem:[%s2641 + $0xa9] sm:$0xff]
  %v2806 = vld [vmem:[%s2641 + $0xb1] sm:$0xff]
  %v2807 = vld [vmem:[%s1303] sm:$0x7]
  %v2809 = vsel %vm29, %v2791, 0
  %v2812 = vsel %vm29, %v2792, 0
  %v2815 = vsel %vm29, %v2793, 0
  %v2818 = vsel %vm29, %v2794, 0
  %v2821 = vsel %vm29, %v2795, 0
  %v2824 = vsel %vm29, %v2796, 0
  %v2827 = vsel %vm29, %v2797, 0
  %v2830 = vsel %vm29, %v2798, 0
  %v2833 = vsel %vm29, %v2799, 0
  %v2836 = vsel %vm29, %v2800, 0
  %v2839 = vsel %vm29, %v2801, 0
  %v2842 = vsel %vm29, %v2802, 0
  %v2845 = vsel %vm29, %v2803, 0
  %v2848 = vsel %vm29, %v2804, 0
  %v2851 = vsel %vm29, %v2805, 0
  %v2854 = vsel %vm29, %v2806, 0
  %v2857 = vsel %vm351, %v2807, 0
  %2859 = vmatpush.msra.mxu0 0.0
  %2860 = vmatpush.msra.mxu0 0.0
  %2861 = vmatpush.msra.mxu0 0.0
  %2862 = vmatpush.msra.mxu0 0.0
  %2863 = vmatpush.msra.mxu0 0.0
  %2864 = vmatpush.msra.mxu0 0.0
  %2865 = vmatpush.msra.mxu0 0.0
  %2866 = vmatpush.msra.mxu0 0.0
  %2867 = vmatpush.msra.mxu0 0.0
  %2868 = vmatpush.msra.mxu0 0.0
  %2869 = vmatpush.msra.mxu0 0.0
  %2870 = vmatpush.msra.mxu0 0.0
  %2871 = vmatpush.msra.mxu0 0.0
  %2872 = vmatpush.msra.mxu0 0.0
  %2873 = vmatpush.msra.mxu0 0.0
  %2874 = vmatpush.msra.mxu0 %v2857
  %2875 = vmatmul.f32.gmra.mxu0 %v2809
  %v2876 = vpop.f32.mrf.mxu0
  %v2877 = vadd.f32 0.0, %v2876
  %2878 = vmatmul.f32.gmra.mxu0 %v2812
  %v2879 = vpop.f32.mrf.mxu0
  %v2880 = vadd.f32 0.0, %v2879
  %2881 = vmatmul.f32.gmra.mxu0 %v2815
  %v2882 = vpop.f32.mrf.mxu0
  %v2883 = vadd.f32 0.0, %v2882
  %2884 = vmatmul.f32.gmra.mxu0 %v2818
  %v2885 = vpop.f32.mrf.mxu0
  %v2886 = vadd.f32 0.0, %v2885
  %2887 = vmatmul.f32.gmra.mxu0 %v2821
  %v2888 = vpop.f32.mrf.mxu0
  %v2889 = vadd.f32 0.0, %v2888
  %2890 = vmatmul.f32.gmra.mxu0 %v2824
  %v2891 = vpop.f32.mrf.mxu0
  %v2892 = vadd.f32 0.0, %v2891
  %2893 = vmatmul.f32.gmra.mxu0 %v2827
  %v2894 = vpop.f32.mrf.mxu0
  %v2895 = vadd.f32 0.0, %v2894
  %2896 = vmatmul.f32.gmra.mxu0 %v2830
  %v2897 = vpop.f32.mrf.mxu0
  %v2898 = vadd.f32 0.0, %v2897
  %2899 = vmatmul.f32.gmra.mxu0 %v2833
  %v2900 = vpop.f32.mrf.mxu0
  %v2901 = vadd.f32 0.0, %v2900
  %2902 = vmatmul.f32.gmra.mxu0 %v2836
  %v2903 = vpop.f32.mrf.mxu0
  %v2904 = vadd.f32 0.0, %v2903
  %2905 = vmatmul.f32.gmra.mxu0 %v2839
  %v2906 = vpop.f32.mrf.mxu0
  %v2907 = vadd.f32 0.0, %v2906
  %2908 = vmatmul.f32.gmra.mxu0 %v2842
  %v2909 = vpop.f32.mrf.mxu0
  %v2910 = vadd.f32 0.0, %v2909
  %2911 = vmatmul.f32.gmra.mxu0 %v2845
  %v2912 = vpop.f32.mrf.mxu0
  %v2913 = vadd.f32 0.0, %v2912
  %2914 = vmatmul.f32.gmra.mxu0 %v2848
  %v2915 = vpop.f32.mrf.mxu0
  %v2916 = vadd.f32 0.0, %v2915
  %2917 = vmatmul.f32.gmra.mxu0 %v2851
  %v2918 = vpop.f32.mrf.mxu0
  %v2919 = vadd.f32 0.0, %v2918
  %2920 = vmatmul.f32.gmra.mxu0 %v2854
  %v2921 = vpop.f32.mrf.mxu0
  %v2922 = vadd.f32 0.0, %v2921
  %2923 = vdwg.mxu0
  %v2924 = vadd.f32 %v2775, %v2877
  %v2925 = vadd.f32 %v2776, %v2880
  %v2926 = vadd.f32 %v2777, %v2883
  %v2927 = vadd.f32 %v2778, %v2886
  %v2928 = vadd.f32 %v2779, %v2889
  %v2929 = vadd.f32 %v2780, %v2892
  %v2930 = vadd.f32 %v2781, %v2895
  %v2931 = vadd.f32 %v2782, %v2898
  %v2932 = vadd.f32 %v2783, %v2901
  %v2933 = vadd.f32 %v2784, %v2904
  %v2934 = vadd.f32 %v2785, %v2907
  %v2935 = vadd.f32 %v2786, %v2910
  %v2936 = vadd.f32 %v2787, %v2913
  %v2937 = vadd.f32 %v2788, %v2916
  %v2938 = vadd.f32 %v2789, %v2919
  %v2939 = vadd.f32 %v2790, %v2922
  %v2940 = vld [vmem:[%s2641 + $0x2] sm:$0xff]
  %v2941 = vld [vmem:[%s2641 + $0xa] sm:$0xff]
  %v2942 = vld [vmem:[%s2641 + $0x1a] sm:$0xff]
  %v2943 = vld [vmem:[%s2641 + $0x22] sm:$0xff]
  %v2944 = vld [vmem:[%s2641 + $0x32] sm:$0xff]
  %v2945 = vld [vmem:[%s2641 + $0x3a] sm:$0xff]
  %v2946 = vld [vmem:[%s2641 + $0x4a] sm:$0xff]
  %v2947 = vld [vmem:[%s2641 + $0x52] sm:$0xff]
  %v2948 = vld [vmem:[%s2641 + $0x62] sm:$0xff]
  %v2949 = vld [vmem:[%s2641 + $0x6a] sm:$0xff]
  %v2950 = vld [vmem:[%s2641 + $0x7a] sm:$0xff]
  %v2951 = vld [vmem:[%s2641 + $0x82] sm:$0xff]
  %v2952 = vld [vmem:[%s2641 + $0x92] sm:$0xff]
  %v2953 = vld [vmem:[%s2641 + $0x9a] sm:$0xff]
  %v2954 = vld [vmem:[%s2641 + $0xaa] sm:$0xff]
  %v2955 = vld [vmem:[%s2641 + $0xb2] sm:$0xff]
  %v2956 = vld [vmem:[%s1453] sm:$0x7]
  %v2958 = vsel %vm29, %v2940, 0
  %v2961 = vsel %vm29, %v2941, 0
  %v2964 = vsel %vm29, %v2942, 0
  %v2967 = vsel %vm29, %v2943, 0
  %v2970 = vsel %vm29, %v2944, 0
  %v2973 = vsel %vm29, %v2945, 0
  %v2976 = vsel %vm29, %v2946, 0
  %v2979 = vsel %vm29, %v2947, 0
  %v2982 = vsel %vm29, %v2948, 0
  %v2985 = vsel %vm29, %v2949, 0
  %v2988 = vsel %vm29, %v2950, 0
  %v2991 = vsel %vm29, %v2951, 0
  %v2994 = vsel %vm29, %v2952, 0
  %v2997 = vsel %vm29, %v2953, 0
  %v3000 = vsel %vm29, %v2954, 0
  %v3003 = vsel %vm29, %v2955, 0
  %v3006 = vsel %vm351, %v2956, 0
  %3008 = vmatpush.msra.mxu0 0.0
  %3009 = vmatpush.msra.mxu0 0.0
  %3010 = vmatpush.msra.mxu0 0.0
  %3011 = vmatpush.msra.mxu0 0.0
  %3012 = vmatpush.msra.mxu0 0.0
  %3013 = vmatpush.msra.mxu0 0.0
  %3014 = vmatpush.msra.mxu0 0.0
  %3015 = vmatpush.msra.mxu0 0.0
  %3016 = vmatpush.msra.mxu0 0.0
  %3017 = vmatpush.msra.mxu0 0.0
  %3018 = vmatpush.msra.mxu0 0.0
  %3019 = vmatpush.msra.mxu0 0.0
  %3020 = vmatpush.msra.mxu0 0.0
  %3021 = vmatpush.msra.mxu0 0.0
  %3022 = vmatpush.msra.mxu0 0.0
  %3023 = vmatpush.msra.mxu0 %v3006
  %3024 = vmatmul.f32.gmra.mxu0 %v2958
  %v3025 = vpop.f32.mrf.mxu0
  %v3026 = vadd.f32 0.0, %v3025
  %3027 = vmatmul.f32.gmra.mxu0 %v2961
  %v3028 = vpop.f32.mrf.mxu0
  %v3029 = vadd.f32 0.0, %v3028
  %3030 = vmatmul.f32.gmra.mxu0 %v2964
  %v3031 = vpop.f32.mrf.mxu0
  %v3032 = vadd.f32 0.0, %v3031
  %3033 = vmatmul.f32.gmra.mxu0 %v2967
  %v3034 = vpop.f32.mrf.mxu0
  %v3035 = vadd.f32 0.0, %v3034
  %3036 = vmatmul.f32.gmra.mxu0 %v2970
  %v3037 = vpop.f32.mrf.mxu0
  %v3038 = vadd.f32 0.0, %v3037
  %3039 = vmatmul.f32.gmra.mxu0 %v2973
  %v3040 = vpop.f32.mrf.mxu0
  %v3041 = vadd.f32 0.0, %v3040
  %3042 = vmatmul.f32.gmra.mxu0 %v2976
  %v3043 = vpop.f32.mrf.mxu0
  %v3044 = vadd.f32 0.0, %v3043
  %3045 = vmatmul.f32.gmra.mxu0 %v2979
  %v3046 = vpop.f32.mrf.mxu0
  %v3047 = vadd.f32 0.0, %v3046
  %3048 = vmatmul.f32.gmra.mxu0 %v2982
  %v3049 = vpop.f32.mrf.mxu0
  %v3050 = vadd.f32 0.0, %v3049
  %3051 = vmatmul.f32.gmra.mxu0 %v2985
  %v3052 = vpop.f32.mrf.mxu0
  %v3053 = vadd.f32 0.0, %v3052
  %3054 = vmatmul.f32.gmra.mxu0 %v2988
  %v3055 = vpop.f32.mrf.mxu0
  %v3056 = vadd.f32 0.0, %v3055
  %3057 = vmatmul.f32.gmra.mxu0 %v2991
  %v3058 = vpop.f32.mrf.mxu0
  %v3059 = vadd.f32 0.0, %v3058
  %3060 = vmatmul.f32.gmra.mxu0 %v2994
  %v3061 = vpop.f32.mrf.mxu0
  %v3062 = vadd.f32 0.0, %v3061
  %3063 = vmatmul.f32.gmra.mxu0 %v2997
  %v3064 = vpop.f32.mrf.mxu0
  %v3065 = vadd.f32 0.0, %v3064
  %3066 = vmatmul.f32.gmra.mxu0 %v3000
  %v3067 = vpop.f32.mrf.mxu0
  %v3068 = vadd.f32 0.0, %v3067
  %3069 = vmatmul.f32.gmra.mxu0 %v3003
  %v3070 = vpop.f32.mrf.mxu0
  %v3071 = vadd.f32 0.0, %v3070
  %3072 = vdwg.mxu0
  %v3073 = vadd.f32 %v2924, %v3026
  %v3074 = vadd.f32 %v2925, %v3029
  %v3075 = vadd.f32 %v2926, %v3032
  %v3076 = vadd.f32 %v2927, %v3035
  %v3077 = vadd.f32 %v2928, %v3038
  %v3078 = vadd.f32 %v2929, %v3041
  %v3079 = vadd.f32 %v2930, %v3044
  %v3080 = vadd.f32 %v2931, %v3047
  %v3081 = vadd.f32 %v2932, %v3050
  %v3082 = vadd.f32 %v2933, %v3053
  %v3083 = vadd.f32 %v2934, %v3056
  %v3084 = vadd.f32 %v2935, %v3059
  %v3085 = vadd.f32 %v2936, %v3062
  %v3086 = vadd.f32 %v2937, %v3065
  %v3087 = vadd.f32 %v2938, %v3068
  %v3088 = vadd.f32 %v2939, %v3071
  %v3089 = vld [vmem:[%s3] sm:$0x1]
  %v3091 = vperm.slane %v3089, 0
  %v3093 = vadd.f32 %v3073, %v3091
  %v3094 = vadd.f32 %v3074, %v3091
  %v3095 = vadd.f32 %v3075, %v3091
  %v3096 = vadd.f32 %v3076, %v3091
  %v3097 = vadd.f32 %v3077, %v3091
  %v3098 = vadd.f32 %v3078, %v3091
  %v3099 = vadd.f32 %v3079, %v3091
  %v3100 = vadd.f32 %v3080, %v3091
  %v3101 = vadd.f32 %v3081, %v3091
  %v3102 = vadd.f32 %v3082, %v3091
  %v3103 = vadd.f32 %v3083, %v3091
  %v3104 = vadd.f32 %v3084, %v3091
  %v3105 = vadd.f32 %v3085, %v3091
  %v3106 = vadd.f32 %v3086, %v3091
  %v3107 = vadd.f32 %v3087, %v3091
  %v3108 = vadd.f32 %v3088, %v3091
  %v3109 = vmax.f32 %v3093, 0.0
  %v3110 = vmax.f32 %v3094, 0.0
  %v3111 = vmax.f32 %v3095, 0.0
  %v3112 = vmax.f32 %v3096, 0.0
  %v3113 = vmax.f32 %v3097, 0.0
  %v3114 = vmax.f32 %v3098, 0.0
  %v3115 = vmax.f32 %v3099, 0.0
  %v3116 = vmax.f32 %v3100, 0.0
  %v3117 = vmax.f32 %v3101, 0.0
  %v3118 = vmax.f32 %v3102, 0.0
  %v3119 = vmax.f32 %v3103, 0.0
  %v3120 = vmax.f32 %v3104, 0.0
  %v3121 = vmax.f32 %v3105, 0.0
  %v3122 = vmax.f32 %v3106, 0.0
  %v3123 = vmax.f32 %v3107, 0.0
  %v3124 = vmax.f32 %v3108, 0.0
  %v3125 = vld [vmem:[%s4] sm:$0xff]
  %v3126 = vld [vmem:[%s4 + $0x8] sm:$0xff]
  %v3127 = vld [vmem:[%s4 + $0x10] sm:$0xff]
  %v3128 = vld [vmem:[%s4 + $0x18] sm:$0xff]
  %v3129 = vld [vmem:[%s5] sm:$0x1]
  %v3131 = vperm.slane %v3129, 0
  %v3134 = vsel %vm1631, %v3109, 0
  %v3137 = vsel %vm1631, %v3110, 0
  %v3140 = vsel %vm1631, %v3111, 0
  %v3143 = vsel %vm1631, %v3112, 0
  %v3146 = vsel %vm1631, %v3113, 0
  %v3149 = vsel %vm1631, %v3114, 0
  %v3152 = vsel %vm1631, %v3115, 0
  %v3155 = vsel %vm1631, %v3116, 0
  %v3158 = vsel %vm1631, %v3117, 0
  %v3161 = vsel %vm1631, %v3118, 0
  %v3164 = vsel %vm1631, %v3119, 0
  %v3167 = vsel %vm1631, %v3120, 0
  %v3170 = vsel %vm1631, %v3121, 0
  %v3173 = vsel %vm1631, %v3122, 0
  %v3176 = vsel %vm1631, %v3123, 0
  %v3179 = vsel %vm1631, %v3124, 0
  %3181 = vmatpush.msra.mxu0 0.0
  %3182 = vmatpush.msra.mxu0 0.0
  %3183 = vmatpush.msra.mxu0 0.0
  %3184 = vmatpush.msra.mxu0 0.0
  %3185 = vmatpush.msra.mxu0 0.0
  %3186 = vmatpush.msra.mxu0 0.0
  %3187 = vmatpush.msra.mxu0 0.0
  %3188 = vmatpush.msra.mxu0 0.0
  %3189 = vmatpush.msra.mxu0 0.0
  %3190 = vmatpush.msra.mxu0 0.0
  %3191 = vmatpush.msra.mxu0 0.0
  %3192 = vmatpush.msra.mxu0 0.0
  %3193 = vmatpush.msra.mxu0 %v3128
  %3194 = vmatpush.msra.mxu0 %v3127
  %3195 = vmatpush.msra.mxu0 %v3126
  %3196 = vmatpush.msra.mxu0 %v3125
  %3197 = vmatmul.f32.gmra.mxu0 %v3134
  %v3198 = vpop.f32.mrf.mxu0
  %v3199 = vadd.f32 %v3131, %v3198
  %3200 = vmatmul.f32.gmra.mxu0 %v3137
  %v3201 = vpop.f32.mrf.mxu0
  %v3202 = vadd.f32 %v3131, %v3201
  %3203 = vmatmul.f32.gmra.mxu0 %v3140
  %v3204 = vpop.f32.mrf.mxu0
  %v3205 = vadd.f32 %v3131, %v3204
  %3206 = vmatmul.f32.gmra.mxu0 %v3143
  %v3207 = vpop.f32.mrf.mxu0
  %v3208 = vadd.f32 %v3131, %v3207
  %3209 = vmatmul.f32.gmra.mxu0 %v3146
  %v3210 = vpop.f32.mrf.mxu0
  %v3211 = vadd.f32 %v3131, %v3210
  %3212 = vmatmul.f32.gmra.mxu0 %v3149
  %v3213 = vpop.f32.mrf.mxu0
  %v3214 = vadd.f32 %v3131, %v3213
  %3215 = vmatmul.f32.gmra.mxu0 %v3152
  %v3216 = vpop.f32.mrf.mxu0
  %v3217 = vadd.f32 %v3131, %v3216
  %3218 = vmatmul.f32.gmra.mxu0 %v3155
  %v3219 = vpop.f32.mrf.mxu0
  %v3220 = vadd.f32 %v3131, %v3219
  %3221 = vmatmul.f32.gmra.mxu0 %v3158
  %v3222 = vpop.f32.mrf.mxu0
  %v3223 = vadd.f32 %v3131, %v3222
  %3224 = vmatmul.f32.gmra.mxu0 %v3161
  %v3225 = vpop.f32.mrf.mxu0
  %v3226 = vadd.f32 %v3131, %v3225
  %3227 = vmatmul.f32.gmra.mxu0 %v3164
  %v3228 = vpop.f32.mrf.mxu0
  %v3229 = vadd.f32 %v3131, %v3228
  %3230 = vmatmul.f32.gmra.mxu0 %v3167
  %v3231 = vpop.f32.mrf.mxu0
  %v3232 = vadd.f32 %v3131, %v3231
  %3233 = vmatmul.f32.gmra.mxu0 %v3170
  %v3234 = vpop.f32.mrf.mxu0
  %v3235 = vadd.f32 %v3131, %v3234
  %3236 = vmatmul.f32.gmra.mxu0 %v3173
  %v3237 = vpop.f32.mrf.mxu0
  %v3238 = vadd.f32 %v3131, %v3237
  %3239 = vmatmul.f32.gmra.mxu0 %v3176
  %v3240 = vpop.f32.mrf.mxu0
  %v3241 = vadd.f32 %v3131, %v3240
  %3242 = vmatmul.f32.gmra.mxu0 %v3179
  %v3243 = vpop.f32.mrf.mxu0
  %v3244 = vadd.f32 %v3131, %v3243
  %3245 = vdwg.mxu0
  %v3246 = vmax.f32 %v3199, 0.0
  %v3247 = vmax.f32 %v3202, 0.0
  %v3248 = vmax.f32 %v3205, 0.0
  %v3249 = vmax.f32 %v3208, 0.0
  %v3250 = vmax.f32 %v3211, 0.0
  %v3251 = vmax.f32 %v3214, 0.0
  %v3252 = vmax.f32 %v3217, 0.0
  %v3253 = vmax.f32 %v3220, 0.0
  %v3254 = vmax.f32 %v3223, 0.0
  %v3255 = vmax.f32 %v3226, 0.0
  %v3256 = vmax.f32 %v3229, 0.0
  %v3257 = vmax.f32 %v3232, 0.0
  %v3258 = vmax.f32 %v3235, 0.0
  %v3259 = vmax.f32 %v3238, 0.0
  %v3260 = vmax.f32 %v3241, 0.0
  %v3261 = vmax.f32 %v3244, 0.0
  %3262 = vst.msk [vmem:[#allocation3 + $0x80] sm:$0xff] %vm1631, %v3246
  %3263 = vst.msk [vmem:[#allocation3 + $0x88] sm:$0xff] %vm1631, %v3247
  %3264 = vst.msk [vmem:[#allocation3 + $0x90] sm:$0xff] %vm1631, %v3248
  %3265 = vst.msk [vmem:[#allocation3 + $0x98] sm:$0xff] %vm1631, %v3249
  %3266 = vst.msk [vmem:[#allocation3 + $0xa0] sm:$0xff] %vm1631, %v3250
  %3267 = vst.msk [vmem:[#allocation3 + $0xa8] sm:$0xff] %vm1631, %v3251
  %3268 = vst.msk [vmem:[#allocation3 + $0xb0] sm:$0xff] %vm1631, %v3252
  %3269 = vst.msk [vmem:[#allocation3 + $0xb8] sm:$0xff] %vm1631, %v3253
  %3270 = vst.msk [vmem:[#allocation3 + $0xc0] sm:$0xff] %vm1631, %v3254
  %3271 = vst.msk [vmem:[#allocation3 + $0xc8] sm:$0xff] %vm1631, %v3255
  %3272 = vst.msk [vmem:[#allocation3 + $0xd0] sm:$0xff] %vm1631, %v3256
  %3273 = vst.msk [vmem:[#allocation3 + $0xd8] sm:$0xff] %vm1631, %v3257
  %3274 = vst.msk [vmem:[#allocation3 + $0xe0] sm:$0xff] %vm1631, %v3258
  %3275 = vst.msk [vmem:[#allocation3 + $0xe8] sm:$0xff] %vm1631, %v3259
  %3276 = vst.msk [vmem:[#allocation3 + $0xf0] sm:$0xff] %vm1631, %v3260
  %3277 = vst.msk [vmem:[#allocation3 + $0xf8] sm:$0xff] %vm1631, %v3261
  %s3278 = scalar_lea.vmem [#allocation2], 432
  %v3279 = vld [vmem:[%s3278] sm:$0xff]
  %v3280 = vld [vmem:[%s3278 + $0x8] sm:$0xff]
  %v3281 = vld [vmem:[%s3278 + $0x18] sm:$0xff]
  %v3282 = vld [vmem:[%s3278 + $0x20] sm:$0xff]
  %v3283 = vld [vmem:[%s3278 + $0x30] sm:$0xff]
  %v3284 = vld [vmem:[%s3278 + $0x38] sm:$0xff]
  %v3285 = vld [vmem:[%s3278 + $0x48] sm:$0xff]
  %v3286 = vld [vmem:[%s3278 + $0x50] sm:$0xff]
  %v3287 = vld [vmem:[%s3278 + $0x60] sm:$0xff]
  %v3288 = vld [vmem:[%s3278 + $0x68] sm:$0xff]
  %v3289 = vld [vmem:[%s3278 + $0x78] sm:$0xff]
  %v3290 = vld [vmem:[%s3278 + $0x80] sm:$0xff]
  %v3291 = vld [vmem:[%s3278 + $0x90] sm:$0xff]
  %v3292 = vld [vmem:[%s3278 + $0x98] sm:$0xff]
  %v3293 = vld [vmem:[%s3278 + $0xa8] sm:$0xff]
  %v3294 = vld [vmem:[%s3278 + $0xb0] sm:$0xff]
  %v3295 = vld [vmem:[%s2] sm:$0x7]
  %v3296 = vld [vmem:[%s3278 + $0x1] sm:$0xff]
  %v3297 = vld [vmem:[%s3278 + $0x9] sm:$0xff]
  %v3298 = vld [vmem:[%s3278 + $0x19] sm:$0xff]
  %v3299 = vld [vmem:[%s3278 + $0x21] sm:$0xff]
  %v3300 = vld [vmem:[%s3278 + $0x31] sm:$0xff]
  %v3301 = vld [vmem:[%s3278 + $0x39] sm:$0xff]
  %v3302 = vld [vmem:[%s3278 + $0x49] sm:$0xff]
  %v3303 = vld [vmem:[%s3278 + $0x51] sm:$0xff]
  %v3304 = vld [vmem:[%s3278 + $0x61] sm:$0xff]
  %v3305 = vld [vmem:[%s3278 + $0x69] sm:$0xff]
  %v3306 = vld [vmem:[%s3278 + $0x79] sm:$0xff]
  %v3307 = vld [vmem:[%s3278 + $0x81] sm:$0xff]
  %v3308 = vld [vmem:[%s3278 + $0x91] sm:$0xff]
  %v3309 = vld [vmem:[%s3278 + $0x99] sm:$0xff]
  %v3310 = vld [vmem:[%s3278 + $0xa9] sm:$0xff]
  %v3311 = vld [vmem:[%s3278 + $0xb1] sm:$0xff]
  %v3312 = vld [vmem:[%s301] sm:$0x7]
  %v3314 = vsel %vm29, %v3296, 0
  %v3317 = vsel %vm29, %v3297, 0
  %v3320 = vsel %vm29, %v3298, 0
  %v3323 = vsel %vm29, %v3299, 0
  %v3326 = vsel %vm29, %v3300, 0
  %v3329 = vsel %vm29, %v3301, 0
  %v3332 = vsel %vm29, %v3302, 0
  %v3335 = vsel %vm29, %v3303, 0
  %v3338 = vsel %vm29, %v3304, 0
  %v3341 = vsel %vm29, %v3305, 0
  %v3344 = vsel %vm29, %v3306, 0
  %v3347 = vsel %vm29, %v3307, 0
  %v3350 = vsel %vm29, %v3308, 0
  %v3353 = vsel %vm29, %v3309, 0
  %v3356 = vsel %vm29, %v3310, 0
  %v3359 = vsel %vm29, %v3311, 0
  %v3362 = vsel %vm351, %v3312, 0
  %3364 = vmatpush.msra.mxu0 0.0
  %3365 = vmatpush.msra.mxu0 0.0
  %3366 = vmatpush.msra.mxu0 0.0
  %3367 = vmatpush.msra.mxu0 0.0
  %3368 = vmatpush.msra.mxu0 0.0
  %3369 = vmatpush.msra.mxu0 0.0
  %3370 = vmatpush.msra.mxu0 0.0
  %3371 = vmatpush.msra.mxu0 0.0
  %3372 = vmatpush.msra.mxu0 0.0
  %3373 = vmatpush.msra.mxu0 0.0
  %3374 = vmatpush.msra.mxu0 0.0
  %3375 = vmatpush.msra.mxu0 0.0
  %3376 = vmatpush.msra.mxu0 0.0
  %3377 = vmatpush.msra.mxu0 0.0
  %3378 = vmatpush.msra.mxu0 0.0
  %3379 = vmatpush.msra.mxu0 %v3362
  %3380 = vmatmul.f32.gmra.mxu0 %v3314
  %v3381 = vpop.f32.mrf.mxu0
  %v3382 = vadd.f32 0.0, %v3381
  %3383 = vmatmul.f32.gmra.mxu0 %v3317
  %v3384 = vpop.f32.mrf.mxu0
  %v3385 = vadd.f32 0.0, %v3384
  %3386 = vmatmul.f32.gmra.mxu0 %v3320
  %v3387 = vpop.f32.mrf.mxu0
  %v3388 = vadd.f32 0.0, %v3387
  %3389 = vmatmul.f32.gmra.mxu0 %v3323
  %v3390 = vpop.f32.mrf.mxu0
  %v3391 = vadd.f32 0.0, %v3390
  %3392 = vmatmul.f32.gmra.mxu0 %v3326
  %v3393 = vpop.f32.mrf.mxu0
  %v3394 = vadd.f32 0.0, %v3393
  %3395 = vmatmul.f32.gmra.mxu0 %v3329
  %v3396 = vpop.f32.mrf.mxu0
  %v3397 = vadd.f32 0.0, %v3396
  %3398 = vmatmul.f32.gmra.mxu0 %v3332
  %v3399 = vpop.f32.mrf.mxu0
  %v3400 = vadd.f32 0.0, %v3399
  %3401 = vmatmul.f32.gmra.mxu0 %v3335
  %v3402 = vpop.f32.mrf.mxu0
  %v3403 = vadd.f32 0.0, %v3402
  %3404 = vmatmul.f32.gmra.mxu0 %v3338
  %v3405 = vpop.f32.mrf.mxu0
  %v3406 = vadd.f32 0.0, %v3405
  %3407 = vmatmul.f32.gmra.mxu0 %v3341
  %v3408 = vpop.f32.mrf.mxu0
  %v3409 = vadd.f32 0.0, %v3408
  %3410 = vmatmul.f32.gmra.mxu0 %v3344
  %v3411 = vpop.f32.mrf.mxu0
  %v3412 = vadd.f32 0.0, %v3411
  %3413 = vmatmul.f32.gmra.mxu0 %v3347
  %v3414 = vpop.f32.mrf.mxu0
  %v3415 = vadd.f32 0.0, %v3414
  %3416 = vmatmul.f32.gmra.mxu0 %v3350
  %v3417 = vpop.f32.mrf.mxu0
  %v3418 = vadd.f32 0.0, %v3417
  %3419 = vmatmul.f32.gmra.mxu0 %v3353
  %v3420 = vpop.f32.mrf.mxu0
  %v3421 = vadd.f32 0.0, %v3420
  %3422 = vmatmul.f32.gmra.mxu0 %v3356
  %v3423 = vpop.f32.mrf.mxu0
  %v3424 = vadd.f32 0.0, %v3423
  %3425 = vmatmul.f32.gmra.mxu0 %v3359
  %v3426 = vpop.f32.mrf.mxu0
  %v3427 = vadd.f32 0.0, %v3426
  %3428 = vdwg.mxu0
  %v3430 = vsel %vm29, %v3279, 0
  %v3433 = vsel %vm29, %v3280, 0
  %v3436 = vsel %vm29, %v3281, 0
  %v3439 = vsel %vm29, %v3282, 0
  %v3442 = vsel %vm29, %v3283, 0
  %v3445 = vsel %vm29, %v3284, 0
  %v3448 = vsel %vm29, %v3285, 0
  %v3451 = vsel %vm29, %v3286, 0
  %v3454 = vsel %vm29, %v3287, 0
  %v3457 = vsel %vm29, %v3288, 0
  %v3460 = vsel %vm29, %v3289, 0
  %v3463 = vsel %vm29, %v3290, 0
  %v3466 = vsel %vm29, %v3291, 0
  %v3469 = vsel %vm29, %v3292, 0
  %v3472 = vsel %vm29, %v3293, 0
  %v3475 = vsel %vm29, %v3294, 0
  %v3478 = vsel %vm351, %v3295, 0
  %3480 = vmatpush.msra.mxu0 0.0
  %3481 = vmatpush.msra.mxu0 0.0
  %3482 = vmatpush.msra.mxu0 0.0
  %3483 = vmatpush.msra.mxu0 0.0
  %3484 = vmatpush.msra.mxu0 0.0
  %3485 = vmatpush.msra.mxu0 0.0
  %3486 = vmatpush.msra.mxu0 0.0
  %3487 = vmatpush.msra.mxu0 0.0
  %3488 = vmatpush.msra.mxu0 0.0
  %3489 = vmatpush.msra.mxu0 0.0
  %3490 = vmatpush.msra.mxu0 0.0
  %3491 = vmatpush.msra.mxu0 0.0
  %3492 = vmatpush.msra.mxu0 0.0
  %3493 = vmatpush.msra.mxu0 0.0
  %3494 = vmatpush.msra.mxu0 0.0
  %3495 = vmatpush.msra.mxu0 %v3478
  %3496 = vmatmul.f32.gmra.mxu0 %v3430
  %v3497 = vpop.f32.mrf.mxu0
  %v3498 = vadd.f32 %v3382, %v3497
  %3499 = vmatmul.f32.gmra.mxu0 %v3433
  %v3500 = vpop.f32.mrf.mxu0
  %v3501 = vadd.f32 %v3385, %v3500
  %3502 = vmatmul.f32.gmra.mxu0 %v3436
  %v3503 = vpop.f32.mrf.mxu0
  %v3504 = vadd.f32 %v3388, %v3503
  %3505 = vmatmul.f32.gmra.mxu0 %v3439
  %v3506 = vpop.f32.mrf.mxu0
  %v3507 = vadd.f32 %v3391, %v3506
  %3508 = vmatmul.f32.gmra.mxu0 %v3442
  %v3509 = vpop.f32.mrf.mxu0
  %v3510 = vadd.f32 %v3394, %v3509
  %3511 = vmatmul.f32.gmra.mxu0 %v3445
  %v3512 = vpop.f32.mrf.mxu0
  %v3513 = vadd.f32 %v3397, %v3512
  %3514 = vmatmul.f32.gmra.mxu0 %v3448
  %v3515 = vpop.f32.mrf.mxu0
  %v3516 = vadd.f32 %v3400, %v3515
  %3517 = vmatmul.f32.gmra.mxu0 %v3451
  %v3518 = vpop.f32.mrf.mxu0
  %v3519 = vadd.f32 %v3403, %v3518
  %3520 = vmatmul.f32.gmra.mxu0 %v3454
  %v3521 = vpop.f32.mrf.mxu0
  %v3522 = vadd.f32 %v3406, %v3521
  %3523 = vmatmul.f32.gmra.mxu0 %v3457
  %v3524 = vpop.f32.mrf.mxu0
  %v3525 = vadd.f32 %v3409, %v3524
  %3526 = vmatmul.f32.gmra.mxu0 %v3460
  %v3527 = vpop.f32.mrf.mxu0
  %v3528 = vadd.f32 %v3412, %v3527
  %3529 = vmatmul.f32.gmra.mxu0 %v3463
  %v3530 = vpop.f32.mrf.mxu0
  %v3531 = vadd.f32 %v3415, %v3530
  %3532 = vmatmul.f32.gmra.mxu0 %v3466
  %v3533 = vpop.f32.mrf.mxu0
  %v3534 = vadd.f32 %v3418, %v3533
  %3535 = vmatmul.f32.gmra.mxu0 %v3469
  %v3536 = vpop.f32.mrf.mxu0
  %v3537 = vadd.f32 %v3421, %v3536
  %3538 = vmatmul.f32.gmra.mxu0 %v3472
  %v3539 = vpop.f32.mrf.mxu0
  %v3540 = vadd.f32 %v3424, %v3539
  %3541 = vmatmul.f32.gmra.mxu0 %v3475
  %v3542 = vpop.f32.mrf.mxu0
  %v3543 = vadd.f32 %v3427, %v3542
  %3544 = vdwg.mxu0
  %v3545 = vld [vmem:[%s3278 + $0x2] sm:$0xff]
  %v3546 = vld [vmem:[%s3278 + $0xa] sm:$0xff]
  %v3547 = vld [vmem:[%s3278 + $0x1a] sm:$0xff]
  %v3548 = vld [vmem:[%s3278 + $0x22] sm:$0xff]
  %v3549 = vld [vmem:[%s3278 + $0x32] sm:$0xff]
  %v3550 = vld [vmem:[%s3278 + $0x3a] sm:$0xff]
  %v3551 = vld [vmem:[%s3278 + $0x4a] sm:$0xff]
  %v3552 = vld [vmem:[%s3278 + $0x52] sm:$0xff]
  %v3553 = vld [vmem:[%s3278 + $0x62] sm:$0xff]
  %v3554 = vld [vmem:[%s3278 + $0x6a] sm:$0xff]
  %v3555 = vld [vmem:[%s3278 + $0x7a] sm:$0xff]
  %v3556 = vld [vmem:[%s3278 + $0x82] sm:$0xff]
  %v3557 = vld [vmem:[%s3278 + $0x92] sm:$0xff]
  %v3558 = vld [vmem:[%s3278 + $0x9a] sm:$0xff]
  %v3559 = vld [vmem:[%s3278 + $0xaa] sm:$0xff]
  %v3560 = vld [vmem:[%s3278 + $0xb2] sm:$0xff]
  %v3561 = vld [vmem:[%s552] sm:$0x7]
  %v3563 = vsel %vm29, %v3545, 0
  %v3566 = vsel %vm29, %v3546, 0
  %v3569 = vsel %vm29, %v3547, 0
  %v3572 = vsel %vm29, %v3548, 0
  %v3575 = vsel %vm29, %v3549, 0
  %v3578 = vsel %vm29, %v3550, 0
  %v3581 = vsel %vm29, %v3551, 0
  %v3584 = vsel %vm29, %v3552, 0
  %v3587 = vsel %vm29, %v3553, 0
  %v3590 = vsel %vm29, %v3554, 0
  %v3593 = vsel %vm29, %v3555, 0
  %v3596 = vsel %vm29, %v3556, 0
  %v3599 = vsel %vm29, %v3557, 0
  %v3602 = vsel %vm29, %v3558, 0
  %v3605 = vsel %vm29, %v3559, 0
  %v3608 = vsel %vm29, %v3560, 0
  %v3611 = vsel %vm351, %v3561, 0
  %3613 = vmatpush.msra.mxu0 0.0
  %3614 = vmatpush.msra.mxu0 0.0
  %3615 = vmatpush.msra.mxu0 0.0
  %3616 = vmatpush.msra.mxu0 0.0
  %3617 = vmatpush.msra.mxu0 0.0
  %3618 = vmatpush.msra.mxu0 0.0
  %3619 = vmatpush.msra.mxu0 0.0
  %3620 = vmatpush.msra.mxu0 0.0
  %3621 = vmatpush.msra.mxu0 0.0
  %3622 = vmatpush.msra.mxu0 0.0
  %3623 = vmatpush.msra.mxu0 0.0
  %3624 = vmatpush.msra.mxu0 0.0
  %3625 = vmatpush.msra.mxu0 0.0
  %3626 = vmatpush.msra.mxu0 0.0
  %3627 = vmatpush.msra.mxu0 0.0
  %3628 = vmatpush.msra.mxu0 %v3611
  %3629 = vmatmul.f32.gmra.mxu0 %v3563
  %v3630 = vpop.f32.mrf.mxu0
  %v3631 = vadd.f32 0.0, %v3630
  %3632 = vmatmul.f32.gmra.mxu0 %v3566
  %v3633 = vpop.f32.mrf.mxu0
  %v3634 = vadd.f32 0.0, %v3633
  %3635 = vmatmul.f32.gmra.mxu0 %v3569
  %v3636 = vpop.f32.mrf.mxu0
  %v3637 = vadd.f32 0.0, %v3636
  %3638 = vmatmul.f32.gmra.mxu0 %v3572
  %v3639 = vpop.f32.mrf.mxu0
  %v3640 = vadd.f32 0.0, %v3639
  %3641 = vmatmul.f32.gmra.mxu0 %v3575
  %v3642 = vpop.f32.mrf.mxu0
  %v3643 = vadd.f32 0.0, %v3642
  %3644 = vmatmul.f32.gmra.mxu0 %v3578
  %v3645 = vpop.f32.mrf.mxu0
  %v3646 = vadd.f32 0.0, %v3645
  %3647 = vmatmul.f32.gmra.mxu0 %v3581
  %v3648 = vpop.f32.mrf.mxu0
  %v3649 = vadd.f32 0.0, %v3648
  %3650 = vmatmul.f32.gmra.mxu0 %v3584
  %v3651 = vpop.f32.mrf.mxu0
  %v3652 = vadd.f32 0.0, %v3651
  %3653 = vmatmul.f32.gmra.mxu0 %v3587
  %v3654 = vpop.f32.mrf.mxu0
  %v3655 = vadd.f32 0.0, %v3654
  %3656 = vmatmul.f32.gmra.mxu0 %v3590
  %v3657 = vpop.f32.mrf.mxu0
  %v3658 = vadd.f32 0.0, %v3657
  %3659 = vmatmul.f32.gmra.mxu0 %v3593
  %v3660 = vpop.f32.mrf.mxu0
  %v3661 = vadd.f32 0.0, %v3660
  %3662 = vmatmul.f32.gmra.mxu0 %v3596
  %v3663 = vpop.f32.mrf.mxu0
  %v3664 = vadd.f32 0.0, %v3663
  %3665 = vmatmul.f32.gmra.mxu0 %v3599
  %v3666 = vpop.f32.mrf.mxu0
  %v3667 = vadd.f32 0.0, %v3666
  %3668 = vmatmul.f32.gmra.mxu0 %v3602
  %v3669 = vpop.f32.mrf.mxu0
  %v3670 = vadd.f32 0.0, %v3669
  %3671 = vmatmul.f32.gmra.mxu0 %v3605
  %v3672 = vpop.f32.mrf.mxu0
  %v3673 = vadd.f32 0.0, %v3672
  %3674 = vmatmul.f32.gmra.mxu0 %v3608
  %v3675 = vpop.f32.mrf.mxu0
  %v3676 = vadd.f32 0.0, %v3675
  %3677 = vdwg.mxu0
  %v3678 = vadd.f32 %v3498, %v3631
  %v3679 = vadd.f32 %v3501, %v3634
  %v3680 = vadd.f32 %v3504, %v3637
  %v3681 = vadd.f32 %v3507, %v3640
  %v3682 = vadd.f32 %v3510, %v3643
  %v3683 = vadd.f32 %v3513, %v3646
  %v3684 = vadd.f32 %v3516, %v3649
  %v3685 = vadd.f32 %v3519, %v3652
  %v3686 = vadd.f32 %v3522, %v3655
  %v3687 = vadd.f32 %v3525, %v3658
  %v3688 = vadd.f32 %v3528, %v3661
  %v3689 = vadd.f32 %v3531, %v3664
  %v3690 = vadd.f32 %v3534, %v3667
  %v3691 = vadd.f32 %v3537, %v3670
  %v3692 = vadd.f32 %v3540, %v3673
  %v3693 = vadd.f32 %v3543, %v3676
  %s3694 = scalar_lea.vmem [#allocation2], 456
  %v3695 = vld [vmem:[%s3694] sm:$0xff]
  %v3696 = vld [vmem:[%s3694 + $0x8] sm:$0xff]
  %v3697 = vld [vmem:[%s3694 + $0x18] sm:$0xff]
  %v3698 = vld [vmem:[%s3694 + $0x20] sm:$0xff]
  %v3699 = vld [vmem:[%s3694 + $0x30] sm:$0xff]
  %v3700 = vld [vmem:[%s3694 + $0x38] sm:$0xff]
  %v3701 = vld [vmem:[%s3694 + $0x48] sm:$0xff]
  %v3702 = vld [vmem:[%s3694 + $0x50] sm:$0xff]
  %v3703 = vld [vmem:[%s3694 + $0x60] sm:$0xff]
  %v3704 = vld [vmem:[%s3694 + $0x68] sm:$0xff]
  %v3705 = vld [vmem:[%s3694 + $0x78] sm:$0xff]
  %v3706 = vld [vmem:[%s3694 + $0x80] sm:$0xff]
  %v3707 = vld [vmem:[%s3694 + $0x90] sm:$0xff]
  %v3708 = vld [vmem:[%s3694 + $0x98] sm:$0xff]
  %v3709 = vld [vmem:[%s3694 + $0xa8] sm:$0xff]
  %v3710 = vld [vmem:[%s3694 + $0xb0] sm:$0xff]
  %v3711 = vld [vmem:[%s702] sm:$0x7]
  %v3713 = vsel %vm29, %v3695, 0
  %v3716 = vsel %vm29, %v3696, 0
  %v3719 = vsel %vm29, %v3697, 0
  %v3722 = vsel %vm29, %v3698, 0
  %v3725 = vsel %vm29, %v3699, 0
  %v3728 = vsel %vm29, %v3700, 0
  %v3731 = vsel %vm29, %v3701, 0
  %v3734 = vsel %vm29, %v3702, 0
  %v3737 = vsel %vm29, %v3703, 0
  %v3740 = vsel %vm29, %v3704, 0
  %v3743 = vsel %vm29, %v3705, 0
  %v3746 = vsel %vm29, %v3706, 0
  %v3749 = vsel %vm29, %v3707, 0
  %v3752 = vsel %vm29, %v3708, 0
  %v3755 = vsel %vm29, %v3709, 0
  %v3758 = vsel %vm29, %v3710, 0
  %v3761 = vsel %vm351, %v3711, 0
  %3763 = vmatpush.msra.mxu0 0.0
  %3764 = vmatpush.msra.mxu0 0.0
  %3765 = vmatpush.msra.mxu0 0.0
  %3766 = vmatpush.msra.mxu0 0.0
  %3767 = vmatpush.msra.mxu0 0.0
  %3768 = vmatpush.msra.mxu0 0.0
  %3769 = vmatpush.msra.mxu0 0.0
  %3770 = vmatpush.msra.mxu0 0.0
  %3771 = vmatpush.msra.mxu0 0.0
  %3772 = vmatpush.msra.mxu0 0.0
  %3773 = vmatpush.msra.mxu0 0.0
  %3774 = vmatpush.msra.mxu0 0.0
  %3775 = vmatpush.msra.mxu0 0.0
  %3776 = vmatpush.msra.mxu0 0.0
  %3777 = vmatpush.msra.mxu0 0.0
  %3778 = vmatpush.msra.mxu0 %v3761
  %3779 = vmatmul.f32.gmra.mxu0 %v3713
  %v3780 = vpop.f32.mrf.mxu0
  %v3781 = vadd.f32 0.0, %v3780
  %3782 = vmatmul.f32.gmra.mxu0 %v3716
  %v3783 = vpop.f32.mrf.mxu0
  %v3784 = vadd.f32 0.0, %v3783
  %3785 = vmatmul.f32.gmra.mxu0 %v3719
  %v3786 = vpop.f32.mrf.mxu0
  %v3787 = vadd.f32 0.0, %v3786
  %3788 = vmatmul.f32.gmra.mxu0 %v3722
  %v3789 = vpop.f32.mrf.mxu0
  %v3790 = vadd.f32 0.0, %v3789
  %3791 = vmatmul.f32.gmra.mxu0 %v3725
  %v3792 = vpop.f32.mrf.mxu0
  %v3793 = vadd.f32 0.0, %v3792
  %3794 = vmatmul.f32.gmra.mxu0 %v3728
  %v3795 = vpop.f32.mrf.mxu0
  %v3796 = vadd.f32 0.0, %v3795
  %3797 = vmatmul.f32.gmra.mxu0 %v3731
  %v3798 = vpop.f32.mrf.mxu0
  %v3799 = vadd.f32 0.0, %v3798
  %3800 = vmatmul.f32.gmra.mxu0 %v3734
  %v3801 = vpop.f32.mrf.mxu0
  %v3802 = vadd.f32 0.0, %v3801
  %3803 = vmatmul.f32.gmra.mxu0 %v3737
  %v3804 = vpop.f32.mrf.mxu0
  %v3805 = vadd.f32 0.0, %v3804
  %3806 = vmatmul.f32.gmra.mxu0 %v3740
  %v3807 = vpop.f32.mrf.mxu0
  %v3808 = vadd.f32 0.0, %v3807
  %3809 = vmatmul.f32.gmra.mxu0 %v3743
  %v3810 = vpop.f32.mrf.mxu0
  %v3811 = vadd.f32 0.0, %v3810
  %3812 = vmatmul.f32.gmra.mxu0 %v3746
  %v3813 = vpop.f32.mrf.mxu0
  %v3814 = vadd.f32 0.0, %v3813
  %3815 = vmatmul.f32.gmra.mxu0 %v3749
  %v3816 = vpop.f32.mrf.mxu0
  %v3817 = vadd.f32 0.0, %v3816
  %3818 = vmatmul.f32.gmra.mxu0 %v3752
  %v3819 = vpop.f32.mrf.mxu0
  %v3820 = vadd.f32 0.0, %v3819
  %3821 = vmatmul.f32.gmra.mxu0 %v3755
  %v3822 = vpop.f32.mrf.mxu0
  %v3823 = vadd.f32 0.0, %v3822
  %3824 = vmatmul.f32.gmra.mxu0 %v3758
  %v3825 = vpop.f32.mrf.mxu0
  %v3826 = vadd.f32 0.0, %v3825
  %3827 = vdwg.mxu0
  %v3828 = vadd.f32 %v3678, %v3781
  %v3829 = vadd.f32 %v3679, %v3784
  %v3830 = vadd.f32 %v3680, %v3787
  %v3831 = vadd.f32 %v3681, %v3790
  %v3832 = vadd.f32 %v3682, %v3793
  %v3833 = vadd.f32 %v3683, %v3796
  %v3834 = vadd.f32 %v3684, %v3799
  %v3835 = vadd.f32 %v3685, %v3802
  %v3836 = vadd.f32 %v3686, %v3805
  %v3837 = vadd.f32 %v3687, %v3808
  %v3838 = vadd.f32 %v3688, %v3811
  %v3839 = vadd.f32 %v3689, %v3814
  %v3840 = vadd.f32 %v3690, %v3817
  %v3841 = vadd.f32 %v3691, %v3820
  %v3842 = vadd.f32 %v3692, %v3823
  %v3843 = vadd.f32 %v3693, %v3826
  %v3844 = vld [vmem:[%s3694 + $0x1] sm:$0xff]
  %v3845 = vld [vmem:[%s3694 + $0x9] sm:$0xff]
  %v3846 = vld [vmem:[%s3694 + $0x19] sm:$0xff]
  %v3847 = vld [vmem:[%s3694 + $0x21] sm:$0xff]
  %v3848 = vld [vmem:[%s3694 + $0x31] sm:$0xff]
  %v3849 = vld [vmem:[%s3694 + $0x39] sm:$0xff]
  %v3850 = vld [vmem:[%s3694 + $0x49] sm:$0xff]
  %v3851 = vld [vmem:[%s3694 + $0x51] sm:$0xff]
  %v3852 = vld [vmem:[%s3694 + $0x61] sm:$0xff]
  %v3853 = vld [vmem:[%s3694 + $0x69] sm:$0xff]
  %v3854 = vld [vmem:[%s3694 + $0x79] sm:$0xff]
  %v3855 = vld [vmem:[%s3694 + $0x81] sm:$0xff]
  %v3856 = vld [vmem:[%s3694 + $0x91] sm:$0xff]
  %v3857 = vld [vmem:[%s3694 + $0x99] sm:$0xff]
  %v3858 = vld [vmem:[%s3694 + $0xa9] sm:$0xff]
  %v3859 = vld [vmem:[%s3694 + $0xb1] sm:$0xff]
  %v3860 = vld [vmem:[%s852] sm:$0x7]
  %v3862 = vsel %vm29, %v3844, 0
  %v3865 = vsel %vm29, %v3845, 0
  %v3868 = vsel %vm29, %v3846, 0
  %v3871 = vsel %vm29, %v3847, 0
  %v3874 = vsel %vm29, %v3848, 0
  %v3877 = vsel %vm29, %v3849, 0
  %v3880 = vsel %vm29, %v3850, 0
  %v3883 = vsel %vm29, %v3851, 0
  %v3886 = vsel %vm29, %v3852, 0
  %v3889 = vsel %vm29, %v3853, 0
  %v3892 = vsel %vm29, %v3854, 0
  %v3895 = vsel %vm29, %v3855, 0
  %v3898 = vsel %vm29, %v3856, 0
  %v3901 = vsel %vm29, %v3857, 0
  %v3904 = vsel %vm29, %v3858, 0
  %v3907 = vsel %vm29, %v3859, 0
  %v3910 = vsel %vm351, %v3860, 0
  %3912 = vmatpush.msra.mxu0 0.0
  %3913 = vmatpush.msra.mxu0 0.0
  %3914 = vmatpush.msra.mxu0 0.0
  %3915 = vmatpush.msra.mxu0 0.0
  %3916 = vmatpush.msra.mxu0 0.0
  %3917 = vmatpush.msra.mxu0 0.0
  %3918 = vmatpush.msra.mxu0 0.0
  %3919 = vmatpush.msra.mxu0 0.0
  %3920 = vmatpush.msra.mxu0 0.0
  %3921 = vmatpush.msra.mxu0 0.0
  %3922 = vmatpush.msra.mxu0 0.0
  %3923 = vmatpush.msra.mxu0 0.0
  %3924 = vmatpush.msra.mxu0 0.0
  %3925 = vmatpush.msra.mxu0 0.0
  %3926 = vmatpush.msra.mxu0 0.0
  %3927 = vmatpush.msra.mxu0 %v3910
  %3928 = vmatmul.f32.gmra.mxu0 %v3862
  %v3929 = vpop.f32.mrf.mxu0
  %v3930 = vadd.f32 0.0, %v3929
  %3931 = vmatmul.f32.gmra.mxu0 %v3865
  %v3932 = vpop.f32.mrf.mxu0
  %v3933 = vadd.f32 0.0, %v3932
  %3934 = vmatmul.f32.gmra.mxu0 %v3868
  %v3935 = vpop.f32.mrf.mxu0
  %v3936 = vadd.f32 0.0, %v3935
  %3937 = vmatmul.f32.gmra.mxu0 %v3871
  %v3938 = vpop.f32.mrf.mxu0
  %v3939 = vadd.f32 0.0, %v3938
  %3940 = vmatmul.f32.gmra.mxu0 %v3874
  %v3941 = vpop.f32.mrf.mxu0
  %v3942 = vadd.f32 0.0, %v3941
  %3943 = vmatmul.f32.gmra.mxu0 %v3877
  %v3944 = vpop.f32.mrf.mxu0
  %v3945 = vadd.f32 0.0, %v3944
  %3946 = vmatmul.f32.gmra.mxu0 %v3880
  %v3947 = vpop.f32.mrf.mxu0
  %v3948 = vadd.f32 0.0, %v3947
  %3949 = vmatmul.f32.gmra.mxu0 %v3883
  %v3950 = vpop.f32.mrf.mxu0
  %v3951 = vadd.f32 0.0, %v3950
  %3952 = vmatmul.f32.gmra.mxu0 %v3886
  %v3953 = vpop.f32.mrf.mxu0
  %v3954 = vadd.f32 0.0, %v3953
  %3955 = vmatmul.f32.gmra.mxu0 %v3889
  %v3956 = vpop.f32.mrf.mxu0
  %v3957 = vadd.f32 0.0, %v3956
  %3958 = vmatmul.f32.gmra.mxu0 %v3892
  %v3959 = vpop.f32.mrf.mxu0
  %v3960 = vadd.f32 0.0, %v3959
  %3961 = vmatmul.f32.gmra.mxu0 %v3895
  %v3962 = vpop.f32.mrf.mxu0
  %v3963 = vadd.f32 0.0, %v3962
  %3964 = vmatmul.f32.gmra.mxu0 %v3898
  %v3965 = vpop.f32.mrf.mxu0
  %v3966 = vadd.f32 0.0, %v3965
  %3967 = vmatmul.f32.gmra.mxu0 %v3901
  %v3968 = vpop.f32.mrf.mxu0
  %v3969 = vadd.f32 0.0, %v3968
  %3970 = vmatmul.f32.gmra.mxu0 %v3904
  %v3971 = vpop.f32.mrf.mxu0
  %v3972 = vadd.f32 0.0, %v3971
  %3973 = vmatmul.f32.gmra.mxu0 %v3907
  %v3974 = vpop.f32.mrf.mxu0
  %v3975 = vadd.f32 0.0, %v3974
  %3976 = vdwg.mxu0
  %v3977 = vadd.f32 %v3828, %v3930
  %v3978 = vadd.f32 %v3829, %v3933
  %v3979 = vadd.f32 %v3830, %v3936
  %v3980 = vadd.f32 %v3831, %v3939
  %v3981 = vadd.f32 %v3832, %v3942
  %v3982 = vadd.f32 %v3833, %v3945
  %v3983 = vadd.f32 %v3834, %v3948
  %v3984 = vadd.f32 %v3835, %v3951
  %v3985 = vadd.f32 %v3836, %v3954
  %v3986 = vadd.f32 %v3837, %v3957
  %v3987 = vadd.f32 %v3838, %v3960
  %v3988 = vadd.f32 %v3839, %v3963
  %v3989 = vadd.f32 %v3840, %v3966
  %v3990 = vadd.f32 %v3841, %v3969
  %v3991 = vadd.f32 %v3842, %v3972
  %v3992 = vadd.f32 %v3843, %v3975
  %v3993 = vld [vmem:[%s3694 + $0x2] sm:$0xff]
  %v3994 = vld [vmem:[%s3694 + $0xa] sm:$0xff]
  %v3995 = vld [vmem:[%s3694 + $0x1a] sm:$0xff]
  %v3996 = vld [vmem:[%s3694 + $0x22] sm:$0xff]
  %v3997 = vld [vmem:[%s3694 + $0x32] sm:$0xff]
  %v3998 = vld [vmem:[%s3694 + $0x3a] sm:$0xff]
  %v3999 = vld [vmem:[%s3694 + $0x4a] sm:$0xff]
  %v4000 = vld [vmem:[%s3694 + $0x52] sm:$0xff]
  %v4001 = vld [vmem:[%s3694 + $0x62] sm:$0xff]
  %v4002 = vld [vmem:[%s3694 + $0x6a] sm:$0xff]
  %v4003 = vld [vmem:[%s3694 + $0x7a] sm:$0xff]
  %v4004 = vld [vmem:[%s3694 + $0x82] sm:$0xff]
  %v4005 = vld [vmem:[%s3694 + $0x92] sm:$0xff]
  %v4006 = vld [vmem:[%s3694 + $0x9a] sm:$0xff]
  %v4007 = vld [vmem:[%s3694 + $0xaa] sm:$0xff]
  %v4008 = vld [vmem:[%s3694 + $0xb2] sm:$0xff]
  %v4009 = vld [vmem:[%s1002] sm:$0x7]
  %v4011 = vsel %vm29, %v3993, 0
  %v4014 = vsel %vm29, %v3994, 0
  %v4017 = vsel %vm29, %v3995, 0
  %v4020 = vsel %vm29, %v3996, 0
  %v4023 = vsel %vm29, %v3997, 0
  %v4026 = vsel %vm29, %v3998, 0
  %v4029 = vsel %vm29, %v3999, 0
  %v4032 = vsel %vm29, %v4000, 0
  %v4035 = vsel %vm29, %v4001, 0
  %v4038 = vsel %vm29, %v4002, 0
  %v4041 = vsel %vm29, %v4003, 0
  %v4044 = vsel %vm29, %v4004, 0
  %v4047 = vsel %vm29, %v4005, 0
  %v4050 = vsel %vm29, %v4006, 0
  %v4053 = vsel %vm29, %v4007, 0
  %v4056 = vsel %vm29, %v4008, 0
  %v4059 = vsel %vm351, %v4009, 0
  %4061 = vmatpush.msra.mxu0 0.0
  %4062 = vmatpush.msra.mxu0 0.0
  %4063 = vmatpush.msra.mxu0 0.0
  %4064 = vmatpush.msra.mxu0 0.0
  %4065 = vmatpush.msra.mxu0 0.0
  %4066 = vmatpush.msra.mxu0 0.0
  %4067 = vmatpush.msra.mxu0 0.0
  %4068 = vmatpush.msra.mxu0 0.0
  %4069 = vmatpush.msra.mxu0 0.0
  %4070 = vmatpush.msra.mxu0 0.0
  %4071 = vmatpush.msra.mxu0 0.0
  %4072 = vmatpush.msra.mxu0 0.0
  %4073 = vmatpush.msra.mxu0 0.0
  %4074 = vmatpush.msra.mxu0 0.0
  %4075 = vmatpush.msra.mxu0 0.0
  %4076 = vmatpush.msra.mxu0 %v4059
  %4077 = vmatmul.f32.gmra.mxu0 %v4011
  %v4078 = vpop.f32.mrf.mxu0
  %v4079 = vadd.f32 0.0, %v4078
  %4080 = vmatmul.f32.gmra.mxu0 %v4014
  %v4081 = vpop.f32.mrf.mxu0
  %v4082 = vadd.f32 0.0, %v4081
  %4083 = vmatmul.f32.gmra.mxu0 %v4017
  %v4084 = vpop.f32.mrf.mxu0
  %v4085 = vadd.f32 0.0, %v4084
  %4086 = vmatmul.f32.gmra.mxu0 %v4020
  %v4087 = vpop.f32.mrf.mxu0
  %v4088 = vadd.f32 0.0, %v4087
  %4089 = vmatmul.f32.gmra.mxu0 %v4023
  %v4090 = vpop.f32.mrf.mxu0
  %v4091 = vadd.f32 0.0, %v4090
  %4092 = vmatmul.f32.gmra.mxu0 %v4026
  %v4093 = vpop.f32.mrf.mxu0
  %v4094 = vadd.f32 0.0, %v4093
  %4095 = vmatmul.f32.gmra.mxu0 %v4029
  %v4096 = vpop.f32.mrf.mxu0
  %v4097 = vadd.f32 0.0, %v4096
  %4098 = vmatmul.f32.gmra.mxu0 %v4032
  %v4099 = vpop.f32.mrf.mxu0
  %v4100 = vadd.f32 0.0, %v4099
  %4101 = vmatmul.f32.gmra.mxu0 %v4035
  %v4102 = vpop.f32.mrf.mxu0
  %v4103 = vadd.f32 0.0, %v4102
  %4104 = vmatmul.f32.gmra.mxu0 %v4038
  %v4105 = vpop.f32.mrf.mxu0
  %v4106 = vadd.f32 0.0, %v4105
  %4107 = vmatmul.f32.gmra.mxu0 %v4041
  %v4108 = vpop.f32.mrf.mxu0
  %v4109 = vadd.f32 0.0, %v4108
  %4110 = vmatmul.f32.gmra.mxu0 %v4044
  %v4111 = vpop.f32.mrf.mxu0
  %v4112 = vadd.f32 0.0, %v4111
  %4113 = vmatmul.f32.gmra.mxu0 %v4047
  %v4114 = vpop.f32.mrf.mxu0
  %v4115 = vadd.f32 0.0, %v4114
  %4116 = vmatmul.f32.gmra.mxu0 %v4050
  %v4117 = vpop.f32.mrf.mxu0
  %v4118 = vadd.f32 0.0, %v4117
  %4119 = vmatmul.f32.gmra.mxu0 %v4053
  %v4120 = vpop.f32.mrf.mxu0
  %v4121 = vadd.f32 0.0, %v4120
  %4122 = vmatmul.f32.gmra.mxu0 %v4056
  %v4123 = vpop.f32.mrf.mxu0
  %v4124 = vadd.f32 0.0, %v4123
  %4125 = vdwg.mxu0
  %v4126 = vadd.f32 %v3977, %v4079
  %v4127 = vadd.f32 %v3978, %v4082
  %v4128 = vadd.f32 %v3979, %v4085
  %v4129 = vadd.f32 %v3980, %v4088
  %v4130 = vadd.f32 %v3981, %v4091
  %v4131 = vadd.f32 %v3982, %v4094
  %v4132 = vadd.f32 %v3983, %v4097
  %v4133 = vadd.f32 %v3984, %v4100
  %v4134 = vadd.f32 %v3985, %v4103
  %v4135 = vadd.f32 %v3986, %v4106
  %v4136 = vadd.f32 %v3987, %v4109
  %v4137 = vadd.f32 %v3988, %v4112
  %v4138 = vadd.f32 %v3989, %v4115
  %v4139 = vadd.f32 %v3990, %v4118
  %v4140 = vadd.f32 %v3991, %v4121
  %v4141 = vadd.f32 %v3992, %v4124
  %s4142 = scalar_lea.vmem [#allocation2], 480
  %v4143 = vld [vmem:[%s4142] sm:$0xff]
  %v4144 = vld [vmem:[%s4142 + $0x8] sm:$0xff]
  %v4145 = vld [vmem:[%s4142 + $0x18] sm:$0xff]
  %v4146 = vld [vmem:[%s4142 + $0x20] sm:$0xff]
  %v4147 = vld [vmem:[%s4142 + $0x30] sm:$0xff]
  %v4148 = vld [vmem:[%s4142 + $0x38] sm:$0xff]
  %v4149 = vld [vmem:[%s4142 + $0x48] sm:$0xff]
  %v4150 = vld [vmem:[%s4142 + $0x50] sm:$0xff]
  %v4151 = vld [vmem:[%s4142 + $0x60] sm:$0xff]
  %v4152 = vld [vmem:[%s4142 + $0x68] sm:$0xff]
  %v4153 = vld [vmem:[%s4142 + $0x78] sm:$0xff]
  %v4154 = vld [vmem:[%s4142 + $0x80] sm:$0xff]
  %v4155 = vld [vmem:[%s4142 + $0x90] sm:$0xff]
  %v4156 = vld [vmem:[%s4142 + $0x98] sm:$0xff]
  %v4157 = vld [vmem:[%s4142 + $0xa8] sm:$0xff]
  %v4158 = vld [vmem:[%s4142 + $0xb0] sm:$0xff]
  %v4159 = vld [vmem:[%s1153] sm:$0x7]
  %v4161 = vsel %vm29, %v4143, 0
  %v4164 = vsel %vm29, %v4144, 0
  %v4167 = vsel %vm29, %v4145, 0
  %v4170 = vsel %vm29, %v4146, 0
  %v4173 = vsel %vm29, %v4147, 0
  %v4176 = vsel %vm29, %v4148, 0
  %v4179 = vsel %vm29, %v4149, 0
  %v4182 = vsel %vm29, %v4150, 0
  %v4185 = vsel %vm29, %v4151, 0
  %v4188 = vsel %vm29, %v4152, 0
  %v4191 = vsel %vm29, %v4153, 0
  %v4194 = vsel %vm29, %v4154, 0
  %v4197 = vsel %vm29, %v4155, 0
  %v4200 = vsel %vm29, %v4156, 0
  %v4203 = vsel %vm29, %v4157, 0
  %v4206 = vsel %vm29, %v4158, 0
  %v4209 = vsel %vm351, %v4159, 0
  %4211 = vmatpush.msra.mxu0 0.0
  %4212 = vmatpush.msra.mxu0 0.0
  %4213 = vmatpush.msra.mxu0 0.0
  %4214 = vmatpush.msra.mxu0 0.0
  %4215 = vmatpush.msra.mxu0 0.0
  %4216 = vmatpush.msra.mxu0 0.0
  %4217 = vmatpush.msra.mxu0 0.0
  %4218 = vmatpush.msra.mxu0 0.0
  %4219 = vmatpush.msra.mxu0 0.0
  %4220 = vmatpush.msra.mxu0 0.0
  %4221 = vmatpush.msra.mxu0 0.0
  %4222 = vmatpush.msra.mxu0 0.0
  %4223 = vmatpush.msra.mxu0 0.0
  %4224 = vmatpush.msra.mxu0 0.0
  %4225 = vmatpush.msra.mxu0 0.0
  %4226 = vmatpush.msra.mxu0 %v4209
  %4227 = vmatmul.f32.gmra.mxu0 %v4161
  %v4228 = vpop.f32.mrf.mxu0
  %v4229 = vadd.f32 0.0, %v4228
  %4230 = vmatmul.f32.gmra.mxu0 %v4164
  %v4231 = vpop.f32.mrf.mxu0
  %v4232 = vadd.f32 0.0, %v4231
  %4233 = vmatmul.f32.gmra.mxu0 %v4167
  %v4234 = vpop.f32.mrf.mxu0
  %v4235 = vadd.f32 0.0, %v4234
  %4236 = vmatmul.f32.gmra.mxu0 %v4170
  %v4237 = vpop.f32.mrf.mxu0
  %v4238 = vadd.f32 0.0, %v4237
  %4239 = vmatmul.f32.gmra.mxu0 %v4173
  %v4240 = vpop.f32.mrf.mxu0
  %v4241 = vadd.f32 0.0, %v4240
  %4242 = vmatmul.f32.gmra.mxu0 %v4176
  %v4243 = vpop.f32.mrf.mxu0
  %v4244 = vadd.f32 0.0, %v4243
  %4245 = vmatmul.f32.gmra.mxu0 %v4179
  %v4246 = vpop.f32.mrf.mxu0
  %v4247 = vadd.f32 0.0, %v4246
  %4248 = vmatmul.f32.gmra.mxu0 %v4182
  %v4249 = vpop.f32.mrf.mxu0
  %v4250 = vadd.f32 0.0, %v4249
  %4251 = vmatmul.f32.gmra.mxu0 %v4185
  %v4252 = vpop.f32.mrf.mxu0
  %v4253 = vadd.f32 0.0, %v4252
  %4254 = vmatmul.f32.gmra.mxu0 %v4188
  %v4255 = vpop.f32.mrf.mxu0
  %v4256 = vadd.f32 0.0, %v4255
  %4257 = vmatmul.f32.gmra.mxu0 %v4191
  %v4258 = vpop.f32.mrf.mxu0
  %v4259 = vadd.f32 0.0, %v4258
  %4260 = vmatmul.f32.gmra.mxu0 %v4194
  %v4261 = vpop.f32.mrf.mxu0
  %v4262 = vadd.f32 0.0, %v4261
  %4263 = vmatmul.f32.gmra.mxu0 %v4197
  %v4264 = vpop.f32.mrf.mxu0
  %v4265 = vadd.f32 0.0, %v4264
  %4266 = vmatmul.f32.gmra.mxu0 %v4200
  %v4267 = vpop.f32.mrf.mxu0
  %v4268 = vadd.f32 0.0, %v4267
  %4269 = vmatmul.f32.gmra.mxu0 %v4203
  %v4270 = vpop.f32.mrf.mxu0
  %v4271 = vadd.f32 0.0, %v4270
  %4272 = vmatmul.f32.gmra.mxu0 %v4206
  %v4273 = vpop.f32.mrf.mxu0
  %v4274 = vadd.f32 0.0, %v4273
  %4275 = vdwg.mxu0
  %v4276 = vadd.f32 %v4126, %v4229
  %v4277 = vadd.f32 %v4127, %v4232
  %v4278 = vadd.f32 %v4128, %v4235
  %v4279 = vadd.f32 %v4129, %v4238
  %v4280 = vadd.f32 %v4130, %v4241
  %v4281 = vadd.f32 %v4131, %v4244
  %v4282 = vadd.f32 %v4132, %v4247
  %v4283 = vadd.f32 %v4133, %v4250
  %v4284 = vadd.f32 %v4134, %v4253
  %v4285 = vadd.f32 %v4135, %v4256
  %v4286 = vadd.f32 %v4136, %v4259
  %v4287 = vadd.f32 %v4137, %v4262
  %v4288 = vadd.f32 %v4138, %v4265
  %v4289 = vadd.f32 %v4139, %v4268
  %v4290 = vadd.f32 %v4140, %v4271
  %v4291 = vadd.f32 %v4141, %v4274
  %v4292 = vld [vmem:[%s4142 + $0x1] sm:$0xff]
  %v4293 = vld [vmem:[%s4142 + $0x9] sm:$0xff]
  %v4294 = vld [vmem:[%s4142 + $0x19] sm:$0xff]
  %v4295 = vld [vmem:[%s4142 + $0x21] sm:$0xff]
  %v4296 = vld [vmem:[%s4142 + $0x31] sm:$0xff]
  %v4297 = vld [vmem:[%s4142 + $0x39] sm:$0xff]
  %v4298 = vld [vmem:[%s4142 + $0x49] sm:$0xff]
  %v4299 = vld [vmem:[%s4142 + $0x51] sm:$0xff]
  %v4300 = vld [vmem:[%s4142 + $0x61] sm:$0xff]
  %v4301 = vld [vmem:[%s4142 + $0x69] sm:$0xff]
  %v4302 = vld [vmem:[%s4142 + $0x79] sm:$0xff]
  %v4303 = vld [vmem:[%s4142 + $0x81] sm:$0xff]
  %v4304 = vld [vmem:[%s4142 + $0x91] sm:$0xff]
  %v4305 = vld [vmem:[%s4142 + $0x99] sm:$0xff]
  %v4306 = vld [vmem:[%s4142 + $0xa9] sm:$0xff]
  %v4307 = vld [vmem:[%s4142 + $0xb1] sm:$0xff]
  %v4308 = vld [vmem:[%s1303] sm:$0x7]
  %v4310 = vsel %vm29, %v4292, 0
  %v4313 = vsel %vm29, %v4293, 0
  %v4316 = vsel %vm29, %v4294, 0
  %v4319 = vsel %vm29, %v4295, 0
  %v4322 = vsel %vm29, %v4296, 0
  %v4325 = vsel %vm29, %v4297, 0
  %v4328 = vsel %vm29, %v4298, 0
  %v4331 = vsel %vm29, %v4299, 0
  %v4334 = vsel %vm29, %v4300, 0
  %v4337 = vsel %vm29, %v4301, 0
  %v4340 = vsel %vm29, %v4302, 0
  %v4343 = vsel %vm29, %v4303, 0
  %v4346 = vsel %vm29, %v4304, 0
  %v4349 = vsel %vm29, %v4305, 0
  %v4352 = vsel %vm29, %v4306, 0
  %v4355 = vsel %vm29, %v4307, 0
  %v4358 = vsel %vm351, %v4308, 0
  %4360 = vmatpush.msra.mxu0 0.0
  %4361 = vmatpush.msra.mxu0 0.0
  %4362 = vmatpush.msra.mxu0 0.0
  %4363 = vmatpush.msra.mxu0 0.0
  %4364 = vmatpush.msra.mxu0 0.0
  %4365 = vmatpush.msra.mxu0 0.0
  %4366 = vmatpush.msra.mxu0 0.0
  %4367 = vmatpush.msra.mxu0 0.0
  %4368 = vmatpush.msra.mxu0 0.0
  %4369 = vmatpush.msra.mxu0 0.0
  %4370 = vmatpush.msra.mxu0 0.0
  %4371 = vmatpush.msra.mxu0 0.0
  %4372 = vmatpush.msra.mxu0 0.0
  %4373 = vmatpush.msra.mxu0 0.0
  %4374 = vmatpush.msra.mxu0 0.0
  %4375 = vmatpush.msra.mxu0 %v4358
  %4376 = vmatmul.f32.gmra.mxu0 %v4310
  %v4377 = vpop.f32.mrf.mxu0
  %v4378 = vadd.f32 0.0, %v4377
  %4379 = vmatmul.f32.gmra.mxu0 %v4313
  %v4380 = vpop.f32.mrf.mxu0
  %v4381 = vadd.f32 0.0, %v4380
  %4382 = vmatmul.f32.gmra.mxu0 %v4316
  %v4383 = vpop.f32.mrf.mxu0
  %v4384 = vadd.f32 0.0, %v4383
  %4385 = vmatmul.f32.gmra.mxu0 %v4319
  %v4386 = vpop.f32.mrf.mxu0
  %v4387 = vadd.f32 0.0, %v4386
  %4388 = vmatmul.f32.gmra.mxu0 %v4322
  %v4389 = vpop.f32.mrf.mxu0
  %v4390 = vadd.f32 0.0, %v4389
  %4391 = vmatmul.f32.gmra.mxu0 %v4325
  %v4392 = vpop.f32.mrf.mxu0
  %v4393 = vadd.f32 0.0, %v4392
  %4394 = vmatmul.f32.gmra.mxu0 %v4328
  %v4395 = vpop.f32.mrf.mxu0
  %v4396 = vadd.f32 0.0, %v4395
  %4397 = vmatmul.f32.gmra.mxu0 %v4331
  %v4398 = vpop.f32.mrf.mxu0
  %v4399 = vadd.f32 0.0, %v4398
  %4400 = vmatmul.f32.gmra.mxu0 %v4334
  %v4401 = vpop.f32.mrf.mxu0
  %v4402 = vadd.f32 0.0, %v4401
  %4403 = vmatmul.f32.gmra.mxu0 %v4337
  %v4404 = vpop.f32.mrf.mxu0
  %v4405 = vadd.f32 0.0, %v4404
  %4406 = vmatmul.f32.gmra.mxu0 %v4340
  %v4407 = vpop.f32.mrf.mxu0
  %v4408 = vadd.f32 0.0, %v4407
  %4409 = vmatmul.f32.gmra.mxu0 %v4343
  %v4410 = vpop.f32.mrf.mxu0
  %v4411 = vadd.f32 0.0, %v4410
  %4412 = vmatmul.f32.gmra.mxu0 %v4346
  %v4413 = vpop.f32.mrf.mxu0
  %v4414 = vadd.f32 0.0, %v4413
  %4415 = vmatmul.f32.gmra.mxu0 %v4349
  %v4416 = vpop.f32.mrf.mxu0
  %v4417 = vadd.f32 0.0, %v4416
  %4418 = vmatmul.f32.gmra.mxu0 %v4352
  %v4419 = vpop.f32.mrf.mxu0
  %v4420 = vadd.f32 0.0, %v4419
  %4421 = vmatmul.f32.gmra.mxu0 %v4355
  %v4422 = vpop.f32.mrf.mxu0
  %v4423 = vadd.f32 0.0, %v4422
  %4424 = vdwg.mxu0
  %v4425 = vadd.f32 %v4276, %v4378
  %v4426 = vadd.f32 %v4277, %v4381
  %v4427 = vadd.f32 %v4278, %v4384
  %v4428 = vadd.f32 %v4279, %v4387
  %v4429 = vadd.f32 %v4280, %v4390
  %v4430 = vadd.f32 %v4281, %v4393
  %v4431 = vadd.f32 %v4282, %v4396
  %v4432 = vadd.f32 %v4283, %v4399
  %v4433 = vadd.f32 %v4284, %v4402
  %v4434 = vadd.f32 %v4285, %v4405
  %v4435 = vadd.f32 %v4286, %v4408
  %v4436 = vadd.f32 %v4287, %v4411
  %v4437 = vadd.f32 %v4288, %v4414
  %v4438 = vadd.f32 %v4289, %v4417
  %v4439 = vadd.f32 %v4290, %v4420
  %v4440 = vadd.f32 %v4291, %v4423
  %v4441 = vld [vmem:[%s4142 + $0x2] sm:$0xff]
  %v4442 = vld [vmem:[%s4142 + $0xa] sm:$0xff]
  %v4443 = vld [vmem:[%s4142 + $0x1a] sm:$0xff]
  %v4444 = vld [vmem:[%s4142 + $0x22] sm:$0xff]
  %v4445 = vld [vmem:[%s4142 + $0x32] sm:$0xff]
  %v4446 = vld [vmem:[%s4142 + $0x3a] sm:$0xff]
  %v4447 = vld [vmem:[%s4142 + $0x4a] sm:$0xff]
  %v4448 = vld [vmem:[%s4142 + $0x52] sm:$0xff]
  %v4449 = vld [vmem:[%s4142 + $0x62] sm:$0xff]
  %v4450 = vld [vmem:[%s4142 + $0x6a] sm:$0xff]
  %v4451 = vld [vmem:[%s4142 + $0x7a] sm:$0xff]
  %v4452 = vld [vmem:[%s4142 + $0x82] sm:$0xff]
  %v4453 = vld [vmem:[%s4142 + $0x92] sm:$0xff]
  %v4454 = vld [vmem:[%s4142 + $0x9a] sm:$0xff]
  %v4455 = vld [vmem:[%s4142 + $0xaa] sm:$0xff]
  %v4456 = vld [vmem:[%s4142 + $0xb2] sm:$0xff]
  %v4457 = vld [vmem:[%s1453] sm:$0x7]
  %v4459 = vsel %vm29, %v4441, 0
  %v4462 = vsel %vm29, %v4442, 0
  %v4465 = vsel %vm29, %v4443, 0
  %v4468 = vsel %vm29, %v4444, 0
  %v4471 = vsel %vm29, %v4445, 0
  %v4474 = vsel %vm29, %v4446, 0
  %v4477 = vsel %vm29, %v4447, 0
  %v4480 = vsel %vm29, %v4448, 0
  %v4483 = vsel %vm29, %v4449, 0
  %v4486 = vsel %vm29, %v4450, 0
  %v4489 = vsel %vm29, %v4451, 0
  %v4492 = vsel %vm29, %v4452, 0
  %v4495 = vsel %vm29, %v4453, 0
  %v4498 = vsel %vm29, %v4454, 0
  %v4501 = vsel %vm29, %v4455, 0
  %v4504 = vsel %vm29, %v4456, 0
  %v4507 = vsel %vm351, %v4457, 0
  %4509 = vmatpush.msra.mxu0 0.0
  %4510 = vmatpush.msra.mxu0 0.0
  %4511 = vmatpush.msra.mxu0 0.0
  %4512 = vmatpush.msra.mxu0 0.0
  %4513 = vmatpush.msra.mxu0 0.0
  %4514 = vmatpush.msra.mxu0 0.0
  %4515 = vmatpush.msra.mxu0 0.0
  %4516 = vmatpush.msra.mxu0 0.0
  %4517 = vmatpush.msra.mxu0 0.0
  %4518 = vmatpush.msra.mxu0 0.0
  %4519 = vmatpush.msra.mxu0 0.0
  %4520 = vmatpush.msra.mxu0 0.0
  %4521 = vmatpush.msra.mxu0 0.0
  %4522 = vmatpush.msra.mxu0 0.0
  %4523 = vmatpush.msra.mxu0 0.0
  %4524 = vmatpush.msra.mxu0 %v4507
  %4525 = vmatmul.f32.gmra.mxu0 %v4459
  %v4526 = vpop.f32.mrf.mxu0
  %v4527 = vadd.f32 0.0, %v4526
  %4528 = vmatmul.f32.gmra.mxu0 %v4462
  %v4529 = vpop.f32.mrf.mxu0
  %v4530 = vadd.f32 0.0, %v4529
  %4531 = vmatmul.f32.gmra.mxu0 %v4465
  %v4532 = vpop.f32.mrf.mxu0
  %v4533 = vadd.f32 0.0, %v4532
  %4534 = vmatmul.f32.gmra.mxu0 %v4468
  %v4535 = vpop.f32.mrf.mxu0
  %v4536 = vadd.f32 0.0, %v4535
  %4537 = vmatmul.f32.gmra.mxu0 %v4471
  %v4538 = vpop.f32.mrf.mxu0
  %v4539 = vadd.f32 0.0, %v4538
  %4540 = vmatmul.f32.gmra.mxu0 %v4474
  %v4541 = vpop.f32.mrf.mxu0
  %v4542 = vadd.f32 0.0, %v4541
  %4543 = vmatmul.f32.gmra.mxu0 %v4477
  %v4544 = vpop.f32.mrf.mxu0
  %v4545 = vadd.f32 0.0, %v4544
  %4546 = vmatmul.f32.gmra.mxu0 %v4480
  %v4547 = vpop.f32.mrf.mxu0
  %v4548 = vadd.f32 0.0, %v4547
  %4549 = vmatmul.f32.gmra.mxu0 %v4483
  %v4550 = vpop.f32.mrf.mxu0
  %v4551 = vadd.f32 0.0, %v4550
  %4552 = vmatmul.f32.gmra.mxu0 %v4486
  %v4553 = vpop.f32.mrf.mxu0
  %v4554 = vadd.f32 0.0, %v4553
  %4555 = vmatmul.f32.gmra.mxu0 %v4489
  %v4556 = vpop.f32.mrf.mxu0
  %v4557 = vadd.f32 0.0, %v4556
  %4558 = vmatmul.f32.gmra.mxu0 %v4492
  %v4559 = vpop.f32.mrf.mxu0
  %v4560 = vadd.f32 0.0, %v4559
  %4561 = vmatmul.f32.gmra.mxu0 %v4495
  %v4562 = vpop.f32.mrf.mxu0
  %v4563 = vadd.f32 0.0, %v4562
  %4564 = vmatmul.f32.gmra.mxu0 %v4498
  %v4565 = vpop.f32.mrf.mxu0
  %v4566 = vadd.f32 0.0, %v4565
  %4567 = vmatmul.f32.gmra.mxu0 %v4501
  %v4568 = vpop.f32.mrf.mxu0
  %v4569 = vadd.f32 0.0, %v4568
  %4570 = vmatmul.f32.gmra.mxu0 %v4504
  %v4571 = vpop.f32.mrf.mxu0
  %v4572 = vadd.f32 0.0, %v4571
  %4573 = vdwg.mxu0
  %v4574 = vadd.f32 %v4425, %v4527
  %v4575 = vadd.f32 %v4426, %v4530
  %v4576 = vadd.f32 %v4427, %v4533
  %v4577 = vadd.f32 %v4428, %v4536
  %v4578 = vadd.f32 %v4429, %v4539
  %v4579 = vadd.f32 %v4430, %v4542
  %v4580 = vadd.f32 %v4431, %v4545
  %v4581 = vadd.f32 %v4432, %v4548
  %v4582 = vadd.f32 %v4433, %v4551
  %v4583 = vadd.f32 %v4434, %v4554
  %v4584 = vadd.f32 %v4435, %v4557
  %v4585 = vadd.f32 %v4436, %v4560
  %v4586 = vadd.f32 %v4437, %v4563
  %v4587 = vadd.f32 %v4438, %v4566
  %v4588 = vadd.f32 %v4439, %v4569
  %v4589 = vadd.f32 %v4440, %v4572
  %v4590 = vld [vmem:[%s3] sm:$0x1]
  %v4592 = vperm.slane %v4590, 0
  %v4594 = vadd.f32 %v4574, %v4592
  %v4595 = vadd.f32 %v4575, %v4592
  %v4596 = vadd.f32 %v4576, %v4592
  %v4597 = vadd.f32 %v4577, %v4592
  %v4598 = vadd.f32 %v4578, %v4592
  %v4599 = vadd.f32 %v4579, %v4592
  %v4600 = vadd.f32 %v4580, %v4592
  %v4601 = vadd.f32 %v4581, %v4592
  %v4602 = vadd.f32 %v4582, %v4592
  %v4603 = vadd.f32 %v4583, %v4592
  %v4604 = vadd.f32 %v4584, %v4592
  %v4605 = vadd.f32 %v4585, %v4592
  %v4606 = vadd.f32 %v4586, %v4592
  %v4607 = vadd.f32 %v4587, %v4592
  %v4608 = vadd.f32 %v4588, %v4592
  %v4609 = vadd.f32 %v4589, %v4592
  %v4610 = vmax.f32 %v4594, 0.0
  %v4611 = vmax.f32 %v4595, 0.0
  %v4612 = vmax.f32 %v4596, 0.0
  %v4613 = vmax.f32 %v4597, 0.0
  %v4614 = vmax.f32 %v4598, 0.0
  %v4615 = vmax.f32 %v4599, 0.0
  %v4616 = vmax.f32 %v4600, 0.0
  %v4617 = vmax.f32 %v4601, 0.0
  %v4618 = vmax.f32 %v4602, 0.0
  %v4619 = vmax.f32 %v4603, 0.0
  %v4620 = vmax.f32 %v4604, 0.0
  %v4621 = vmax.f32 %v4605, 0.0
  %v4622 = vmax.f32 %v4606, 0.0
  %v4623 = vmax.f32 %v4607, 0.0
  %v4624 = vmax.f32 %v4608, 0.0
  %v4625 = vmax.f32 %v4609, 0.0
  %v4626 = vld [vmem:[%s4] sm:$0xff]
  %v4627 = vld [vmem:[%s4 + $0x8] sm:$0xff]
  %v4628 = vld [vmem:[%s4 + $0x10] sm:$0xff]
  %v4629 = vld [vmem:[%s4 + $0x18] sm:$0xff]
  %v4630 = vld [vmem:[%s5] sm:$0x1]
  %v4632 = vperm.slane %v4630, 0
  %v4635 = vsel %vm1631, %v4610, 0
  %v4638 = vsel %vm1631, %v4611, 0
  %v4641 = vsel %vm1631, %v4612, 0
  %v4644 = vsel %vm1631, %v4613, 0
  %v4647 = vsel %vm1631, %v4614, 0
  %v4650 = vsel %vm1631, %v4615, 0
  %v4653 = vsel %vm1631, %v4616, 0
  %v4656 = vsel %vm1631, %v4617, 0
  %v4659 = vsel %vm1631, %v4618, 0
  %v4662 = vsel %vm1631, %v4619, 0
  %v4665 = vsel %vm1631, %v4620, 0
  %v4668 = vsel %vm1631, %v4621, 0
  %v4671 = vsel %vm1631, %v4622, 0
  %v4674 = vsel %vm1631, %v4623, 0
  %v4677 = vsel %vm1631, %v4624, 0
  %v4680 = vsel %vm1631, %v4625, 0
  %4682 = vmatpush.msra.mxu0 0.0
  %4683 = vmatpush.msra.mxu0 0.0
  %4684 = vmatpush.msra.mxu0 0.0
  %4685 = vmatpush.msra.mxu0 0.0
  %4686 = vmatpush.msra.mxu0 0.0
  %4687 = vmatpush.msra.mxu0 0.0
  %4688 = vmatpush.msra.mxu0 0.0
  %4689 = vmatpush.msra.mxu0 0.0
  %4690 = vmatpush.msra.mxu0 0.0
  %4691 = vmatpush.msra.mxu0 0.0
  %4692 = vmatpush.msra.mxu0 0.0
  %4693 = vmatpush.msra.mxu0 0.0
  %4694 = vmatpush.msra.mxu0 %v4629
  %4695 = vmatpush.msra.mxu0 %v4628
  %4696 = vmatpush.msra.mxu0 %v4627
  %4697 = vmatpush.msra.mxu0 %v4626
  %4698 = vmatmul.f32.gmra.mxu0 %v4635
  %v4699 = vpop.f32.mrf.mxu0
  %v4700 = vadd.f32 %v4632, %v4699
  %4701 = vmatmul.f32.gmra.mxu0 %v4638
  %v4702 = vpop.f32.mrf.mxu0
  %v4703 = vadd.f32 %v4632, %v4702
  %4704 = vmatmul.f32.gmra.mxu0 %v4641
  %v4705 = vpop.f32.mrf.mxu0
  %v4706 = vadd.f32 %v4632, %v4705
  %4707 = vmatmul.f32.gmra.mxu0 %v4644
  %v4708 = vpop.f32.mrf.mxu0
  %v4709 = vadd.f32 %v4632, %v4708
  %4710 = vmatmul.f32.gmra.mxu0 %v4647
  %v4711 = vpop.f32.mrf.mxu0
  %v4712 = vadd.f32 %v4632, %v4711
  %4713 = vmatmul.f32.gmra.mxu0 %v4650
  %v4714 = vpop.f32.mrf.mxu0
  %v4715 = vadd.f32 %v4632, %v4714
  %4716 = vmatmul.f32.gmra.mxu0 %v4653
  %v4717 = vpop.f32.mrf.mxu0
  %v4718 = vadd.f32 %v4632, %v4717
  %4719 = vmatmul.f32.gmra.mxu0 %v4656
  %v4720 = vpop.f32.mrf.mxu0
  %v4721 = vadd.f32 %v4632, %v4720
  %4722 = vmatmul.f32.gmra.mxu0 %v4659
  %v4723 = vpop.f32.mrf.mxu0
  %v4724 = vadd.f32 %v4632, %v4723
  %4725 = vmatmul.f32.gmra.mxu0 %v4662
  %v4726 = vpop.f32.mrf.mxu0
  %v4727 = vadd.f32 %v4632, %v4726
  %4728 = vmatmul.f32.gmra.mxu0 %v4665
  %v4729 = vpop.f32.mrf.mxu0
  %v4730 = vadd.f32 %v4632, %v4729
  %4731 = vmatmul.f32.gmra.mxu0 %v4668
  %v4732 = vpop.f32.mrf.mxu0
  %v4733 = vadd.f32 %v4632, %v4732
  %4734 = vmatmul.f32.gmra.mxu0 %v4671
  %v4735 = vpop.f32.mrf.mxu0
  %v4736 = vadd.f32 %v4632, %v4735
  %4737 = vmatmul.f32.gmra.mxu0 %v4674
  %v4738 = vpop.f32.mrf.mxu0
  %v4739 = vadd.f32 %v4632, %v4738
  %4740 = vmatmul.f32.gmra.mxu0 %v4677
  %v4741 = vpop.f32.mrf.mxu0
  %v4742 = vadd.f32 %v4632, %v4741
  %4743 = vmatmul.f32.gmra.mxu0 %v4680
  %v4744 = vpop.f32.mrf.mxu0
  %v4745 = vadd.f32 %v4632, %v4744
  %4746 = vdwg.mxu0
  %v4747 = vmax.f32 %v4700, 0.0
  %v4748 = vmax.f32 %v4703, 0.0
  %v4749 = vmax.f32 %v4706, 0.0
  %v4750 = vmax.f32 %v4709, 0.0
  %v4751 = vmax.f32 %v4712, 0.0
  %v4752 = vmax.f32 %v4715, 0.0
  %v4753 = vmax.f32 %v4718, 0.0
  %v4754 = vmax.f32 %v4721, 0.0
  %v4755 = vmax.f32 %v4724, 0.0
  %v4756 = vmax.f32 %v4727, 0.0
  %v4757 = vmax.f32 %v4730, 0.0
  %v4758 = vmax.f32 %v4733, 0.0
  %v4759 = vmax.f32 %v4736, 0.0
  %v4760 = vmax.f32 %v4739, 0.0
  %v4761 = vmax.f32 %v4742, 0.0
  %v4762 = vmax.f32 %v4745, 0.0
  %s4763 = scalar_lea.vmem [#allocation3], 256
  %4764 = vst.msk [vmem:[%s4763] sm:$0xff] %vm1631, %v4747
  %4765 = vst.msk [vmem:[%s4763 + $0x8] sm:$0xff] %vm1631, %v4748
  %4766 = vst.msk [vmem:[%s4763 + $0x10] sm:$0xff] %vm1631, %v4749
  %4767 = vst.msk [vmem:[%s4763 + $0x18] sm:$0xff] %vm1631, %v4750
  %4768 = vst.msk [vmem:[%s4763 + $0x20] sm:$0xff] %vm1631, %v4751
  %4769 = vst.msk [vmem:[%s4763 + $0x28] sm:$0xff] %vm1631, %v4752
  %4770 = vst.msk [vmem:[%s4763 + $0x30] sm:$0xff] %vm1631, %v4753
  %4771 = vst.msk [vmem:[%s4763 + $0x38] sm:$0xff] %vm1631, %v4754
  %4772 = vst.msk [vmem:[%s4763 + $0x40] sm:$0xff] %vm1631, %v4755
  %4773 = vst.msk [vmem:[%s4763 + $0x48] sm:$0xff] %vm1631, %v4756
  %4774 = vst.msk [vmem:[%s4763 + $0x50] sm:$0xff] %vm1631, %v4757
  %4775 = vst.msk [vmem:[%s4763 + $0x58] sm:$0xff] %vm1631, %v4758
  %4776 = vst.msk [vmem:[%s4763 + $0x60] sm:$0xff] %vm1631, %v4759
  %4777 = vst.msk [vmem:[%s4763 + $0x68] sm:$0xff] %vm1631, %v4760
  %4778 = vst.msk [vmem:[%s4763 + $0x70] sm:$0xff] %vm1631, %v4761
  %4779 = vst.msk [vmem:[%s4763 + $0x78] sm:$0xff] %vm1631, %v4762
  %s4780 = scalar_lea.vmem [#allocation2], 624
  %v4781 = vld [vmem:[%s4780] sm:$0xff]
  %v4782 = vld [vmem:[%s4780 + $0x8] sm:$0xff]
  %v4783 = vld [vmem:[%s4780 + $0x18] sm:$0xff]
  %v4784 = vld [vmem:[%s4780 + $0x20] sm:$0xff]
  %v4785 = vld [vmem:[%s4780 + $0x30] sm:$0xff]
  %v4786 = vld [vmem:[%s4780 + $0x38] sm:$0xff]
  %v4787 = vld [vmem:[%s4780 + $0x48] sm:$0xff]
  %v4788 = vld [vmem:[%s4780 + $0x50] sm:$0xff]
  %v4789 = vld [vmem:[%s4780 + $0x60] sm:$0xff]
  %v4790 = vld [vmem:[%s4780 + $0x68] sm:$0xff]
  %v4791 = vld [vmem:[%s4780 + $0x78] sm:$0xff]
  %v4792 = vld [vmem:[%s4780 + $0x80] sm:$0xff]
  %v4793 = vld [vmem:[%s4780 + $0x90] sm:$0xff]
  %v4794 = vld [vmem:[%s4780 + $0x98] sm:$0xff]
  %v4795 = vld [vmem:[%s4780 + $0xa8] sm:$0xff]
  %v4796 = vld [vmem:[%s4780 + $0xb0] sm:$0xff]
  %v4797 = vld [vmem:[%s2] sm:$0x7]
  %v4798 = vld [vmem:[%s4780 + $0x1] sm:$0xff]
  %v4799 = vld [vmem:[%s4780 + $0x9] sm:$0xff]
  %v4800 = vld [vmem:[%s4780 + $0x19] sm:$0xff]
  %v4801 = vld [vmem:[%s4780 + $0x21] sm:$0xff]
  %v4802 = vld [vmem:[%s4780 + $0x31] sm:$0xff]
  %v4803 = vld [vmem:[%s4780 + $0x39] sm:$0xff]
  %v4804 = vld [vmem:[%s4780 + $0x49] sm:$0xff]
  %v4805 = vld [vmem:[%s4780 + $0x51] sm:$0xff]
  %v4806 = vld [vmem:[%s4780 + $0x61] sm:$0xff]
  %v4807 = vld [vmem:[%s4780 + $0x69] sm:$0xff]
  %v4808 = vld [vmem:[%s4780 + $0x79] sm:$0xff]
  %v4809 = vld [vmem:[%s4780 + $0x81] sm:$0xff]
  %v4810 = vld [vmem:[%s4780 + $0x91] sm:$0xff]
  %v4811 = vld [vmem:[%s4780 + $0x99] sm:$0xff]
  %v4812 = vld [vmem:[%s4780 + $0xa9] sm:$0xff]
  %v4813 = vld [vmem:[%s4780 + $0xb1] sm:$0xff]
  %v4814 = vld [vmem:[%s301] sm:$0x7]
  %v4816 = vsel %vm29, %v4798, 0
  %v4819 = vsel %vm29, %v4799, 0
  %v4822 = vsel %vm29, %v4800, 0
  %v4825 = vsel %vm29, %v4801, 0
  %v4828 = vsel %vm29, %v4802, 0
  %v4831 = vsel %vm29, %v4803, 0
  %v4834 = vsel %vm29, %v4804, 0
  %v4837 = vsel %vm29, %v4805, 0
  %v4840 = vsel %vm29, %v4806, 0
  %v4843 = vsel %vm29, %v4807, 0
  %v4846 = vsel %vm29, %v4808, 0
  %v4849 = vsel %vm29, %v4809, 0
  %v4852 = vsel %vm29, %v4810, 0
  %v4855 = vsel %vm29, %v4811, 0
  %v4858 = vsel %vm29, %v4812, 0
  %v4861 = vsel %vm29, %v4813, 0
  %v4864 = vsel %vm351, %v4814, 0
  %4866 = vmatpush.msra.mxu0 0.0
  %4867 = vmatpush.msra.mxu0 0.0
  %4868 = vmatpush.msra.mxu0 0.0
  %4869 = vmatpush.msra.mxu0 0.0
  %4870 = vmatpush.msra.mxu0 0.0
  %4871 = vmatpush.msra.mxu0 0.0
  %4872 = vmatpush.msra.mxu0 0.0
  %4873 = vmatpush.msra.mxu0 0.0
  %4874 = vmatpush.msra.mxu0 0.0
  %4875 = vmatpush.msra.mxu0 0.0
  %4876 = vmatpush.msra.mxu0 0.0
  %4877 = vmatpush.msra.mxu0 0.0
  %4878 = vmatpush.msra.mxu0 0.0
  %4879 = vmatpush.msra.mxu0 0.0
  %4880 = vmatpush.msra.mxu0 0.0
  %4881 = vmatpush.msra.mxu0 %v4864
  %4882 = vmatmul.f32.gmra.mxu0 %v4816
  %v4883 = vpop.f32.mrf.mxu0
  %v4884 = vadd.f32 0.0, %v4883
  %4885 = vmatmul.f32.gmra.mxu0 %v4819
  %v4886 = vpop.f32.mrf.mxu0
  %v4887 = vadd.f32 0.0, %v4886
  %4888 = vmatmul.f32.gmra.mxu0 %v4822
  %v4889 = vpop.f32.mrf.mxu0
  %v4890 = vadd.f32 0.0, %v4889
  %4891 = vmatmul.f32.gmra.mxu0 %v4825
  %v4892 = vpop.f32.mrf.mxu0
  %v4893 = vadd.f32 0.0, %v4892
  %4894 = vmatmul.f32.gmra.mxu0 %v4828
  %v4895 = vpop.f32.mrf.mxu0
  %v4896 = vadd.f32 0.0, %v4895
  %4897 = vmatmul.f32.gmra.mxu0 %v4831
  %v4898 = vpop.f32.mrf.mxu0
  %v4899 = vadd.f32 0.0, %v4898
  %4900 = vmatmul.f32.gmra.mxu0 %v4834
  %v4901 = vpop.f32.mrf.mxu0
  %v4902 = vadd.f32 0.0, %v4901
  %4903 = vmatmul.f32.gmra.mxu0 %v4837
  %v4904 = vpop.f32.mrf.mxu0
  %v4905 = vadd.f32 0.0, %v4904
  %4906 = vmatmul.f32.gmra.mxu0 %v4840
  %v4907 = vpop.f32.mrf.mxu0
  %v4908 = vadd.f32 0.0, %v4907
  %4909 = vmatmul.f32.gmra.mxu0 %v4843
  %v4910 = vpop.f32.mrf.mxu0
  %v4911 = vadd.f32 0.0, %v4910
  %4912 = vmatmul.f32.gmra.mxu0 %v4846
  %v4913 = vpop.f32.mrf.mxu0
  %v4914 = vadd.f32 0.0, %v4913
  %4915 = vmatmul.f32.gmra.mxu0 %v4849
  %v4916 = vpop.f32.mrf.mxu0
  %v4917 = vadd.f32 0.0, %v4916
  %4918 = vmatmul.f32.gmra.mxu0 %v4852
  %v4919 = vpop.f32.mrf.mxu0
  %v4920 = vadd.f32 0.0, %v4919
  %4921 = vmatmul.f32.gmra.mxu0 %v4855
  %v4922 = vpop.f32.mrf.mxu0
  %v4923 = vadd.f32 0.0, %v4922
  %4924 = vmatmul.f32.gmra.mxu0 %v4858
  %v4925 = vpop.f32.mrf.mxu0
  %v4926 = vadd.f32 0.0, %v4925
  %4927 = vmatmul.f32.gmra.mxu0 %v4861
  %v4928 = vpop.f32.mrf.mxu0
  %v4929 = vadd.f32 0.0, %v4928
  %4930 = vdwg.mxu0
  %v4932 = vsel %vm29, %v4781, 0
  %v4935 = vsel %vm29, %v4782, 0
  %v4938 = vsel %vm29, %v4783, 0
  %v4941 = vsel %vm29, %v4784, 0
  %v4944 = vsel %vm29, %v4785, 0
  %v4947 = vsel %vm29, %v4786, 0
  %v4950 = vsel %vm29, %v4787, 0
  %v4953 = vsel %vm29, %v4788, 0
  %v4956 = vsel %vm29, %v4789, 0
  %v4959 = vsel %vm29, %v4790, 0
  %v4962 = vsel %vm29, %v4791, 0
  %v4965 = vsel %vm29, %v4792, 0
  %v4968 = vsel %vm29, %v4793, 0
  %v4971 = vsel %vm29, %v4794, 0
  %v4974 = vsel %vm29, %v4795, 0
  %v4977 = vsel %vm29, %v4796, 0
  %v4980 = vsel %vm351, %v4797, 0
  %4982 = vmatpush.msra.mxu0 0.0
  %4983 = vmatpush.msra.mxu0 0.0
  %4984 = vmatpush.msra.mxu0 0.0
  %4985 = vmatpush.msra.mxu0 0.0
  %4986 = vmatpush.msra.mxu0 0.0
  %4987 = vmatpush.msra.mxu0 0.0
  %4988 = vmatpush.msra.mxu0 0.0
  %4989 = vmatpush.msra.mxu0 0.0
  %4990 = vmatpush.msra.mxu0 0.0
  %4991 = vmatpush.msra.mxu0 0.0
  %4992 = vmatpush.msra.mxu0 0.0
  %4993 = vmatpush.msra.mxu0 0.0
  %4994 = vmatpush.msra.mxu0 0.0
  %4995 = vmatpush.msra.mxu0 0.0
  %4996 = vmatpush.msra.mxu0 0.0
  %4997 = vmatpush.msra.mxu0 %v4980
  %4998 = vmatmul.f32.gmra.mxu0 %v4932
  %v4999 = vpop.f32.mrf.mxu0
  %v5000 = vadd.f32 %v4884, %v4999
  %5001 = vmatmul.f32.gmra.mxu0 %v4935
  %v5002 = vpop.f32.mrf.mxu0
  %v5003 = vadd.f32 %v4887, %v5002
  %5004 = vmatmul.f32.gmra.mxu0 %v4938
  %v5005 = vpop.f32.mrf.mxu0
  %v5006 = vadd.f32 %v4890, %v5005
  %5007 = vmatmul.f32.gmra.mxu0 %v4941
  %v5008 = vpop.f32.mrf.mxu0
  %v5009 = vadd.f32 %v4893, %v5008
  %5010 = vmatmul.f32.gmra.mxu0 %v4944
  %v5011 = vpop.f32.mrf.mxu0
  %v5012 = vadd.f32 %v4896, %v5011
  %5013 = vmatmul.f32.gmra.mxu0 %v4947
  %v5014 = vpop.f32.mrf.mxu0
  %v5015 = vadd.f32 %v4899, %v5014
  %5016 = vmatmul.f32.gmra.mxu0 %v4950
  %v5017 = vpop.f32.mrf.mxu0
  %v5018 = vadd.f32 %v4902, %v5017
  %5019 = vmatmul.f32.gmra.mxu0 %v4953
  %v5020 = vpop.f32.mrf.mxu0
  %v5021 = vadd.f32 %v4905, %v5020
  %5022 = vmatmul.f32.gmra.mxu0 %v4956
  %v5023 = vpop.f32.mrf.mxu0
  %v5024 = vadd.f32 %v4908, %v5023
  %5025 = vmatmul.f32.gmra.mxu0 %v4959
  %v5026 = vpop.f32.mrf.mxu0
  %v5027 = vadd.f32 %v4911, %v5026
  %5028 = vmatmul.f32.gmra.mxu0 %v4962
  %v5029 = vpop.f32.mrf.mxu0
  %v5030 = vadd.f32 %v4914, %v5029
  %5031 = vmatmul.f32.gmra.mxu0 %v4965
  %v5032 = vpop.f32.mrf.mxu0
  %v5033 = vadd.f32 %v4917, %v5032
  %5034 = vmatmul.f32.gmra.mxu0 %v4968
  %v5035 = vpop.f32.mrf.mxu0
  %v5036 = vadd.f32 %v4920, %v5035
  %5037 = vmatmul.f32.gmra.mxu0 %v4971
  %v5038 = vpop.f32.mrf.mxu0
  %v5039 = vadd.f32 %v4923, %v5038
  %5040 = vmatmul.f32.gmra.mxu0 %v4974
  %v5041 = vpop.f32.mrf.mxu0
  %v5042 = vadd.f32 %v4926, %v5041
  %5043 = vmatmul.f32.gmra.mxu0 %v4977
  %v5044 = vpop.f32.mrf.mxu0
  %v5045 = vadd.f32 %v4929, %v5044
  %5046 = vdwg.mxu0
  %v5047 = vld [vmem:[%s4780 + $0x2] sm:$0xff]
  %v5048 = vld [vmem:[%s4780 + $0xa] sm:$0xff]
  %v5049 = vld [vmem:[%s4780 + $0x1a] sm:$0xff]
  %v5050 = vld [vmem:[%s4780 + $0x22] sm:$0xff]
  %v5051 = vld [vmem:[%s4780 + $0x32] sm:$0xff]
  %v5052 = vld [vmem:[%s4780 + $0x3a] sm:$0xff]
  %v5053 = vld [vmem:[%s4780 + $0x4a] sm:$0xff]
  %v5054 = vld [vmem:[%s4780 + $0x52] sm:$0xff]
  %v5055 = vld [vmem:[%s4780 + $0x62] sm:$0xff]
  %v5056 = vld [vmem:[%s4780 + $0x6a] sm:$0xff]
  %v5057 = vld [vmem:[%s4780 + $0x7a] sm:$0xff]
  %v5058 = vld [vmem:[%s4780 + $0x82] sm:$0xff]
  %v5059 = vld [vmem:[%s4780 + $0x92] sm:$0xff]
  %v5060 = vld [vmem:[%s4780 + $0x9a] sm:$0xff]
  %v5061 = vld [vmem:[%s4780 + $0xaa] sm:$0xff]
  %v5062 = vld [vmem:[%s4780 + $0xb2] sm:$0xff]
  %v5063 = vld [vmem:[%s552] sm:$0x7]
  %v5065 = vsel %vm29, %v5047, 0
  %v5068 = vsel %vm29, %v5048, 0
  %v5071 = vsel %vm29, %v5049, 0
  %v5074 = vsel %vm29, %v5050, 0
  %v5077 = vsel %vm29, %v5051, 0
  %v5080 = vsel %vm29, %v5052, 0
  %v5083 = vsel %vm29, %v5053, 0
  %v5086 = vsel %vm29, %v5054, 0
  %v5089 = vsel %vm29, %v5055, 0
  %v5092 = vsel %vm29, %v5056, 0
  %v5095 = vsel %vm29, %v5057, 0
  %v5098 = vsel %vm29, %v5058, 0
  %v5101 = vsel %vm29, %v5059, 0
  %v5104 = vsel %vm29, %v5060, 0
  %v5107 = vsel %vm29, %v5061, 0
  %v5110 = vsel %vm29, %v5062, 0
  %v5113 = vsel %vm351, %v5063, 0
  %5115 = vmatpush.msra.mxu0 0.0
  %5116 = vmatpush.msra.mxu0 0.0
  %5117 = vmatpush.msra.mxu0 0.0
  %5118 = vmatpush.msra.mxu0 0.0
  %5119 = vmatpush.msra.mxu0 0.0
  %5120 = vmatpush.msra.mxu0 0.0
  %5121 = vmatpush.msra.mxu0 0.0
  %5122 = vmatpush.msra.mxu0 0.0
  %5123 = vmatpush.msra.mxu0 0.0
  %5124 = vmatpush.msra.mxu0 0.0
  %5125 = vmatpush.msra.mxu0 0.0
  %5126 = vmatpush.msra.mxu0 0.0
  %5127 = vmatpush.msra.mxu0 0.0
  %5128 = vmatpush.msra.mxu0 0.0
  %5129 = vmatpush.msra.mxu0 0.0
  %5130 = vmatpush.msra.mxu0 %v5113
  %5131 = vmatmul.f32.gmra.mxu0 %v5065
  %v5132 = vpop.f32.mrf.mxu0
  %v5133 = vadd.f32 0.0, %v5132
  %5134 = vmatmul.f32.gmra.mxu0 %v5068
  %v5135 = vpop.f32.mrf.mxu0
  %v5136 = vadd.f32 0.0, %v5135
  %5137 = vmatmul.f32.gmra.mxu0 %v5071
  %v5138 = vpop.f32.mrf.mxu0
  %v5139 = vadd.f32 0.0, %v5138
  %5140 = vmatmul.f32.gmra.mxu0 %v5074
  %v5141 = vpop.f32.mrf.mxu0
  %v5142 = vadd.f32 0.0, %v5141
  %5143 = vmatmul.f32.gmra.mxu0 %v5077
  %v5144 = vpop.f32.mrf.mxu0
  %v5145 = vadd.f32 0.0, %v5144
  %5146 = vmatmul.f32.gmra.mxu0 %v5080
  %v5147 = vpop.f32.mrf.mxu0
  %v5148 = vadd.f32 0.0, %v5147
  %5149 = vmatmul.f32.gmra.mxu0 %v5083
  %v5150 = vpop.f32.mrf.mxu0
  %v5151 = vadd.f32 0.0, %v5150
  %5152 = vmatmul.f32.gmra.mxu0 %v5086
  %v5153 = vpop.f32.mrf.mxu0
  %v5154 = vadd.f32 0.0, %v5153
  %5155 = vmatmul.f32.gmra.mxu0 %v5089
  %v5156 = vpop.f32.mrf.mxu0
  %v5157 = vadd.f32 0.0, %v5156
  %5158 = vmatmul.f32.gmra.mxu0 %v5092
  %v5159 = vpop.f32.mrf.mxu0
  %v5160 = vadd.f32 0.0, %v5159
  %5161 = vmatmul.f32.gmra.mxu0 %v5095
  %v5162 = vpop.f32.mrf.mxu0
  %v5163 = vadd.f32 0.0, %v5162
  %5164 = vmatmul.f32.gmra.mxu0 %v5098
  %v5165 = vpop.f32.mrf.mxu0
  %v5166 = vadd.f32 0.0, %v5165
  %5167 = vmatmul.f32.gmra.mxu0 %v5101
  %v5168 = vpop.f32.mrf.mxu0
  %v5169 = vadd.f32 0.0, %v5168
  %5170 = vmatmul.f32.gmra.mxu0 %v5104
  %v5171 = vpop.f32.mrf.mxu0
  %v5172 = vadd.f32 0.0, %v5171
  %5173 = vmatmul.f32.gmra.mxu0 %v5107
  %v5174 = vpop.f32.mrf.mxu0
  %v5175 = vadd.f32 0.0, %v5174
  %5176 = vmatmul.f32.gmra.mxu0 %v5110
  %v5177 = vpop.f32.mrf.mxu0
  %v5178 = vadd.f32 0.0, %v5177
  %5179 = vdwg.mxu0
  %v5180 = vadd.f32 %v5000, %v5133
  %v5181 = vadd.f32 %v5003, %v5136
  %v5182 = vadd.f32 %v5006, %v5139
  %v5183 = vadd.f32 %v5009, %v5142
  %v5184 = vadd.f32 %v5012, %v5145
  %v5185 = vadd.f32 %v5015, %v5148
  %v5186 = vadd.f32 %v5018, %v5151
  %v5187 = vadd.f32 %v5021, %v5154
  %v5188 = vadd.f32 %v5024, %v5157
  %v5189 = vadd.f32 %v5027, %v5160
  %v5190 = vadd.f32 %v5030, %v5163
  %v5191 = vadd.f32 %v5033, %v5166
  %v5192 = vadd.f32 %v5036, %v5169
  %v5193 = vadd.f32 %v5039, %v5172
  %v5194 = vadd.f32 %v5042, %v5175
  %v5195 = vadd.f32 %v5045, %v5178
  %s5196 = scalar_lea.vmem [#allocation2], 648
  %v5197 = vld [vmem:[%s5196] sm:$0xff]
  %v5198 = vld [vmem:[%s5196 + $0x8] sm:$0xff]
  %v5199 = vld [vmem:[%s5196 + $0x18] sm:$0xff]
  %v5200 = vld [vmem:[%s5196 + $0x20] sm:$0xff]
  %v5201 = vld [vmem:[%s5196 + $0x30] sm:$0xff]
  %v5202 = vld [vmem:[%s5196 + $0x38] sm:$0xff]
  %v5203 = vld [vmem:[%s5196 + $0x48] sm:$0xff]
  %v5204 = vld [vmem:[%s5196 + $0x50] sm:$0xff]
  %v5205 = vld [vmem:[%s5196 + $0x60] sm:$0xff]
  %v5206 = vld [vmem:[%s5196 + $0x68] sm:$0xff]
  %v5207 = vld [vmem:[%s5196 + $0x78] sm:$0xff]
  %v5208 = vld [vmem:[%s5196 + $0x80] sm:$0xff]
  %v5209 = vld [vmem:[%s5196 + $0x90] sm:$0xff]
  %v5210 = vld [vmem:[%s5196 + $0x98] sm:$0xff]
  %v5211 = vld [vmem:[%s5196 + $0xa8] sm:$0xff]
  %v5212 = vld [vmem:[%s5196 + $0xb0] sm:$0xff]
  %v5213 = vld [vmem:[%s702] sm:$0x7]
  %v5215 = vsel %vm29, %v5197, 0
  %v5218 = vsel %vm29, %v5198, 0
  %v5221 = vsel %vm29, %v5199, 0
  %v5224 = vsel %vm29, %v5200, 0
  %v5227 = vsel %vm29, %v5201, 0
  %v5230 = vsel %vm29, %v5202, 0
  %v5233 = vsel %vm29, %v5203, 0
  %v5236 = vsel %vm29, %v5204, 0
  %v5239 = vsel %vm29, %v5205, 0
  %v5242 = vsel %vm29, %v5206, 0
  %v5245 = vsel %vm29, %v5207, 0
  %v5248 = vsel %vm29, %v5208, 0
  %v5251 = vsel %vm29, %v5209, 0
  %v5254 = vsel %vm29, %v5210, 0
  %v5257 = vsel %vm29, %v5211, 0
  %v5260 = vsel %vm29, %v5212, 0
  %v5263 = vsel %vm351, %v5213, 0
  %5265 = vmatpush.msra.mxu0 0.0
  %5266 = vmatpush.msra.mxu0 0.0
  %5267 = vmatpush.msra.mxu0 0.0
  %5268 = vmatpush.msra.mxu0 0.0
  %5269 = vmatpush.msra.mxu0 0.0
  %5270 = vmatpush.msra.mxu0 0.0
  %5271 = vmatpush.msra.mxu0 0.0
  %5272 = vmatpush.msra.mxu0 0.0
  %5273 = vmatpush.msra.mxu0 0.0
  %5274 = vmatpush.msra.mxu0 0.0
  %5275 = vmatpush.msra.mxu0 0.0
  %5276 = vmatpush.msra.mxu0 0.0
  %5277 = vmatpush.msra.mxu0 0.0
  %5278 = vmatpush.msra.mxu0 0.0
  %5279 = vmatpush.msra.mxu0 0.0
  %5280 = vmatpush.msra.mxu0 %v5263
  %5281 = vmatmul.f32.gmra.mxu0 %v5215
  %v5282 = vpop.f32.mrf.mxu0
  %v5283 = vadd.f32 0.0, %v5282
  %5284 = vmatmul.f32.gmra.mxu0 %v5218
  %v5285 = vpop.f32.mrf.mxu0
  %v5286 = vadd.f32 0.0, %v5285
  %5287 = vmatmul.f32.gmra.mxu0 %v5221
  %v5288 = vpop.f32.mrf.mxu0
  %v5289 = vadd.f32 0.0, %v5288
  %5290 = vmatmul.f32.gmra.mxu0 %v5224
  %v5291 = vpop.f32.mrf.mxu0
  %v5292 = vadd.f32 0.0, %v5291
  %5293 = vmatmul.f32.gmra.mxu0 %v5227
  %v5294 = vpop.f32.mrf.mxu0
  %v5295 = vadd.f32 0.0, %v5294
  %5296 = vmatmul.f32.gmra.mxu0 %v5230
  %v5297 = vpop.f32.mrf.mxu0
  %v5298 = vadd.f32 0.0, %v5297
  %5299 = vmatmul.f32.gmra.mxu0 %v5233
  %v5300 = vpop.f32.mrf.mxu0
  %v5301 = vadd.f32 0.0, %v5300
  %5302 = vmatmul.f32.gmra.mxu0 %v5236
  %v5303 = vpop.f32.mrf.mxu0
  %v5304 = vadd.f32 0.0, %v5303
  %5305 = vmatmul.f32.gmra.mxu0 %v5239
  %v5306 = vpop.f32.mrf.mxu0
  %v5307 = vadd.f32 0.0, %v5306
  %5308 = vmatmul.f32.gmra.mxu0 %v5242
  %v5309 = vpop.f32.mrf.mxu0
  %v5310 = vadd.f32 0.0, %v5309
  %5311 = vmatmul.f32.gmra.mxu0 %v5245
  %v5312 = vpop.f32.mrf.mxu0
  %v5313 = vadd.f32 0.0, %v5312
  %5314 = vmatmul.f32.gmra.mxu0 %v5248
  %v5315 = vpop.f32.mrf.mxu0
  %v5316 = vadd.f32 0.0, %v5315
  %5317 = vmatmul.f32.gmra.mxu0 %v5251
  %v5318 = vpop.f32.mrf.mxu0
  %v5319 = vadd.f32 0.0, %v5318
  %5320 = vmatmul.f32.gmra.mxu0 %v5254
  %v5321 = vpop.f32.mrf.mxu0
  %v5322 = vadd.f32 0.0, %v5321
  %5323 = vmatmul.f32.gmra.mxu0 %v5257
  %v5324 = vpop.f32.mrf.mxu0
  %v5325 = vadd.f32 0.0, %v5324
  %5326 = vmatmul.f32.gmra.mxu0 %v5260
  %v5327 = vpop.f32.mrf.mxu0
  %v5328 = vadd.f32 0.0, %v5327
  %5329 = vdwg.mxu0
  %v5330 = vadd.f32 %v5180, %v5283
  %v5331 = vadd.f32 %v5181, %v5286
  %v5332 = vadd.f32 %v5182, %v5289
  %v5333 = vadd.f32 %v5183, %v5292
  %v5334 = vadd.f32 %v5184, %v5295
  %v5335 = vadd.f32 %v5185, %v5298
  %v5336 = vadd.f32 %v5186, %v5301
  %v5337 = vadd.f32 %v5187, %v5304
  %v5338 = vadd.f32 %v5188, %v5307
  %v5339 = vadd.f32 %v5189, %v5310
  %v5340 = vadd.f32 %v5190, %v5313
  %v5341 = vadd.f32 %v5191, %v5316
  %v5342 = vadd.f32 %v5192, %v5319
  %v5343 = vadd.f32 %v5193, %v5322
  %v5344 = vadd.f32 %v5194, %v5325
  %v5345 = vadd.f32 %v5195, %v5328
  %v5346 = vld [vmem:[%s5196 + $0x1] sm:$0xff]
  %v5347 = vld [vmem:[%s5196 + $0x9] sm:$0xff]
  %v5348 = vld [vmem:[%s5196 + $0x19] sm:$0xff]
  %v5349 = vld [vmem:[%s5196 + $0x21] sm:$0xff]
  %v5350 = vld [vmem:[%s5196 + $0x31] sm:$0xff]
  %v5351 = vld [vmem:[%s5196 + $0x39] sm:$0xff]
  %v5352 = vld [vmem:[%s5196 + $0x49] sm:$0xff]
  %v5353 = vld [vmem:[%s5196 + $0x51] sm:$0xff]
  %v5354 = vld [vmem:[%s5196 + $0x61] sm:$0xff]
  %v5355 = vld [vmem:[%s5196 + $0x69] sm:$0xff]
  %v5356 = vld [vmem:[%s5196 + $0x79] sm:$0xff]
  %v5357 = vld [vmem:[%s5196 + $0x81] sm:$0xff]
  %v5358 = vld [vmem:[%s5196 + $0x91] sm:$0xff]
  %v5359 = vld [vmem:[%s5196 + $0x99] sm:$0xff]
  %v5360 = vld [vmem:[%s5196 + $0xa9] sm:$0xff]
  %v5361 = vld [vmem:[%s5196 + $0xb1] sm:$0xff]
  %v5362 = vld [vmem:[%s852] sm:$0x7]
  %v5364 = vsel %vm29, %v5346, 0
  %v5367 = vsel %vm29, %v5347, 0
  %v5370 = vsel %vm29, %v5348, 0
  %v5373 = vsel %vm29, %v5349, 0
  %v5376 = vsel %vm29, %v5350, 0
  %v5379 = vsel %vm29, %v5351, 0
  %v5382 = vsel %vm29, %v5352, 0
  %v5385 = vsel %vm29, %v5353, 0
  %v5388 = vsel %vm29, %v5354, 0
  %v5391 = vsel %vm29, %v5355, 0
  %v5394 = vsel %vm29, %v5356, 0
  %v5397 = vsel %vm29, %v5357, 0
  %v5400 = vsel %vm29, %v5358, 0
  %v5403 = vsel %vm29, %v5359, 0
  %v5406 = vsel %vm29, %v5360, 0
  %v5409 = vsel %vm29, %v5361, 0
  %v5412 = vsel %vm351, %v5362, 0
  %5414 = vmatpush.msra.mxu0 0.0
  %5415 = vmatpush.msra.mxu0 0.0
  %5416 = vmatpush.msra.mxu0 0.0
  %5417 = vmatpush.msra.mxu0 0.0
  %5418 = vmatpush.msra.mxu0 0.0
  %5419 = vmatpush.msra.mxu0 0.0
  %5420 = vmatpush.msra.mxu0 0.0
  %5421 = vmatpush.msra.mxu0 0.0
  %5422 = vmatpush.msra.mxu0 0.0
  %5423 = vmatpush.msra.mxu0 0.0
  %5424 = vmatpush.msra.mxu0 0.0
  %5425 = vmatpush.msra.mxu0 0.0
  %5426 = vmatpush.msra.mxu0 0.0
  %5427 = vmatpush.msra.mxu0 0.0
  %5428 = vmatpush.msra.mxu0 0.0
  %5429 = vmatpush.msra.mxu0 %v5412
  %5430 = vmatmul.f32.gmra.mxu0 %v5364
  %v5431 = vpop.f32.mrf.mxu0
  %v5432 = vadd.f32 0.0, %v5431
  %5433 = vmatmul.f32.gmra.mxu0 %v5367
  %v5434 = vpop.f32.mrf.mxu0
  %v5435 = vadd.f32 0.0, %v5434
  %5436 = vmatmul.f32.gmra.mxu0 %v5370
  %v5437 = vpop.f32.mrf.mxu0
  %v5438 = vadd.f32 0.0, %v5437
  %5439 = vmatmul.f32.gmra.mxu0 %v5373
  %v5440 = vpop.f32.mrf.mxu0
  %v5441 = vadd.f32 0.0, %v5440
  %5442 = vmatmul.f32.gmra.mxu0 %v5376
  %v5443 = vpop.f32.mrf.mxu0
  %v5444 = vadd.f32 0.0, %v5443
  %5445 = vmatmul.f32.gmra.mxu0 %v5379
  %v5446 = vpop.f32.mrf.mxu0
  %v5447 = vadd.f32 0.0, %v5446
  %5448 = vmatmul.f32.gmra.mxu0 %v5382
  %v5449 = vpop.f32.mrf.mxu0
  %v5450 = vadd.f32 0.0, %v5449
  %5451 = vmatmul.f32.gmra.mxu0 %v5385
  %v5452 = vpop.f32.mrf.mxu0
  %v5453 = vadd.f32 0.0, %v5452
  %5454 = vmatmul.f32.gmra.mxu0 %v5388
  %v5455 = vpop.f32.mrf.mxu0
  %v5456 = vadd.f32 0.0, %v5455
  %5457 = vmatmul.f32.gmra.mxu0 %v5391
  %v5458 = vpop.f32.mrf.mxu0
  %v5459 = vadd.f32 0.0, %v5458
  %5460 = vmatmul.f32.gmra.mxu0 %v5394
  %v5461 = vpop.f32.mrf.mxu0
  %v5462 = vadd.f32 0.0, %v5461
  %5463 = vmatmul.f32.gmra.mxu0 %v5397
  %v5464 = vpop.f32.mrf.mxu0
  %v5465 = vadd.f32 0.0, %v5464
  %5466 = vmatmul.f32.gmra.mxu0 %v5400
  %v5467 = vpop.f32.mrf.mxu0
  %v5468 = vadd.f32 0.0, %v5467
  %5469 = vmatmul.f32.gmra.mxu0 %v5403
  %v5470 = vpop.f32.mrf.mxu0
  %v5471 = vadd.f32 0.0, %v5470
  %5472 = vmatmul.f32.gmra.mxu0 %v5406
  %v5473 = vpop.f32.mrf.mxu0
  %v5474 = vadd.f32 0.0, %v5473
  %5475 = vmatmul.f32.gmra.mxu0 %v5409
  %v5476 = vpop.f32.mrf.mxu0
  %v5477 = vadd.f32 0.0, %v5476
  %5478 = vdwg.mxu0
  %v5479 = vadd.f32 %v5330, %v5432
  %v5480 = vadd.f32 %v5331, %v5435
  %v5481 = vadd.f32 %v5332, %v5438
  %v5482 = vadd.f32 %v5333, %v5441
  %v5483 = vadd.f32 %v5334, %v5444
  %v5484 = vadd.f32 %v5335, %v5447
  %v5485 = vadd.f32 %v5336, %v5450
  %v5486 = vadd.f32 %v5337, %v5453
  %v5487 = vadd.f32 %v5338, %v5456
  %v5488 = vadd.f32 %v5339, %v5459
  %v5489 = vadd.f32 %v5340, %v5462
  %v5490 = vadd.f32 %v5341, %v5465
  %v5491 = vadd.f32 %v5342, %v5468
  %v5492 = vadd.f32 %v5343, %v5471
  %v5493 = vadd.f32 %v5344, %v5474
  %v5494 = vadd.f32 %v5345, %v5477
  %v5495 = vld [vmem:[%s5196 + $0x2] sm:$0xff]
  %v5496 = vld [vmem:[%s5196 + $0xa] sm:$0xff]
  %v5497 = vld [vmem:[%s5196 + $0x1a] sm:$0xff]
  %v5498 = vld [vmem:[%s5196 + $0x22] sm:$0xff]
  %v5499 = vld [vmem:[%s5196 + $0x32] sm:$0xff]
  %v5500 = vld [vmem:[%s5196 + $0x3a] sm:$0xff]
  %v5501 = vld [vmem:[%s5196 + $0x4a] sm:$0xff]
  %v5502 = vld [vmem:[%s5196 + $0x52] sm:$0xff]
  %v5503 = vld [vmem:[%s5196 + $0x62] sm:$0xff]
  %v5504 = vld [vmem:[%s5196 + $0x6a] sm:$0xff]
  %v5505 = vld [vmem:[%s5196 + $0x7a] sm:$0xff]
  %v5506 = vld [vmem:[%s5196 + $0x82] sm:$0xff]
  %v5507 = vld [vmem:[%s5196 + $0x92] sm:$0xff]
  %v5508 = vld [vmem:[%s5196 + $0x9a] sm:$0xff]
  %v5509 = vld [vmem:[%s5196 + $0xaa] sm:$0xff]
  %v5510 = vld [vmem:[%s5196 + $0xb2] sm:$0xff]
  %v5511 = vld [vmem:[%s1002] sm:$0x7]
  %v5513 = vsel %vm29, %v5495, 0
  %v5516 = vsel %vm29, %v5496, 0
  %v5519 = vsel %vm29, %v5497, 0
  %v5522 = vsel %vm29, %v5498, 0
  %v5525 = vsel %vm29, %v5499, 0
  %v5528 = vsel %vm29, %v5500, 0
  %v5531 = vsel %vm29, %v5501, 0
  %v5534 = vsel %vm29, %v5502, 0
  %v5537 = vsel %vm29, %v5503, 0
  %v5540 = vsel %vm29, %v5504, 0
  %v5543 = vsel %vm29, %v5505, 0
  %v5546 = vsel %vm29, %v5506, 0
  %v5549 = vsel %vm29, %v5507, 0
  %v5552 = vsel %vm29, %v5508, 0
  %v5555 = vsel %vm29, %v5509, 0
  %v5558 = vsel %vm29, %v5510, 0
  %v5561 = vsel %vm351, %v5511, 0
  %5563 = vmatpush.msra.mxu0 0.0
  %5564 = vmatpush.msra.mxu0 0.0
  %5565 = vmatpush.msra.mxu0 0.0
  %5566 = vmatpush.msra.mxu0 0.0
  %5567 = vmatpush.msra.mxu0 0.0
  %5568 = vmatpush.msra.mxu0 0.0
  %5569 = vmatpush.msra.mxu0 0.0
  %5570 = vmatpush.msra.mxu0 0.0
  %5571 = vmatpush.msra.mxu0 0.0
  %5572 = vmatpush.msra.mxu0 0.0
  %5573 = vmatpush.msra.mxu0 0.0
  %5574 = vmatpush.msra.mxu0 0.0
  %5575 = vmatpush.msra.mxu0 0.0
  %5576 = vmatpush.msra.mxu0 0.0
  %5577 = vmatpush.msra.mxu0 0.0
  %5578 = vmatpush.msra.mxu0 %v5561
  %5579 = vmatmul.f32.gmra.mxu0 %v5513
  %v5580 = vpop.f32.mrf.mxu0
  %v5581 = vadd.f32 0.0, %v5580
  %5582 = vmatmul.f32.gmra.mxu0 %v5516
  %v5583 = vpop.f32.mrf.mxu0
  %v5584 = vadd.f32 0.0, %v5583
  %5585 = vmatmul.f32.gmra.mxu0 %v5519
  %v5586 = vpop.f32.mrf.mxu0
  %v5587 = vadd.f32 0.0, %v5586
  %5588 = vmatmul.f32.gmra.mxu0 %v5522
  %v5589 = vpop.f32.mrf.mxu0
  %v5590 = vadd.f32 0.0, %v5589
  %5591 = vmatmul.f32.gmra.mxu0 %v5525
  %v5592 = vpop.f32.mrf.mxu0
  %v5593 = vadd.f32 0.0, %v5592
  %5594 = vmatmul.f32.gmra.mxu0 %v5528
  %v5595 = vpop.f32.mrf.mxu0
  %v5596 = vadd.f32 0.0, %v5595
  %5597 = vmatmul.f32.gmra.mxu0 %v5531
  %v5598 = vpop.f32.mrf.mxu0
  %v5599 = vadd.f32 0.0, %v5598
  %5600 = vmatmul.f32.gmra.mxu0 %v5534
  %v5601 = vpop.f32.mrf.mxu0
  %v5602 = vadd.f32 0.0, %v5601
  %5603 = vmatmul.f32.gmra.mxu0 %v5537
  %v5604 = vpop.f32.mrf.mxu0
  %v5605 = vadd.f32 0.0, %v5604
  %5606 = vmatmul.f32.gmra.mxu0 %v5540
  %v5607 = vpop.f32.mrf.mxu0
  %v5608 = vadd.f32 0.0, %v5607
  %5609 = vmatmul.f32.gmra.mxu0 %v5543
  %v5610 = vpop.f32.mrf.mxu0
  %v5611 = vadd.f32 0.0, %v5610
  %5612 = vmatmul.f32.gmra.mxu0 %v5546
  %v5613 = vpop.f32.mrf.mxu0
  %v5614 = vadd.f32 0.0, %v5613
  %5615 = vmatmul.f32.gmra.mxu0 %v5549
  %v5616 = vpop.f32.mrf.mxu0
  %v5617 = vadd.f32 0.0, %v5616
  %5618 = vmatmul.f32.gmra.mxu0 %v5552
  %v5619 = vpop.f32.mrf.mxu0
  %v5620 = vadd.f32 0.0, %v5619
  %5621 = vmatmul.f32.gmra.mxu0 %v5555
  %v5622 = vpop.f32.mrf.mxu0
  %v5623 = vadd.f32 0.0, %v5622
  %5624 = vmatmul.f32.gmra.mxu0 %v5558
  %v5625 = vpop.f32.mrf.mxu0
  %v5626 = vadd.f32 0.0, %v5625
  %5627 = vdwg.mxu0
  %v5628 = vadd.f32 %v5479, %v5581
  %v5629 = vadd.f32 %v5480, %v5584
  %v5630 = vadd.f32 %v5481, %v5587
  %v5631 = vadd.f32 %v5482, %v5590
  %v5632 = vadd.f32 %v5483, %v5593
  %v5633 = vadd.f32 %v5484, %v5596
  %v5634 = vadd.f32 %v5485, %v5599
  %v5635 = vadd.f32 %v5486, %v5602
  %v5636 = vadd.f32 %v5487, %v5605
  %v5637 = vadd.f32 %v5488, %v5608
  %v5638 = vadd.f32 %v5489, %v5611
  %v5639 = vadd.f32 %v5490, %v5614
  %v5640 = vadd.f32 %v5491, %v5617
  %v5641 = vadd.f32 %v5492, %v5620
  %v5642 = vadd.f32 %v5493, %v5623
  %v5643 = vadd.f32 %v5494, %v5626
  %s5644 = scalar_lea.vmem [#allocation2], 672
  %v5645 = vld [vmem:[%s5644] sm:$0xff]
  %v5646 = vld [vmem:[%s5644 + $0x8] sm:$0xff]
  %v5647 = vld [vmem:[%s5644 + $0x18] sm:$0xff]
  %v5648 = vld [vmem:[%s5644 + $0x20] sm:$0xff]
  %v5649 = vld [vmem:[%s5644 + $0x30] sm:$0xff]
  %v5650 = vld [vmem:[%s5644 + $0x38] sm:$0xff]
  %v5651 = vld [vmem:[%s5644 + $0x48] sm:$0xff]
  %v5652 = vld [vmem:[%s5644 + $0x50] sm:$0xff]
  %v5653 = vld [vmem:[%s5644 + $0x60] sm:$0xff]
  %v5654 = vld [vmem:[%s5644 + $0x68] sm:$0xff]
  %v5655 = vld [vmem:[%s5644 + $0x78] sm:$0xff]
  %v5656 = vld [vmem:[%s5644 + $0x80] sm:$0xff]
  %v5657 = vld [vmem:[%s5644 + $0x90] sm:$0xff]
  %v5658 = vld [vmem:[%s5644 + $0x98] sm:$0xff]
  %v5659 = vld [vmem:[%s5644 + $0xa8] sm:$0xff]
  %v5660 = vld [vmem:[%s5644 + $0xb0] sm:$0xff]
  %v5661 = vld [vmem:[%s1153] sm:$0x7]
  %v5663 = vsel %vm29, %v5645, 0
  %v5666 = vsel %vm29, %v5646, 0
  %v5669 = vsel %vm29, %v5647, 0
  %v5672 = vsel %vm29, %v5648, 0
  %v5675 = vsel %vm29, %v5649, 0
  %v5678 = vsel %vm29, %v5650, 0
  %v5681 = vsel %vm29, %v5651, 0
  %v5684 = vsel %vm29, %v5652, 0
  %v5687 = vsel %vm29, %v5653, 0
  %v5690 = vsel %vm29, %v5654, 0
  %v5693 = vsel %vm29, %v5655, 0
  %v5696 = vsel %vm29, %v5656, 0
  %v5699 = vsel %vm29, %v5657, 0
  %v5702 = vsel %vm29, %v5658, 0
  %v5705 = vsel %vm29, %v5659, 0
  %v5708 = vsel %vm29, %v5660, 0
  %v5711 = vsel %vm351, %v5661, 0
  %5713 = vmatpush.msra.mxu0 0.0
  %5714 = vmatpush.msra.mxu0 0.0
  %5715 = vmatpush.msra.mxu0 0.0
  %5716 = vmatpush.msra.mxu0 0.0
  %5717 = vmatpush.msra.mxu0 0.0
  %5718 = vmatpush.msra.mxu0 0.0
  %5719 = vmatpush.msra.mxu0 0.0
  %5720 = vmatpush.msra.mxu0 0.0
  %5721 = vmatpush.msra.mxu0 0.0
  %5722 = vmatpush.msra.mxu0 0.0
  %5723 = vmatpush.msra.mxu0 0.0
  %5724 = vmatpush.msra.mxu0 0.0
  %5725 = vmatpush.msra.mxu0 0.0
  %5726 = vmatpush.msra.mxu0 0.0
  %5727 = vmatpush.msra.mxu0 0.0
  %5728 = vmatpush.msra.mxu0 %v5711
  %5729 = vmatmul.f32.gmra.mxu0 %v5663
  %v5730 = vpop.f32.mrf.mxu0
  %v5731 = vadd.f32 0.0, %v5730
  %5732 = vmatmul.f32.gmra.mxu0 %v5666
  %v5733 = vpop.f32.mrf.mxu0
  %v5734 = vadd.f32 0.0, %v5733
  %5735 = vmatmul.f32.gmra.mxu0 %v5669
  %v5736 = vpop.f32.mrf.mxu0
  %v5737 = vadd.f32 0.0, %v5736
  %5738 = vmatmul.f32.gmra.mxu0 %v5672
  %v5739 = vpop.f32.mrf.mxu0
  %v5740 = vadd.f32 0.0, %v5739
  %5741 = vmatmul.f32.gmra.mxu0 %v5675
  %v5742 = vpop.f32.mrf.mxu0
  %v5743 = vadd.f32 0.0, %v5742
  %5744 = vmatmul.f32.gmra.mxu0 %v5678
  %v5745 = vpop.f32.mrf.mxu0
  %v5746 = vadd.f32 0.0, %v5745
  %5747 = vmatmul.f32.gmra.mxu0 %v5681
  %v5748 = vpop.f32.mrf.mxu0
  %v5749 = vadd.f32 0.0, %v5748
  %5750 = vmatmul.f32.gmra.mxu0 %v5684
  %v5751 = vpop.f32.mrf.mxu0
  %v5752 = vadd.f32 0.0, %v5751
  %5753 = vmatmul.f32.gmra.mxu0 %v5687
  %v5754 = vpop.f32.mrf.mxu0
  %v5755 = vadd.f32 0.0, %v5754
  %5756 = vmatmul.f32.gmra.mxu0 %v5690
  %v5757 = vpop.f32.mrf.mxu0
  %v5758 = vadd.f32 0.0, %v5757
  %5759 = vmatmul.f32.gmra.mxu0 %v5693
  %v5760 = vpop.f32.mrf.mxu0
  %v5761 = vadd.f32 0.0, %v5760
  %5762 = vmatmul.f32.gmra.mxu0 %v5696
  %v5763 = vpop.f32.mrf.mxu0
  %v5764 = vadd.f32 0.0, %v5763
  %5765 = vmatmul.f32.gmra.mxu0 %v5699
  %v5766 = vpop.f32.mrf.mxu0
  %v5767 = vadd.f32 0.0, %v5766
  %5768 = vmatmul.f32.gmra.mxu0 %v5702
  %v5769 = vpop.f32.mrf.mxu0
  %v5770 = vadd.f32 0.0, %v5769
  %5771 = vmatmul.f32.gmra.mxu0 %v5705
  %v5772 = vpop.f32.mrf.mxu0
  %v5773 = vadd.f32 0.0, %v5772
  %5774 = vmatmul.f32.gmra.mxu0 %v5708
  %v5775 = vpop.f32.mrf.mxu0
  %v5776 = vadd.f32 0.0, %v5775
  %5777 = vdwg.mxu0
  %v5778 = vadd.f32 %v5628, %v5731
  %v5779 = vadd.f32 %v5629, %v5734
  %v5780 = vadd.f32 %v5630, %v5737
  %v5781 = vadd.f32 %v5631, %v5740
  %v5782 = vadd.f32 %v5632, %v5743
  %v5783 = vadd.f32 %v5633, %v5746
  %v5784 = vadd.f32 %v5634, %v5749
  %v5785 = vadd.f32 %v5635, %v5752
  %v5786 = vadd.f32 %v5636, %v5755
  %v5787 = vadd.f32 %v5637, %v5758
  %v5788 = vadd.f32 %v5638, %v5761
  %v5789 = vadd.f32 %v5639, %v5764
  %v5790 = vadd.f32 %v5640, %v5767
  %v5791 = vadd.f32 %v5641, %v5770
  %v5792 = vadd.f32 %v5642, %v5773
  %v5793 = vadd.f32 %v5643, %v5776
  %v5794 = vld [vmem:[%s5644 + $0x1] sm:$0xff]
  %v5795 = vld [vmem:[%s5644 + $0x9] sm:$0xff]
  %v5796 = vld [vmem:[%s5644 + $0x19] sm:$0xff]
  %v5797 = vld [vmem:[%s5644 + $0x21] sm:$0xff]
  %v5798 = vld [vmem:[%s5644 + $0x31] sm:$0xff]
  %v5799 = vld [vmem:[%s5644 + $0x39] sm:$0xff]
  %v5800 = vld [vmem:[%s5644 + $0x49] sm:$0xff]
  %v5801 = vld [vmem:[%s5644 + $0x51] sm:$0xff]
  %v5802 = vld [vmem:[%s5644 + $0x61] sm:$0xff]
  %v5803 = vld [vmem:[%s5644 + $0x69] sm:$0xff]
  %v5804 = vld [vmem:[%s5644 + $0x79] sm:$0xff]
  %v5805 = vld [vmem:[%s5644 + $0x81] sm:$0xff]
  %v5806 = vld [vmem:[%s5644 + $0x91] sm:$0xff]
  %v5807 = vld [vmem:[%s5644 + $0x99] sm:$0xff]
  %v5808 = vld [vmem:[%s5644 + $0xa9] sm:$0xff]
  %v5809 = vld [vmem:[%s5644 + $0xb1] sm:$0xff]
  %v5810 = vld [vmem:[%s1303] sm:$0x7]
  %v5812 = vsel %vm29, %v5794, 0
  %v5815 = vsel %vm29, %v5795, 0
  %v5818 = vsel %vm29, %v5796, 0
  %v5821 = vsel %vm29, %v5797, 0
  %v5824 = vsel %vm29, %v5798, 0
  %v5827 = vsel %vm29, %v5799, 0
  %v5830 = vsel %vm29, %v5800, 0
  %v5833 = vsel %vm29, %v5801, 0
  %v5836 = vsel %vm29, %v5802, 0
  %v5839 = vsel %vm29, %v5803, 0
  %v5842 = vsel %vm29, %v5804, 0
  %v5845 = vsel %vm29, %v5805, 0
  %v5848 = vsel %vm29, %v5806, 0
  %v5851 = vsel %vm29, %v5807, 0
  %v5854 = vsel %vm29, %v5808, 0
  %v5857 = vsel %vm29, %v5809, 0
  %v5860 = vsel %vm351, %v5810, 0
  %5862 = vmatpush.msra.mxu0 0.0
  %5863 = vmatpush.msra.mxu0 0.0
  %5864 = vmatpush.msra.mxu0 0.0
  %5865 = vmatpush.msra.mxu0 0.0
  %5866 = vmatpush.msra.mxu0 0.0
  %5867 = vmatpush.msra.mxu0 0.0
  %5868 = vmatpush.msra.mxu0 0.0
  %5869 = vmatpush.msra.mxu0 0.0
  %5870 = vmatpush.msra.mxu0 0.0
  %5871 = vmatpush.msra.mxu0 0.0
  %5872 = vmatpush.msra.mxu0 0.0
  %5873 = vmatpush.msra.mxu0 0.0
  %5874 = vmatpush.msra.mxu0 0.0
  %5875 = vmatpush.msra.mxu0 0.0
  %5876 = vmatpush.msra.mxu0 0.0
  %5877 = vmatpush.msra.mxu0 %v5860
  %5878 = vmatmul.f32.gmra.mxu0 %v5812
  %v5879 = vpop.f32.mrf.mxu0
  %v5880 = vadd.f32 0.0, %v5879
  %5881 = vmatmul.f32.gmra.mxu0 %v5815
  %v5882 = vpop.f32.mrf.mxu0
  %v5883 = vadd.f32 0.0, %v5882
  %5884 = vmatmul.f32.gmra.mxu0 %v5818
  %v5885 = vpop.f32.mrf.mxu0
  %v5886 = vadd.f32 0.0, %v5885
  %5887 = vmatmul.f32.gmra.mxu0 %v5821
  %v5888 = vpop.f32.mrf.mxu0
  %v5889 = vadd.f32 0.0, %v5888
  %5890 = vmatmul.f32.gmra.mxu0 %v5824
  %v5891 = vpop.f32.mrf.mxu0
  %v5892 = vadd.f32 0.0, %v5891
  %5893 = vmatmul.f32.gmra.mxu0 %v5827
  %v5894 = vpop.f32.mrf.mxu0
  %v5895 = vadd.f32 0.0, %v5894
  %5896 = vmatmul.f32.gmra.mxu0 %v5830
  %v5897 = vpop.f32.mrf.mxu0
  %v5898 = vadd.f32 0.0, %v5897
  %5899 = vmatmul.f32.gmra.mxu0 %v5833
  %v5900 = vpop.f32.mrf.mxu0
  %v5901 = vadd.f32 0.0, %v5900
  %5902 = vmatmul.f32.gmra.mxu0 %v5836
  %v5903 = vpop.f32.mrf.mxu0
  %v5904 = vadd.f32 0.0, %v5903
  %5905 = vmatmul.f32.gmra.mxu0 %v5839
  %v5906 = vpop.f32.mrf.mxu0
  %v5907 = vadd.f32 0.0, %v5906
  %5908 = vmatmul.f32.gmra.mxu0 %v5842
  %v5909 = vpop.f32.mrf.mxu0
  %v5910 = vadd.f32 0.0, %v5909
  %5911 = vmatmul.f32.gmra.mxu0 %v5845
  %v5912 = vpop.f32.mrf.mxu0
  %v5913 = vadd.f32 0.0, %v5912
  %5914 = vmatmul.f32.gmra.mxu0 %v5848
  %v5915 = vpop.f32.mrf.mxu0
  %v5916 = vadd.f32 0.0, %v5915
  %5917 = vmatmul.f32.gmra.mxu0 %v5851
  %v5918 = vpop.f32.mrf.mxu0
  %v5919 = vadd.f32 0.0, %v5918
  %5920 = vmatmul.f32.gmra.mxu0 %v5854
  %v5921 = vpop.f32.mrf.mxu0
  %v5922 = vadd.f32 0.0, %v5921
  %5923 = vmatmul.f32.gmra.mxu0 %v5857
  %v5924 = vpop.f32.mrf.mxu0
  %v5925 = vadd.f32 0.0, %v5924
  %5926 = vdwg.mxu0
  %v5927 = vadd.f32 %v5778, %v5880
  %v5928 = vadd.f32 %v5779, %v5883
  %v5929 = vadd.f32 %v5780, %v5886
  %v5930 = vadd.f32 %v5781, %v5889
  %v5931 = vadd.f32 %v5782, %v5892
  %v5932 = vadd.f32 %v5783, %v5895
  %v5933 = vadd.f32 %v5784, %v5898
  %v5934 = vadd.f32 %v5785, %v5901
  %v5935 = vadd.f32 %v5786, %v5904
  %v5936 = vadd.f32 %v5787, %v5907
  %v5937 = vadd.f32 %v5788, %v5910
  %v5938 = vadd.f32 %v5789, %v5913
  %v5939 = vadd.f32 %v5790, %v5916
  %v5940 = vadd.f32 %v5791, %v5919
  %v5941 = vadd.f32 %v5792, %v5922
  %v5942 = vadd.f32 %v5793, %v5925
  %v5943 = vld [vmem:[%s5644 + $0x2] sm:$0xff]
  %v5944 = vld [vmem:[%s5644 + $0xa] sm:$0xff]
  %v5945 = vld [vmem:[%s5644 + $0x1a] sm:$0xff]
  %v5946 = vld [vmem:[%s5644 + $0x22] sm:$0xff]
  %v5947 = vld [vmem:[%s5644 + $0x32] sm:$0xff]
  %v5948 = vld [vmem:[%s5644 + $0x3a] sm:$0xff]
  %v5949 = vld [vmem:[%s5644 + $0x4a] sm:$0xff]
  %v5950 = vld [vmem:[%s5644 + $0x52] sm:$0xff]
  %v5951 = vld [vmem:[%s5644 + $0x62] sm:$0xff]
  %v5952 = vld [vmem:[%s5644 + $0x6a] sm:$0xff]
  %v5953 = vld [vmem:[%s5644 + $0x7a] sm:$0xff]
  %v5954 = vld [vmem:[%s5644 + $0x82] sm:$0xff]
  %v5955 = vld [vmem:[%s5644 + $0x92] sm:$0xff]
  %v5956 = vld [vmem:[%s5644 + $0x9a] sm:$0xff]
  %v5957 = vld [vmem:[%s5644 + $0xaa] sm:$0xff]
  %v5958 = vld [vmem:[%s5644 + $0xb2] sm:$0xff]
  %v5959 = vld [vmem:[%s1453] sm:$0x7]
  %v5961 = vsel %vm29, %v5943, 0
  %v5964 = vsel %vm29, %v5944, 0
  %v5967 = vsel %vm29, %v5945, 0
  %v5970 = vsel %vm29, %v5946, 0
  %v5973 = vsel %vm29, %v5947, 0
  %v5976 = vsel %vm29, %v5948, 0
  %v5979 = vsel %vm29, %v5949, 0
  %v5982 = vsel %vm29, %v5950, 0
  %v5985 = vsel %vm29, %v5951, 0
  %v5988 = vsel %vm29, %v5952, 0
  %v5991 = vsel %vm29, %v5953, 0
  %v5994 = vsel %vm29, %v5954, 0
  %v5997 = vsel %vm29, %v5955, 0
  %v6000 = vsel %vm29, %v5956, 0
  %v6003 = vsel %vm29, %v5957, 0
  %v6006 = vsel %vm29, %v5958, 0
  %v6009 = vsel %vm351, %v5959, 0
  %6011 = vmatpush.msra.mxu0 0.0
  %6012 = vmatpush.msra.mxu0 0.0
  %6013 = vmatpush.msra.mxu0 0.0
  %6014 = vmatpush.msra.mxu0 0.0
  %6015 = vmatpush.msra.mxu0 0.0
  %6016 = vmatpush.msra.mxu0 0.0
  %6017 = vmatpush.msra.mxu0 0.0
  %6018 = vmatpush.msra.mxu0 0.0
  %6019 = vmatpush.msra.mxu0 0.0
  %6020 = vmatpush.msra.mxu0 0.0
  %6021 = vmatpush.msra.mxu0 0.0
  %6022 = vmatpush.msra.mxu0 0.0
  %6023 = vmatpush.msra.mxu0 0.0
  %6024 = vmatpush.msra.mxu0 0.0
  %6025 = vmatpush.msra.mxu0 0.0
  %6026 = vmatpush.msra.mxu0 %v6009
  %6027 = vmatmul.f32.gmra.mxu0 %v5961
  %v6028 = vpop.f32.mrf.mxu0
  %v6029 = vadd.f32 0.0, %v6028
  %6030 = vmatmul.f32.gmra.mxu0 %v5964
  %v6031 = vpop.f32.mrf.mxu0
  %v6032 = vadd.f32 0.0, %v6031
  %6033 = vmatmul.f32.gmra.mxu0 %v5967
  %v6034 = vpop.f32.mrf.mxu0
  %v6035 = vadd.f32 0.0, %v6034
  %6036 = vmatmul.f32.gmra.mxu0 %v5970
  %v6037 = vpop.f32.mrf.mxu0
  %v6038 = vadd.f32 0.0, %v6037
  %6039 = vmatmul.f32.gmra.mxu0 %v5973
  %v6040 = vpop.f32.mrf.mxu0
  %v6041 = vadd.f32 0.0, %v6040
  %6042 = vmatmul.f32.gmra.mxu0 %v5976
  %v6043 = vpop.f32.mrf.mxu0
  %v6044 = vadd.f32 0.0, %v6043
  %6045 = vmatmul.f32.gmra.mxu0 %v5979
  %v6046 = vpop.f32.mrf.mxu0
  %v6047 = vadd.f32 0.0, %v6046
  %6048 = vmatmul.f32.gmra.mxu0 %v5982
  %v6049 = vpop.f32.mrf.mxu0
  %v6050 = vadd.f32 0.0, %v6049
  %6051 = vmatmul.f32.gmra.mxu0 %v5985
  %v6052 = vpop.f32.mrf.mxu0
  %v6053 = vadd.f32 0.0, %v6052
  %6054 = vmatmul.f32.gmra.mxu0 %v5988
  %v6055 = vpop.f32.mrf.mxu0
  %v6056 = vadd.f32 0.0, %v6055
  %6057 = vmatmul.f32.gmra.mxu0 %v5991
  %v6058 = vpop.f32.mrf.mxu0
  %v6059 = vadd.f32 0.0, %v6058
  %6060 = vmatmul.f32.gmra.mxu0 %v5994
  %v6061 = vpop.f32.mrf.mxu0
  %v6062 = vadd.f32 0.0, %v6061
  %6063 = vmatmul.f32.gmra.mxu0 %v5997
  %v6064 = vpop.f32.mrf.mxu0
  %v6065 = vadd.f32 0.0, %v6064
  %6066 = vmatmul.f32.gmra.mxu0 %v6000
  %v6067 = vpop.f32.mrf.mxu0
  %v6068 = vadd.f32 0.0, %v6067
  %6069 = vmatmul.f32.gmra.mxu0 %v6003
  %v6070 = vpop.f32.mrf.mxu0
  %v6071 = vadd.f32 0.0, %v6070
  %6072 = vmatmul.f32.gmra.mxu0 %v6006
  %v6073 = vpop.f32.mrf.mxu0
  %v6074 = vadd.f32 0.0, %v6073
  %6075 = vdwg.mxu0
  %v6076 = vadd.f32 %v5927, %v6029
  %v6077 = vadd.f32 %v5928, %v6032
  %v6078 = vadd.f32 %v5929, %v6035
  %v6079 = vadd.f32 %v5930, %v6038
  %v6080 = vadd.f32 %v5931, %v6041
  %v6081 = vadd.f32 %v5932, %v6044
  %v6082 = vadd.f32 %v5933, %v6047
  %v6083 = vadd.f32 %v5934, %v6050
  %v6084 = vadd.f32 %v5935, %v6053
  %v6085 = vadd.f32 %v5936, %v6056
  %v6086 = vadd.f32 %v5937, %v6059
  %v6087 = vadd.f32 %v5938, %v6062
  %v6088 = vadd.f32 %v5939, %v6065
  %v6089 = vadd.f32 %v5940, %v6068
  %v6090 = vadd.f32 %v5941, %v6071
  %v6091 = vadd.f32 %v5942, %v6074
  %v6092 = vld [vmem:[%s3] sm:$0x1]
  %v6094 = vperm.slane %v6092, 0
  %v6096 = vadd.f32 %v6076, %v6094
  %v6097 = vadd.f32 %v6077, %v6094
  %v6098 = vadd.f32 %v6078, %v6094
  %v6099 = vadd.f32 %v6079, %v6094
  %v6100 = vadd.f32 %v6080, %v6094
  %v6101 = vadd.f32 %v6081, %v6094
  %v6102 = vadd.f32 %v6082, %v6094
  %v6103 = vadd.f32 %v6083, %v6094
  %v6104 = vadd.f32 %v6084, %v6094
  %v6105 = vadd.f32 %v6085, %v6094
  %v6106 = vadd.f32 %v6086, %v6094
  %v6107 = vadd.f32 %v6087, %v6094
  %v6108 = vadd.f32 %v6088, %v6094
  %v6109 = vadd.f32 %v6089, %v6094
  %v6110 = vadd.f32 %v6090, %v6094
  %v6111 = vadd.f32 %v6091, %v6094
  %v6112 = vmax.f32 %v6096, 0.0
  %v6113 = vmax.f32 %v6097, 0.0
  %v6114 = vmax.f32 %v6098, 0.0
  %v6115 = vmax.f32 %v6099, 0.0
  %v6116 = vmax.f32 %v6100, 0.0
  %v6117 = vmax.f32 %v6101, 0.0
  %v6118 = vmax.f32 %v6102, 0.0
  %v6119 = vmax.f32 %v6103, 0.0
  %v6120 = vmax.f32 %v6104, 0.0
  %v6121 = vmax.f32 %v6105, 0.0
  %v6122 = vmax.f32 %v6106, 0.0
  %v6123 = vmax.f32 %v6107, 0.0
  %v6124 = vmax.f32 %v6108, 0.0
  %v6125 = vmax.f32 %v6109, 0.0
  %v6126 = vmax.f32 %v6110, 0.0
  %v6127 = vmax.f32 %v6111, 0.0
  %v6128 = vld [vmem:[%s4] sm:$0xff]
  %v6129 = vld [vmem:[%s4 + $0x8] sm:$0xff]
  %v6130 = vld [vmem:[%s4 + $0x10] sm:$0xff]
  %v6131 = vld [vmem:[%s4 + $0x18] sm:$0xff]
  %v6132 = vld [vmem:[%s5] sm:$0x1]
  %v6134 = vperm.slane %v6132, 0
  %v6137 = vsel %vm1631, %v6112, 0
  %v6140 = vsel %vm1631, %v6113, 0
  %v6143 = vsel %vm1631, %v6114, 0
  %v6146 = vsel %vm1631, %v6115, 0
  %v6149 = vsel %vm1631, %v6116, 0
  %v6152 = vsel %vm1631, %v6117, 0
  %v6155 = vsel %vm1631, %v6118, 0
  %v6158 = vsel %vm1631, %v6119, 0
  %v6161 = vsel %vm1631, %v6120, 0
  %v6164 = vsel %vm1631, %v6121, 0
  %v6167 = vsel %vm1631, %v6122, 0
  %v6170 = vsel %vm1631, %v6123, 0
  %v6173 = vsel %vm1631, %v6124, 0
  %v6176 = vsel %vm1631, %v6125, 0
  %v6179 = vsel %vm1631, %v6126, 0
  %v6182 = vsel %vm1631, %v6127, 0
  %6184 = vmatpush.msra.mxu0 0.0
  %6185 = vmatpush.msra.mxu0 0.0
  %6186 = vmatpush.msra.mxu0 0.0
  %6187 = vmatpush.msra.mxu0 0.0
  %6188 = vmatpush.msra.mxu0 0.0
  %6189 = vmatpush.msra.mxu0 0.0
  %6190 = vmatpush.msra.mxu0 0.0
  %6191 = vmatpush.msra.mxu0 0.0
  %6192 = vmatpush.msra.mxu0 0.0
  %6193 = vmatpush.msra.mxu0 0.0
  %6194 = vmatpush.msra.mxu0 0.0
  %6195 = vmatpush.msra.mxu0 0.0
  %6196 = vmatpush.msra.mxu0 %v6131
  %6197 = vmatpush.msra.mxu0 %v6130
  %6198 = vmatpush.msra.mxu0 %v6129
  %6199 = vmatpush.msra.mxu0 %v6128
  %6200 = vmatmul.f32.gmra.mxu0 %v6137
  %v6201 = vpop.f32.mrf.mxu0
  %v6202 = vadd.f32 %v6134, %v6201
  %6203 = vmatmul.f32.gmra.mxu0 %v6140
  %v6204 = vpop.f32.mrf.mxu0
  %v6205 = vadd.f32 %v6134, %v6204
  %6206 = vmatmul.f32.gmra.mxu0 %v6143
  %v6207 = vpop.f32.mrf.mxu0
  %v6208 = vadd.f32 %v6134, %v6207
  %6209 = vmatmul.f32.gmra.mxu0 %v6146
  %v6210 = vpop.f32.mrf.mxu0
  %v6211 = vadd.f32 %v6134, %v6210
  %6212 = vmatmul.f32.gmra.mxu0 %v6149
  %v6213 = vpop.f32.mrf.mxu0
  %v6214 = vadd.f32 %v6134, %v6213
  %6215 = vmatmul.f32.gmra.mxu0 %v6152
  %v6216 = vpop.f32.mrf.mxu0
  %v6217 = vadd.f32 %v6134, %v6216
  %6218 = vmatmul.f32.gmra.mxu0 %v6155
  %v6219 = vpop.f32.mrf.mxu0
  %v6220 = vadd.f32 %v6134, %v6219
  %6221 = vmatmul.f32.gmra.mxu0 %v6158
  %v6222 = vpop.f32.mrf.mxu0
  %v6223 = vadd.f32 %v6134, %v6222
  %6224 = vmatmul.f32.gmra.mxu0 %v6161
  %v6225 = vpop.f32.mrf.mxu0
  %v6226 = vadd.f32 %v6134, %v6225
  %6227 = vmatmul.f32.gmra.mxu0 %v6164
  %v6228 = vpop.f32.mrf.mxu0
  %v6229 = vadd.f32 %v6134, %v6228
  %6230 = vmatmul.f32.gmra.mxu0 %v6167
  %v6231 = vpop.f32.mrf.mxu0
  %v6232 = vadd.f32 %v6134, %v6231
  %6233 = vmatmul.f32.gmra.mxu0 %v6170
  %v6234 = vpop.f32.mrf.mxu0
  %v6235 = vadd.f32 %v6134, %v6234
  %6236 = vmatmul.f32.gmra.mxu0 %v6173
  %v6237 = vpop.f32.mrf.mxu0
  %v6238 = vadd.f32 %v6134, %v6237
  %6239 = vmatmul.f32.gmra.mxu0 %v6176
  %v6240 = vpop.f32.mrf.mxu0
  %v6241 = vadd.f32 %v6134, %v6240
  %6242 = vmatmul.f32.gmra.mxu0 %v6179
  %v6243 = vpop.f32.mrf.mxu0
  %v6244 = vadd.f32 %v6134, %v6243
  %6245 = vmatmul.f32.gmra.mxu0 %v6182
  %v6246 = vpop.f32.mrf.mxu0
  %v6247 = vadd.f32 %v6134, %v6246
  %6248 = vdwg.mxu0
  %v6249 = vmax.f32 %v6202, 0.0
  %v6250 = vmax.f32 %v6205, 0.0
  %v6251 = vmax.f32 %v6208, 0.0
  %v6252 = vmax.f32 %v6211, 0.0
  %v6253 = vmax.f32 %v6214, 0.0
  %v6254 = vmax.f32 %v6217, 0.0
  %v6255 = vmax.f32 %v6220, 0.0
  %v6256 = vmax.f32 %v6223, 0.0
  %v6257 = vmax.f32 %v6226, 0.0
  %v6258 = vmax.f32 %v6229, 0.0
  %v6259 = vmax.f32 %v6232, 0.0
  %v6260 = vmax.f32 %v6235, 0.0
  %v6261 = vmax.f32 %v6238, 0.0
  %v6262 = vmax.f32 %v6241, 0.0
  %v6263 = vmax.f32 %v6244, 0.0
  %v6264 = vmax.f32 %v6247, 0.0
  %6265 = vst.msk [vmem:[%s4763 + $0x80] sm:$0xff] %vm1631, %v6249
  %6266 = vst.msk [vmem:[%s4763 + $0x88] sm:$0xff] %vm1631, %v6250
  %6267 = vst.msk [vmem:[%s4763 + $0x90] sm:$0xff] %vm1631, %v6251
  %6268 = vst.msk [vmem:[%s4763 + $0x98] sm:$0xff] %vm1631, %v6252
  %6269 = vst.msk [vmem:[%s4763 + $0xa0] sm:$0xff] %vm1631, %v6253
  %6270 = vst.msk [vmem:[%s4763 + $0xa8] sm:$0xff] %vm1631, %v6254
  %6271 = vst.msk [vmem:[%s4763 + $0xb0] sm:$0xff] %vm1631, %v6255
  %6272 = vst.msk [vmem:[%s4763 + $0xb8] sm:$0xff] %vm1631, %v6256
  %6273 = vst.msk [vmem:[%s4763 + $0xc0] sm:$0xff] %vm1631, %v6257
  %6274 = vst.msk [vmem:[%s4763 + $0xc8] sm:$0xff] %vm1631, %v6258
  %6275 = vst.msk [vmem:[%s4763 + $0xd0] sm:$0xff] %vm1631, %v6259
  %6276 = vst.msk [vmem:[%s4763 + $0xd8] sm:$0xff] %vm1631, %v6260
  %6277 = vst.msk [vmem:[%s4763 + $0xe0] sm:$0xff] %vm1631, %v6261
  %6278 = vst.msk [vmem:[%s4763 + $0xe8] sm:$0xff] %vm1631, %v6262
  %6279 = vst.msk [vmem:[%s4763 + $0xf0] sm:$0xff] %vm1631, %v6263
  %6280 = vst.msk [vmem:[%s4763 + $0xf8] sm:$0xff] %vm1631, %v6264
  %v6281 = vld [vmem:[%s1] sm:$0xf]
  %v6282 = vld [vmem:[%s1 + $0x4] sm:$0xf]
  %v6283 = vld [vmem:[%s1 + $0x8] sm:$0xf]
  %v6284 = vld [vmem:[%s1 + $0xc] sm:$0xf]
  %v6285 = vld [vmem:[#allocation3] sm:$0xff]
  %v6286 = vld [vmem:[#allocation3 + $0x8] sm:$0xff]
  %v6287 = vld [vmem:[#allocation3 + $0x10] sm:$0xff]
  %v6288 = vld [vmem:[#allocation3 + $0x18] sm:$0xff]
  %v6289 = vld [vmem:[#allocation3 + $0x20] sm:$0xff]
  %v6290 = vld [vmem:[#allocation3 + $0x28] sm:$0xff]
  %v6291 = vld [vmem:[#allocation3 + $0x30] sm:$0xff]
  %v6292 = vld [vmem:[#allocation3 + $0x38] sm:$0xff]
  %v6293 = vld [vmem:[#allocation3 + $0x40] sm:$0xff]
  %v6294 = vld [vmem:[#allocation3 + $0x48] sm:$0xff]
  %v6295 = vld [vmem:[#allocation3 + $0x50] sm:$0xff]
  %v6296 = vld [vmem:[#allocation3 + $0x58] sm:$0xff]
  %v6297 = vld [vmem:[#allocation3 + $0x60] sm:$0xff]
  %v6298 = vld [vmem:[#allocation3 + $0x68] sm:$0xff]
  %v6299 = vperm.slane %v6281, 0
  %v6300 = vmul.f32 %v6285, %v6299
  %v6301 = vmul.f32 %v6286, %v6299
  %v6302 = vmul.f32 %v6287, %v6299
  %v6303 = vmul.f32 %v6288, %v6299
  %v6304 = vmul.f32 %v6289, %v6299
  %v6305 = vmul.f32 %v6290, %v6299
  %v6306 = vmul.f32 %v6291, %v6299
  %v6307 = vmul.f32 %v6292, %v6299
  %v6308 = vadd.f32 %v6300, 0.0
  %v6309 = vadd.f32 %v6301, 0.0
  %v6310 = vadd.f32 %v6302, 0.0
  %v6311 = vadd.f32 %v6303, 0.0
  %v6312 = vadd.f32 %v6304, 0.0
  %v6313 = vadd.f32 %v6305, 0.0
  %v6314 = vadd.f32 %v6306, 0.0
  %v6315 = vadd.f32 %v6307, 0.0
  %v6316 = vperm.slane %v6282, 0
  %v6317 = vmul.f32 %v6287, %v6316
  %v6318 = vmul.f32 %v6288, %v6316
  %v6319 = vmul.f32 %v6289, %v6316
  %v6320 = vmul.f32 %v6290, %v6316
  %v6321 = vmul.f32 %v6291, %v6316
  %v6322 = vmul.f32 %v6292, %v6316
  %v6323 = vmul.f32 %v6293, %v6316
  %v6324 = vmul.f32 %v6294, %v6316
  %v6325 = vadd.f32 %v6308, %v6317
  %v6326 = vadd.f32 %v6309, %v6318
  %v6327 = vadd.f32 %v6310, %v6319
  %v6328 = vadd.f32 %v6311, %v6320
  %v6329 = vadd.f32 %v6312, %v6321
  %v6330 = vadd.f32 %v6313, %v6322
  %v6331 = vadd.f32 %v6314, %v6323
  %v6332 = vadd.f32 %v6315, %v6324
  %v6333 = vperm.slane %v6283, 0
  %v6334 = vmul.f32 %v6289, %v6333
  %v6335 = vmul.f32 %v6290, %v6333
  %v6336 = vmul.f32 %v6291, %v6333
  %v6337 = vmul.f32 %v6292, %v6333
  %v6338 = vmul.f32 %v6293, %v6333
  %v6339 = vmul.f32 %v6294, %v6333
  %v6340 = vmul.f32 %v6295, %v6333
  %v6341 = vmul.f32 %v6296, %v6333
  %v6342 = vadd.f32 %v6325, %v6334
  %v6343 = vadd.f32 %v6326, %v6335
  %v6344 = vadd.f32 %v6327, %v6336
  %v6345 = vadd.f32 %v6328, %v6337
  %v6346 = vadd.f32 %v6329, %v6338
  %v6347 = vadd.f32 %v6330, %v6339
  %v6348 = vadd.f32 %v6331, %v6340
  %v6349 = vadd.f32 %v6332, %v6341
  %v6350 = vperm.slane %v6284, 0
  %v6351 = vmul.f32 %v6291, %v6350
  %v6352 = vmul.f32 %v6292, %v6350
  %v6353 = vmul.f32 %v6293, %v6350
  %v6354 = vmul.f32 %v6294, %v6350
  %v6355 = vmul.f32 %v6295, %v6350
  %v6356 = vmul.f32 %v6296, %v6350
  %v6357 = vmul.f32 %v6297, %v6350
  %v6358 = vmul.f32 %v6298, %v6350
  %v6359 = vadd.f32 %v6342, %v6351
  %v6360 = vadd.f32 %v6343, %v6352
  %v6361 = vadd.f32 %v6344, %v6353
  %v6362 = vadd.f32 %v6345, %v6354
  %v6363 = vadd.f32 %v6346, %v6355
  %v6364 = vadd.f32 %v6347, %v6356
  %v6365 = vadd.f32 %v6348, %v6357
  %v6366 = vadd.f32 %v6349, %v6358
  %v6367 = vrot.slane %v6285, 1
  %v6368 = vrot.slane %v6286, 1
  %v6369 = vrot.slane %v6287, 1
  %v6370 = vrot.slane %v6288, 1
  %v6371 = vrot.slane %v6289, 1
  %v6372 = vrot.slane %v6290, 1
  %v6373 = vrot.slane %v6291, 1
  %v6374 = vrot.slane %v6292, 1
  %v6375 = vrot.slane %v6293, 1
  %v6376 = vrot.slane %v6294, 1
  %v6377 = vrot.slane %v6295, 1
  %v6378 = vrot.slane %v6296, 1
  %v6379 = vrot.slane %v6297, 1
  %v6380 = vrot.slane %v6298, 1
  %v6381 = vlaneseq
  %v6382 = vshrl.u32 %v6381, 7
  %vm6383 = vcmp.lt.s32.totalorder %v6382, 7
  %v6384 = vsel %vm6383, %v6379, %v6380
  %v6385 = vsel %vm6383, %v6378, %v6379
  %v6386 = vsel %vm6383, %v6377, %v6378
  %v6387 = vsel %vm6383, %v6376, %v6377
  %v6388 = vsel %vm6383, %v6375, %v6376
  %v6389 = vsel %vm6383, %v6374, %v6375
  %v6390 = vsel %vm6383, %v6373, %v6374
  %v6391 = vsel %vm6383, %v6372, %v6373
  %v6392 = vsel %vm6383, %v6371, %v6372
  %v6393 = vsel %vm6383, %v6370, %v6371
  %v6394 = vsel %vm6383, %v6369, %v6370
  %v6395 = vsel %vm6383, %v6368, %v6369
  %v6396 = vsel %vm6383, %v6367, %v6368
  %v6397 = vsel %vm6383, %v6380, %v6367
  %v6398 = vperm.slane %v6281, 1
  %v6399 = vmul.f32 %v6396, %v6398
  %v6400 = vmul.f32 %v6395, %v6398
  %v6401 = vmul.f32 %v6394, %v6398
  %v6402 = vmul.f32 %v6393, %v6398
  %v6403 = vmul.f32 %v6392, %v6398
  %v6404 = vmul.f32 %v6391, %v6398
  %v6405 = vmul.f32 %v6390, %v6398
  %v6406 = vmul.f32 %v6389, %v6398
  %v6407 = vadd.f32 %v6359, %v6399
  %v6408 = vadd.f32 %v6360, %v6400
  %v6409 = vadd.f32 %v6361, %v6401
  %v6410 = vadd.f32 %v6362, %v6402
  %v6411 = vadd.f32 %v6363, %v6403
  %v6412 = vadd.f32 %v6364, %v6404
  %v6413 = vadd.f32 %v6365, %v6405
  %v6414 = vadd.f32 %v6366, %v6406
  %v6415 = vperm.slane %v6282, 1
  %v6416 = vmul.f32 %v6394, %v6415
  %v6417 = vmul.f32 %v6393, %v6415
  %v6418 = vmul.f32 %v6392, %v6415
  %v6419 = vmul.f32 %v6391, %v6415
  %v6420 = vmul.f32 %v6390, %v6415
  %v6421 = vmul.f32 %v6389, %v6415
  %v6422 = vmul.f32 %v6388, %v6415
  %v6423 = vmul.f32 %v6387, %v6415
  %v6424 = vadd.f32 %v6407, %v6416
  %v6425 = vadd.f32 %v6408, %v6417
  %v6426 = vadd.f32 %v6409, %v6418
  %v6427 = vadd.f32 %v6410, %v6419
  %v6428 = vadd.f32 %v6411, %v6420
  %v6429 = vadd.f32 %v6412, %v6421
  %v6430 = vadd.f32 %v6413, %v6422
  %v6431 = vadd.f32 %v6414, %v6423
  %v6432 = vperm.slane %v6283, 1
  %v6433 = vmul.f32 %v6392, %v6432
  %v6434 = vmul.f32 %v6391, %v6432
  %v6435 = vmul.f32 %v6390, %v6432
  %v6436 = vmul.f32 %v6389, %v6432
  %v6437 = vmul.f32 %v6388, %v6432
  %v6438 = vmul.f32 %v6387, %v6432
  %v6439 = vmul.f32 %v6386, %v6432
  %v6440 = vmul.f32 %v6385, %v6432
  %v6441 = vadd.f32 %v6424, %v6433
  %v6442 = vadd.f32 %v6425, %v6434
  %v6443 = vadd.f32 %v6426, %v6435
  %v6444 = vadd.f32 %v6427, %v6436
  %v6445 = vadd.f32 %v6428, %v6437
  %v6446 = vadd.f32 %v6429, %v6438
  %v6447 = vadd.f32 %v6430, %v6439
  %v6448 = vadd.f32 %v6431, %v6440
  %v6449 = vperm.slane %v6284, 1
  %v6450 = vmul.f32 %v6390, %v6449
  %v6451 = vmul.f32 %v6389, %v6449
  %v6452 = vmul.f32 %v6388, %v6449
  %v6453 = vmul.f32 %v6387, %v6449
  %v6454 = vmul.f32 %v6386, %v6449
  %v6455 = vmul.f32 %v6385, %v6449
  %v6456 = vmul.f32 %v6384, %v6449
  %v6457 = vmul.f32 %v6397, %v6449
  %v6458 = vadd.f32 %v6441, %v6450
  %v6459 = vadd.f32 %v6442, %v6451
  %v6460 = vadd.f32 %v6443, %v6452
  %v6461 = vadd.f32 %v6444, %v6453
  %v6462 = vadd.f32 %v6445, %v6454
  %v6463 = vadd.f32 %v6446, %v6455
  %v6464 = vadd.f32 %v6447, %v6456
  %v6465 = vadd.f32 %v6448, %v6457
  %v6466 = vrot.slane %v6285, 2
  %v6467 = vrot.slane %v6286, 2
  %v6468 = vrot.slane %v6287, 2
  %v6469 = vrot.slane %v6288, 2
  %v6470 = vrot.slane %v6289, 2
  %v6471 = vrot.slane %v6290, 2
  %v6472 = vrot.slane %v6291, 2
  %v6473 = vrot.slane %v6292, 2
  %v6474 = vrot.slane %v6293, 2
  %v6475 = vrot.slane %v6294, 2
  %v6476 = vrot.slane %v6295, 2
  %v6477 = vrot.slane %v6296, 2
  %v6478 = vrot.slane %v6297, 2
  %v6479 = vrot.slane %v6298, 2
  %vm6480 = vcmp.lt.s32.totalorder %v6382, 6
  %v6481 = vsel %vm6480, %v6478, %v6479
  %v6482 = vsel %vm6480, %v6477, %v6478
  %v6483 = vsel %vm6480, %v6476, %v6477
  %v6484 = vsel %vm6480, %v6475, %v6476
  %v6485 = vsel %vm6480, %v6474, %v6475
  %v6486 = vsel %vm6480, %v6473, %v6474
  %v6487 = vsel %vm6480, %v6472, %v6473
  %v6488 = vsel %vm6480, %v6471, %v6472
  %v6489 = vsel %vm6480, %v6470, %v6471
  %v6490 = vsel %vm6480, %v6469, %v6470
  %v6491 = vsel %vm6480, %v6468, %v6469
  %v6492 = vsel %vm6480, %v6467, %v6468
  %v6493 = vsel %vm6480, %v6466, %v6467
  %v6494 = vsel %vm6480, %v6479, %v6466
  %v6495 = vperm.slane %v6281, 2
  %v6496 = vmul.f32 %v6493, %v6495
  %v6497 = vmul.f32 %v6492, %v6495
  %v6498 = vmul.f32 %v6491, %v6495
  %v6499 = vmul.f32 %v6490, %v6495
  %v6500 = vmul.f32 %v6489, %v6495
  %v6501 = vmul.f32 %v6488, %v6495
  %v6502 = vmul.f32 %v6487, %v6495
  %v6503 = vmul.f32 %v6486, %v6495
  %v6504 = vadd.f32 %v6458, %v6496
  %v6505 = vadd.f32 %v6459, %v6497
  %v6506 = vadd.f32 %v6460, %v6498
  %v6507 = vadd.f32 %v6461, %v6499
  %v6508 = vadd.f32 %v6462, %v6500
  %v6509 = vadd.f32 %v6463, %v6501
  %v6510 = vadd.f32 %v6464, %v6502
  %v6511 = vadd.f32 %v6465, %v6503
  %v6512 = vperm.slane %v6282, 2
  %v6513 = vmul.f32 %v6491, %v6512
  %v6514 = vmul.f32 %v6490, %v6512
  %v6515 = vmul.f32 %v6489, %v6512
  %v6516 = vmul.f32 %v6488, %v6512
  %v6517 = vmul.f32 %v6487, %v6512
  %v6518 = vmul.f32 %v6486, %v6512
  %v6519 = vmul.f32 %v6485, %v6512
  %v6520 = vmul.f32 %v6484, %v6512
  %v6521 = vadd.f32 %v6504, %v6513
  %v6522 = vadd.f32 %v6505, %v6514
  %v6523 = vadd.f32 %v6506, %v6515
  %v6524 = vadd.f32 %v6507, %v6516
  %v6525 = vadd.f32 %v6508, %v6517
  %v6526 = vadd.f32 %v6509, %v6518
  %v6527 = vadd.f32 %v6510, %v6519
  %v6528 = vadd.f32 %v6511, %v6520
  %v6529 = vperm.slane %v6283, 2
  %v6530 = vmul.f32 %v6489, %v6529
  %v6531 = vmul.f32 %v6488, %v6529
  %v6532 = vmul.f32 %v6487, %v6529
  %v6533 = vmul.f32 %v6486, %v6529
  %v6534 = vmul.f32 %v6485, %v6529
  %v6535 = vmul.f32 %v6484, %v6529
  %v6536 = vmul.f32 %v6483, %v6529
  %v6537 = vmul.f32 %v6482, %v6529
  %v6538 = vadd.f32 %v6521, %v6530
  %v6539 = vadd.f32 %v6522, %v6531
  %v6540 = vadd.f32 %v6523, %v6532
  %v6541 = vadd.f32 %v6524, %v6533
  %v6542 = vadd.f32 %v6525, %v6534
  %v6543 = vadd.f32 %v6526, %v6535
  %v6544 = vadd.f32 %v6527, %v6536
  %v6545 = vadd.f32 %v6528, %v6537
  %v6546 = vperm.slane %v6284, 2
  %v6547 = vmul.f32 %v6487, %v6546
  %v6548 = vmul.f32 %v6486, %v6546
  %v6549 = vmul.f32 %v6485, %v6546
  %v6550 = vmul.f32 %v6484, %v6546
  %v6551 = vmul.f32 %v6483, %v6546
  %v6552 = vmul.f32 %v6482, %v6546
  %v6553 = vmul.f32 %v6481, %v6546
  %v6554 = vmul.f32 %v6494, %v6546
  %v6555 = vadd.f32 %v6538, %v6547
  %v6556 = vadd.f32 %v6539, %v6548
  %v6557 = vadd.f32 %v6540, %v6549
  %v6558 = vadd.f32 %v6541, %v6550
  %v6559 = vadd.f32 %v6542, %v6551
  %v6560 = vadd.f32 %v6543, %v6552
  %v6561 = vadd.f32 %v6544, %v6553
  %v6562 = vadd.f32 %v6545, %v6554
  %v6563 = vrot.slane %v6285, 3
  %v6564 = vrot.slane %v6286, 3
  %v6565 = vrot.slane %v6287, 3
  %v6566 = vrot.slane %v6288, 3
  %v6567 = vrot.slane %v6289, 3
  %v6568 = vrot.slane %v6290, 3
  %v6569 = vrot.slane %v6291, 3
  %v6570 = vrot.slane %v6292, 3
  %v6571 = vrot.slane %v6293, 3
  %v6572 = vrot.slane %v6294, 3
  %v6573 = vrot.slane %v6295, 3
  %v6574 = vrot.slane %v6296, 3
  %v6575 = vrot.slane %v6297, 3
  %v6576 = vrot.slane %v6298, 3
  %vm6577 = vcmp.lt.s32.totalorder %v6382, 5
  %v6578 = vsel %vm6577, %v6575, %v6576
  %v6579 = vsel %vm6577, %v6574, %v6575
  %v6580 = vsel %vm6577, %v6573, %v6574
  %v6581 = vsel %vm6577, %v6572, %v6573
  %v6582 = vsel %vm6577, %v6571, %v6572
  %v6583 = vsel %vm6577, %v6570, %v6571
  %v6584 = vsel %vm6577, %v6569, %v6570
  %v6585 = vsel %vm6577, %v6568, %v6569
  %v6586 = vsel %vm6577, %v6567, %v6568
  %v6587 = vsel %vm6577, %v6566, %v6567
  %v6588 = vsel %vm6577, %v6565, %v6566
  %v6589 = vsel %vm6577, %v6564, %v6565
  %v6590 = vsel %vm6577, %v6563, %v6564
  %v6591 = vsel %vm6577, %v6576, %v6563
  %v6592 = vperm.slane %v6281, 3
  %v6593 = vmul.f32 %v6590, %v6592
  %v6594 = vmul.f32 %v6589, %v6592
  %v6595 = vmul.f32 %v6588, %v6592
  %v6596 = vmul.f32 %v6587, %v6592
  %v6597 = vmul.f32 %v6586, %v6592
  %v6598 = vmul.f32 %v6585, %v6592
  %v6599 = vmul.f32 %v6584, %v6592
  %v6600 = vmul.f32 %v6583, %v6592
  %v6601 = vadd.f32 %v6555, %v6593
  %v6602 = vadd.f32 %v6556, %v6594
  %v6603 = vadd.f32 %v6557, %v6595
  %v6604 = vadd.f32 %v6558, %v6596
  %v6605 = vadd.f32 %v6559, %v6597
  %v6606 = vadd.f32 %v6560, %v6598
  %v6607 = vadd.f32 %v6561, %v6599
  %v6608 = vadd.f32 %v6562, %v6600
  %v6609 = vperm.slane %v6282, 3
  %v6610 = vmul.f32 %v6588, %v6609
  %v6611 = vmul.f32 %v6587, %v6609
  %v6612 = vmul.f32 %v6586, %v6609
  %v6613 = vmul.f32 %v6585, %v6609
  %v6614 = vmul.f32 %v6584, %v6609
  %v6615 = vmul.f32 %v6583, %v6609
  %v6616 = vmul.f32 %v6582, %v6609
  %v6617 = vmul.f32 %v6581, %v6609
  %v6618 = vadd.f32 %v6601, %v6610
  %v6619 = vadd.f32 %v6602, %v6611
  %v6620 = vadd.f32 %v6603, %v6612
  %v6621 = vadd.f32 %v6604, %v6613
  %v6622 = vadd.f32 %v6605, %v6614
  %v6623 = vadd.f32 %v6606, %v6615
  %v6624 = vadd.f32 %v6607, %v6616
  %v6625 = vadd.f32 %v6608, %v6617
  %v6626 = vperm.slane %v6283, 3
  %v6627 = vmul.f32 %v6586, %v6626
  %v6628 = vmul.f32 %v6585, %v6626
  %v6629 = vmul.f32 %v6584, %v6626
  %v6630 = vmul.f32 %v6583, %v6626
  %v6631 = vmul.f32 %v6582, %v6626
  %v6632 = vmul.f32 %v6581, %v6626
  %v6633 = vmul.f32 %v6580, %v6626
  %v6634 = vmul.f32 %v6579, %v6626
  %v6635 = vadd.f32 %v6618, %v6627
  %v6636 = vadd.f32 %v6619, %v6628
  %v6637 = vadd.f32 %v6620, %v6629
  %v6638 = vadd.f32 %v6621, %v6630
  %v6639 = vadd.f32 %v6622, %v6631
  %v6640 = vadd.f32 %v6623, %v6632
  %v6641 = vadd.f32 %v6624, %v6633
  %v6642 = vadd.f32 %v6625, %v6634
  %v6643 = vperm.slane %v6284, 3
  %v6644 = vmul.f32 %v6584, %v6643
  %v6645 = vmul.f32 %v6583, %v6643
  %v6646 = vmul.f32 %v6582, %v6643
  %v6647 = vmul.f32 %v6581, %v6643
  %v6648 = vmul.f32 %v6580, %v6643
  %v6649 = vmul.f32 %v6579, %v6643
  %v6650 = vmul.f32 %v6578, %v6643
  %v6651 = vmul.f32 %v6591, %v6643
  %v6652 = vadd.f32 %v6635, %v6644
  %v6653 = vadd.f32 %v6636, %v6645
  %v6654 = vadd.f32 %v6637, %v6646
  %v6655 = vadd.f32 %v6638, %v6647
  %v6656 = vadd.f32 %v6639, %v6648
  %v6657 = vadd.f32 %v6640, %v6649
  %v6658 = vadd.f32 %v6641, %v6650
  %v6659 = vadd.f32 %v6642, %v6651
  %6660 = vst.msk [vmem:[#allocation4] sm:$0xff] %vm1631, %v6652
  %6661 = vst.msk [vmem:[#allocation4 + $0x8] sm:$0xff] %vm1631, %v6653
  %6662 = vst.msk [vmem:[#allocation4 + $0x10] sm:$0xff] %vm1631, %v6654
  %6663 = vst.msk [vmem:[#allocation4 + $0x18] sm:$0xff] %vm1631, %v6655
  %6664 = vst.msk [vmem:[#allocation4 + $0x20] sm:$0xff] %vm1631, %v6656
  %6665 = vst.msk [vmem:[#allocation4 + $0x28] sm:$0xff] %vm1631, %v6657
  %6666 = vst.msk [vmem:[#allocation4 + $0x30] sm:$0xff] %vm1631, %v6658
  %6667 = vst.msk [vmem:[#allocation4 + $0x38] sm:$0xff] %vm1631, %v6659
  %v6668 = vld [vmem:[#allocation3 + $0x40] sm:$0xff]
  %v6669 = vld [vmem:[#allocation3 + $0x48] sm:$0xff]
  %v6670 = vld [vmem:[#allocation3 + $0x50] sm:$0xff]
  %v6671 = vld [vmem:[#allocation3 + $0x58] sm:$0xff]
  %v6672 = vld [vmem:[#allocation3 + $0x60] sm:$0xff]
  %v6673 = vld [vmem:[#allocation3 + $0x68] sm:$0xff]
  %v6674 = vld [vmem:[#allocation3 + $0x70] sm:$0xff]
  %v6675 = vld [vmem:[#allocation3 + $0x78] sm:$0xff]
  %v6676 = vld [vmem:[#allocation3 + $0x80] sm:$0xff]
  %v6677 = vld [vmem:[#allocation3 + $0x88] sm:$0xff]
  %v6678 = vld [vmem:[#allocation3 + $0x90] sm:$0xff]
  %v6679 = vld [vmem:[#allocation3 + $0x98] sm:$0xff]
  %v6680 = vld [vmem:[#allocation3 + $0xa0] sm:$0xff]
  %v6681 = vld [vmem:[#allocation3 + $0xa8] sm:$0xff]
  %v6682 = vmul.f32 %v6668, %v6299
  %v6683 = vmul.f32 %v6669, %v6299
  %v6684 = vmul.f32 %v6670, %v6299
  %v6685 = vmul.f32 %v6671, %v6299
  %v6686 = vmul.f32 %v6672, %v6299
  %v6687 = vmul.f32 %v6673, %v6299
  %v6688 = vmul.f32 %v6674, %v6299
  %v6689 = vmul.f32 %v6675, %v6299
  %v6690 = vadd.f32 %v6682, 0.0
  %v6691 = vadd.f32 %v6683, 0.0
  %v6692 = vadd.f32 %v6684, 0.0
  %v6693 = vadd.f32 %v6685, 0.0
  %v6694 = vadd.f32 %v6686, 0.0
  %v6695 = vadd.f32 %v6687, 0.0
  %v6696 = vadd.f32 %v6688, 0.0
  %v6697 = vadd.f32 %v6689, 0.0
  %v6698 = vmul.f32 %v6670, %v6316
  %v6699 = vmul.f32 %v6671, %v6316
  %v6700 = vmul.f32 %v6672, %v6316
  %v6701 = vmul.f32 %v6673, %v6316
  %v6702 = vmul.f32 %v6674, %v6316
  %v6703 = vmul.f32 %v6675, %v6316
  %v6704 = vmul.f32 %v6676, %v6316
  %v6705 = vmul.f32 %v6677, %v6316
  %v6706 = vadd.f32 %v6690, %v6698
  %v6707 = vadd.f32 %v6691, %v6699
  %v6708 = vadd.f32 %v6692, %v6700
  %v6709 = vadd.f32 %v6693, %v6701
  %v6710 = vadd.f32 %v6694, %v6702
  %v6711 = vadd.f32 %v6695, %v6703
  %v6712 = vadd.f32 %v6696, %v6704
  %v6713 = vadd.f32 %v6697, %v6705
  %v6714 = vmul.f32 %v6672, %v6333
  %v6715 = vmul.f32 %v6673, %v6333
  %v6716 = vmul.f32 %v6674, %v6333
  %v6717 = vmul.f32 %v6675, %v6333
  %v6718 = vmul.f32 %v6676, %v6333
  %v6719 = vmul.f32 %v6677, %v6333
  %v6720 = vmul.f32 %v6678, %v6333
  %v6721 = vmul.f32 %v6679, %v6333
  %v6722 = vadd.f32 %v6706, %v6714
  %v6723 = vadd.f32 %v6707, %v6715
  %v6724 = vadd.f32 %v6708, %v6716
  %v6725 = vadd.f32 %v6709, %v6717
  %v6726 = vadd.f32 %v6710, %v6718
  %v6727 = vadd.f32 %v6711, %v6719
  %v6728 = vadd.f32 %v6712, %v6720
  %v6729 = vadd.f32 %v6713, %v6721
  %v6730 = vmul.f32 %v6674, %v6350
  %v6731 = vmul.f32 %v6675, %v6350
  %v6732 = vmul.f32 %v6676, %v6350
  %v6733 = vmul.f32 %v6677, %v6350
  %v6734 = vmul.f32 %v6678, %v6350
  %v6735 = vmul.f32 %v6679, %v6350
  %v6736 = vmul.f32 %v6680, %v6350
  %v6737 = vmul.f32 %v6681, %v6350
  %v6738 = vadd.f32 %v6722, %v6730
  %v6739 = vadd.f32 %v6723, %v6731
  %v6740 = vadd.f32 %v6724, %v6732
  %v6741 = vadd.f32 %v6725, %v6733
  %v6742 = vadd.f32 %v6726, %v6734
  %v6743 = vadd.f32 %v6727, %v6735
  %v6744 = vadd.f32 %v6728, %v6736
  %v6745 = vadd.f32 %v6729, %v6737
  %v6746 = vrot.slane %v6668, 1
  %v6747 = vrot.slane %v6669, 1
  %v6748 = vrot.slane %v6670, 1
  %v6749 = vrot.slane %v6671, 1
  %v6750 = vrot.slane %v6672, 1
  %v6751 = vrot.slane %v6673, 1
  %v6752 = vrot.slane %v6674, 1
  %v6753 = vrot.slane %v6675, 1
  %v6754 = vrot.slane %v6676, 1
  %v6755 = vrot.slane %v6677, 1
  %v6756 = vrot.slane %v6678, 1
  %v6757 = vrot.slane %v6679, 1
  %v6758 = vrot.slane %v6680, 1
  %v6759 = vrot.slane %v6681, 1
  %v6760 = vsel %vm6383, %v6758, %v6759
  %v6761 = vsel %vm6383, %v6757, %v6758
  %v6762 = vsel %vm6383, %v6756, %v6757
  %v6763 = vsel %vm6383, %v6755, %v6756
  %v6764 = vsel %vm6383, %v6754, %v6755
  %v6765 = vsel %vm6383, %v6753, %v6754
  %v6766 = vsel %vm6383, %v6752, %v6753
  %v6767 = vsel %vm6383, %v6751, %v6752
  %v6768 = vsel %vm6383, %v6750, %v6751
  %v6769 = vsel %vm6383, %v6749, %v6750
  %v6770 = vsel %vm6383, %v6748, %v6749
  %v6771 = vsel %vm6383, %v6747, %v6748
  %v6772 = vsel %vm6383, %v6746, %v6747
  %v6773 = vsel %vm6383, %v6759, %v6746
  %v6774 = vmul.f32 %v6772, %v6398
  %v6775 = vmul.f32 %v6771, %v6398
  %v6776 = vmul.f32 %v6770, %v6398
  %v6777 = vmul.f32 %v6769, %v6398
  %v6778 = vmul.f32 %v6768, %v6398
  %v6779 = vmul.f32 %v6767, %v6398
  %v6780 = vmul.f32 %v6766, %v6398
  %v6781 = vmul.f32 %v6765, %v6398
  %v6782 = vadd.f32 %v6738, %v6774
  %v6783 = vadd.f32 %v6739, %v6775
  %v6784 = vadd.f32 %v6740, %v6776
  %v6785 = vadd.f32 %v6741, %v6777
  %v6786 = vadd.f32 %v6742, %v6778
  %v6787 = vadd.f32 %v6743, %v6779
  %v6788 = vadd.f32 %v6744, %v6780
  %v6789 = vadd.f32 %v6745, %v6781
  %v6790 = vmul.f32 %v6770, %v6415
  %v6791 = vmul.f32 %v6769, %v6415
  %v6792 = vmul.f32 %v6768, %v6415
  %v6793 = vmul.f32 %v6767, %v6415
  %v6794 = vmul.f32 %v6766, %v6415
  %v6795 = vmul.f32 %v6765, %v6415
  %v6796 = vmul.f32 %v6764, %v6415
  %v6797 = vmul.f32 %v6763, %v6415
  %v6798 = vadd.f32 %v6782, %v6790
  %v6799 = vadd.f32 %v6783, %v6791
  %v6800 = vadd.f32 %v6784, %v6792
  %v6801 = vadd.f32 %v6785, %v6793
  %v6802 = vadd.f32 %v6786, %v6794
  %v6803 = vadd.f32 %v6787, %v6795
  %v6804 = vadd.f32 %v6788, %v6796
  %v6805 = vadd.f32 %v6789, %v6797
  %v6806 = vmul.f32 %v6768, %v6432
  %v6807 = vmul.f32 %v6767, %v6432
  %v6808 = vmul.f32 %v6766, %v6432
  %v6809 = vmul.f32 %v6765, %v6432
  %v6810 = vmul.f32 %v6764, %v6432
  %v6811 = vmul.f32 %v6763, %v6432
  %v6812 = vmul.f32 %v6762, %v6432
  %v6813 = vmul.f32 %v6761, %v6432
  %v6814 = vadd.f32 %v6798, %v6806
  %v6815 = vadd.f32 %v6799, %v6807
  %v6816 = vadd.f32 %v6800, %v6808
  %v6817 = vadd.f32 %v6801, %v6809
  %v6818 = vadd.f32 %v6802, %v6810
  %v6819 = vadd.f32 %v6803, %v6811
  %v6820 = vadd.f32 %v6804, %v6812
  %v6821 = vadd.f32 %v6805, %v6813
  %v6822 = vmul.f32 %v6766, %v6449
  %v6823 = vmul.f32 %v6765, %v6449
  %v6824 = vmul.f32 %v6764, %v6449
  %v6825 = vmul.f32 %v6763, %v6449
  %v6826 = vmul.f32 %v6762, %v6449
  %v6827 = vmul.f32 %v6761, %v6449
  %v6828 = vmul.f32 %v6760, %v6449
  %v6829 = vmul.f32 %v6773, %v6449
  %v6830 = vadd.f32 %v6814, %v6822
  %v6831 = vadd.f32 %v6815, %v6823
  %v6832 = vadd.f32 %v6816, %v6824
  %v6833 = vadd.f32 %v6817, %v6825
  %v6834 = vadd.f32 %v6818, %v6826
  %v6835 = vadd.f32 %v6819, %v6827
  %v6836 = vadd.f32 %v6820, %v6828
  %v6837 = vadd.f32 %v6821, %v6829
  %v6838 = vrot.slane %v6668, 2
  %v6839 = vrot.slane %v6669, 2
  %v6840 = vrot.slane %v6670, 2
  %v6841 = vrot.slane %v6671, 2
  %v6842 = vrot.slane %v6672, 2
  %v6843 = vrot.slane %v6673, 2
  %v6844 = vrot.slane %v6674, 2
  %v6845 = vrot.slane %v6675, 2
  %v6846 = vrot.slane %v6676, 2
  %v6847 = vrot.slane %v6677, 2
  %v6848 = vrot.slane %v6678, 2
  %v6849 = vrot.slane %v6679, 2
  %v6850 = vrot.slane %v6680, 2
  %v6851 = vrot.slane %v6681, 2
  %v6852 = vsel %vm6480, %v6850, %v6851
  %v6853 = vsel %vm6480, %v6849, %v6850
  %v6854 = vsel %vm6480, %v6848, %v6849
  %v6855 = vsel %vm6480, %v6847, %v6848
  %v6856 = vsel %vm6480, %v6846, %v6847
  %v6857 = vsel %vm6480, %v6845, %v6846
  %v6858 = vsel %vm6480, %v6844, %v6845
  %v6859 = vsel %vm6480, %v6843, %v6844
  %v6860 = vsel %vm6480, %v6842, %v6843
  %v6861 = vsel %vm6480, %v6841, %v6842
  %v6862 = vsel %vm6480, %v6840, %v6841
  %v6863 = vsel %vm6480, %v6839, %v6840
  %v6864 = vsel %vm6480, %v6838, %v6839
  %v6865 = vsel %vm6480, %v6851, %v6838
  %v6866 = vmul.f32 %v6864, %v6495
  %v6867 = vmul.f32 %v6863, %v6495
  %v6868 = vmul.f32 %v6862, %v6495
  %v6869 = vmul.f32 %v6861, %v6495
  %v6870 = vmul.f32 %v6860, %v6495
  %v6871 = vmul.f32 %v6859, %v6495
  %v6872 = vmul.f32 %v6858, %v6495
  %v6873 = vmul.f32 %v6857, %v6495
  %v6874 = vadd.f32 %v6830, %v6866
  %v6875 = vadd.f32 %v6831, %v6867
  %v6876 = vadd.f32 %v6832, %v6868
  %v6877 = vadd.f32 %v6833, %v6869
  %v6878 = vadd.f32 %v6834, %v6870
  %v6879 = vadd.f32 %v6835, %v6871
  %v6880 = vadd.f32 %v6836, %v6872
  %v6881 = vadd.f32 %v6837, %v6873
  %v6882 = vmul.f32 %v6862, %v6512
  %v6883 = vmul.f32 %v6861, %v6512
  %v6884 = vmul.f32 %v6860, %v6512
  %v6885 = vmul.f32 %v6859, %v6512
  %v6886 = vmul.f32 %v6858, %v6512
  %v6887 = vmul.f32 %v6857, %v6512
  %v6888 = vmul.f32 %v6856, %v6512
  %v6889 = vmul.f32 %v6855, %v6512
  %v6890 = vadd.f32 %v6874, %v6882
  %v6891 = vadd.f32 %v6875, %v6883
  %v6892 = vadd.f32 %v6876, %v6884
  %v6893 = vadd.f32 %v6877, %v6885
  %v6894 = vadd.f32 %v6878, %v6886
  %v6895 = vadd.f32 %v6879, %v6887
  %v6896 = vadd.f32 %v6880, %v6888
  %v6897 = vadd.f32 %v6881, %v6889
  %v6898 = vmul.f32 %v6860, %v6529
  %v6899 = vmul.f32 %v6859, %v6529
  %v6900 = vmul.f32 %v6858, %v6529
  %v6901 = vmul.f32 %v6857, %v6529
  %v6902 = vmul.f32 %v6856, %v6529
  %v6903 = vmul.f32 %v6855, %v6529
  %v6904 = vmul.f32 %v6854, %v6529
  %v6905 = vmul.f32 %v6853, %v6529
  %v6906 = vadd.f32 %v6890, %v6898
  %v6907 = vadd.f32 %v6891, %v6899
  %v6908 = vadd.f32 %v6892, %v6900
  %v6909 = vadd.f32 %v6893, %v6901
  %v6910 = vadd.f32 %v6894, %v6902
  %v6911 = vadd.f32 %v6895, %v6903
  %v6912 = vadd.f32 %v6896, %v6904
  %v6913 = vadd.f32 %v6897, %v6905
  %v6914 = vmul.f32 %v6858, %v6546
  %v6915 = vmul.f32 %v6857, %v6546
  %v6916 = vmul.f32 %v6856, %v6546
  %v6917 = vmul.f32 %v6855, %v6546
  %v6918 = vmul.f32 %v6854, %v6546
  %v6919 = vmul.f32 %v6853, %v6546
  %v6920 = vmul.f32 %v6852, %v6546
  %v6921 = vmul.f32 %v6865, %v6546
  %v6922 = vadd.f32 %v6906, %v6914
  %v6923 = vadd.f32 %v6907, %v6915
  %v6924 = vadd.f32 %v6908, %v6916
  %v6925 = vadd.f32 %v6909, %v6917
  %v6926 = vadd.f32 %v6910, %v6918
  %v6927 = vadd.f32 %v6911, %v6919
  %v6928 = vadd.f32 %v6912, %v6920
  %v6929 = vadd.f32 %v6913, %v6921
  %v6930 = vrot.slane %v6668, 3
  %v6931 = vrot.slane %v6669, 3
  %v6932 = vrot.slane %v6670, 3
  %v6933 = vrot.slane %v6671, 3
  %v6934 = vrot.slane %v6672, 3
  %v6935 = vrot.slane %v6673, 3
  %v6936 = vrot.slane %v6674, 3
  %v6937 = vrot.slane %v6675, 3
  %v6938 = vrot.slane %v6676, 3
  %v6939 = vrot.slane %v6677, 3
  %v6940 = vrot.slane %v6678, 3
  %v6941 = vrot.slane %v6679, 3
  %v6942 = vrot.slane %v6680, 3
  %v6943 = vrot.slane %v6681, 3
  %v6944 = vsel %vm6577, %v6942, %v6943
  %v6945 = vsel %vm6577, %v6941, %v6942
  %v6946 = vsel %vm6577, %v6940, %v6941
  %v6947 = vsel %vm6577, %v6939, %v6940
  %v6948 = vsel %vm6577, %v6938, %v6939
  %v6949 = vsel %vm6577, %v6937, %v6938
  %v6950 = vsel %vm6577, %v6936, %v6937
  %v6951 = vsel %vm6577, %v6935, %v6936
  %v6952 = vsel %vm6577, %v6934, %v6935
  %v6953 = vsel %vm6577, %v6933, %v6934
  %v6954 = vsel %vm6577, %v6932, %v6933
  %v6955 = vsel %vm6577, %v6931, %v6932
  %v6956 = vsel %vm6577, %v6930, %v6931
  %v6957 = vsel %vm6577, %v6943, %v6930
  %v6958 = vmul.f32 %v6956, %v6592
  %v6959 = vmul.f32 %v6955, %v6592
  %v6960 = vmul.f32 %v6954, %v6592
  %v6961 = vmul.f32 %v6953, %v6592
  %v6962 = vmul.f32 %v6952, %v6592
  %v6963 = vmul.f32 %v6951, %v6592
  %v6964 = vmul.f32 %v6950, %v6592
  %v6965 = vmul.f32 %v6949, %v6592
  %v6966 = vadd.f32 %v6922, %v6958
  %v6967 = vadd.f32 %v6923, %v6959
  %v6968 = vadd.f32 %v6924, %v6960
  %v6969 = vadd.f32 %v6925, %v6961
  %v6970 = vadd.f32 %v6926, %v6962
  %v6971 = vadd.f32 %v6927, %v6963
  %v6972 = vadd.f32 %v6928, %v6964
  %v6973 = vadd.f32 %v6929, %v6965
  %v6974 = vmul.f32 %v6954, %v6609
  %v6975 = vmul.f32 %v6953, %v6609
  %v6976 = vmul.f32 %v6952, %v6609
  %v6977 = vmul.f32 %v6951, %v6609
  %v6978 = vmul.f32 %v6950, %v6609
  %v6979 = vmul.f32 %v6949, %v6609
  %v6980 = vmul.f32 %v6948, %v6609
  %v6981 = vmul.f32 %v6947, %v6609
  %v6982 = vadd.f32 %v6966, %v6974
  %v6983 = vadd.f32 %v6967, %v6975
  %v6984 = vadd.f32 %v6968, %v6976
  %v6985 = vadd.f32 %v6969, %v6977
  %v6986 = vadd.f32 %v6970, %v6978
  %v6987 = vadd.f32 %v6971, %v6979
  %v6988 = vadd.f32 %v6972, %v6980
  %v6989 = vadd.f32 %v6973, %v6981
  %v6990 = vmul.f32 %v6952, %v6626
  %v6991 = vmul.f32 %v6951, %v6626
  %v6992 = vmul.f32 %v6950, %v6626
  %v6993 = vmul.f32 %v6949, %v6626
  %v6994 = vmul.f32 %v6948, %v6626
  %v6995 = vmul.f32 %v6947, %v6626
  %v6996 = vmul.f32 %v6946, %v6626
  %v6997 = vmul.f32 %v6945, %v6626
  %v6998 = vadd.f32 %v6982, %v6990
  %v6999 = vadd.f32 %v6983, %v6991
  %v7000 = vadd.f32 %v6984, %v6992
  %v7001 = vadd.f32 %v6985, %v6993
  %v7002 = vadd.f32 %v6986, %v6994
  %v7003 = vadd.f32 %v6987, %v6995
  %v7004 = vadd.f32 %v6988, %v6996
  %v7005 = vadd.f32 %v6989, %v6997
  %v7006 = vmul.f32 %v6950, %v6643
  %v7007 = vmul.f32 %v6949, %v6643
  %v7008 = vmul.f32 %v6948, %v6643
  %v7009 = vmul.f32 %v6947, %v6643
  %v7010 = vmul.f32 %v6946, %v6643
  %v7011 = vmul.f32 %v6945, %v6643
  %v7012 = vmul.f32 %v6944, %v6643
  %v7013 = vmul.f32 %v6957, %v6643
  %v7014 = vadd.f32 %v6998, %v7006
  %v7015 = vadd.f32 %v6999, %v7007
  %v7016 = vadd.f32 %v7000, %v7008
  %v7017 = vadd.f32 %v7001, %v7009
  %v7018 = vadd.f32 %v7002, %v7010
  %v7019 = vadd.f32 %v7003, %v7011
  %v7020 = vadd.f32 %v7004, %v7012
  %v7021 = vadd.f32 %v7005, %v7013
  %7022 = vst.msk [vmem:[#allocation4 + $0x40] sm:$0xff] %vm1631, %v7014
  %7023 = vst.msk [vmem:[#allocation4 + $0x48] sm:$0xff] %vm1631, %v7015
  %7024 = vst.msk [vmem:[#allocation4 + $0x50] sm:$0xff] %vm1631, %v7016
  %7025 = vst.msk [vmem:[#allocation4 + $0x58] sm:$0xff] %vm1631, %v7017
  %7026 = vst.msk [vmem:[#allocation4 + $0x60] sm:$0xff] %vm1631, %v7018
  %7027 = vst.msk [vmem:[#allocation4 + $0x68] sm:$0xff] %vm1631, %v7019
  %7028 = vst.msk [vmem:[#allocation4 + $0x70] sm:$0xff] %vm1631, %v7020
  %7029 = vst.msk [vmem:[#allocation4 + $0x78] sm:$0xff] %vm1631, %v7021
  %v7030 = vld [vmem:[#allocation3 + $0x80] sm:$0xff]
  %v7031 = vld [vmem:[#allocation3 + $0x88] sm:$0xff]
  %v7032 = vld [vmem:[#allocation3 + $0x90] sm:$0xff]
  %v7033 = vld [vmem:[#allocation3 + $0x98] sm:$0xff]
  %v7034 = vld [vmem:[#allocation3 + $0xa0] sm:$0xff]
  %v7035 = vld [vmem:[#allocation3 + $0xa8] sm:$0xff]
  %v7036 = vld [vmem:[#allocation3 + $0xb0] sm:$0xff]
  %v7037 = vld [vmem:[#allocation3 + $0xb8] sm:$0xff]
  %v7038 = vld [vmem:[#allocation3 + $0xc0] sm:$0xff]
  %v7039 = vld [vmem:[#allocation3 + $0xc8] sm:$0xff]
  %v7040 = vld [vmem:[#allocation3 + $0xd0] sm:$0xff]
  %v7041 = vld [vmem:[#allocation3 + $0xd8] sm:$0xff]
  %v7042 = vld [vmem:[#allocation3 + $0xe0] sm:$0xff]
  %v7043 = vld [vmem:[#allocation3 + $0xe8] sm:$0xff]
  %v7044 = vmul.f32 %v7030, %v6299
  %v7045 = vmul.f32 %v7031, %v6299
  %v7046 = vmul.f32 %v7032, %v6299
  %v7047 = vmul.f32 %v7033, %v6299
  %v7048 = vmul.f32 %v7034, %v6299
  %v7049 = vmul.f32 %v7035, %v6299
  %v7050 = vmul.f32 %v7036, %v6299
  %v7051 = vmul.f32 %v7037, %v6299
  %v7052 = vadd.f32 %v7044, 0.0
  %v7053 = vadd.f32 %v7045, 0.0
  %v7054 = vadd.f32 %v7046, 0.0
  %v7055 = vadd.f32 %v7047, 0.0
  %v7056 = vadd.f32 %v7048, 0.0
  %v7057 = vadd.f32 %v7049, 0.0
  %v7058 = vadd.f32 %v7050, 0.0
  %v7059 = vadd.f32 %v7051, 0.0
  %v7060 = vmul.f32 %v7032, %v6316
  %v7061 = vmul.f32 %v7033, %v6316
  %v7062 = vmul.f32 %v7034, %v6316
  %v7063 = vmul.f32 %v7035, %v6316
  %v7064 = vmul.f32 %v7036, %v6316
  %v7065 = vmul.f32 %v7037, %v6316
  %v7066 = vmul.f32 %v7038, %v6316
  %v7067 = vmul.f32 %v7039, %v6316
  %v7068 = vadd.f32 %v7052, %v7060
  %v7069 = vadd.f32 %v7053, %v7061
  %v7070 = vadd.f32 %v7054, %v7062
  %v7071 = vadd.f32 %v7055, %v7063
  %v7072 = vadd.f32 %v7056, %v7064
  %v7073 = vadd.f32 %v7057, %v7065
  %v7074 = vadd.f32 %v7058, %v7066
  %v7075 = vadd.f32 %v7059, %v7067
  %v7076 = vmul.f32 %v7034, %v6333
  %v7077 = vmul.f32 %v7035, %v6333
  %v7078 = vmul.f32 %v7036, %v6333
  %v7079 = vmul.f32 %v7037, %v6333
  %v7080 = vmul.f32 %v7038, %v6333
  %v7081 = vmul.f32 %v7039, %v6333
  %v7082 = vmul.f32 %v7040, %v6333
  %v7083 = vmul.f32 %v7041, %v6333
  %v7084 = vadd.f32 %v7068, %v7076
  %v7085 = vadd.f32 %v7069, %v7077
  %v7086 = vadd.f32 %v7070, %v7078
  %v7087 = vadd.f32 %v7071, %v7079
  %v7088 = vadd.f32 %v7072, %v7080
  %v7089 = vadd.f32 %v7073, %v7081
  %v7090 = vadd.f32 %v7074, %v7082
  %v7091 = vadd.f32 %v7075, %v7083
  %v7092 = vmul.f32 %v7036, %v6350
  %v7093 = vmul.f32 %v7037, %v6350
  %v7094 = vmul.f32 %v7038, %v6350
  %v7095 = vmul.f32 %v7039, %v6350
  %v7096 = vmul.f32 %v7040, %v6350
  %v7097 = vmul.f32 %v7041, %v6350
  %v7098 = vmul.f32 %v7042, %v6350
  %v7099 = vmul.f32 %v7043, %v6350
  %v7100 = vadd.f32 %v7084, %v7092
  %v7101 = vadd.f32 %v7085, %v7093
  %v7102 = vadd.f32 %v7086, %v7094
  %v7103 = vadd.f32 %v7087, %v7095
  %v7104 = vadd.f32 %v7088, %v7096
  %v7105 = vadd.f32 %v7089, %v7097
  %v7106 = vadd.f32 %v7090, %v7098
  %v7107 = vadd.f32 %v7091, %v7099
  %v7108 = vrot.slane %v7030, 1
  %v7109 = vrot.slane %v7031, 1
  %v7110 = vrot.slane %v7032, 1
  %v7111 = vrot.slane %v7033, 1
  %v7112 = vrot.slane %v7034, 1
  %v7113 = vrot.slane %v7035, 1
  %v7114 = vrot.slane %v7036, 1
  %v7115 = vrot.slane %v7037, 1
  %v7116 = vrot.slane %v7038, 1
  %v7117 = vrot.slane %v7039, 1
  %v7118 = vrot.slane %v7040, 1
  %v7119 = vrot.slane %v7041, 1
  %v7120 = vrot.slane %v7042, 1
  %v7121 = vrot.slane %v7043, 1
  %v7122 = vsel %vm6383, %v7120, %v7121
  %v7123 = vsel %vm6383, %v7119, %v7120
  %v7124 = vsel %vm6383, %v7118, %v7119
  %v7125 = vsel %vm6383, %v7117, %v7118
  %v7126 = vsel %vm6383, %v7116, %v7117
  %v7127 = vsel %vm6383, %v7115, %v7116
  %v7128 = vsel %vm6383, %v7114, %v7115
  %v7129 = vsel %vm6383, %v7113, %v7114
  %v7130 = vsel %vm6383, %v7112, %v7113
  %v7131 = vsel %vm6383, %v7111, %v7112
  %v7132 = vsel %vm6383, %v7110, %v7111
  %v7133 = vsel %vm6383, %v7109, %v7110
  %v7134 = vsel %vm6383, %v7108, %v7109
  %v7135 = vsel %vm6383, %v7121, %v7108
  %v7136 = vmul.f32 %v7134, %v6398
  %v7137 = vmul.f32 %v7133, %v6398
  %v7138 = vmul.f32 %v7132, %v6398
  %v7139 = vmul.f32 %v7131, %v6398
  %v7140 = vmul.f32 %v7130, %v6398
  %v7141 = vmul.f32 %v7129, %v6398
  %v7142 = vmul.f32 %v7128, %v6398
  %v7143 = vmul.f32 %v7127, %v6398
  %v7144 = vadd.f32 %v7100, %v7136
  %v7145 = vadd.f32 %v7101, %v7137
  %v7146 = vadd.f32 %v7102, %v7138
  %v7147 = vadd.f32 %v7103, %v7139
  %v7148 = vadd.f32 %v7104, %v7140
  %v7149 = vadd.f32 %v7105, %v7141
  %v7150 = vadd.f32 %v7106, %v7142
  %v7151 = vadd.f32 %v7107, %v7143
  %v7152 = vmul.f32 %v7132, %v6415
  %v7153 = vmul.f32 %v7131, %v6415
  %v7154 = vmul.f32 %v7130, %v6415
  %v7155 = vmul.f32 %v7129, %v6415
  %v7156 = vmul.f32 %v7128, %v6415
  %v7157 = vmul.f32 %v7127, %v6415
  %v7158 = vmul.f32 %v7126, %v6415
  %v7159 = vmul.f32 %v7125, %v6415
  %v7160 = vadd.f32 %v7144, %v7152
  %v7161 = vadd.f32 %v7145, %v7153
  %v7162 = vadd.f32 %v7146, %v7154
  %v7163 = vadd.f32 %v7147, %v7155
  %v7164 = vadd.f32 %v7148, %v7156
  %v7165 = vadd.f32 %v7149, %v7157
  %v7166 = vadd.f32 %v7150, %v7158
  %v7167 = vadd.f32 %v7151, %v7159
  %v7168 = vmul.f32 %v7130, %v6432
  %v7169 = vmul.f32 %v7129, %v6432
  %v7170 = vmul.f32 %v7128, %v6432
  %v7171 = vmul.f32 %v7127, %v6432
  %v7172 = vmul.f32 %v7126, %v6432
  %v7173 = vmul.f32 %v7125, %v6432
  %v7174 = vmul.f32 %v7124, %v6432
  %v7175 = vmul.f32 %v7123, %v6432
  %v7176 = vadd.f32 %v7160, %v7168
  %v7177 = vadd.f32 %v7161, %v7169
  %v7178 = vadd.f32 %v7162, %v7170
  %v7179 = vadd.f32 %v7163, %v7171
  %v7180 = vadd.f32 %v7164, %v7172
  %v7181 = vadd.f32 %v7165, %v7173
  %v7182 = vadd.f32 %v7166, %v7174
  %v7183 = vadd.f32 %v7167, %v7175
  %v7184 = vmul.f32 %v7128, %v6449
  %v7185 = vmul.f32 %v7127, %v6449
  %v7186 = vmul.f32 %v7126, %v6449
  %v7187 = vmul.f32 %v7125, %v6449
  %v7188 = vmul.f32 %v7124, %v6449
  %v7189 = vmul.f32 %v7123, %v6449
  %v7190 = vmul.f32 %v7122, %v6449
  %v7191 = vmul.f32 %v7135, %v6449
  %v7192 = vadd.f32 %v7176, %v7184
  %v7193 = vadd.f32 %v7177, %v7185
  %v7194 = vadd.f32 %v7178, %v7186
  %v7195 = vadd.f32 %v7179, %v7187
  %v7196 = vadd.f32 %v7180, %v7188
  %v7197 = vadd.f32 %v7181, %v7189
  %v7198 = vadd.f32 %v7182, %v7190
  %v7199 = vadd.f32 %v7183, %v7191
  %v7200 = vrot.slane %v7030, 2
  %v7201 = vrot.slane %v7031, 2
  %v7202 = vrot.slane %v7032, 2
  %v7203 = vrot.slane %v7033, 2
  %v7204 = vrot.slane %v7034, 2
  %v7205 = vrot.slane %v7035, 2
  %v7206 = vrot.slane %v7036, 2
  %v7207 = vrot.slane %v7037, 2
  %v7208 = vrot.slane %v7038, 2
  %v7209 = vrot.slane %v7039, 2
  %v7210 = vrot.slane %v7040, 2
  %v7211 = vrot.slane %v7041, 2
  %v7212 = vrot.slane %v7042, 2
  %v7213 = vrot.slane %v7043, 2
  %v7214 = vsel %vm6480, %v7212, %v7213
  %v7215 = vsel %vm6480, %v7211, %v7212
  %v7216 = vsel %vm6480, %v7210, %v7211
  %v7217 = vsel %vm6480, %v7209, %v7210
  %v7218 = vsel %vm6480, %v7208, %v7209
  %v7219 = vsel %vm6480, %v7207, %v7208
  %v7220 = vsel %vm6480, %v7206, %v7207
  %v7221 = vsel %vm6480, %v7205, %v7206
  %v7222 = vsel %vm6480, %v7204, %v7205
  %v7223 = vsel %vm6480, %v7203, %v7204
  %v7224 = vsel %vm6480, %v7202, %v7203
  %v7225 = vsel %vm6480, %v7201, %v7202
  %v7226 = vsel %vm6480, %v7200, %v7201
  %v7227 = vsel %vm6480, %v7213, %v7200
  %v7228 = vmul.f32 %v7226, %v6495
  %v7229 = vmul.f32 %v7225, %v6495
  %v7230 = vmul.f32 %v7224, %v6495
  %v7231 = vmul.f32 %v7223, %v6495
  %v7232 = vmul.f32 %v7222, %v6495
  %v7233 = vmul.f32 %v7221, %v6495
  %v7234 = vmul.f32 %v7220, %v6495
  %v7235 = vmul.f32 %v7219, %v6495
  %v7236 = vadd.f32 %v7192, %v7228
  %v7237 = vadd.f32 %v7193, %v7229
  %v7238 = vadd.f32 %v7194, %v7230
  %v7239 = vadd.f32 %v7195, %v7231
  %v7240 = vadd.f32 %v7196, %v7232
  %v7241 = vadd.f32 %v7197, %v7233
  %v7242 = vadd.f32 %v7198, %v7234
  %v7243 = vadd.f32 %v7199, %v7235
  %v7244 = vmul.f32 %v7224, %v6512
  %v7245 = vmul.f32 %v7223, %v6512
  %v7246 = vmul.f32 %v7222, %v6512
  %v7247 = vmul.f32 %v7221, %v6512
  %v7248 = vmul.f32 %v7220, %v6512
  %v7249 = vmul.f32 %v7219, %v6512
  %v7250 = vmul.f32 %v7218, %v6512
  %v7251 = vmul.f32 %v7217, %v6512
  %v7252 = vadd.f32 %v7236, %v7244
  %v7253 = vadd.f32 %v7237, %v7245
  %v7254 = vadd.f32 %v7238, %v7246
  %v7255 = vadd.f32 %v7239, %v7247
  %v7256 = vadd.f32 %v7240, %v7248
  %v7257 = vadd.f32 %v7241, %v7249
  %v7258 = vadd.f32 %v7242, %v7250
  %v7259 = vadd.f32 %v7243, %v7251
  %v7260 = vmul.f32 %v7222, %v6529
  %v7261 = vmul.f32 %v7221, %v6529
  %v7262 = vmul.f32 %v7220, %v6529
  %v7263 = vmul.f32 %v7219, %v6529
  %v7264 = vmul.f32 %v7218, %v6529
  %v7265 = vmul.f32 %v7217, %v6529
  %v7266 = vmul.f32 %v7216, %v6529
  %v7267 = vmul.f32 %v7215, %v6529
  %v7268 = vadd.f32 %v7252, %v7260
  %v7269 = vadd.f32 %v7253, %v7261
  %v7270 = vadd.f32 %v7254, %v7262
  %v7271 = vadd.f32 %v7255, %v7263
  %v7272 = vadd.f32 %v7256, %v7264
  %v7273 = vadd.f32 %v7257, %v7265
  %v7274 = vadd.f32 %v7258, %v7266
  %v7275 = vadd.f32 %v7259, %v7267
  %v7276 = vmul.f32 %v7220, %v6546
  %v7277 = vmul.f32 %v7219, %v6546
  %v7278 = vmul.f32 %v7218, %v6546
  %v7279 = vmul.f32 %v7217, %v6546
  %v7280 = vmul.f32 %v7216, %v6546
  %v7281 = vmul.f32 %v7215, %v6546
  %v7282 = vmul.f32 %v7214, %v6546
  %v7283 = vmul.f32 %v7227, %v6546
  %v7284 = vadd.f32 %v7268, %v7276
  %v7285 = vadd.f32 %v7269, %v7277
  %v7286 = vadd.f32 %v7270, %v7278
  %v7287 = vadd.f32 %v7271, %v7279
  %v7288 = vadd.f32 %v7272, %v7280
  %v7289 = vadd.f32 %v7273, %v7281
  %v7290 = vadd.f32 %v7274, %v7282
  %v7291 = vadd.f32 %v7275, %v7283
  %v7292 = vrot.slane %v7030, 3
  %v7293 = vrot.slane %v7031, 3
  %v7294 = vrot.slane %v7032, 3
  %v7295 = vrot.slane %v7033, 3
  %v7296 = vrot.slane %v7034, 3
  %v7297 = vrot.slane %v7035, 3
  %v7298 = vrot.slane %v7036, 3
  %v7299 = vrot.slane %v7037, 3
  %v7300 = vrot.slane %v7038, 3
  %v7301 = vrot.slane %v7039, 3
  %v7302 = vrot.slane %v7040, 3
  %v7303 = vrot.slane %v7041, 3
  %v7304 = vrot.slane %v7042, 3
  %v7305 = vrot.slane %v7043, 3
  %v7306 = vsel %vm6577, %v7304, %v7305
  %v7307 = vsel %vm6577, %v7303, %v7304
  %v7308 = vsel %vm6577, %v7302, %v7303
  %v7309 = vsel %vm6577, %v7301, %v7302
  %v7310 = vsel %vm6577, %v7300, %v7301
  %v7311 = vsel %vm6577, %v7299, %v7300
  %v7312 = vsel %vm6577, %v7298, %v7299
  %v7313 = vsel %vm6577, %v7297, %v7298
  %v7314 = vsel %vm6577, %v7296, %v7297
  %v7315 = vsel %vm6577, %v7295, %v7296
  %v7316 = vsel %vm6577, %v7294, %v7295
  %v7317 = vsel %vm6577, %v7293, %v7294
  %v7318 = vsel %vm6577, %v7292, %v7293
  %v7319 = vsel %vm6577, %v7305, %v7292
  %v7320 = vmul.f32 %v7318, %v6592
  %v7321 = vmul.f32 %v7317, %v6592
  %v7322 = vmul.f32 %v7316, %v6592
  %v7323 = vmul.f32 %v7315, %v6592
  %v7324 = vmul.f32 %v7314, %v6592
  %v7325 = vmul.f32 %v7313, %v6592
  %v7326 = vmul.f32 %v7312, %v6592
  %v7327 = vmul.f32 %v7311, %v6592
  %v7328 = vadd.f32 %v7284, %v7320
  %v7329 = vadd.f32 %v7285, %v7321
  %v7330 = vadd.f32 %v7286, %v7322
  %v7331 = vadd.f32 %v7287, %v7323
  %v7332 = vadd.f32 %v7288, %v7324
  %v7333 = vadd.f32 %v7289, %v7325
  %v7334 = vadd.f32 %v7290, %v7326
  %v7335 = vadd.f32 %v7291, %v7327
  %v7336 = vmul.f32 %v7316, %v6609
  %v7337 = vmul.f32 %v7315, %v6609
  %v7338 = vmul.f32 %v7314, %v6609
  %v7339 = vmul.f32 %v7313, %v6609
  %v7340 = vmul.f32 %v7312, %v6609
  %v7341 = vmul.f32 %v7311, %v6609
  %v7342 = vmul.f32 %v7310, %v6609
  %v7343 = vmul.f32 %v7309, %v6609
  %v7344 = vadd.f32 %v7328, %v7336
  %v7345 = vadd.f32 %v7329, %v7337
  %v7346 = vadd.f32 %v7330, %v7338
  %v7347 = vadd.f32 %v7331, %v7339
  %v7348 = vadd.f32 %v7332, %v7340
  %v7349 = vadd.f32 %v7333, %v7341
  %v7350 = vadd.f32 %v7334, %v7342
  %v7351 = vadd.f32 %v7335, %v7343
  %v7352 = vmul.f32 %v7314, %v6626
  %v7353 = vmul.f32 %v7313, %v6626
  %v7354 = vmul.f32 %v7312, %v6626
  %v7355 = vmul.f32 %v7311, %v6626
  %v7356 = vmul.f32 %v7310, %v6626
  %v7357 = vmul.f32 %v7309, %v6626
  %v7358 = vmul.f32 %v7308, %v6626
  %v7359 = vmul.f32 %v7307, %v6626
  %v7360 = vadd.f32 %v7344, %v7352
  %v7361 = vadd.f32 %v7345, %v7353
  %v7362 = vadd.f32 %v7346, %v7354
  %v7363 = vadd.f32 %v7347, %v7355
  %v7364 = vadd.f32 %v7348, %v7356
  %v7365 = vadd.f32 %v7349, %v7357
  %v7366 = vadd.f32 %v7350, %v7358
  %v7367 = vadd.f32 %v7351, %v7359
  %v7368 = vmul.f32 %v7312, %v6643
  %v7369 = vmul.f32 %v7311, %v6643
  %v7370 = vmul.f32 %v7310, %v6643
  %v7371 = vmul.f32 %v7309, %v6643
  %v7372 = vmul.f32 %v7308, %v6643
  %v7373 = vmul.f32 %v7307, %v6643
  %v7374 = vmul.f32 %v7306, %v6643
  %v7375 = vmul.f32 %v7319, %v6643
  %v7376 = vadd.f32 %v7360, %v7368
  %v7377 = vadd.f32 %v7361, %v7369
  %v7378 = vadd.f32 %v7362, %v7370
  %v7379 = vadd.f32 %v7363, %v7371
  %v7380 = vadd.f32 %v7364, %v7372
  %v7381 = vadd.f32 %v7365, %v7373
  %v7382 = vadd.f32 %v7366, %v7374
  %v7383 = vadd.f32 %v7367, %v7375
  %7384 = vst.msk [vmem:[#allocation4 + $0x80] sm:$0xff] %vm1631, %v7376
  %7385 = vst.msk [vmem:[#allocation4 + $0x88] sm:$0xff] %vm1631, %v7377
  %7386 = vst.msk [vmem:[#allocation4 + $0x90] sm:$0xff] %vm1631, %v7378
  %7387 = vst.msk [vmem:[#allocation4 + $0x98] sm:$0xff] %vm1631, %v7379
  %7388 = vst.msk [vmem:[#allocation4 + $0xa0] sm:$0xff] %vm1631, %v7380
  %7389 = vst.msk [vmem:[#allocation4 + $0xa8] sm:$0xff] %vm1631, %v7381
  %7390 = vst.msk [vmem:[#allocation4 + $0xb0] sm:$0xff] %vm1631, %v7382
  %7391 = vst.msk [vmem:[#allocation4 + $0xb8] sm:$0xff] %vm1631, %v7383
  %v7392 = vld [vmem:[#allocation3 + $0xc0] sm:$0xff]
  %v7393 = vld [vmem:[#allocation3 + $0xc8] sm:$0xff]
  %v7394 = vld [vmem:[#allocation3 + $0xd0] sm:$0xff]
  %v7395 = vld [vmem:[#allocation3 + $0xd8] sm:$0xff]
  %v7396 = vld [vmem:[#allocation3 + $0xe0] sm:$0xff]
  %v7397 = vld [vmem:[#allocation3 + $0xe8] sm:$0xff]
  %v7398 = vld [vmem:[#allocation3 + $0xf0] sm:$0xff]
  %v7399 = vld [vmem:[#allocation3 + $0xf8] sm:$0xff]
  %v7400 = vmul.f32 %v7392, %v6299
  %v7401 = vmul.f32 %v7393, %v6299
  %v7402 = vadd.f32 %v7400, 0.0
  %v7403 = vadd.f32 %v7401, 0.0
  %v7404 = vmul.f32 %v7394, %v6316
  %v7405 = vmul.f32 %v7395, %v6316
  %v7406 = vadd.f32 %v7402, %v7404
  %v7407 = vadd.f32 %v7403, %v7405
  %v7408 = vmul.f32 %v7396, %v6333
  %v7409 = vmul.f32 %v7397, %v6333
  %v7410 = vadd.f32 %v7406, %v7408
  %v7411 = vadd.f32 %v7407, %v7409
  %v7412 = vmul.f32 %v7398, %v6350
  %v7413 = vmul.f32 %v7399, %v6350
  %v7414 = vadd.f32 %v7410, %v7412
  %v7415 = vadd.f32 %v7411, %v7413
  %v7416 = vrot.slane %v7392, 1
  %v7417 = vrot.slane %v7393, 1
  %v7418 = vrot.slane %v7394, 1
  %v7419 = vrot.slane %v7395, 1
  %v7420 = vrot.slane %v7396, 1
  %v7421 = vrot.slane %v7397, 1
  %v7422 = vrot.slane %v7398, 1
  %v7423 = vrot.slane %v7399, 1
  %v7424 = vsel %vm6383, %v7422, %v7423
  %v7425 = vsel %vm6383, %v7421, %v7422
  %v7426 = vsel %vm6383, %v7420, %v7421
  %v7427 = vsel %vm6383, %v7419, %v7420
  %v7428 = vsel %vm6383, %v7418, %v7419
  %v7429 = vsel %vm6383, %v7417, %v7418
  %v7430 = vsel %vm6383, %v7416, %v7417
  %v7431 = vsel %vm6383, %v7423, %v7416
  %v7432 = vmul.f32 %v7430, %v6398
  %v7433 = vmul.f32 %v7429, %v6398
  %v7434 = vadd.f32 %v7414, %v7432
  %v7435 = vadd.f32 %v7415, %v7433
  %v7436 = vmul.f32 %v7428, %v6415
  %v7437 = vmul.f32 %v7427, %v6415
  %v7438 = vadd.f32 %v7434, %v7436
  %v7439 = vadd.f32 %v7435, %v7437
  %v7440 = vmul.f32 %v7426, %v6432
  %v7441 = vmul.f32 %v7425, %v6432
  %v7442 = vadd.f32 %v7438, %v7440
  %v7443 = vadd.f32 %v7439, %v7441
  %v7444 = vmul.f32 %v7424, %v6449
  %v7445 = vmul.f32 %v7431, %v6449
  %v7446 = vadd.f32 %v7442, %v7444
  %v7447 = vadd.f32 %v7443, %v7445
  %v7448 = vrot.slane %v7392, 2
  %v7449 = vrot.slane %v7393, 2
  %v7450 = vrot.slane %v7394, 2
  %v7451 = vrot.slane %v7395, 2
  %v7452 = vrot.slane %v7396, 2
  %v7453 = vrot.slane %v7397, 2
  %v7454 = vrot.slane %v7398, 2
  %v7455 = vrot.slane %v7399, 2
  %v7456 = vsel %vm6480, %v7454, %v7455
  %v7457 = vsel %vm6480, %v7453, %v7454
  %v7458 = vsel %vm6480, %v7452, %v7453
  %v7459 = vsel %vm6480, %v7451, %v7452
  %v7460 = vsel %vm6480, %v7450, %v7451
  %v7461 = vsel %vm6480, %v7449, %v7450
  %v7462 = vsel %vm6480, %v7448, %v7449
  %v7463 = vsel %vm6480, %v7455, %v7448
  %v7464 = vmul.f32 %v7462, %v6495
  %v7465 = vmul.f32 %v7461, %v6495
  %v7466 = vadd.f32 %v7446, %v7464
  %v7467 = vadd.f32 %v7447, %v7465
  %v7468 = vmul.f32 %v7460, %v6512
  %v7469 = vmul.f32 %v7459, %v6512
  %v7470 = vadd.f32 %v7466, %v7468
  %v7471 = vadd.f32 %v7467, %v7469
  %v7472 = vmul.f32 %v7458, %v6529
  %v7473 = vmul.f32 %v7457, %v6529
  %v7474 = vadd.f32 %v7470, %v7472
  %v7475 = vadd.f32 %v7471, %v7473
  %v7476 = vmul.f32 %v7456, %v6546
  %v7477 = vmul.f32 %v7463, %v6546
  %v7478 = vadd.f32 %v7474, %v7476
  %v7479 = vadd.f32 %v7475, %v7477
  %v7480 = vrot.slane %v7392, 3
  %v7481 = vrot.slane %v7393, 3
  %v7482 = vrot.slane %v7394, 3
  %v7483 = vrot.slane %v7395, 3
  %v7484 = vrot.slane %v7396, 3
  %v7485 = vrot.slane %v7397, 3
  %v7486 = vrot.slane %v7398, 3
  %v7487 = vrot.slane %v7399, 3
  %v7488 = vsel %vm6577, %v7486, %v7487
  %v7489 = vsel %vm6577, %v7485, %v7486
  %v7490 = vsel %vm6577, %v7484, %v7485
  %v7491 = vsel %vm6577, %v7483, %v7484
  %v7492 = vsel %vm6577, %v7482, %v7483
  %v7493 = vsel %vm6577, %v7481, %v7482
  %v7494 = vsel %vm6577, %v7480, %v7481
  %v7495 = vsel %vm6577, %v7487, %v7480
  %v7496 = vmul.f32 %v7494, %v6592
  %v7497 = vmul.f32 %v7493, %v6592
  %v7498 = vadd.f32 %v7478, %v7496
  %v7499 = vadd.f32 %v7479, %v7497
  %v7500 = vmul.f32 %v7492, %v6609
  %v7501 = vmul.f32 %v7491, %v6609
  %v7502 = vadd.f32 %v7498, %v7500
  %v7503 = vadd.f32 %v7499, %v7501
  %v7504 = vmul.f32 %v7490, %v6626
  %v7505 = vmul.f32 %v7489, %v6626
  %v7506 = vadd.f32 %v7502, %v7504
  %v7507 = vadd.f32 %v7503, %v7505
  %v7508 = vmul.f32 %v7488, %v6643
  %v7509 = vmul.f32 %v7495, %v6643
  %v7510 = vadd.f32 %v7506, %v7508
  %v7511 = vadd.f32 %v7507, %v7509
  %7512 = vst.msk [vmem:[#allocation4 + $0xc0] sm:$0xff] %vm1631, %v7510
  %7513 = vst.msk [vmem:[#allocation4 + $0xc8] sm:$0xff] %vm1631, %v7511
  %7514 = vst.msk [vmem:[#allocation4 + $0xd0] sm:$0xff] %vm1631, 0.0
  %7515 = vst.msk [vmem:[#allocation4 + $0xd8] sm:$0xff] %vm1631, 0.0
  %7516 = vst.msk [vmem:[#allocation4 + $0xe0] sm:$0xff] %vm1631, 0.0
  %7517 = vst.msk [vmem:[#allocation4 + $0xe8] sm:$0xff] %vm1631, 0.0
  %7518 = vst.msk [vmem:[#allocation4 + $0xf0] sm:$0xff] %vm1631, 0.0
  %7519 = vst.msk [vmem:[#allocation4 + $0xf8] sm:$0xff] %vm1631, 0.0
  %s7520 = scalar_lea.vmem %s1, 16
  %v7521 = vld [vmem:[%s7520] sm:$0xf]
  %v7522 = vld [vmem:[%s7520 + $0x4] sm:$0xf]
  %v7523 = vld [vmem:[%s7520 + $0x8] sm:$0xf]
  %v7524 = vld [vmem:[%s7520 + $0xc] sm:$0xf]
  %v7525 = vld [vmem:[%s4763] sm:$0xff]
  %v7526 = vld [vmem:[%s4763 + $0x8] sm:$0xff]
  %v7527 = vld [vmem:[%s4763 + $0x10] sm:$0xff]
  %v7528 = vld [vmem:[%s4763 + $0x18] sm:$0xff]
  %v7529 = vld [vmem:[%s4763 + $0x20] sm:$0xff]
  %v7530 = vld [vmem:[%s4763 + $0x28] sm:$0xff]
  %v7531 = vld [vmem:[%s4763 + $0x30] sm:$0xff]
  %v7532 = vld [vmem:[%s4763 + $0x38] sm:$0xff]
  %v7533 = vld [vmem:[%s4763 + $0x40] sm:$0xff]
  %v7534 = vld [vmem:[%s4763 + $0x48] sm:$0xff]
  %v7535 = vld [vmem:[%s4763 + $0x50] sm:$0xff]
  %v7536 = vld [vmem:[%s4763 + $0x58] sm:$0xff]
  %v7537 = vld [vmem:[%s4763 + $0x60] sm:$0xff]
  %v7538 = vld [vmem:[%s4763 + $0x68] sm:$0xff]
  %v7539 = vperm.slane %v7521, 0
  %v7540 = vmul.f32 %v7525, %v7539
  %v7541 = vmul.f32 %v7526, %v7539
  %v7542 = vmul.f32 %v7527, %v7539
  %v7543 = vmul.f32 %v7528, %v7539
  %v7544 = vmul.f32 %v7529, %v7539
  %v7545 = vmul.f32 %v7530, %v7539
  %v7546 = vmul.f32 %v7531, %v7539
  %v7547 = vmul.f32 %v7532, %v7539
  %v7548 = vadd.f32 %v7540, 0.0
  %v7549 = vadd.f32 %v7541, 0.0
  %v7550 = vadd.f32 %v7542, 0.0
  %v7551 = vadd.f32 %v7543, 0.0
  %v7552 = vadd.f32 %v7544, 0.0
  %v7553 = vadd.f32 %v7545, 0.0
  %v7554 = vadd.f32 %v7546, 0.0
  %v7555 = vadd.f32 %v7547, 0.0
  %v7556 = vperm.slane %v7522, 0
  %v7557 = vmul.f32 %v7527, %v7556
  %v7558 = vmul.f32 %v7528, %v7556
  %v7559 = vmul.f32 %v7529, %v7556
  %v7560 = vmul.f32 %v7530, %v7556
  %v7561 = vmul.f32 %v7531, %v7556
  %v7562 = vmul.f32 %v7532, %v7556
  %v7563 = vmul.f32 %v7533, %v7556
  %v7564 = vmul.f32 %v7534, %v7556
  %v7565 = vadd.f32 %v7548, %v7557
  %v7566 = vadd.f32 %v7549, %v7558
  %v7567 = vadd.f32 %v7550, %v7559
  %v7568 = vadd.f32 %v7551, %v7560
  %v7569 = vadd.f32 %v7552, %v7561
  %v7570 = vadd.f32 %v7553, %v7562
  %v7571 = vadd.f32 %v7554, %v7563
  %v7572 = vadd.f32 %v7555, %v7564
  %v7573 = vperm.slane %v7523, 0
  %v7574 = vmul.f32 %v7529, %v7573
  %v7575 = vmul.f32 %v7530, %v7573
  %v7576 = vmul.f32 %v7531, %v7573
  %v7577 = vmul.f32 %v7532, %v7573
  %v7578 = vmul.f32 %v7533, %v7573
  %v7579 = vmul.f32 %v7534, %v7573
  %v7580 = vmul.f32 %v7535, %v7573
  %v7581 = vmul.f32 %v7536, %v7573
  %v7582 = vadd.f32 %v7565, %v7574
  %v7583 = vadd.f32 %v7566, %v7575
  %v7584 = vadd.f32 %v7567, %v7576
  %v7585 = vadd.f32 %v7568, %v7577
  %v7586 = vadd.f32 %v7569, %v7578
  %v7587 = vadd.f32 %v7570, %v7579
  %v7588 = vadd.f32 %v7571, %v7580
  %v7589 = vadd.f32 %v7572, %v7581
  %v7590 = vperm.slane %v7524, 0
  %v7591 = vmul.f32 %v7531, %v7590
  %v7592 = vmul.f32 %v7532, %v7590
  %v7593 = vmul.f32 %v7533, %v7590
  %v7594 = vmul.f32 %v7534, %v7590
  %v7595 = vmul.f32 %v7535, %v7590
  %v7596 = vmul.f32 %v7536, %v7590
  %v7597 = vmul.f32 %v7537, %v7590
  %v7598 = vmul.f32 %v7538, %v7590
  %v7599 = vadd.f32 %v7582, %v7591
  %v7600 = vadd.f32 %v7583, %v7592
  %v7601 = vadd.f32 %v7584, %v7593
  %v7602 = vadd.f32 %v7585, %v7594
  %v7603 = vadd.f32 %v7586, %v7595
  %v7604 = vadd.f32 %v7587, %v7596
  %v7605 = vadd.f32 %v7588, %v7597
  %v7606 = vadd.f32 %v7589, %v7598
  %v7607 = vrot.slane %v7525, 1
  %v7608 = vrot.slane %v7526, 1
  %v7609 = vrot.slane %v7527, 1
  %v7610 = vrot.slane %v7528, 1
  %v7611 = vrot.slane %v7529, 1
  %v7612 = vrot.slane %v7530, 1
  %v7613 = vrot.slane %v7531, 1
  %v7614 = vrot.slane %v7532, 1
  %v7615 = vrot.slane %v7533, 1
  %v7616 = vrot.slane %v7534, 1
  %v7617 = vrot.slane %v7535, 1
  %v7618 = vrot.slane %v7536, 1
  %v7619 = vrot.slane %v7537, 1
  %v7620 = vrot.slane %v7538, 1
  %v7621 = vsel %vm6383, %v7619, %v7620
  %v7622 = vsel %vm6383, %v7618, %v7619
  %v7623 = vsel %vm6383, %v7617, %v7618
  %v7624 = vsel %vm6383, %v7616, %v7617
  %v7625 = vsel %vm6383, %v7615, %v7616
  %v7626 = vsel %vm6383, %v7614, %v7615
  %v7627 = vsel %vm6383, %v7613, %v7614
  %v7628 = vsel %vm6383, %v7612, %v7613
  %v7629 = vsel %vm6383, %v7611, %v7612
  %v7630 = vsel %vm6383, %v7610, %v7611
  %v7631 = vsel %vm6383, %v7609, %v7610
  %v7632 = vsel %vm6383, %v7608, %v7609
  %v7633 = vsel %vm6383, %v7607, %v7608
  %v7634 = vsel %vm6383, %v7620, %v7607
  %v7635 = vperm.slane %v7521, 1
  %v7636 = vmul.f32 %v7633, %v7635
  %v7637 = vmul.f32 %v7632, %v7635
  %v7638 = vmul.f32 %v7631, %v7635
  %v7639 = vmul.f32 %v7630, %v7635
  %v7640 = vmul.f32 %v7629, %v7635
  %v7641 = vmul.f32 %v7628, %v7635
  %v7642 = vmul.f32 %v7627, %v7635
  %v7643 = vmul.f32 %v7626, %v7635
  %v7644 = vadd.f32 %v7599, %v7636
  %v7645 = vadd.f32 %v7600, %v7637
  %v7646 = vadd.f32 %v7601, %v7638
  %v7647 = vadd.f32 %v7602, %v7639
  %v7648 = vadd.f32 %v7603, %v7640
  %v7649 = vadd.f32 %v7604, %v7641
  %v7650 = vadd.f32 %v7605, %v7642
  %v7651 = vadd.f32 %v7606, %v7643
  %v7652 = vperm.slane %v7522, 1
  %v7653 = vmul.f32 %v7631, %v7652
  %v7654 = vmul.f32 %v7630, %v7652
  %v7655 = vmul.f32 %v7629, %v7652
  %v7656 = vmul.f32 %v7628, %v7652
  %v7657 = vmul.f32 %v7627, %v7652
  %v7658 = vmul.f32 %v7626, %v7652
  %v7659 = vmul.f32 %v7625, %v7652
  %v7660 = vmul.f32 %v7624, %v7652
  %v7661 = vadd.f32 %v7644, %v7653
  %v7662 = vadd.f32 %v7645, %v7654
  %v7663 = vadd.f32 %v7646, %v7655
  %v7664 = vadd.f32 %v7647, %v7656
  %v7665 = vadd.f32 %v7648, %v7657
  %v7666 = vadd.f32 %v7649, %v7658
  %v7667 = vadd.f32 %v7650, %v7659
  %v7668 = vadd.f32 %v7651, %v7660
  %v7669 = vperm.slane %v7523, 1
  %v7670 = vmul.f32 %v7629, %v7669
  %v7671 = vmul.f32 %v7628, %v7669
  %v7672 = vmul.f32 %v7627, %v7669
  %v7673 = vmul.f32 %v7626, %v7669
  %v7674 = vmul.f32 %v7625, %v7669
  %v7675 = vmul.f32 %v7624, %v7669
  %v7676 = vmul.f32 %v7623, %v7669
  %v7677 = vmul.f32 %v7622, %v7669
  %v7678 = vadd.f32 %v7661, %v7670
  %v7679 = vadd.f32 %v7662, %v7671
  %v7680 = vadd.f32 %v7663, %v7672
  %v7681 = vadd.f32 %v7664, %v7673
  %v7682 = vadd.f32 %v7665, %v7674
  %v7683 = vadd.f32 %v7666, %v7675
  %v7684 = vadd.f32 %v7667, %v7676
  %v7685 = vadd.f32 %v7668, %v7677
  %v7686 = vperm.slane %v7524, 1
  %v7687 = vmul.f32 %v7627, %v7686
  %v7688 = vmul.f32 %v7626, %v7686
  %v7689 = vmul.f32 %v7625, %v7686
  %v7690 = vmul.f32 %v7624, %v7686
  %v7691 = vmul.f32 %v7623, %v7686
  %v7692 = vmul.f32 %v7622, %v7686
  %v7693 = vmul.f32 %v7621, %v7686
  %v7694 = vmul.f32 %v7634, %v7686
  %v7695 = vadd.f32 %v7678, %v7687
  %v7696 = vadd.f32 %v7679, %v7688
  %v7697 = vadd.f32 %v7680, %v7689
  %v7698 = vadd.f32 %v7681, %v7690
  %v7699 = vadd.f32 %v7682, %v7691
  %v7700 = vadd.f32 %v7683, %v7692
  %v7701 = vadd.f32 %v7684, %v7693
  %v7702 = vadd.f32 %v7685, %v7694
  %v7703 = vrot.slane %v7525, 2
  %v7704 = vrot.slane %v7526, 2
  %v7705 = vrot.slane %v7527, 2
  %v7706 = vrot.slane %v7528, 2
  %v7707 = vrot.slane %v7529, 2
  %v7708 = vrot.slane %v7530, 2
  %v7709 = vrot.slane %v7531, 2
  %v7710 = vrot.slane %v7532, 2
  %v7711 = vrot.slane %v7533, 2
  %v7712 = vrot.slane %v7534, 2
  %v7713 = vrot.slane %v7535, 2
  %v7714 = vrot.slane %v7536, 2
  %v7715 = vrot.slane %v7537, 2
  %v7716 = vrot.slane %v7538, 2
  %v7717 = vsel %vm6480, %v7715, %v7716
  %v7718 = vsel %vm6480, %v7714, %v7715
  %v7719 = vsel %vm6480, %v7713, %v7714
  %v7720 = vsel %vm6480, %v7712, %v7713
  %v7721 = vsel %vm6480, %v7711, %v7712
  %v7722 = vsel %vm6480, %v7710, %v7711
  %v7723 = vsel %vm6480, %v7709, %v7710
  %v7724 = vsel %vm6480, %v7708, %v7709
  %v7725 = vsel %vm6480, %v7707, %v7708
  %v7726 = vsel %vm6480, %v7706, %v7707
  %v7727 = vsel %vm6480, %v7705, %v7706
  %v7728 = vsel %vm6480, %v7704, %v7705
  %v7729 = vsel %vm6480, %v7703, %v7704
  %v7730 = vsel %vm6480, %v7716, %v7703
  %v7731 = vperm.slane %v7521, 2
  %v7732 = vmul.f32 %v7729, %v7731
  %v7733 = vmul.f32 %v7728, %v7731
  %v7734 = vmul.f32 %v7727, %v7731
  %v7735 = vmul.f32 %v7726, %v7731
  %v7736 = vmul.f32 %v7725, %v7731
  %v7737 = vmul.f32 %v7724, %v7731
  %v7738 = vmul.f32 %v7723, %v7731
  %v7739 = vmul.f32 %v7722, %v7731
  %v7740 = vadd.f32 %v7695, %v7732
  %v7741 = vadd.f32 %v7696, %v7733
  %v7742 = vadd.f32 %v7697, %v7734
  %v7743 = vadd.f32 %v7698, %v7735
  %v7744 = vadd.f32 %v7699, %v7736
  %v7745 = vadd.f32 %v7700, %v7737
  %v7746 = vadd.f32 %v7701, %v7738
  %v7747 = vadd.f32 %v7702, %v7739
  %v7748 = vperm.slane %v7522, 2
  %v7749 = vmul.f32 %v7727, %v7748
  %v7750 = vmul.f32 %v7726, %v7748
  %v7751 = vmul.f32 %v7725, %v7748
  %v7752 = vmul.f32 %v7724, %v7748
  %v7753 = vmul.f32 %v7723, %v7748
  %v7754 = vmul.f32 %v7722, %v7748
  %v7755 = vmul.f32 %v7721, %v7748
  %v7756 = vmul.f32 %v7720, %v7748
  %v7757 = vadd.f32 %v7740, %v7749
  %v7758 = vadd.f32 %v7741, %v7750
  %v7759 = vadd.f32 %v7742, %v7751
  %v7760 = vadd.f32 %v7743, %v7752
  %v7761 = vadd.f32 %v7744, %v7753
  %v7762 = vadd.f32 %v7745, %v7754
  %v7763 = vadd.f32 %v7746, %v7755
  %v7764 = vadd.f32 %v7747, %v7756
  %v7765 = vperm.slane %v7523, 2
  %v7766 = vmul.f32 %v7725, %v7765
  %v7767 = vmul.f32 %v7724, %v7765
  %v7768 = vmul.f32 %v7723, %v7765
  %v7769 = vmul.f32 %v7722, %v7765
  %v7770 = vmul.f32 %v7721, %v7765
  %v7771 = vmul.f32 %v7720, %v7765
  %v7772 = vmul.f32 %v7719, %v7765
  %v7773 = vmul.f32 %v7718, %v7765
  %v7774 = vadd.f32 %v7757, %v7766
  %v7775 = vadd.f32 %v7758, %v7767
  %v7776 = vadd.f32 %v7759, %v7768
  %v7777 = vadd.f32 %v7760, %v7769
  %v7778 = vadd.f32 %v7761, %v7770
  %v7779 = vadd.f32 %v7762, %v7771
  %v7780 = vadd.f32 %v7763, %v7772
  %v7781 = vadd.f32 %v7764, %v7773
  %v7782 = vperm.slane %v7524, 2
  %v7783 = vmul.f32 %v7723, %v7782
  %v7784 = vmul.f32 %v7722, %v7782
  %v7785 = vmul.f32 %v7721, %v7782
  %v7786 = vmul.f32 %v7720, %v7782
  %v7787 = vmul.f32 %v7719, %v7782
  %v7788 = vmul.f32 %v7718, %v7782
  %v7789 = vmul.f32 %v7717, %v7782
  %v7790 = vmul.f32 %v7730, %v7782
  %v7791 = vadd.f32 %v7774, %v7783
  %v7792 = vadd.f32 %v7775, %v7784
  %v7793 = vadd.f32 %v7776, %v7785
  %v7794 = vadd.f32 %v7777, %v7786
  %v7795 = vadd.f32 %v7778, %v7787
  %v7796 = vadd.f32 %v7779, %v7788
  %v7797 = vadd.f32 %v7780, %v7789
  %v7798 = vadd.f32 %v7781, %v7790
  %v7799 = vrot.slane %v7525, 3
  %v7800 = vrot.slane %v7526, 3
  %v7801 = vrot.slane %v7527, 3
  %v7802 = vrot.slane %v7528, 3
  %v7803 = vrot.slane %v7529, 3
  %v7804 = vrot.slane %v7530, 3
  %v7805 = vrot.slane %v7531, 3
  %v7806 = vrot.slane %v7532, 3
  %v7807 = vrot.slane %v7533, 3
  %v7808 = vrot.slane %v7534, 3
  %v7809 = vrot.slane %v7535, 3
  %v7810 = vrot.slane %v7536, 3
  %v7811 = vrot.slane %v7537, 3
  %v7812 = vrot.slane %v7538, 3
  %v7813 = vsel %vm6577, %v7811, %v7812
  %v7814 = vsel %vm6577, %v7810, %v7811
  %v7815 = vsel %vm6577, %v7809, %v7810
  %v7816 = vsel %vm6577, %v7808, %v7809
  %v7817 = vsel %vm6577, %v7807, %v7808
  %v7818 = vsel %vm6577, %v7806, %v7807
  %v7819 = vsel %vm6577, %v7805, %v7806
  %v7820 = vsel %vm6577, %v7804, %v7805
  %v7821 = vsel %vm6577, %v7803, %v7804
  %v7822 = vsel %vm6577, %v7802, %v7803
  %v7823 = vsel %vm6577, %v7801, %v7802
  %v7824 = vsel %vm6577, %v7800, %v7801
  %v7825 = vsel %vm6577, %v7799, %v7800
  %v7826 = vsel %vm6577, %v7812, %v7799
  %v7827 = vperm.slane %v7521, 3
  %v7828 = vmul.f32 %v7825, %v7827
  %v7829 = vmul.f32 %v7824, %v7827
  %v7830 = vmul.f32 %v7823, %v7827
  %v7831 = vmul.f32 %v7822, %v7827
  %v7832 = vmul.f32 %v7821, %v7827
  %v7833 = vmul.f32 %v7820, %v7827
  %v7834 = vmul.f32 %v7819, %v7827
  %v7835 = vmul.f32 %v7818, %v7827
  %v7836 = vadd.f32 %v7791, %v7828
  %v7837 = vadd.f32 %v7792, %v7829
  %v7838 = vadd.f32 %v7793, %v7830
  %v7839 = vadd.f32 %v7794, %v7831
  %v7840 = vadd.f32 %v7795, %v7832
  %v7841 = vadd.f32 %v7796, %v7833
  %v7842 = vadd.f32 %v7797, %v7834
  %v7843 = vadd.f32 %v7798, %v7835
  %v7844 = vperm.slane %v7522, 3
  %v7845 = vmul.f32 %v7823, %v7844
  %v7846 = vmul.f32 %v7822, %v7844
  %v7847 = vmul.f32 %v7821, %v7844
  %v7848 = vmul.f32 %v7820, %v7844
  %v7849 = vmul.f32 %v7819, %v7844
  %v7850 = vmul.f32 %v7818, %v7844
  %v7851 = vmul.f32 %v7817, %v7844
  %v7852 = vmul.f32 %v7816, %v7844
  %v7853 = vadd.f32 %v7836, %v7845
  %v7854 = vadd.f32 %v7837, %v7846
  %v7855 = vadd.f32 %v7838, %v7847
  %v7856 = vadd.f32 %v7839, %v7848
  %v7857 = vadd.f32 %v7840, %v7849
  %v7858 = vadd.f32 %v7841, %v7850
  %v7859 = vadd.f32 %v7842, %v7851
  %v7860 = vadd.f32 %v7843, %v7852
  %v7861 = vperm.slane %v7523, 3
  %v7862 = vmul.f32 %v7821, %v7861
  %v7863 = vmul.f32 %v7820, %v7861
  %v7864 = vmul.f32 %v7819, %v7861
  %v7865 = vmul.f32 %v7818, %v7861
  %v7866 = vmul.f32 %v7817, %v7861
  %v7867 = vmul.f32 %v7816, %v7861
  %v7868 = vmul.f32 %v7815, %v7861
  %v7869 = vmul.f32 %v7814, %v7861
  %v7870 = vadd.f32 %v7853, %v7862
  %v7871 = vadd.f32 %v7854, %v7863
  %v7872 = vadd.f32 %v7855, %v7864
  %v7873 = vadd.f32 %v7856, %v7865
  %v7874 = vadd.f32 %v7857, %v7866
  %v7875 = vadd.f32 %v7858, %v7867
  %v7876 = vadd.f32 %v7859, %v7868
  %v7877 = vadd.f32 %v7860, %v7869
  %v7878 = vperm.slane %v7524, 3
  %v7879 = vmul.f32 %v7819, %v7878
  %v7880 = vmul.f32 %v7818, %v7878
  %v7881 = vmul.f32 %v7817, %v7878
  %v7882 = vmul.f32 %v7816, %v7878
  %v7883 = vmul.f32 %v7815, %v7878
  %v7884 = vmul.f32 %v7814, %v7878
  %v7885 = vmul.f32 %v7813, %v7878
  %v7886 = vmul.f32 %v7826, %v7878
  %v7887 = vadd.f32 %v7870, %v7879
  %v7888 = vadd.f32 %v7871, %v7880
  %v7889 = vadd.f32 %v7872, %v7881
  %v7890 = vadd.f32 %v7873, %v7882
  %v7891 = vadd.f32 %v7874, %v7883
  %v7892 = vadd.f32 %v7875, %v7884
  %v7893 = vadd.f32 %v7876, %v7885
  %v7894 = vadd.f32 %v7877, %v7886
  %7895 = vst.msk [vmem:[#allocation4 + $0x100] sm:$0xff] %vm1631, %v7887
  %7896 = vst.msk [vmem:[#allocation4 + $0x108] sm:$0xff] %vm1631, %v7888
  %7897 = vst.msk [vmem:[#allocation4 + $0x110] sm:$0xff] %vm1631, %v7889
  %7898 = vst.msk [vmem:[#allocation4 + $0x118] sm:$0xff] %vm1631, %v7890
  %7899 = vst.msk [vmem:[#allocation4 + $0x120] sm:$0xff] %vm1631, %v7891
  %7900 = vst.msk [vmem:[#allocation4 + $0x128] sm:$0xff] %vm1631, %v7892
  %7901 = vst.msk [vmem:[#allocation4 + $0x130] sm:$0xff] %vm1631, %v7893
  %7902 = vst.msk [vmem:[#allocation4 + $0x138] sm:$0xff] %vm1631, %v7894
  %v7903 = vld [vmem:[%s4763 + $0x40] sm:$0xff]
  %v7904 = vld [vmem:[%s4763 + $0x48] sm:$0xff]
  %v7905 = vld [vmem:[%s4763 + $0x50] sm:$0xff]
  %v7906 = vld [vmem:[%s4763 + $0x58] sm:$0xff]
  %v7907 = vld [vmem:[%s4763 + $0x60] sm:$0xff]
  %v7908 = vld [vmem:[%s4763 + $0x68] sm:$0xff]
  %v7909 = vld [vmem:[%s4763 + $0x70] sm:$0xff]
  %v7910 = vld [vmem:[%s4763 + $0x78] sm:$0xff]
  %v7911 = vld [vmem:[%s4763 + $0x80] sm:$0xff]
  %v7912 = vld [vmem:[%s4763 + $0x88] sm:$0xff]
  %v7913 = vld [vmem:[%s4763 + $0x90] sm:$0xff]
  %v7914 = vld [vmem:[%s4763 + $0x98] sm:$0xff]
  %v7915 = vld [vmem:[%s4763 + $0xa0] sm:$0xff]
  %v7916 = vld [vmem:[%s4763 + $0xa8] sm:$0xff]
  %v7917 = vmul.f32 %v7903, %v7539
  %v7918 = vmul.f32 %v7904, %v7539
  %v7919 = vmul.f32 %v7905, %v7539
  %v7920 = vmul.f32 %v7906, %v7539
  %v7921 = vmul.f32 %v7907, %v7539
  %v7922 = vmul.f32 %v7908, %v7539
  %v7923 = vmul.f32 %v7909, %v7539
  %v7924 = vmul.f32 %v7910, %v7539
  %v7925 = vadd.f32 %v7917, 0.0
  %v7926 = vadd.f32 %v7918, 0.0
  %v7927 = vadd.f32 %v7919, 0.0
  %v7928 = vadd.f32 %v7920, 0.0
  %v7929 = vadd.f32 %v7921, 0.0
  %v7930 = vadd.f32 %v7922, 0.0
  %v7931 = vadd.f32 %v7923, 0.0
  %v7932 = vadd.f32 %v7924, 0.0
  %v7933 = vmul.f32 %v7905, %v7556
  %v7934 = vmul.f32 %v7906, %v7556
  %v7935 = vmul.f32 %v7907, %v7556
  %v7936 = vmul.f32 %v7908, %v7556
  %v7937 = vmul.f32 %v7909, %v7556
  %v7938 = vmul.f32 %v7910, %v7556
  %v7939 = vmul.f32 %v7911, %v7556
  %v7940 = vmul.f32 %v7912, %v7556
  %v7941 = vadd.f32 %v7925, %v7933
  %v7942 = vadd.f32 %v7926, %v7934
  %v7943 = vadd.f32 %v7927, %v7935
  %v7944 = vadd.f32 %v7928, %v7936
  %v7945 = vadd.f32 %v7929, %v7937
  %v7946 = vadd.f32 %v7930, %v7938
  %v7947 = vadd.f32 %v7931, %v7939
  %v7948 = vadd.f32 %v7932, %v7940
  %v7949 = vmul.f32 %v7907, %v7573
  %v7950 = vmul.f32 %v7908, %v7573
  %v7951 = vmul.f32 %v7909, %v7573
  %v7952 = vmul.f32 %v7910, %v7573
  %v7953 = vmul.f32 %v7911, %v7573
  %v7954 = vmul.f32 %v7912, %v7573
  %v7955 = vmul.f32 %v7913, %v7573
  %v7956 = vmul.f32 %v7914, %v7573
  %v7957 = vadd.f32 %v7941, %v7949
  %v7958 = vadd.f32 %v7942, %v7950
  %v7959 = vadd.f32 %v7943, %v7951
  %v7960 = vadd.f32 %v7944, %v7952
  %v7961 = vadd.f32 %v7945, %v7953
  %v7962 = vadd.f32 %v7946, %v7954
  %v7963 = vadd.f32 %v7947, %v7955
  %v7964 = vadd.f32 %v7948, %v7956
  %v7965 = vmul.f32 %v7909, %v7590
  %v7966 = vmul.f32 %v7910, %v7590
  %v7967 = vmul.f32 %v7911, %v7590
  %v7968 = vmul.f32 %v7912, %v7590
  %v7969 = vmul.f32 %v7913, %v7590
  %v7970 = vmul.f32 %v7914, %v7590
  %v7971 = vmul.f32 %v7915, %v7590
  %v7972 = vmul.f32 %v7916, %v7590
  %v7973 = vadd.f32 %v7957, %v7965
  %v7974 = vadd.f32 %v7958, %v7966
  %v7975 = vadd.f32 %v7959, %v7967
  %v7976 = vadd.f32 %v7960, %v7968
  %v7977 = vadd.f32 %v7961, %v7969
  %v7978 = vadd.f32 %v7962, %v7970
  %v7979 = vadd.f32 %v7963, %v7971
  %v7980 = vadd.f32 %v7964, %v7972
  %v7981 = vrot.slane %v7903, 1
  %v7982 = vrot.slane %v7904, 1
  %v7983 = vrot.slane %v7905, 1
  %v7984 = vrot.slane %v7906, 1
  %v7985 = vrot.slane %v7907, 1
  %v7986 = vrot.slane %v7908, 1
  %v7987 = vrot.slane %v7909, 1
  %v7988 = vrot.slane %v7910, 1
  %v7989 = vrot.slane %v7911, 1
  %v7990 = vrot.slane %v7912, 1
  %v7991 = vrot.slane %v7913, 1
  %v7992 = vrot.slane %v7914, 1
  %v7993 = vrot.slane %v7915, 1
  %v7994 = vrot.slane %v7916, 1
  %v7995 = vsel %vm6383, %v7993, %v7994
  %v7996 = vsel %vm6383, %v7992, %v7993
  %v7997 = vsel %vm6383, %v7991, %v7992
  %v7998 = vsel %vm6383, %v7990, %v7991
  %v7999 = vsel %vm6383, %v7989, %v7990
  %v8000 = vsel %vm6383, %v7988, %v7989
  %v8001 = vsel %vm6383, %v7987, %v7988
  %v8002 = vsel %vm6383, %v7986, %v7987
  %v8003 = vsel %vm6383, %v7985, %v7986
  %v8004 = vsel %vm6383, %v7984, %v7985
  %v8005 = vsel %vm6383, %v7983, %v7984
  %v8006 = vsel %vm6383, %v7982, %v7983
  %v8007 = vsel %vm6383, %v7981, %v7982
  %v8008 = vsel %vm6383, %v7994, %v7981
  %v8009 = vmul.f32 %v8007, %v7635
  %v8010 = vmul.f32 %v8006, %v7635
  %v8011 = vmul.f32 %v8005, %v7635
  %v8012 = vmul.f32 %v8004, %v7635
  %v8013 = vmul.f32 %v8003, %v7635
  %v8014 = vmul.f32 %v8002, %v7635
  %v8015 = vmul.f32 %v8001, %v7635
  %v8016 = vmul.f32 %v8000, %v7635
  %v8017 = vadd.f32 %v7973, %v8009
  %v8018 = vadd.f32 %v7974, %v8010
  %v8019 = vadd.f32 %v7975, %v8011
  %v8020 = vadd.f32 %v7976, %v8012
  %v8021 = vadd.f32 %v7977, %v8013
  %v8022 = vadd.f32 %v7978, %v8014
  %v8023 = vadd.f32 %v7979, %v8015
  %v8024 = vadd.f32 %v7980, %v8016
  %v8025 = vmul.f32 %v8005, %v7652
  %v8026 = vmul.f32 %v8004, %v7652
  %v8027 = vmul.f32 %v8003, %v7652
  %v8028 = vmul.f32 %v8002, %v7652
  %v8029 = vmul.f32 %v8001, %v7652
  %v8030 = vmul.f32 %v8000, %v7652
  %v8031 = vmul.f32 %v7999, %v7652
  %v8032 = vmul.f32 %v7998, %v7652
  %v8033 = vadd.f32 %v8017, %v8025
  %v8034 = vadd.f32 %v8018, %v8026
  %v8035 = vadd.f32 %v8019, %v8027
  %v8036 = vadd.f32 %v8020, %v8028
  %v8037 = vadd.f32 %v8021, %v8029
  %v8038 = vadd.f32 %v8022, %v8030
  %v8039 = vadd.f32 %v8023, %v8031
  %v8040 = vadd.f32 %v8024, %v8032
  %v8041 = vmul.f32 %v8003, %v7669
  %v8042 = vmul.f32 %v8002, %v7669
  %v8043 = vmul.f32 %v8001, %v7669
  %v8044 = vmul.f32 %v8000, %v7669
  %v8045 = vmul.f32 %v7999, %v7669
  %v8046 = vmul.f32 %v7998, %v7669
  %v8047 = vmul.f32 %v7997, %v7669
  %v8048 = vmul.f32 %v7996, %v7669
  %v8049 = vadd.f32 %v8033, %v8041
  %v8050 = vadd.f32 %v8034, %v8042
  %v8051 = vadd.f32 %v8035, %v8043
  %v8052 = vadd.f32 %v8036, %v8044
  %v8053 = vadd.f32 %v8037, %v8045
  %v8054 = vadd.f32 %v8038, %v8046
  %v8055 = vadd.f32 %v8039, %v8047
  %v8056 = vadd.f32 %v8040, %v8048
  %v8057 = vmul.f32 %v8001, %v7686
  %v8058 = vmul.f32 %v8000, %v7686
  %v8059 = vmul.f32 %v7999, %v7686
  %v8060 = vmul.f32 %v7998, %v7686
  %v8061 = vmul.f32 %v7997, %v7686
  %v8062 = vmul.f32 %v7996, %v7686
  %v8063 = vmul.f32 %v7995, %v7686
  %v8064 = vmul.f32 %v8008, %v7686
  %v8065 = vadd.f32 %v8049, %v8057
  %v8066 = vadd.f32 %v8050, %v8058
  %v8067 = vadd.f32 %v8051, %v8059
  %v8068 = vadd.f32 %v8052, %v8060
  %v8069 = vadd.f32 %v8053, %v8061
  %v8070 = vadd.f32 %v8054, %v8062
  %v8071 = vadd.f32 %v8055, %v8063
  %v8072 = vadd.f32 %v8056, %v8064
  %v8073 = vrot.slane %v7903, 2
  %v8074 = vrot.slane %v7904, 2
  %v8075 = vrot.slane %v7905, 2
  %v8076 = vrot.slane %v7906, 2
  %v8077 = vrot.slane %v7907, 2
  %v8078 = vrot.slane %v7908, 2
  %v8079 = vrot.slane %v7909, 2
  %v8080 = vrot.slane %v7910, 2
  %v8081 = vrot.slane %v7911, 2
  %v8082 = vrot.slane %v7912, 2
  %v8083 = vrot.slane %v7913, 2
  %v8084 = vrot.slane %v7914, 2
  %v8085 = vrot.slane %v7915, 2
  %v8086 = vrot.slane %v7916, 2
  %v8087 = vsel %vm6480, %v8085, %v8086
  %v8088 = vsel %vm6480, %v8084, %v8085
  %v8089 = vsel %vm6480, %v8083, %v8084
  %v8090 = vsel %vm6480, %v8082, %v8083
  %v8091 = vsel %vm6480, %v8081, %v8082
  %v8092 = vsel %vm6480, %v8080, %v8081
  %v8093 = vsel %vm6480, %v8079, %v8080
  %v8094 = vsel %vm6480, %v8078, %v8079
  %v8095 = vsel %vm6480, %v8077, %v8078
  %v8096 = vsel %vm6480, %v8076, %v8077
  %v8097 = vsel %vm6480, %v8075, %v8076
  %v8098 = vsel %vm6480, %v8074, %v8075
  %v8099 = vsel %vm6480, %v8073, %v8074
  %v8100 = vsel %vm6480, %v8086, %v8073
  %v8101 = vmul.f32 %v8099, %v7731
  %v8102 = vmul.f32 %v8098, %v7731
  %v8103 = vmul.f32 %v8097, %v7731
  %v8104 = vmul.f32 %v8096, %v7731
  %v8105 = vmul.f32 %v8095, %v7731
  %v8106 = vmul.f32 %v8094, %v7731
  %v8107 = vmul.f32 %v8093, %v7731
  %v8108 = vmul.f32 %v8092, %v7731
  %v8109 = vadd.f32 %v8065, %v8101
  %v8110 = vadd.f32 %v8066, %v8102
  %v8111 = vadd.f32 %v8067, %v8103
  %v8112 = vadd.f32 %v8068, %v8104
  %v8113 = vadd.f32 %v8069, %v8105
  %v8114 = vadd.f32 %v8070, %v8106
  %v8115 = vadd.f32 %v8071, %v8107
  %v8116 = vadd.f32 %v8072, %v8108
  %v8117 = vmul.f32 %v8097, %v7748
  %v8118 = vmul.f32 %v8096, %v7748
  %v8119 = vmul.f32 %v8095, %v7748
  %v8120 = vmul.f32 %v8094, %v7748
  %v8121 = vmul.f32 %v8093, %v7748
  %v8122 = vmul.f32 %v8092, %v7748
  %v8123 = vmul.f32 %v8091, %v7748
  %v8124 = vmul.f32 %v8090, %v7748
  %v8125 = vadd.f32 %v8109, %v8117
  %v8126 = vadd.f32 %v8110, %v8118
  %v8127 = vadd.f32 %v8111, %v8119
  %v8128 = vadd.f32 %v8112, %v8120
  %v8129 = vadd.f32 %v8113, %v8121
  %v8130 = vadd.f32 %v8114, %v8122
  %v8131 = vadd.f32 %v8115, %v8123
  %v8132 = vadd.f32 %v8116, %v8124
  %v8133 = vmul.f32 %v8095, %v7765
  %v8134 = vmul.f32 %v8094, %v7765
  %v8135 = vmul.f32 %v8093, %v7765
  %v8136 = vmul.f32 %v8092, %v7765
  %v8137 = vmul.f32 %v8091, %v7765
  %v8138 = vmul.f32 %v8090, %v7765
  %v8139 = vmul.f32 %v8089, %v7765
  %v8140 = vmul.f32 %v8088, %v7765
  %v8141 = vadd.f32 %v8125, %v8133
  %v8142 = vadd.f32 %v8126, %v8134
  %v8143 = vadd.f32 %v8127, %v8135
  %v8144 = vadd.f32 %v8128, %v8136
  %v8145 = vadd.f32 %v8129, %v8137
  %v8146 = vadd.f32 %v8130, %v8138
  %v8147 = vadd.f32 %v8131, %v8139
  %v8148 = vadd.f32 %v8132, %v8140
  %v8149 = vmul.f32 %v8093, %v7782
  %v8150 = vmul.f32 %v8092, %v7782
  %v8151 = vmul.f32 %v8091, %v7782
  %v8152 = vmul.f32 %v8090, %v7782
  %v8153 = vmul.f32 %v8089, %v7782
  %v8154 = vmul.f32 %v8088, %v7782
  %v8155 = vmul.f32 %v8087, %v7782
  %v8156 = vmul.f32 %v8100, %v7782
  %v8157 = vadd.f32 %v8141, %v8149
  %v8158 = vadd.f32 %v8142, %v8150
  %v8159 = vadd.f32 %v8143, %v8151
  %v8160 = vadd.f32 %v8144, %v8152
  %v8161 = vadd.f32 %v8145, %v8153
  %v8162 = vadd.f32 %v8146, %v8154
  %v8163 = vadd.f32 %v8147, %v8155
  %v8164 = vadd.f32 %v8148, %v8156
  %v8165 = vrot.slane %v7903, 3
  %v8166 = vrot.slane %v7904, 3
  %v8167 = vrot.slane %v7905, 3
  %v8168 = vrot.slane %v7906, 3
  %v8169 = vrot.slane %v7907, 3
  %v8170 = vrot.slane %v7908, 3
  %v8171 = vrot.slane %v7909, 3
  %v8172 = vrot.slane %v7910, 3
  %v8173 = vrot.slane %v7911, 3
  %v8174 = vrot.slane %v7912, 3
  %v8175 = vrot.slane %v7913, 3
  %v8176 = vrot.slane %v7914, 3
  %v8177 = vrot.slane %v7915, 3
  %v8178 = vrot.slane %v7916, 3
  %v8179 = vsel %vm6577, %v8177, %v8178
  %v8180 = vsel %vm6577, %v8176, %v8177
  %v8181 = vsel %vm6577, %v8175, %v8176
  %v8182 = vsel %vm6577, %v8174, %v8175
  %v8183 = vsel %vm6577, %v8173, %v8174
  %v8184 = vsel %vm6577, %v8172, %v8173
  %v8185 = vsel %vm6577, %v8171, %v8172
  %v8186 = vsel %vm6577, %v8170, %v8171
  %v8187 = vsel %vm6577, %v8169, %v8170
  %v8188 = vsel %vm6577, %v8168, %v8169
  %v8189 = vsel %vm6577, %v8167, %v8168
  %v8190 = vsel %vm6577, %v8166, %v8167
  %v8191 = vsel %vm6577, %v8165, %v8166
  %v8192 = vsel %vm6577, %v8178, %v8165
  %v8193 = vmul.f32 %v8191, %v7827
  %v8194 = vmul.f32 %v8190, %v7827
  %v8195 = vmul.f32 %v8189, %v7827
  %v8196 = vmul.f32 %v8188, %v7827
  %v8197 = vmul.f32 %v8187, %v7827
  %v8198 = vmul.f32 %v8186, %v7827
  %v8199 = vmul.f32 %v8185, %v7827
  %v8200 = vmul.f32 %v8184, %v7827
  %v8201 = vadd.f32 %v8157, %v8193
  %v8202 = vadd.f32 %v8158, %v8194
  %v8203 = vadd.f32 %v8159, %v8195
  %v8204 = vadd.f32 %v8160, %v8196
  %v8205 = vadd.f32 %v8161, %v8197
  %v8206 = vadd.f32 %v8162, %v8198
  %v8207 = vadd.f32 %v8163, %v8199
  %v8208 = vadd.f32 %v8164, %v8200
  %v8209 = vmul.f32 %v8189, %v7844
  %v8210 = vmul.f32 %v8188, %v7844
  %v8211 = vmul.f32 %v8187, %v7844
  %v8212 = vmul.f32 %v8186, %v7844
  %v8213 = vmul.f32 %v8185, %v7844
  %v8214 = vmul.f32 %v8184, %v7844
  %v8215 = vmul.f32 %v8183, %v7844
  %v8216 = vmul.f32 %v8182, %v7844
  %v8217 = vadd.f32 %v8201, %v8209
  %v8218 = vadd.f32 %v8202, %v8210
  %v8219 = vadd.f32 %v8203, %v8211
  %v8220 = vadd.f32 %v8204, %v8212
  %v8221 = vadd.f32 %v8205, %v8213
  %v8222 = vadd.f32 %v8206, %v8214
  %v8223 = vadd.f32 %v8207, %v8215
  %v8224 = vadd.f32 %v8208, %v8216
  %v8225 = vmul.f32 %v8187, %v7861
  %v8226 = vmul.f32 %v8186, %v7861
  %v8227 = vmul.f32 %v8185, %v7861
  %v8228 = vmul.f32 %v8184, %v7861
  %v8229 = vmul.f32 %v8183, %v7861
  %v8230 = vmul.f32 %v8182, %v7861
  %v8231 = vmul.f32 %v8181, %v7861
  %v8232 = vmul.f32 %v8180, %v7861
  %v8233 = vadd.f32 %v8217, %v8225
  %v8234 = vadd.f32 %v8218, %v8226
  %v8235 = vadd.f32 %v8219, %v8227
  %v8236 = vadd.f32 %v8220, %v8228
  %v8237 = vadd.f32 %v8221, %v8229
  %v8238 = vadd.f32 %v8222, %v8230
  %v8239 = vadd.f32 %v8223, %v8231
  %v8240 = vadd.f32 %v8224, %v8232
  %v8241 = vmul.f32 %v8185, %v7878
  %v8242 = vmul.f32 %v8184, %v7878
  %v8243 = vmul.f32 %v8183, %v7878
  %v8244 = vmul.f32 %v8182, %v7878
  %v8245 = vmul.f32 %v8181, %v7878
  %v8246 = vmul.f32 %v8180, %v7878
  %v8247 = vmul.f32 %v8179, %v7878
  %v8248 = vmul.f32 %v8192, %v7878
  %v8249 = vadd.f32 %v8233, %v8241
  %v8250 = vadd.f32 %v8234, %v8242
  %v8251 = vadd.f32 %v8235, %v8243
  %v8252 = vadd.f32 %v8236, %v8244
  %v8253 = vadd.f32 %v8237, %v8245
  %v8254 = vadd.f32 %v8238, %v8246
  %v8255 = vadd.f32 %v8239, %v8247
  %v8256 = vadd.f32 %v8240, %v8248
  %8257 = vst.msk [vmem:[#allocation4 + $0x140] sm:$0xff] %vm1631, %v8249
  %8258 = vst.msk [vmem:[#allocation4 + $0x148] sm:$0xff] %vm1631, %v8250
  %8259 = vst.msk [vmem:[#allocation4 + $0x150] sm:$0xff] %vm1631, %v8251
  %8260 = vst.msk [vmem:[#allocation4 + $0x158] sm:$0xff] %vm1631, %v8252
  %8261 = vst.msk [vmem:[#allocation4 + $0x160] sm:$0xff] %vm1631, %v8253
  %8262 = vst.msk [vmem:[#allocation4 + $0x168] sm:$0xff] %vm1631, %v8254
  %8263 = vst.msk [vmem:[#allocation4 + $0x170] sm:$0xff] %vm1631, %v8255
  %8264 = vst.msk [vmem:[#allocation4 + $0x178] sm:$0xff] %vm1631, %v8256
  %v8265 = vld [vmem:[%s4763 + $0x80] sm:$0xff]
  %v8266 = vld [vmem:[%s4763 + $0x88] sm:$0xff]
  %v8267 = vld [vmem:[%s4763 + $0x90] sm:$0xff]
  %v8268 = vld [vmem:[%s4763 + $0x98] sm:$0xff]
  %v8269 = vld [vmem:[%s4763 + $0xa0] sm:$0xff]
  %v8270 = vld [vmem:[%s4763 + $0xa8] sm:$0xff]
  %v8271 = vld [vmem:[%s4763 + $0xb0] sm:$0xff]
  %v8272 = vld [vmem:[%s4763 + $0xb8] sm:$0xff]
  %v8273 = vld [vmem:[%s4763 + $0xc0] sm:$0xff]
  %v8274 = vld [vmem:[%s4763 + $0xc8] sm:$0xff]
  %v8275 = vld [vmem:[%s4763 + $0xd0] sm:$0xff]
  %v8276 = vld [vmem:[%s4763 + $0xd8] sm:$0xff]
  %v8277 = vld [vmem:[%s4763 + $0xe0] sm:$0xff]
  %v8278 = vld [vmem:[%s4763 + $0xe8] sm:$0xff]
  %v8279 = vmul.f32 %v8265, %v7539
  %v8280 = vmul.f32 %v8266, %v7539
  %v8281 = vmul.f32 %v8267, %v7539
  %v8282 = vmul.f32 %v8268, %v7539
  %v8283 = vmul.f32 %v8269, %v7539
  %v8284 = vmul.f32 %v8270, %v7539
  %v8285 = vmul.f32 %v8271, %v7539
  %v8286 = vmul.f32 %v8272, %v7539
  %v8287 = vadd.f32 %v8279, 0.0
  %v8288 = vadd.f32 %v8280, 0.0
  %v8289 = vadd.f32 %v8281, 0.0
  %v8290 = vadd.f32 %v8282, 0.0
  %v8291 = vadd.f32 %v8283, 0.0
  %v8292 = vadd.f32 %v8284, 0.0
  %v8293 = vadd.f32 %v8285, 0.0
  %v8294 = vadd.f32 %v8286, 0.0
  %v8295 = vmul.f32 %v8267, %v7556
  %v8296 = vmul.f32 %v8268, %v7556
  %v8297 = vmul.f32 %v8269, %v7556
  %v8298 = vmul.f32 %v8270, %v7556
  %v8299 = vmul.f32 %v8271, %v7556
  %v8300 = vmul.f32 %v8272, %v7556
  %v8301 = vmul.f32 %v8273, %v7556
  %v8302 = vmul.f32 %v8274, %v7556
  %v8303 = vadd.f32 %v8287, %v8295
  %v8304 = vadd.f32 %v8288, %v8296
  %v8305 = vadd.f32 %v8289, %v8297
  %v8306 = vadd.f32 %v8290, %v8298
  %v8307 = vadd.f32 %v8291, %v8299
  %v8308 = vadd.f32 %v8292, %v8300
  %v8309 = vadd.f32 %v8293, %v8301
  %v8310 = vadd.f32 %v8294, %v8302
  %v8311 = vmul.f32 %v8269, %v7573
  %v8312 = vmul.f32 %v8270, %v7573
  %v8313 = vmul.f32 %v8271, %v7573
  %v8314 = vmul.f32 %v8272, %v7573
  %v8315 = vmul.f32 %v8273, %v7573
  %v8316 = vmul.f32 %v8274, %v7573
  %v8317 = vmul.f32 %v8275, %v7573
  %v8318 = vmul.f32 %v8276, %v7573
  %v8319 = vadd.f32 %v8303, %v8311
  %v8320 = vadd.f32 %v8304, %v8312
  %v8321 = vadd.f32 %v8305, %v8313
  %v8322 = vadd.f32 %v8306, %v8314
  %v8323 = vadd.f32 %v8307, %v8315
  %v8324 = vadd.f32 %v8308, %v8316
  %v8325 = vadd.f32 %v8309, %v8317
  %v8326 = vadd.f32 %v8310, %v8318
  %v8327 = vmul.f32 %v8271, %v7590
  %v8328 = vmul.f32 %v8272, %v7590
  %v8329 = vmul.f32 %v8273, %v7590
  %v8330 = vmul.f32 %v8274, %v7590
  %v8331 = vmul.f32 %v8275, %v7590
  %v8332 = vmul.f32 %v8276, %v7590
  %v8333 = vmul.f32 %v8277, %v7590
  %v8334 = vmul.f32 %v8278, %v7590
  %v8335 = vadd.f32 %v8319, %v8327
  %v8336 = vadd.f32 %v8320, %v8328
  %v8337 = vadd.f32 %v8321, %v8329
  %v8338 = vadd.f32 %v8322, %v8330
  %v8339 = vadd.f32 %v8323, %v8331
  %v8340 = vadd.f32 %v8324, %v8332
  %v8341 = vadd.f32 %v8325, %v8333
  %v8342 = vadd.f32 %v8326, %v8334
  %v8343 = vrot.slane %v8265, 1
  %v8344 = vrot.slane %v8266, 1
  %v8345 = vrot.slane %v8267, 1
  %v8346 = vrot.slane %v8268, 1
  %v8347 = vrot.slane %v8269, 1
  %v8348 = vrot.slane %v8270, 1
  %v8349 = vrot.slane %v8271, 1
  %v8350 = vrot.slane %v8272, 1
  %v8351 = vrot.slane %v8273, 1
  %v8352 = vrot.slane %v8274, 1
  %v8353 = vrot.slane %v8275, 1
  %v8354 = vrot.slane %v8276, 1
  %v8355 = vrot.slane %v8277, 1
  %v8356 = vrot.slane %v8278, 1
  %v8357 = vsel %vm6383, %v8355, %v8356
  %v8358 = vsel %vm6383, %v8354, %v8355
  %v8359 = vsel %vm6383, %v8353, %v8354
  %v8360 = vsel %vm6383, %v8352, %v8353
  %v8361 = vsel %vm6383, %v8351, %v8352
  %v8362 = vsel %vm6383, %v8350, %v8351
  %v8363 = vsel %vm6383, %v8349, %v8350
  %v8364 = vsel %vm6383, %v8348, %v8349
  %v8365 = vsel %vm6383, %v8347, %v8348
  %v8366 = vsel %vm6383, %v8346, %v8347
  %v8367 = vsel %vm6383, %v8345, %v8346
  %v8368 = vsel %vm6383, %v8344, %v8345
  %v8369 = vsel %vm6383, %v8343, %v8344
  %v8370 = vsel %vm6383, %v8356, %v8343
  %v8371 = vmul.f32 %v8369, %v7635
  %v8372 = vmul.f32 %v8368, %v7635
  %v8373 = vmul.f32 %v8367, %v7635
  %v8374 = vmul.f32 %v8366, %v7635
  %v8375 = vmul.f32 %v8365, %v7635
  %v8376 = vmul.f32 %v8364, %v7635
  %v8377 = vmul.f32 %v8363, %v7635
  %v8378 = vmul.f32 %v8362, %v7635
  %v8379 = vadd.f32 %v8335, %v8371
  %v8380 = vadd.f32 %v8336, %v8372
  %v8381 = vadd.f32 %v8337, %v8373
  %v8382 = vadd.f32 %v8338, %v8374
  %v8383 = vadd.f32 %v8339, %v8375
  %v8384 = vadd.f32 %v8340, %v8376
  %v8385 = vadd.f32 %v8341, %v8377
  %v8386 = vadd.f32 %v8342, %v8378
  %v8387 = vmul.f32 %v8367, %v7652
  %v8388 = vmul.f32 %v8366, %v7652
  %v8389 = vmul.f32 %v8365, %v7652
  %v8390 = vmul.f32 %v8364, %v7652
  %v8391 = vmul.f32 %v8363, %v7652
  %v8392 = vmul.f32 %v8362, %v7652
  %v8393 = vmul.f32 %v8361, %v7652
  %v8394 = vmul.f32 %v8360, %v7652
  %v8395 = vadd.f32 %v8379, %v8387
  %v8396 = vadd.f32 %v8380, %v8388
  %v8397 = vadd.f32 %v8381, %v8389
  %v8398 = vadd.f32 %v8382, %v8390
  %v8399 = vadd.f32 %v8383, %v8391
  %v8400 = vadd.f32 %v8384, %v8392
  %v8401 = vadd.f32 %v8385, %v8393
  %v8402 = vadd.f32 %v8386, %v8394
  %v8403 = vmul.f32 %v8365, %v7669
  %v8404 = vmul.f32 %v8364, %v7669
  %v8405 = vmul.f32 %v8363, %v7669
  %v8406 = vmul.f32 %v8362, %v7669
  %v8407 = vmul.f32 %v8361, %v7669
  %v8408 = vmul.f32 %v8360, %v7669
  %v8409 = vmul.f32 %v8359, %v7669
  %v8410 = vmul.f32 %v8358, %v7669
  %v8411 = vadd.f32 %v8395, %v8403
  %v8412 = vadd.f32 %v8396, %v8404
  %v8413 = vadd.f32 %v8397, %v8405
  %v8414 = vadd.f32 %v8398, %v8406
  %v8415 = vadd.f32 %v8399, %v8407
  %v8416 = vadd.f32 %v8400, %v8408
  %v8417 = vadd.f32 %v8401, %v8409
  %v8418 = vadd.f32 %v8402, %v8410
  %v8419 = vmul.f32 %v8363, %v7686
  %v8420 = vmul.f32 %v8362, %v7686
  %v8421 = vmul.f32 %v8361, %v7686
  %v8422 = vmul.f32 %v8360, %v7686
  %v8423 = vmul.f32 %v8359, %v7686
  %v8424 = vmul.f32 %v8358, %v7686
  %v8425 = vmul.f32 %v8357, %v7686
  %v8426 = vmul.f32 %v8370, %v7686
  %v8427 = vadd.f32 %v8411, %v8419
  %v8428 = vadd.f32 %v8412, %v8420
  %v8429 = vadd.f32 %v8413, %v8421
  %v8430 = vadd.f32 %v8414, %v8422
  %v8431 = vadd.f32 %v8415, %v8423
  %v8432 = vadd.f32 %v8416, %v8424
  %v8433 = vadd.f32 %v8417, %v8425
  %v8434 = vadd.f32 %v8418, %v8426
  %v8435 = vrot.slane %v8265, 2
  %v8436 = vrot.slane %v8266, 2
  %v8437 = vrot.slane %v8267, 2
  %v8438 = vrot.slane %v8268, 2
  %v8439 = vrot.slane %v8269, 2
  %v8440 = vrot.slane %v8270, 2
  %v8441 = vrot.slane %v8271, 2
  %v8442 = vrot.slane %v8272, 2
  %v8443 = vrot.slane %v8273, 2
  %v8444 = vrot.slane %v8274, 2
  %v8445 = vrot.slane %v8275, 2
  %v8446 = vrot.slane %v8276, 2
  %v8447 = vrot.slane %v8277, 2
  %v8448 = vrot.slane %v8278, 2
  %v8449 = vsel %vm6480, %v8447, %v8448
  %v8450 = vsel %vm6480, %v8446, %v8447
  %v8451 = vsel %vm6480, %v8445, %v8446
  %v8452 = vsel %vm6480, %v8444, %v8445
  %v8453 = vsel %vm6480, %v8443, %v8444
  %v8454 = vsel %vm6480, %v8442, %v8443
  %v8455 = vsel %vm6480, %v8441, %v8442
  %v8456 = vsel %vm6480, %v8440, %v8441
  %v8457 = vsel %vm6480, %v8439, %v8440
  %v8458 = vsel %vm6480, %v8438, %v8439
  %v8459 = vsel %vm6480, %v8437, %v8438
  %v8460 = vsel %vm6480, %v8436, %v8437
  %v8461 = vsel %vm6480, %v8435, %v8436
  %v8462 = vsel %vm6480, %v8448, %v8435
  %v8463 = vmul.f32 %v8461, %v7731
  %v8464 = vmul.f32 %v8460, %v7731
  %v8465 = vmul.f32 %v8459, %v7731
  %v8466 = vmul.f32 %v8458, %v7731
  %v8467 = vmul.f32 %v8457, %v7731
  %v8468 = vmul.f32 %v8456, %v7731
  %v8469 = vmul.f32 %v8455, %v7731
  %v8470 = vmul.f32 %v8454, %v7731
  %v8471 = vadd.f32 %v8427, %v8463
  %v8472 = vadd.f32 %v8428, %v8464
  %v8473 = vadd.f32 %v8429, %v8465
  %v8474 = vadd.f32 %v8430, %v8466
  %v8475 = vadd.f32 %v8431, %v8467
  %v8476 = vadd.f32 %v8432, %v8468
  %v8477 = vadd.f32 %v8433, %v8469
  %v8478 = vadd.f32 %v8434, %v8470
  %v8479 = vmul.f32 %v8459, %v7748
  %v8480 = vmul.f32 %v8458, %v7748
  %v8481 = vmul.f32 %v8457, %v7748
  %v8482 = vmul.f32 %v8456, %v7748
  %v8483 = vmul.f32 %v8455, %v7748
  %v8484 = vmul.f32 %v8454, %v7748
  %v8485 = vmul.f32 %v8453, %v7748
  %v8486 = vmul.f32 %v8452, %v7748
  %v8487 = vadd.f32 %v8471, %v8479
  %v8488 = vadd.f32 %v8472, %v8480
  %v8489 = vadd.f32 %v8473, %v8481
  %v8490 = vadd.f32 %v8474, %v8482
  %v8491 = vadd.f32 %v8475, %v8483
  %v8492 = vadd.f32 %v8476, %v8484
  %v8493 = vadd.f32 %v8477, %v8485
  %v8494 = vadd.f32 %v8478, %v8486
  %v8495 = vmul.f32 %v8457, %v7765
  %v8496 = vmul.f32 %v8456, %v7765
  %v8497 = vmul.f32 %v8455, %v7765
  %v8498 = vmul.f32 %v8454, %v7765
  %v8499 = vmul.f32 %v8453, %v7765
  %v8500 = vmul.f32 %v8452, %v7765
  %v8501 = vmul.f32 %v8451, %v7765
  %v8502 = vmul.f32 %v8450, %v7765
  %v8503 = vadd.f32 %v8487, %v8495
  %v8504 = vadd.f32 %v8488, %v8496
  %v8505 = vadd.f32 %v8489, %v8497
  %v8506 = vadd.f32 %v8490, %v8498
  %v8507 = vadd.f32 %v8491, %v8499
  %v8508 = vadd.f32 %v8492, %v8500
  %v8509 = vadd.f32 %v8493, %v8501
  %v8510 = vadd.f32 %v8494, %v8502
  %v8511 = vmul.f32 %v8455, %v7782
  %v8512 = vmul.f32 %v8454, %v7782
  %v8513 = vmul.f32 %v8453, %v7782
  %v8514 = vmul.f32 %v8452, %v7782
  %v8515 = vmul.f32 %v8451, %v7782
  %v8516 = vmul.f32 %v8450, %v7782
  %v8517 = vmul.f32 %v8449, %v7782
  %v8518 = vmul.f32 %v8462, %v7782
  %v8519 = vadd.f32 %v8503, %v8511
  %v8520 = vadd.f32 %v8504, %v8512
  %v8521 = vadd.f32 %v8505, %v8513
  %v8522 = vadd.f32 %v8506, %v8514
  %v8523 = vadd.f32 %v8507, %v8515
  %v8524 = vadd.f32 %v8508, %v8516
  %v8525 = vadd.f32 %v8509, %v8517
  %v8526 = vadd.f32 %v8510, %v8518
  %v8527 = vrot.slane %v8265, 3
  %v8528 = vrot.slane %v8266, 3
  %v8529 = vrot.slane %v8267, 3
  %v8530 = vrot.slane %v8268, 3
  %v8531 = vrot.slane %v8269, 3
  %v8532 = vrot.slane %v8270, 3
  %v8533 = vrot.slane %v8271, 3
  %v8534 = vrot.slane %v8272, 3
  %v8535 = vrot.slane %v8273, 3
  %v8536 = vrot.slane %v8274, 3
  %v8537 = vrot.slane %v8275, 3
  %v8538 = vrot.slane %v8276, 3
  %v8539 = vrot.slane %v8277, 3
  %v8540 = vrot.slane %v8278, 3
  %v8541 = vsel %vm6577, %v8539, %v8540
  %v8542 = vsel %vm6577, %v8538, %v8539
  %v8543 = vsel %vm6577, %v8537, %v8538
  %v8544 = vsel %vm6577, %v8536, %v8537
  %v8545 = vsel %vm6577, %v8535, %v8536
  %v8546 = vsel %vm6577, %v8534, %v8535
  %v8547 = vsel %vm6577, %v8533, %v8534
  %v8548 = vsel %vm6577, %v8532, %v8533
  %v8549 = vsel %vm6577, %v8531, %v8532
  %v8550 = vsel %vm6577, %v8530, %v8531
  %v8551 = vsel %vm6577, %v8529, %v8530
  %v8552 = vsel %vm6577, %v8528, %v8529
  %v8553 = vsel %vm6577, %v8527, %v8528
  %v8554 = vsel %vm6577, %v8540, %v8527
  %v8555 = vmul.f32 %v8553, %v7827
  %v8556 = vmul.f32 %v8552, %v7827
  %v8557 = vmul.f32 %v8551, %v7827
  %v8558 = vmul.f32 %v8550, %v7827
  %v8559 = vmul.f32 %v8549, %v7827
  %v8560 = vmul.f32 %v8548, %v7827
  %v8561 = vmul.f32 %v8547, %v7827
  %v8562 = vmul.f32 %v8546, %v7827
  %v8563 = vadd.f32 %v8519, %v8555
  %v8564 = vadd.f32 %v8520, %v8556
  %v8565 = vadd.f32 %v8521, %v8557
  %v8566 = vadd.f32 %v8522, %v8558
  %v8567 = vadd.f32 %v8523, %v8559
  %v8568 = vadd.f32 %v8524, %v8560
  %v8569 = vadd.f32 %v8525, %v8561
  %v8570 = vadd.f32 %v8526, %v8562
  %v8571 = vmul.f32 %v8551, %v7844
  %v8572 = vmul.f32 %v8550, %v7844
  %v8573 = vmul.f32 %v8549, %v7844
  %v8574 = vmul.f32 %v8548, %v7844
  %v8575 = vmul.f32 %v8547, %v7844
  %v8576 = vmul.f32 %v8546, %v7844
  %v8577 = vmul.f32 %v8545, %v7844
  %v8578 = vmul.f32 %v8544, %v7844
  %v8579 = vadd.f32 %v8563, %v8571
  %v8580 = vadd.f32 %v8564, %v8572
  %v8581 = vadd.f32 %v8565, %v8573
  %v8582 = vadd.f32 %v8566, %v8574
  %v8583 = vadd.f32 %v8567, %v8575
  %v8584 = vadd.f32 %v8568, %v8576
  %v8585 = vadd.f32 %v8569, %v8577
  %v8586 = vadd.f32 %v8570, %v8578
  %v8587 = vmul.f32 %v8549, %v7861
  %v8588 = vmul.f32 %v8548, %v7861
  %v8589 = vmul.f32 %v8547, %v7861
  %v8590 = vmul.f32 %v8546, %v7861
  %v8591 = vmul.f32 %v8545, %v7861
  %v8592 = vmul.f32 %v8544, %v7861
  %v8593 = vmul.f32 %v8543, %v7861
  %v8594 = vmul.f32 %v8542, %v7861
  %v8595 = vadd.f32 %v8579, %v8587
  %v8596 = vadd.f32 %v8580, %v8588
  %v8597 = vadd.f32 %v8581, %v8589
  %v8598 = vadd.f32 %v8582, %v8590
  %v8599 = vadd.f32 %v8583, %v8591
  %v8600 = vadd.f32 %v8584, %v8592
  %v8601 = vadd.f32 %v8585, %v8593
  %v8602 = vadd.f32 %v8586, %v8594
  %v8603 = vmul.f32 %v8547, %v7878
  %v8604 = vmul.f32 %v8546, %v7878
  %v8605 = vmul.f32 %v8545, %v7878
  %v8606 = vmul.f32 %v8544, %v7878
  %v8607 = vmul.f32 %v8543, %v7878
  %v8608 = vmul.f32 %v8542, %v7878
  %v8609 = vmul.f32 %v8541, %v7878
  %v8610 = vmul.f32 %v8554, %v7878
  %v8611 = vadd.f32 %v8595, %v8603
  %v8612 = vadd.f32 %v8596, %v8604
  %v8613 = vadd.f32 %v8597, %v8605
  %v8614 = vadd.f32 %v8598, %v8606
  %v8615 = vadd.f32 %v8599, %v8607
  %v8616 = vadd.f32 %v8600, %v8608
  %v8617 = vadd.f32 %v8601, %v8609
  %v8618 = vadd.f32 %v8602, %v8610
  %8619 = vst.msk [vmem:[#allocation4 + $0x180] sm:$0xff] %vm1631, %v8611
  %8620 = vst.msk [vmem:[#allocation4 + $0x188] sm:$0xff] %vm1631, %v8612
  %8621 = vst.msk [vmem:[#allocation4 + $0x190] sm:$0xff] %vm1631, %v8613
  %8622 = vst.msk [vmem:[#allocation4 + $0x198] sm:$0xff] %vm1631, %v8614
  %8623 = vst.msk [vmem:[#allocation4 + $0x1a0] sm:$0xff] %vm1631, %v8615
  %8624 = vst.msk [vmem:[#allocation4 + $0x1a8] sm:$0xff] %vm1631, %v8616
  %8625 = vst.msk [vmem:[#allocation4 + $0x1b0] sm:$0xff] %vm1631, %v8617
  %8626 = vst.msk [vmem:[#allocation4 + $0x1b8] sm:$0xff] %vm1631, %v8618
  %v8627 = vld [vmem:[%s4763 + $0xc0] sm:$0xff]
  %v8628 = vld [vmem:[%s4763 + $0xc8] sm:$0xff]
  %v8629 = vld [vmem:[%s4763 + $0xd0] sm:$0xff]
  %v8630 = vld [vmem:[%s4763 + $0xd8] sm:$0xff]
  %v8631 = vld [vmem:[%s4763 + $0xe0] sm:$0xff]
  %v8632 = vld [vmem:[%s4763 + $0xe8] sm:$0xff]
  %v8633 = vld [vmem:[%s4763 + $0xf0] sm:$0xff]
  %v8634 = vld [vmem:[%s4763 + $0xf8] sm:$0xff]
  %v8635 = vmul.f32 %v8627, %v7539
  %v8636 = vmul.f32 %v8628, %v7539
  %v8637 = vadd.f32 %v8635, 0.0
  %v8638 = vadd.f32 %v8636, 0.0
  %v8639 = vmul.f32 %v8629, %v7556
  %v8640 = vmul.f32 %v8630, %v7556
  %v8641 = vadd.f32 %v8637, %v8639
  %v8642 = vadd.f32 %v8638, %v8640
  %v8643 = vmul.f32 %v8631, %v7573
  %v8644 = vmul.f32 %v8632, %v7573
  %v8645 = vadd.f32 %v8641, %v8643
  %v8646 = vadd.f32 %v8642, %v8644
  %v8647 = vmul.f32 %v8633, %v7590
  %v8648 = vmul.f32 %v8634, %v7590
  %v8649 = vadd.f32 %v8645, %v8647
  %v8650 = vadd.f32 %v8646, %v8648
  %v8651 = vrot.slane %v8627, 1
  %v8652 = vrot.slane %v8628, 1
  %v8653 = vrot.slane %v8629, 1
  %v8654 = vrot.slane %v8630, 1
  %v8655 = vrot.slane %v8631, 1
  %v8656 = vrot.slane %v8632, 1
  %v8657 = vrot.slane %v8633, 1
  %v8658 = vrot.slane %v8634, 1
  %v8659 = vsel %vm6383, %v8657, %v8658
  %v8660 = vsel %vm6383, %v8656, %v8657
  %v8661 = vsel %vm6383, %v8655, %v8656
  %v8662 = vsel %vm6383, %v8654, %v8655
  %v8663 = vsel %vm6383, %v8653, %v8654
  %v8664 = vsel %vm6383, %v8652, %v8653
  %v8665 = vsel %vm6383, %v8651, %v8652
  %v8666 = vsel %vm6383, %v8658, %v8651
  %v8667 = vmul.f32 %v8665, %v7635
  %v8668 = vmul.f32 %v8664, %v7635
  %v8669 = vadd.f32 %v8649, %v8667
  %v8670 = vadd.f32 %v8650, %v8668
  %v8671 = vmul.f32 %v8663, %v7652
  %v8672 = vmul.f32 %v8662, %v7652
  %v8673 = vadd.f32 %v8669, %v8671
  %v8674 = vadd.f32 %v8670, %v8672
  %v8675 = vmul.f32 %v8661, %v7669
  %v8676 = vmul.f32 %v8660, %v7669
  %v8677 = vadd.f32 %v8673, %v8675
  %v8678 = vadd.f32 %v8674, %v8676
  %v8679 = vmul.f32 %v8659, %v7686
  %v8680 = vmul.f32 %v8666, %v7686
  %v8681 = vadd.f32 %v8677, %v8679
  %v8682 = vadd.f32 %v8678, %v8680
  %v8683 = vrot.slane %v8627, 2
  %v8684 = vrot.slane %v8628, 2
  %v8685 = vrot.slane %v8629, 2
  %v8686 = vrot.slane %v8630, 2
  %v8687 = vrot.slane %v8631, 2
  %v8688 = vrot.slane %v8632, 2
  %v8689 = vrot.slane %v8633, 2
  %v8690 = vrot.slane %v8634, 2
  %v8691 = vsel %vm6480, %v8689, %v8690
  %v8692 = vsel %vm6480, %v8688, %v8689
  %v8693 = vsel %vm6480, %v8687, %v8688
  %v8694 = vsel %vm6480, %v8686, %v8687
  %v8695 = vsel %vm6480, %v8685, %v8686
  %v8696 = vsel %vm6480, %v8684, %v8685
  %v8697 = vsel %vm6480, %v8683, %v8684
  %v8698 = vsel %vm6480, %v8690, %v8683
  %v8699 = vmul.f32 %v8697, %v7731
  %v8700 = vmul.f32 %v8696, %v7731
  %v8701 = vadd.f32 %v8681, %v8699
  %v8702 = vadd.f32 %v8682, %v8700
  %v8703 = vmul.f32 %v8695, %v7748
  %v8704 = vmul.f32 %v8694, %v7748
  %v8705 = vadd.f32 %v8701, %v8703
  %v8706 = vadd.f32 %v8702, %v8704
  %v8707 = vmul.f32 %v8693, %v7765
  %v8708 = vmul.f32 %v8692, %v7765
  %v8709 = vadd.f32 %v8705, %v8707
  %v8710 = vadd.f32 %v8706, %v8708
  %v8711 = vmul.f32 %v8691, %v7782
  %v8712 = vmul.f32 %v8698, %v7782
  %v8713 = vadd.f32 %v8709, %v8711
  %v8714 = vadd.f32 %v8710, %v8712
  %v8715 = vrot.slane %v8627, 3
  %v8716 = vrot.slane %v8628, 3
  %v8717 = vrot.slane %v8629, 3
  %v8718 = vrot.slane %v8630, 3
  %v8719 = vrot.slane %v8631, 3
  %v8720 = vrot.slane %v8632, 3
  %v8721 = vrot.slane %v8633, 3
  %v8722 = vrot.slane %v8634, 3
  %v8723 = vsel %vm6577, %v8721, %v8722
  %v8724 = vsel %vm6577, %v8720, %v8721
  %v8725 = vsel %vm6577, %v8719, %v8720
  %v8726 = vsel %vm6577, %v8718, %v8719
  %v8727 = vsel %vm6577, %v8717, %v8718
  %v8728 = vsel %vm6577, %v8716, %v8717
  %v8729 = vsel %vm6577, %v8715, %v8716
  %v8730 = vsel %vm6577, %v8722, %v8715
  %v8731 = vmul.f32 %v8729, %v7827
  %v8732 = vmul.f32 %v8728, %v7827
  %v8733 = vadd.f32 %v8713, %v8731
  %v8734 = vadd.f32 %v8714, %v8732
  %v8735 = vmul.f32 %v8727, %v7844
  %v8736 = vmul.f32 %v8726, %v7844
  %v8737 = vadd.f32 %v8733, %v8735
  %v8738 = vadd.f32 %v8734, %v8736
  %v8739 = vmul.f32 %v8725, %v7861
  %v8740 = vmul.f32 %v8724, %v7861
  %v8741 = vadd.f32 %v8737, %v8739
  %v8742 = vadd.f32 %v8738, %v8740
  %v8743 = vmul.f32 %v8723, %v7878
  %v8744 = vmul.f32 %v8730, %v7878
  %v8745 = vadd.f32 %v8741, %v8743
  %v8746 = vadd.f32 %v8742, %v8744
  %8747 = vst.msk [vmem:[#allocation4 + $0x1c0] sm:$0xff] %vm1631, %v8745
  %8748 = vst.msk [vmem:[#allocation4 + $0x1c8] sm:$0xff] %vm1631, %v8746
  %8749 = vst.msk [vmem:[#allocation4 + $0x1d0] sm:$0xff] %vm1631, 0.0
  %8750 = vst.msk [vmem:[#allocation4 + $0x1d8] sm:$0xff] %vm1631, 0.0
  %8751 = vst.msk [vmem:[#allocation4 + $0x1e0] sm:$0xff] %vm1631, 0.0
  %8752 = vst.msk [vmem:[#allocation4 + $0x1e8] sm:$0xff] %vm1631, 0.0
  %8753 = vst.msk [vmem:[#allocation4 + $0x1f0] sm:$0xff] %vm1631, 0.0
  %8754 = vst.msk [vmem:[#allocation4 + $0x1f8] sm:$0xff] %vm1631, 0.0
  %v8755 = vld [vmem:[%s6] sm:$0xff]
  %v8756 = vld [vmem:[#allocation4] sm:$0xff]
  %v8757 = vld [vmem:[#allocation4 + $0x8] sm:$0xff]
  %v8758 = vld [vmem:[#allocation4 + $0x10] sm:$0xff]
  %v8759 = vld [vmem:[#allocation4 + $0x18] sm:$0xff]
  %v8760 = vld [vmem:[#allocation4 + $0x20] sm:$0xff]
  %v8761 = vld [vmem:[#allocation4 + $0x28] sm:$0xff]
  %v8762 = vld [vmem:[#allocation4 + $0x30] sm:$0xff]
  %v8763 = vld [vmem:[#allocation4 + $0x38] sm:$0xff]
  %v8764 = vld [vmem:[#allocation4 + $0x40] sm:$0xff]
  %v8765 = vld [vmem:[#allocation4 + $0x48] sm:$0xff]
  %v8766 = vld [vmem:[#allocation4 + $0x50] sm:$0xff]
  %v8767 = vld [vmem:[#allocation4 + $0x58] sm:$0xff]
  %v8768 = vld [vmem:[#allocation4 + $0x60] sm:$0xff]
  %v8769 = vld [vmem:[#allocation4 + $0x68] sm:$0xff]
  %v8770 = vld [vmem:[#allocation4 + $0x70] sm:$0xff]
  %v8771 = vld [vmem:[#allocation4 + $0x78] sm:$0xff]
  %v8772 = vld [vmem:[#allocation4 + $0x80] sm:$0xff]
  %v8773 = vld [vmem:[#allocation4 + $0x88] sm:$0xff]
  %v8774 = vld [vmem:[#allocation4 + $0x90] sm:$0xff]
  %v8775 = vld [vmem:[#allocation4 + $0x98] sm:$0xff]
  %v8776 = vld [vmem:[#allocation4 + $0xa0] sm:$0xff]
  %v8777 = vld [vmem:[#allocation4 + $0xa8] sm:$0xff]
  %v8778 = vld [vmem:[#allocation4 + $0xb0] sm:$0xff]
  %v8779 = vld [vmem:[#allocation4 + $0xb8] sm:$0xff]
  %v8780 = vld [vmem:[#allocation4 + $0xc0] sm:$0xff]
  %v8781 = vld [vmem:[#allocation4 + $0xc8] sm:$0xff]
  %v8782 = vld [vmem:[#allocation4 + $0xd0] sm:$0xff]
  %v8783 = vld [vmem:[#allocation4 + $0xd8] sm:$0xff]
  %v8784 = vld [vmem:[#allocation4 + $0xe0] sm:$0xff]
  %v8785 = vld [vmem:[#allocation4 + $0xe8] sm:$0xff]
  %v8786 = vld [vmem:[#allocation4 + $0xf0] sm:$0xff]
  %v8787 = vld [vmem:[#allocation4 + $0xf8] sm:$0xff]
  %v8788 = vld [vmem:[#allocation4 + $0x100] sm:$0xff]
  %v8789 = vld [vmem:[#allocation4 + $0x108] sm:$0xff]
  %v8790 = vld [vmem:[#allocation4 + $0x110] sm:$0xff]
  %v8791 = vld [vmem:[#allocation4 + $0x118] sm:$0xff]
  %v8792 = vld [vmem:[#allocation4 + $0x120] sm:$0xff]
  %v8793 = vld [vmem:[#allocation4 + $0x128] sm:$0xff]
  %v8794 = vld [vmem:[#allocation4 + $0x130] sm:$0xff]
  %v8795 = vld [vmem:[#allocation4 + $0x138] sm:$0xff]
  %v8796 = vld [vmem:[#allocation4 + $0x140] sm:$0xff]
  %v8797 = vld [vmem:[#allocation4 + $0x148] sm:$0xff]
  %v8798 = vld [vmem:[#allocation4 + $0x150] sm:$0xff]
  %v8799 = vld [vmem:[#allocation4 + $0x158] sm:$0xff]
  %v8800 = vld [vmem:[#allocation4 + $0x160] sm:$0xff]
  %v8801 = vld [vmem:[#allocation4 + $0x168] sm:$0xff]
  %v8802 = vld [vmem:[#allocation4 + $0x170] sm:$0xff]
  %v8803 = vld [vmem:[#allocation4 + $0x178] sm:$0xff]
  %v8804 = vld [vmem:[#allocation4 + $0x180] sm:$0xff]
  %v8805 = vld [vmem:[#allocation4 + $0x188] sm:$0xff]
  %v8806 = vld [vmem:[#allocation4 + $0x190] sm:$0xff]
  %v8807 = vld [vmem:[#allocation4 + $0x198] sm:$0xff]
  %v8808 = vld [vmem:[#allocation4 + $0x1a0] sm:$0xff]
  %v8809 = vld [vmem:[#allocation4 + $0x1a8] sm:$0xff]
  %v8810 = vld [vmem:[#allocation4 + $0x1b0] sm:$0xff]
  %v8811 = vld [vmem:[#allocation4 + $0x1b8] sm:$0xff]
  %v8812 = vld [vmem:[#allocation4 + $0x1c0] sm:$0xff]
  %v8813 = vld [vmem:[#allocation4 + $0x1c8] sm:$0xff]
  %v8814 = vld [vmem:[#allocation4 + $0x1d0] sm:$0xff]
  %v8815 = vld [vmem:[#allocation4 + $0x1d8] sm:$0xff]
  %v8816 = vld [vmem:[#allocation4 + $0x1e0] sm:$0xff]
  %v8817 = vld [vmem:[#allocation4 + $0x1e8] sm:$0xff]
  %v8818 = vld [vmem:[#allocation4 + $0x1f0] sm:$0xff]
  %v8819 = vld [vmem:[#allocation4 + $0x1f8] sm:$0xff]
  %v8820 = vld [vmem:[%s7] sm:$0xff]
  %8822 = vset.pattern.permute.xlu0 0
  %8823 = vperm.xlu0 %8822, %v8820
  %v8824 = vpop.permute.xlu0 %8823
  %v8827 = vsel %vm1631, %v8755, 0
  %v8830 = vsel %vm1631, %v8756, 0
  %v8833 = vsel %vm1631, %v8757, 0
  %v8836 = vsel %vm1631, %v8758, 0
  %v8839 = vsel %vm1631, %v8759, 0
  %v8842 = vsel %vm1631, %v8760, 0
  %v8845 = vsel %vm1631, %v8761, 0
  %v8848 = vsel %vm1631, %v8762, 0
  %v8851 = vsel %vm1631, %v8763, 0
  %v8854 = vsel %vm1631, %v8764, 0
  %v8857 = vsel %vm1631, %v8765, 0
  %v8860 = vsel %vm1631, %v8766, 0
  %v8863 = vsel %vm1631, %v8767, 0
  %v8866 = vsel %vm1631, %v8768, 0
  %v8869 = vsel %vm1631, %v8769, 0
  %v8872 = vsel %vm1631, %v8770, 0
  %v8875 = vsel %vm1631, %v8771, 0
  %v8878 = vsel %vm1631, %v8772, 0
  %v8881 = vsel %vm1631, %v8773, 0
  %v8884 = vsel %vm1631, %v8774, 0
  %v8887 = vsel %vm1631, %v8775, 0
  %v8890 = vsel %vm1631, %v8776, 0
  %v8893 = vsel %vm1631, %v8777, 0
  %v8896 = vsel %vm1631, %v8778, 0
  %v8899 = vsel %vm1631, %v8779, 0
  %v8902 = vsel %vm1631, %v8780, 0
  %v8905 = vsel %vm1631, %v8781, 0
  %v8908 = vsel %vm1631, %v8782, 0
  %v8911 = vsel %vm1631, %v8783, 0
  %v8914 = vsel %vm1631, %v8784, 0
  %v8917 = vsel %vm1631, %v8785, 0
  %v8920 = vsel %vm1631, %v8786, 0
  %v8923 = vsel %vm1631, %v8787, 0
  %v8926 = vsel %vm1631, %v8788, 0
  %v8929 = vsel %vm1631, %v8789, 0
  %v8932 = vsel %vm1631, %v8790, 0
  %v8935 = vsel %vm1631, %v8791, 0
  %v8938 = vsel %vm1631, %v8792, 0
  %v8941 = vsel %vm1631, %v8793, 0
  %v8944 = vsel %vm1631, %v8794, 0
  %v8947 = vsel %vm1631, %v8795, 0
  %v8950 = vsel %vm1631, %v8796, 0
  %v8953 = vsel %vm1631, %v8797, 0
  %v8956 = vsel %vm1631, %v8798, 0
  %v8959 = vsel %vm1631, %v8799, 0
  %v8962 = vsel %vm1631, %v8800, 0
  %v8965 = vsel %vm1631, %v8801, 0
  %v8968 = vsel %vm1631, %v8802, 0
  %v8971 = vsel %vm1631, %v8803, 0
  %v8974 = vsel %vm1631, %v8804, 0
  %v8977 = vsel %vm1631, %v8805, 0
  %v8980 = vsel %vm1631, %v8806, 0
  %v8983 = vsel %vm1631, %v8807, 0
  %v8986 = vsel %vm1631, %v8808, 0
  %v8989 = vsel %vm1631, %v8809, 0
  %v8992 = vsel %vm1631, %v8810, 0
  %v8995 = vsel %vm1631, %v8811, 0
  %v8998 = vsel %vm1631, %v8812, 0
  %v9001 = vsel %vm1631, %v8813, 0
  %v9004 = vsel %vm1631, %v8814, 0
  %v9007 = vsel %vm1631, %v8815, 0
  %v9010 = vsel %vm1631, %v8816, 0
  %v9013 = vsel %vm1631, %v8817, 0
  %v9016 = vsel %vm1631, %v8818, 0
  %v9019 = vsel %vm1631, %v8819, 0
  %9021 = vmatpush.xpose.msra.mxu0 %v8875
  %9022 = vmatpush.xpose.msra.mxu0 %v8872
  %9023 = vmatpush.xpose.msra.mxu0 %v8869
  %9024 = vmatpush.xpose.msra.mxu0 %v8866
  %9025 = vmatpush.xpose.msra.mxu0 %v8863
  %9026 = vmatpush.xpose.msra.mxu0 %v8860
  %9027 = vmatpush.xpose.msra.mxu0 %v8857
  %9028 = vmatpush.xpose.msra.mxu0 %v8854
  %9029 = vmatpush.xpose.msra.mxu0 %v8851
  %9030 = vmatpush.xpose.msra.mxu0 %v8848
  %9031 = vmatpush.xpose.msra.mxu0 %v8845
  %9032 = vmatpush.xpose.msra.mxu0 %v8842
  %9033 = vmatpush.xpose.msra.mxu0 %v8839
  %9034 = vmatpush.xpose.msra.mxu0 %v8836
  %9035 = vmatpush.xpose.msra.mxu0 %v8833
  %9036 = vmatpush.xpose.msra.mxu0 %v8830
  %9037 = vmatmul.f32.gmra.mxu0 %v8827
  %v9038 = vpop.f32.mrf.mxu0
  %v9039 = vadd.f32 %v8824, %v9038
  %9040 = vdwg.mxu0
  %9041 = vmatpush.xpose.msra.mxu0 %v8923
  %9042 = vmatpush.xpose.msra.mxu0 %v8920
  %9043 = vmatpush.xpose.msra.mxu0 %v8917
  %9044 = vmatpush.xpose.msra.mxu0 %v8914
  %9045 = vmatpush.xpose.msra.mxu0 %v8911
  %9046 = vmatpush.xpose.msra.mxu0 %v8908
  %9047 = vmatpush.xpose.msra.mxu0 %v8905
  %9048 = vmatpush.xpose.msra.mxu0 %v8902
  %9049 = vmatpush.xpose.msra.mxu0 %v8899
  %9050 = vmatpush.xpose.msra.mxu0 %v8896
  %9051 = vmatpush.xpose.msra.mxu0 %v8893
  %9052 = vmatpush.xpose.msra.mxu0 %v8890
  %9053 = vmatpush.xpose.msra.mxu0 %v8887
  %9054 = vmatpush.xpose.msra.mxu0 %v8884
  %9055 = vmatpush.xpose.msra.mxu0 %v8881
  %9056 = vmatpush.xpose.msra.mxu0 %v8878
  %9057 = vmatmul.f32.gmra.mxu0 %v8827
  %v9058 = vpop.f32.mrf.mxu0
  %v9059 = vadd.f32 %v8824, %v9058
  %9060 = vdwg.mxu0
  %9061 = vmatpush.xpose.msra.mxu0 %v8971
  %9062 = vmatpush.xpose.msra.mxu0 %v8968
  %9063 = vmatpush.xpose.msra.mxu0 %v8965
  %9064 = vmatpush.xpose.msra.mxu0 %v8962
  %9065 = vmatpush.xpose.msra.mxu0 %v8959
  %9066 = vmatpush.xpose.msra.mxu0 %v8956
  %9067 = vmatpush.xpose.msra.mxu0 %v8953
  %9068 = vmatpush.xpose.msra.mxu0 %v8950
  %9069 = vmatpush.xpose.msra.mxu0 %v8947
  %9070 = vmatpush.xpose.msra.mxu0 %v8944
  %9071 = vmatpush.xpose.msra.mxu0 %v8941
  %9072 = vmatpush.xpose.msra.mxu0 %v8938
  %9073 = vmatpush.xpose.msra.mxu0 %v8935
  %9074 = vmatpush.xpose.msra.mxu0 %v8932
  %9075 = vmatpush.xpose.msra.mxu0 %v8929
  %9076 = vmatpush.xpose.msra.mxu0 %v8926
  %9077 = vmatmul.f32.gmra.mxu0 %v8827
  %v9078 = vpop.f32.mrf.mxu0
  %v9079 = vadd.f32 %v8824, %v9078
  %9080 = vdwg.mxu0
  %9081 = vmatpush.xpose.msra.mxu0 %v9019
  %9082 = vmatpush.xpose.msra.mxu0 %v9016
  %9083 = vmatpush.xpose.msra.mxu0 %v9013
  %9084 = vmatpush.xpose.msra.mxu0 %v9010
  %9085 = vmatpush.xpose.msra.mxu0 %v9007
  %9086 = vmatpush.xpose.msra.mxu0 %v9004
  %9087 = vmatpush.xpose.msra.mxu0 %v9001
  %9088 = vmatpush.xpose.msra.mxu0 %v8998
  %9089 = vmatpush.xpose.msra.mxu0 %v8995
  %9090 = vmatpush.xpose.msra.mxu0 %v8992
  %9091 = vmatpush.xpose.msra.mxu0 %v8989
  %9092 = vmatpush.xpose.msra.mxu0 %v8986
  %9093 = vmatpush.xpose.msra.mxu0 %v8983
  %9094 = vmatpush.xpose.msra.mxu0 %v8980
  %9095 = vmatpush.xpose.msra.mxu0 %v8977
  %9096 = vmatpush.xpose.msra.mxu0 %v8974
  %9097 = vmatmul.f32.gmra.mxu0 %v8827
  %v9098 = vpop.f32.mrf.mxu0
  %v9099 = vadd.f32 %v8824, %v9098
  %9100 = vdwg.mxu0
  %9101 = vst [vmem:[%s8] sm:$0xff] %v9039
  %9102 = vst [vmem:[%s8 + $0x8] sm:$0xff] %v9059
  %s9103 = scalar_lea.vmem %s8, 16
  %9104 = vst [vmem:[%s9103] sm:$0xff] %v9079
  %9105 = vst [vmem:[%s9103 + $0x8] sm:$0xff] %v9099
  // Predicated region
  $region34: #{tracker_z_forward.1} parent=0 // pred_check
    _
  $region35: #{tracker_z_forward.1} parent=0 // pred_check_branch
    %9107 = sbr.rel (0) target = $region37
  $region36: #{tracker_z_forward.1} parent=0 // pred_region
    _
  $region37: #{tracker_z_forward.1} parent=0 // pred_fallthru
    _
  // Predicated region
  $region38: #{tracker_z_forward.1} parent=0 // pred_check
    _
  $region39: #{tracker_z_forward.1} parent=0 // pred_check_branch
    %9109 = sbr.rel (0) target = $region41
  $region40: #{tracker_z_forward.1} parent=0 // pred_region
    _
  $region41: #{tracker_z_forward.1} parent=0 // pred_fallthru
    _

</llo_original>
